<compile_context>
chip_gen: v7x
topology: tpu7x:2x2x1
jax: 0.10.0
libtpu: 0.0.40
codegen_flags: <defaults>
</compile_context>

<pallas_src>
import functools

import jax
import jax.numpy as jnp
from jax.experimental import pallas as pl
from jax.experimental.pallas import tpu as pltpu


# ------------------------------------------------------------------ fused kernel
def _deeptrader_kernel(*refs, num_tcn, k, dilation_base, T, P, pad0,
                       num_lstm, B, N, H, F, M, BP):
    # refs layout:
    #   x, (w_tcn, b_tcn)*num_tcn, A, wg, bg, ws, bs,
    #   xm2d, (wih, whh, b_lstm)*num_lstm, wmu, bmu, wsig, bsig,
    #   scores_out, mu_out, sigma_out, x_pad(scr), h_pad(scr), seq(scr)
    idx = 0
    x_ref = refs[idx]; idx += 1
    tcn_refs = []
    for _ in range(num_tcn):
        tcn_refs.append((refs[idx], refs[idx + 1])); idx += 2
    a_ref, wg_ref, bg_ref, ws_ref, bs_ref = refs[idx:idx + 5]; idx += 5
    xm_ref = refs[idx]; idx += 1
    lstm_refs = []
    for _ in range(num_lstm):
        lstm_refs.append((refs[idx], refs[idx + 1], refs[idx + 2])); idx += 3
    wmu_ref, bmu_ref, wsig_ref, bsig_ref = refs[idx:idx + 4]; idx += 4
    scores_ref, mu_ref, sig_ref = refs[idx:idx + 3]; idx += 3
    xpad_ref, hpad_ref, seq_ref = refs[idx:idx + 3]

    R = B * N
    f32 = jnp.float32
    bf16 = jnp.bfloat16

    # Deterministic contents for the output blocks this grid step does not own
    # (each grid step writes its own (squeezed) leading block).
    scores_ref[...] = jnp.zeros_like(scores_ref)
    mu_ref[...] = jnp.zeros_like(mu_ref)
    sig_ref[...] = jnp.zeros_like(sig_ref)

    core = pl.program_id(0)

    # -------------------------------------------------- Asset Scoring Unit (core 0)
    @pl.when(core == 0)
    def _asset():
        # In-kernel causal pad for layer 0 (no wrapper jnp.pad HBM copy).
        xpad_ref[0:pad0] = jnp.zeros((pad0, R, F), f32)
        xpad_ref[pad0:] = x_ref[...]
        # Zero only the causal-history prefix; [P:] is overwritten every layer.
        hpad_ref[0:P] = jnp.zeros((P, R, H), f32)

        prev = None
        for layer, (w_ref, b_ref) in enumerate(tcn_refs):
            d = dilation_base ** layer
            if layer == 0:
                src_ref, base, cin = xpad_ref, 0, F
            else:
                src_ref, base, cin = hpad_ref, P - (k - 1) * d, H
            # Fuse the k dilated causal taps into one deep matmul:
            # [T, R, k*cin] -> [T*R, k*cin] @ [k*cin, H]
            taps = jnp.concatenate(
                [src_ref[base + j * d: base + j * d + T] for j in range(k)],
                axis=-1)
            lhs = taps.reshape(T * R, k * cin).astype(bf16)
            acc = jnp.dot(lhs, w_ref[...],
                          preferred_element_type=f32).reshape(T, R, H)
            acc = acc + b_ref[...][None, :, :]
            if prev is not None:
                acc = acc + prev                       # residual (layers > 0)
            prev = jnp.maximum(acc, 0.0)               # ReLU, [T, R, H]
            if layer < num_tcn - 1:
                hpad_ref[P:] = prev                    # stage for next layer

        # Graph conv on the last timestep: per-batch [N,N]@[N,H] (no kron).
        h_last = prev[T - 1].astype(bf16)              # [R, H]
        gc = jnp.concatenate(
            [jnp.dot(a_ref[...], h_last[bb * N:(bb + 1) * N],
                     preferred_element_type=f32) for bb in range(B)],
            axis=0)                                    # [R, H] f32
        z = jnp.maximum(
            jnp.dot(gc.astype(bf16), wg_ref[...],
                    preferred_element_type=f32) + bg_ref[...], 0.0)
        s_logit = jnp.sum(z * ws_ref[...], axis=-1, keepdims=True) + bs_ref[...]
        scores_ref[...] = jax.nn.sigmoid(s_logit)      # [R, 1]

    # ------------------------------------------------- Market Scoring Unit (core 1)
    @pl.when(core == 1)
    def _market():
        h_final = None
        for layer, (wih_ref, whh_ref, b_ref) in enumerate(lstm_refs):
            if layer == 0:
                x2d = xm_ref[...].astype(bf16)                      # [T*BP, M]
            else:
                x2d = seq_ref[...].reshape(T * BP, H).astype(bf16)  # [T*BP, H]
            # Hoisted input-to-hidden matmul over all timesteps (one MXU call).
            gx = (jnp.dot(x2d, wih_ref[...], preferred_element_type=f32)
                  .reshape(T, BP, 4 * H) + b_ref[...][None, :, :])  # [T, BP, 4H]

            h = jnp.zeros((BP, H), f32)
            c = jnp.zeros((BP, H), f32)
            for t in range(T):                         # static unrolled recurrence
                gates = gx[t] + jnp.dot(h.astype(bf16), whh_ref[...],
                                        preferred_element_type=f32)   # [BP, 4H]
                s_all = jax.nn.sigmoid(gates)          # ONE full-width EUP sigmoid
                i_g = s_all[:, 0 * H:1 * H]
                f_g = s_all[:, 1 * H:2 * H]
                o_g = s_all[:, 3 * H:4 * H]
                g_g = jnp.tanh(gates[:, 2 * H:3 * H])
                c = f_g * c + i_g * g_g
                h = o_g * jnp.tanh(c)
                if layer < num_lstm - 1:
                    seq_ref[t] = h                     # stage sequence for next layer
            h_final = h                                # [BP, H]

        mu_logit = (jnp.sum(h_final * wmu_ref[...], axis=-1, keepdims=True)
                    + bmu_ref[...])
        sg_logit = (jnp.sum(h_final * wsig_ref[...], axis=-1, keepdims=True)
                    + bsig_ref[...])
        mu_ref[...] = jax.nn.sigmoid(mu_logit[:B])
        sg = sg_logit[:B]
        # numerically stable softplus (log1p avoided for lowering safety)
        sig_ref[...] = jnp.maximum(sg, 0.0) + jnp.log(1.0 + jnp.exp(-jnp.abs(sg)))


# ------------------------------------------------------------------ fused wrapper
def deeptrader_scoring(params, stock_features, market_features, *,
                       kernel_size, dilation_base):
    B, N, F, T = stock_features.shape
    _, Tm, M = market_features.shape
    R = B * N
    H = params['wg'].shape[0]
    num_tcn = len(params['tcn'])
    num_lstm = len(params['lstm'])
    P = (kernel_size - 1) * dilation_base ** (num_tcn - 1)
    pad0 = kernel_size - 1
    BP = ((B + 7) // 8) * 8                      # batch padded to one sublane tile
    assert R % 8 == 0, "B*N must be a multiple of 8 for tile-aligned reshapes"
    # TODO(synk): at production R, add a parallel grid axis over R tiles instead
    #             of the single full-array block.

    # thin wrapper relayouts (tiny at these sizes)
    # TODO(synk): fold the [B,N,F,T]->[T,R,F] reorder into index_maps at scale.
    x = jnp.transpose(stock_features, (3, 0, 1, 2)).reshape(T, R, F).astype(jnp.float32)
    xm = jnp.transpose(market_features, (1, 0, 2)).astype(jnp.float32)      # [T,B,M]
    xm = jnp.pad(xm, ((0, 0), (0, BP - B), (0, 0))).reshape(T * BP, M)      # [T*BP,M]

    flat = [x]
    in_specs = [pl.BlockSpec(x.shape, lambda i: (0, 0, 0))]
    for (w, b) in params['tcn']:
        kk, cin, hh = w.shape
        w2 = w.reshape(kk * cin, hh).astype(jnp.bfloat16)    # fused-tap weight
        b = b.astype(jnp.float32)
        flat += [w2, b]
        in_specs += [pl.BlockSpec(w2.shape, lambda i: (0, 0)),
                     pl.BlockSpec(b.shape, lambda i: (0, 0))]
    A = params['A'].astype(jnp.bfloat16)
    wg = params['wg'].astype(jnp.bfloat16)
    flat += [A, wg, params['bg'], params['ws'], params['bs']]
    in_specs += [pl.BlockSpec(A.shape, lambda i: (0, 0)),
                 pl.BlockSpec(wg.shape, lambda i: (0, 0)),
                 pl.BlockSpec(params['bg'].shape, lambda i: (0, 0)),
                 pl.BlockSpec(params['ws'].shape, lambda i: (0, 0)),
                 pl.BlockSpec(params['bs'].shape, lambda i: (0, 0))]
    flat += [xm]
    in_specs += [pl.BlockSpec(xm.shape, lambda i: (0, 0))]
    for (wih, whh, b) in params['lstm']:
        wih = wih.astype(jnp.bfloat16)
        whh = whh.astype(jnp.bfloat16)
        b = b.astype(jnp.float32)
        flat += [wih, whh, b]
        in_specs += [pl.BlockSpec(wih.shape, lambda i: (0, 0)),
                     pl.BlockSpec(whh.shape, lambda i: (0, 0)),
                     pl.BlockSpec(b.shape, lambda i: (0, 0))]
    flat += [params['wmu'], params['bmu'], params['wsig'], params['bsig']]
    in_specs += [pl.BlockSpec(params['wmu'].shape, lambda i: (0, 0)),
                 pl.BlockSpec(params['bmu'].shape, lambda i: (0, 0)),
                 pl.BlockSpec(params['wsig'].shape, lambda i: (0, 0)),
                 pl.BlockSpec(params['bsig'].shape, lambda i: (0, 0))]

    out_shapes = (jax.ShapeDtypeStruct((2, R, 1), jnp.float32),   # scores (block 0)
                  jax.ShapeDtypeStruct((2, B, 1), jnp.float32),   # mu     (block 1)
                  jax.ShapeDtypeStruct((2, B, 1), jnp.float32))   # sigma  (block 1)
    out_specs = (pl.BlockSpec((None, R, 1), lambda i: (i, 0, 0)),
                 pl.BlockSpec((None, B, 1), lambda i: (i, 0, 0)),
                 pl.BlockSpec((None, B, 1), lambda i: (i, 0, 0)))

    scores2, mu2, sig2 = pl.pallas_call(
        functools.partial(_deeptrader_kernel,
                          num_tcn=num_tcn, k=kernel_size,
                          dilation_base=dilation_base, T=T, P=P, pad0=pad0,
                          num_lstm=num_lstm, B=B, N=N, H=H, F=F, M=M, BP=BP),
        out_shape=out_shapes,
        grid=(2,),
        in_specs=in_specs,
        out_specs=out_specs,
        scratch_shapes=[pltpu.VMEM((T + pad0, R, F), jnp.float32),   # x_pad
                        pltpu.VMEM((T + P, R, H), jnp.float32),      # h_pad
                        pltpu.VMEM((T, BP, H), jnp.float32)],        # LSTM seq
        compiler_params=pltpu.CompilerParams(
            dimension_semantics=("parallel",)),      # asset/market on v7x's 2 cores
    )(*flat)

    asset_scores = scores2[0, :, 0].reshape(B, N)
    mu = mu2[1]
    sigma = sig2[1]
    return asset_scores, mu, sigma


# --------------------------------------------------------------- portfolio (JAX glue)
def portfolio_generator(asset_scores, short_ratio, winner_size):
    # top-k long / bottom-k short + softmax over selected scores.
    B, N = asset_scores.shape
    rows = jnp.arange(B)[:, None]
    top_vals, top_idx = jax.lax.top_k(asset_scores, winner_size)
    long_w = jnp.zeros((B, N), jnp.float32).at[rows, top_idx].set(
        jax.nn.softmax(top_vals, axis=-1))
    bot_vals, bot_idx = jax.lax.top_k(-asset_scores, winner_size)
    short_w = jnp.zeros((B, N), jnp.float32).at[rows, bot_idx].set(
        jax.nn.softmax(bot_vals, axis=-1))
    return {'long_weights': long_w, 'short_weights': short_w, 'short_ratio': short_ratio}


# ------------------------------------------------------------------------- parameters
def init_params(key, *, num_stocks, stock_feature_dim, market_feature_dim,
                hidden_dim, num_layers_asset, num_layers_market,
                kernel_size, dilation_base):
    keys = iter(jax.random.split(key, 64))
    scale = 0.1

    def rnd(shape):
        return scale * jax.random.normal(next(keys), shape, jnp.float32)

    params = {}
    # Asset TCN layers.
    tcn = []
    cin = stock_feature_dim
    for _ in range(num_layers_asset):
        tcn.append((rnd((kernel_size, cin, hidden_dim)),        # w [k, Cin, H]
                    rnd((1, hidden_dim))))                      # b
        cin = hidden_dim
    params['tcn'] = tcn
    # Graph + score head.
    N = num_stocks
    params['A'] = (0.5 * jnp.eye(N, dtype=jnp.float32)
                   + 0.5 * jnp.ones((N, N), jnp.float32) / N)   # deterministic adjacency
    params['wg'] = rnd((hidden_dim, hidden_dim))
    params['bg'] = rnd((1, hidden_dim))
    params['ws'] = rnd((1, hidden_dim))                         # score head as a row
    params['bs'] = rnd((1, 1))
    # Market LSTM stack (gate order i, f, g, o; single combined bias).
    lstm = []
    i_dim = market_feature_dim
    for _ in range(num_layers_market):
        lstm.append((rnd((i_dim, 4 * hidden_dim)),
                     rnd((hidden_dim, 4 * hidden_dim)),
                     rnd((1, 4 * hidden_dim))))
        i_dim = hidden_dim
    params['lstm'] = lstm
    # Market heads (stored as rows).
    params['wmu'] = rnd((1, hidden_dim))
    params['bmu'] = rnd((1, 1))
    params['wsig'] = rnd((1, hidden_dim))
    params['bsig'] = rnd((1, 1))
    return params


# ----------------------------------------------------------------------------- forward
def deeptrader_forward(params, stock_features, market_features, *,
                       kernel_size, dilation_base, winner_size):
    # stock_features : [B, N, F, T]   market_features : [B, T, M]
    asset_scores, mu, sigma = deeptrader_scoring(
        params, stock_features, market_features,
        kernel_size=kernel_size, dilation_base=dilation_base)
    short_ratio = mu                                   # eval path (no sampling)

    out = portfolio_generator(asset_scores, short_ratio, winner_size)
    out['mu'] = mu
    out['sigma'] = sigma
    out['asset_scores'] = asset_scores
    return out


# --------------------------------------------------------------------------------- main
if __name__ == "__main__":
    B = 2                 # batch
    N = 8                 # num stocks (len(tickers))
    F = 4                 # stock_feature_dim
    M = 5                 # market_feature_dim
    T = 16                # seq_length
    HIDDEN = 32           # 4*H = 128 => full-lane LSTM gates
    NUM_LAYERS_ASSET = 4
    NUM_LAYERS_MARKET = 2
    KERNEL_SIZE = 3
    DILATION_BASE = 2
    WINNER_SIZE = 2

    key = jax.random.PRNGKey(0)
    kp, ks, km = jax.random.split(key, 3)
    params = init_params(kp,
                         num_stocks=N, stock_feature_dim=F, market_feature_dim=M,
                         hidden_dim=HIDDEN, num_layers_asset=NUM_LAYERS_ASSET,
                         num_layers_market=NUM_LAYERS_MARKET,
                         kernel_size=KERNEL_SIZE, dilation_base=DILATION_BASE)

    stock_features = jax.random.normal(ks, (B, N, F, T), jnp.float32)
    market_features = jax.random.normal(km, (B, T, M), jnp.float32)

    fwd = jax.jit(functools.partial(deeptrader_forward,
                                    kernel_size=KERNEL_SIZE,
                                    dilation_base=DILATION_BASE,
                                    winner_size=WINNER_SIZE))
    out = fwd(params, stock_features, market_features)
    jax.block_until_ready(out)

    assert out['long_weights'].shape == (B, N)
    assert out['short_weights'].shape == (B, N)
    assert out['asset_scores'].shape == (B, N)
    assert out['mu'].shape == (B, 1) and out['sigma'].shape == (B, 1)
    print("KERNEL_OK")
</pallas_src>

<mosaic_0001>
module attributes {stable_mosaic.version = 11 : i64} {
  func.func @_deeptrader_kernel(%arg0: i32, %arg1: memref<16x16x4xf32, #tpu.memory_space<vmem>>, %arg2: memref<12x32xbf16, #tpu.memory_space<vmem>>, %arg3: memref<1x32xf32, #tpu.memory_space<vmem>>, %arg4: memref<96x32xbf16, #tpu.memory_space<vmem>>, %arg5: memref<1x32xf32, #tpu.memory_space<vmem>>, %arg6: memref<96x32xbf16, #tpu.memory_space<vmem>>, %arg7: memref<1x32xf32, #tpu.memory_space<vmem>>, %arg8: memref<96x32xbf16, #tpu.memory_space<vmem>>, %arg9: memref<1x32xf32, #tpu.memory_space<vmem>>, %arg10: memref<8x8xbf16, #tpu.memory_space<vmem>>, %arg11: memref<32x32xbf16, #tpu.memory_space<vmem>>, %arg12: memref<1x32xf32, #tpu.memory_space<vmem>>, %arg13: memref<1x32xf32, #tpu.memory_space<vmem>>, %arg14: memref<1x1xf32, #tpu.memory_space<vmem>>, %arg15: memref<128x5xf32, #tpu.memory_space<vmem>>, %arg16: memref<5x128xbf16, #tpu.memory_space<vmem>>, %arg17: memref<32x128xbf16, #tpu.memory_space<vmem>>, %arg18: memref<1x128xf32, #tpu.memory_space<vmem>>, %arg19: memref<32x128xbf16, #tpu.memory_space<vmem>>, %arg20: memref<32x128xbf16, #tpu.memory_space<vmem>>, %arg21: memref<1x128xf32, #tpu.memory_space<vmem>>, %arg22: memref<1x32xf32, #tpu.memory_space<vmem>>, %arg23: memref<1x1xf32, #tpu.memory_space<vmem>>, %arg24: memref<1x32xf32, #tpu.memory_space<vmem>>, %arg25: memref<1x1xf32, #tpu.memory_space<vmem>>, %arg26: memref<1x16x1xf32, #tpu.memory_space<vmem>>, %arg27: memref<1x2x1xf32, #tpu.memory_space<vmem>>, %arg28: memref<1x2x1xf32, #tpu.memory_space<vmem>>, %arg29: memref<18x16x4xf32, #tpu.memory_space<vmem>>, %arg30: memref<32x16x32xf32, #tpu.memory_space<vmem>>, %arg31: memref<16x8x32xf32, #tpu.memory_space<vmem>>) attributes {dimension_semantics = [#tpu.dimension_semantics<parallel>], iteration_bounds = array<i64: 2>, scalar_prefetch = 0 : i64, scratch_operands = 3 : i64, tpu.core_type = #tpu.core_type<tc>, window_params = [{pipeline_mode = #tpu.pipeline_mode<synchronous>, transform_indices = @transform_0, window_bounds = array<i64: 16, 16, 4>}, {pipeline_mode = #tpu.pipeline_mode<synchronous>, transform_indices = @transform_1, window_bounds = array<i64: 12, 32>}, {pipeline_mode = #tpu.pipeline_mode<synchronous>, transform_indices = @transform_2, window_bounds = array<i64: 1, 32>}, {pipeline_mode = #tpu.pipeline_mode<synchronous>, transform_indices = @transform_3, window_bounds = array<i64: 96, 32>}, {pipeline_mode = #tpu.pipeline_mode<synchronous>, transform_indices = @transform_4, window_bounds = array<i64: 1, 32>}, {pipeline_mode = #tpu.pipeline_mode<synchronous>, transform_indices = @transform_5, window_bounds = array<i64: 96, 32>}, {pipeline_mode = #tpu.pipeline_mode<synchronous>, transform_indices = @transform_6, window_bounds = array<i64: 1, 32>}, {pipeline_mode = #tpu.pipeline_mode<synchronous>, transform_indices = @transform_7, window_bounds = array<i64: 96, 32>}, {pipeline_mode = #tpu.pipeline_mode<synchronous>, transform_indices = @transform_8, window_bounds = array<i64: 1, 32>}, {pipeline_mode = #tpu.pipeline_mode<synchronous>, transform_indices = @transform_9, window_bounds = array<i64: 8, 8>}, {pipeline_mode = #tpu.pipeline_mode<synchronous>, transform_indices = @transform_10, window_bounds = array<i64: 32, 32>}, {pipeline_mode = #tpu.pipeline_mode<synchronous>, transform_indices = @transform_11, window_bounds = array<i64: 1, 32>}, {pipeline_mode = #tpu.pipeline_mode<synchronous>, transform_indices = @transform_12, window_bounds = array<i64: 1, 32>}, {pipeline_mode = #tpu.pipeline_mode<synchronous>, transform_indices = @transform_13, window_bounds = array<i64: 1, 1>}, {pipeline_mode = #tpu.pipeline_mode<synchronous>, transform_indices = @transform_14, window_bounds = array<i64: 128, 5>}, {pipeline_mode = #tpu.pipeline_mode<synchronous>, transform_indices = @transform_15, window_bounds = array<i64: 5, 128>}, {pipeline_mode = #tpu.pipeline_mode<synchronous>, transform_indices = @transform_16, window_bounds = array<i64: 32, 128>}, {pipeline_mode = #tpu.pipeline_mode<synchronous>, transform_indices = @transform_17, window_bounds = array<i64: 1, 128>}, {pipeline_mode = #tpu.pipeline_mode<synchronous>, transform_indices = @transform_18, window_bounds = array<i64: 32, 128>}, {pipeline_mode = #tpu.pipeline_mode<synchronous>, transform_indices = @transform_19, window_bounds = array<i64: 32, 128>}, {pipeline_mode = #tpu.pipeline_mode<synchronous>, transform_indices = @transform_20, window_bounds = array<i64: 1, 128>}, {pipeline_mode = #tpu.pipeline_mode<synchronous>, transform_indices = @transform_21, window_bounds = array<i64: 1, 32>}, {pipeline_mode = #tpu.pipeline_mode<synchronous>, transform_indices = @transform_22, window_bounds = array<i64: 1, 1>}, {pipeline_mode = #tpu.pipeline_mode<synchronous>, transform_indices = @transform_23, window_bounds = array<i64: 1, 32>}, {pipeline_mode = #tpu.pipeline_mode<synchronous>, transform_indices = @transform_24, window_bounds = array<i64: 1, 1>}, {transform_indices = @transform_25, window_bounds = array<i64: 1, 16, 1>}, {transform_indices = @transform_26, window_bounds = array<i64: 1, 2, 1>}, {transform_indices = @transform_27, window_bounds = array<i64: 1, 2, 1>}]} {
    %cst = arith.constant 0.000000e+00 : f32
    %0 = vector.broadcast %cst : f32 to vector<16x1xf32>
    %c0 = arith.constant 0 : index
    %c0_0 = arith.constant 0 : index
    %c0_1 = arith.constant 0 : index
    %1 = vector.load %arg26[%c0, %c0_0, %c0_1] : memref<1x16x1xf32, #tpu.memory_space<vmem>>, vector<1x16x1xf32>
    %2 = vector.shape_cast %1 : vector<1x16x1xf32> to vector<16x1xf32>
    %3 = vector.shape_cast %0 : vector<16x1xf32> to vector<1x16x1xf32>
    tpu.vector_store %arg26[%c0, %c0_0, %c0_1], %3 {strides = array<i32>} : memref<1x16x1xf32, #tpu.memory_space<vmem>>, vector<1x16x1xf32>,
    %cst_2 = arith.constant 0.000000e+00 : f32
    %4 = vector.broadcast %cst_2 : f32 to vector<2x1xf32>
    %c0_3 = arith.constant 0 : index
    %c0_4 = arith.constant 0 : index
    %c0_5 = arith.constant 0 : index
    %5 = vector.load %arg27[%c0_3, %c0_4, %c0_5] : memref<1x2x1xf32, #tpu.memory_space<vmem>>, vector<1x2x1xf32>
    %6 = vector.shape_cast %5 : vector<1x2x1xf32> to vector<2x1xf32>
    %7 = vector.shape_cast %4 : vector<2x1xf32> to vector<1x2x1xf32>
    tpu.vector_store %arg27[%c0_3, %c0_4, %c0_5], %7 {strides = array<i32>} : memref<1x2x1xf32, #tpu.memory_space<vmem>>, vector<1x2x1xf32>,
    %cst_6 = arith.constant 0.000000e+00 : f32
    %8 = vector.broadcast %cst_6 : f32 to vector<2x1xf32>
    %c0_7 = arith.constant 0 : index
    %c0_8 = arith.constant 0 : index
    %c0_9 = arith.constant 0 : index
    %9 = vector.load %arg28[%c0_7, %c0_8, %c0_9] : memref<1x2x1xf32, #tpu.memory_space<vmem>>, vector<1x2x1xf32>
    %10 = vector.shape_cast %9 : vector<1x2x1xf32> to vector<2x1xf32>
    %11 = vector.shape_cast %8 : vector<2x1xf32> to vector<1x2x1xf32>
    tpu.vector_store %arg28[%c0_7, %c0_8, %c0_9], %11 {strides = array<i32>} : memref<1x2x1xf32, #tpu.memory_space<vmem>>, vector<1x2x1xf32>,
    %c0_i32 = arith.constant 0 : i32
    %12 = arith.cmpi eq, %arg0, %c0_i32 : i32
    %13 = arith.extui %12 : i1 to i32
    %c0_i32_10 = arith.constant 0 : i32
    %14 = arith.cmpi ne, %13, %c0_i32_10 : i32
    scf.if %14 {
      %cst_12 = arith.constant 0.000000e+00 : f32
      %18 = vector.broadcast %cst_12 : f32 to vector<2x16x4xf32>
      %c0_13 = arith.constant 0 : index
      %c0_14 = arith.constant 0 : index
      %c0_15 = arith.constant 0 : index
      %19 = vector.load %arg29[%c0_13, %c0_14, %c0_15] : memref<18x16x4xf32, #tpu.memory_space<vmem>>, vector<2x16x4xf32>
      tpu.vector_store %arg29[%c0_13, %c0_14, %c0_15], %18 {strides = array<i32>} : memref<18x16x4xf32, #tpu.memory_space<vmem>>, vector<2x16x4xf32>,
      %c0_16 = arith.constant 0 : index
      %c0_17 = arith.constant 0 : index
      %c0_18 = arith.constant 0 : index
      %20 = vector.load %arg1[%c0_16, %c0_17, %c0_18] : memref<16x16x4xf32, #tpu.memory_space<vmem>>, vector<16x16x4xf32>
      %c2 = arith.constant 2 : index
      %c0_19 = arith.constant 0 : index
      %c0_20 = arith.constant 0 : index
      %21 = vector.load %arg29[%c2, %c0_19, %c0_20] : memref<18x16x4xf32, #tpu.memory_space<vmem>>, vector<16x16x4xf32>
      tpu.vector_store %arg29[%c2, %c0_19, %c0_20], %20 {strides = array<i32>} : memref<18x16x4xf32, #tpu.memory_space<vmem>>, vector<16x16x4xf32>,
      %cst_21 = arith.constant 0.000000e+00 : f32
      %22 = vector.broadcast %cst_21 : f32 to vector<16x16x32xf32>
      %c0_22 = arith.constant 0 : index
      %c0_23 = arith.constant 0 : index
      %c0_24 = arith.constant 0 : index
      %23 = vector.load %arg30[%c0_22, %c0_23, %c0_24] : memref<32x16x32xf32, #tpu.memory_space<vmem>>, vector<16x16x32xf32>
      tpu.vector_store %arg30[%c0_22, %c0_23, %c0_24], %22 {strides = array<i32>} : memref<32x16x32xf32, #tpu.memory_space<vmem>>, vector<16x16x32xf32>,
      %c0_25 = arith.constant 0 : index
      %c0_26 = arith.constant 0 : index
      %c0_27 = arith.constant 0 : index
      %24 = vector.load %arg29[%c0_25, %c0_26, %c0_27] : memref<18x16x4xf32, #tpu.memory_space<vmem>>, vector<16x16x4xf32>
      %c1 = arith.constant 1 : index
      %c0_28 = arith.constant 0 : index
      %c0_29 = arith.constant 0 : index
      %25 = vector.load %arg29[%c1, %c0_28, %c0_29] : memref<18x16x4xf32, #tpu.memory_space<vmem>>, vector<16x16x4xf32>
      %c2_30 = arith.constant 2 : index
      %c0_31 = arith.constant 0 : index
      %c0_32 = arith.constant 0 : index
      %26 = vector.load %arg29[%c2_30, %c0_31, %c0_32] : memref<18x16x4xf32, #tpu.memory_space<vmem>>, vector<16x16x4xf32>
      %27 = tpu.concatenate %24, %25, %26 in 2 : vector<16x16x4xf32>, vector<16x16x4xf32>, vector<16x16x4xf32> -> vector<16x16x12xf32>
      %28 = vector.shape_cast %27 : vector<16x16x12xf32> to vector<256x12xf32>
      %29 = arith.truncf %28 : vector<256x12xf32> to vector<256x12xbf16>
      %c0_33 = arith.constant 0 : index
      %c0_34 = arith.constant 0 : index
      %30 = vector.load %arg2[%c0_33, %c0_34] : memref<12x32xbf16, #tpu.memory_space<vmem>>, vector<12x32xbf16>
      %cst_35 = arith.constant dense<0.000000e+00> : vector<256x32xf32>
      %31 = tpu.matmul %29, %30, %cst_35 {dimension_numbers = #tpu.dot_dimension_numbers<[1], [0], [0], [1], [0, 0, 1, 1], [], []>} : vector<256x12xbf16>, vector<12x32xbf16>, vector<256x32xf32> -> vector<256x32xf32>
      %32 = vector.shape_cast %31 : vector<256x32xf32> to vector<16x16x32xf32>
      %c0_36 = arith.constant 0 : index
      %c0_37 = arith.constant 0 : index
      %33 = vector.load %arg3[%c0_36, %c0_37] : memref<1x32xf32, #tpu.memory_space<vmem>>, vector<1x32xf32>
      %34 = vector.shape_cast %33 : vector<1x32xf32> to vector<1x1x32xf32>
      %35 = vector.broadcast %34 : vector<1x1x32xf32> to vector<16x16x32xf32>
      %36 = arith.addf %32, %35 : vector<16x16x32xf32>
      %cst_38 = arith.constant 0.000000e+00 : f32
      %37 = vector.broadcast %cst_38 : f32 to vector<16x16x32xf32>
      %38 = arith.maximumf %36, %37 : vector<16x16x32xf32>
      %c16 = arith.constant 16 : index
      %c0_39 = arith.constant 0 : index
      %c0_40 = arith.constant 0 : index
      %39 = vector.load %arg30[%c16, %c0_39, %c0_40] : memref<32x16x32xf32, #tpu.memory_space<vmem>>, vector<16x16x32xf32>
      tpu.vector_store %arg30[%c16, %c0_39, %c0_40], %38 {strides = array<i32>} : memref<32x16x32xf32, #tpu.memory_space<vmem>>, vector<16x16x32xf32>,
      %c12 = arith.constant 12 : index
      %c0_41 = arith.constant 0 : index
      %c0_42 = arith.constant 0 : index
      %40 = vector.load %arg30[%c12, %c0_41, %c0_42] : memref<32x16x32xf32, #tpu.memory_space<vmem>>, vector<16x16x32xf32>
      %c14 = arith.constant 14 : index
      %c0_43 = arith.constant 0 : index
      %c0_44 = arith.constant 0 : index
      %41 = vector.load %arg30[%c14, %c0_43, %c0_44] : memref<32x16x32xf32, #tpu.memory_space<vmem>>, vector<16x16x32xf32>
      %c16_45 = arith.constant 16 : index
      %c0_46 = arith.constant 0 : index
      %c0_47 = arith.constant 0 : index
      %42 = vector.load %arg30[%c16_45, %c0_46, %c0_47] : memref<32x16x32xf32, #tpu.memory_space<vmem>>, vector<16x16x32xf32>
      %43 = tpu.concatenate %40, %41, %42 in 2 : vector<16x16x32xf32>, vector<16x16x32xf32>, vector<16x16x32xf32> -> vector<16x16x96xf32>
      %44 = vector.shape_cast %43 : vector<16x16x96xf32> to vector<256x96xf32>
      %45 = arith.truncf %44 : vector<256x96xf32> to vector<256x96xbf16>
      %c0_48 = arith.constant 0 : index
      %c0_49 = arith.constant 0 : index
      %46 = vector.load %arg4[%c0_48, %c0_49] : memref<96x32xbf16, #tpu.memory_space<vmem>>, vector<96x32xbf16>
      %cst_50 = arith.constant dense<0.000000e+00> : vector<256x32xf32>
      %47 = tpu.matmul %45, %46, %cst_50 {dimension_numbers = #tpu.dot_dimension_numbers<[1], [0], [0], [1], [0, 0, 1, 1], [], []>} : vector<256x96xbf16>, vector<96x32xbf16>, vector<256x32xf32> -> vector<256x32xf32>
      %48 = vector.shape_cast %47 : vector<256x32xf32> to vector<16x16x32xf32>
      %c0_51 = arith.constant 0 : index
      %c0_52 = arith.constant 0 : index
      %49 = vector.load %arg5[%c0_51, %c0_52] : memref<1x32xf32, #tpu.memory_space<vmem>>, vector<1x32xf32>
      %50 = vector.shape_cast %49 : vector<1x32xf32> to vector<1x1x32xf32>
      %51 = vector.broadcast %50 : vector<1x1x32xf32> to vector<16x16x32xf32>
      %52 = arith.addf %48, %51 : vector<16x16x32xf32>
      %53 = arith.addf %52, %38 : vector<16x16x32xf32>
      %cst_53 = arith.constant 0.000000e+00 : f32
      %54 = vector.broadcast %cst_53 : f32 to vector<16x16x32xf32>
      %55 = arith.maximumf %53, %54 : vector<16x16x32xf32>
      %c16_54 = arith.constant 16 : index
      %c0_55 = arith.constant 0 : index
      %c0_56 = arith.constant 0 : index
      %56 = vector.load %arg30[%c16_54, %c0_55, %c0_56] : memref<32x16x32xf32, #tpu.memory_space<vmem>>, vector<16x16x32xf32>
      tpu.vector_store %arg30[%c16_54, %c0_55, %c0_56], %55 {strides = array<i32>} : memref<32x16x32xf32, #tpu.memory_space<vmem>>, vector<16x16x32xf32>,
      %c8 = arith.constant 8 : index
      %c0_57 = arith.constant 0 : index
      %c0_58 = arith.constant 0 : index
      %57 = vector.load %arg30[%c8, %c0_57, %c0_58] : memref<32x16x32xf32, #tpu.memory_space<vmem>>, vector<16x16x32xf32>
      %c12_59 = arith.constant 12 : index
      %c0_60 = arith.constant 0 : index
      %c0_61 = arith.constant 0 : index
      %58 = vector.load %arg30[%c12_59, %c0_60, %c0_61] : memref<32x16x32xf32, #tpu.memory_space<vmem>>, vector<16x16x32xf32>
      %c16_62 = arith.constant 16 : index
      %c0_63 = arith.constant 0 : index
      %c0_64 = arith.constant 0 : index
      %59 = vector.load %arg30[%c16_62, %c0_63, %c0_64] : memref<32x16x32xf32, #tpu.memory_space<vmem>>, vector<16x16x32xf32>
      %60 = tpu.concatenate %57, %58, %59 in 2 : vector<16x16x32xf32>, vector<16x16x32xf32>, vector<16x16x32xf32> -> vector<16x16x96xf32>
      %61 = vector.shape_cast %60 : vector<16x16x96xf32> to vector<256x96xf32>
      %62 = arith.truncf %61 : vector<256x96xf32> to vector<256x96xbf16>
      %c0_65 = arith.constant 0 : index
      %c0_66 = arith.constant 0 : index
      %63 = vector.load %arg6[%c0_65, %c0_66] : memref<96x32xbf16, #tpu.memory_space<vmem>>, vector<96x32xbf16>
      %cst_67 = arith.constant dense<0.000000e+00> : vector<256x32xf32>
      %64 = tpu.matmul %62, %63, %cst_67 {dimension_numbers = #tpu.dot_dimension_numbers<[1], [0], [0], [1], [0, 0, 1, 1], [], []>} : vector<256x96xbf16>, vector<96x32xbf16>, vector<256x32xf32> -> vector<256x32xf32>
      %65 = vector.shape_cast %64 : vector<256x32xf32> to vector<16x16x32xf32>
      %c0_68 = arith.constant 0 : index
      %c0_69 = arith.constant 0 : index
      %66 = vector.load %arg7[%c0_68, %c0_69] : memref<1x32xf32, #tpu.memory_space<vmem>>, vector<1x32xf32>
      %67 = vector.shape_cast %66 : vector<1x32xf32> to vector<1x1x32xf32>
      %68 = vector.broadcast %67 : vector<1x1x32xf32> to vector<16x16x32xf32>
      %69 = arith.addf %65, %68 : vector<16x16x32xf32>
      %70 = arith.addf %69, %55 : vector<16x16x32xf32>
      %cst_70 = arith.constant 0.000000e+00 : f32
      %71 = vector.broadcast %cst_70 : f32 to vector<16x16x32xf32>
      %72 = arith.maximumf %70, %71 : vector<16x16x32xf32>
      %c16_71 = arith.constant 16 : index
      %c0_72 = arith.constant 0 : index
      %c0_73 = arith.constant 0 : index
      %73 = vector.load %arg30[%c16_71, %c0_72, %c0_73] : memref<32x16x32xf32, #tpu.memory_space<vmem>>, vector<16x16x32xf32>
      tpu.vector_store %arg30[%c16_71, %c0_72, %c0_73], %72 {strides = array<i32>} : memref<32x16x32xf32, #tpu.memory_space<vmem>>, vector<16x16x32xf32>,
      %c0_74 = arith.constant 0 : index
      %c0_75 = arith.constant 0 : index
      %c0_76 = arith.constant 0 : index
      %74 = vector.load %arg30[%c0_74, %c0_75, %c0_76] : memref<32x16x32xf32, #tpu.memory_space<vmem>>, vector<16x16x32xf32>
      %c8_77 = arith.constant 8 : index
      %c0_78 = arith.constant 0 : index
      %c0_79 = arith.constant 0 : index
      %75 = vector.load %arg30[%c8_77, %c0_78, %c0_79] : memref<32x16x32xf32, #tpu.memory_space<vmem>>, vector<16x16x32xf32>
      %c16_80 = arith.constant 16 : index
      %c0_81 = arith.constant 0 : index
      %c0_82 = arith.constant 0 : index
      %76 = vector.load %arg30[%c16_80, %c0_81, %c0_82] : memref<32x16x32xf32, #tpu.memory_space<vmem>>, vector<16x16x32xf32>
      %77 = tpu.concatenate %74, %75, %76 in 2 : vector<16x16x32xf32>, vector<16x16x32xf32>, vector<16x16x32xf32> -> vector<16x16x96xf32>
      %78 = vector.shape_cast %77 : vector<16x16x96xf32> to vector<256x96xf32>
      %79 = arith.truncf %78 : vector<256x96xf32> to vector<256x96xbf16>
      %c0_83 = arith.constant 0 : index
      %c0_84 = arith.constant 0 : index
      %80 = vector.load %arg8[%c0_83, %c0_84] : memref<96x32xbf16, #tpu.memory_space<vmem>>, vector<96x32xbf16>
      %cst_85 = arith.constant dense<0.000000e+00> : vector<256x32xf32>
      %81 = tpu.matmul %79, %80, %cst_85 {dimension_numbers = #tpu.dot_dimension_numbers<[1], [0], [0], [1], [0, 0, 1, 1], [], []>} : vector<256x96xbf16>, vector<96x32xbf16>, vector<256x32xf32> -> vector<256x32xf32>
      %82 = vector.shape_cast %81 : vector<256x32xf32> to vector<16x16x32xf32>
      %c0_86 = arith.constant 0 : index
      %c0_87 = arith.constant 0 : index
      %83 = vector.load %arg9[%c0_86, %c0_87] : memref<1x32xf32, #tpu.memory_space<vmem>>, vector<1x32xf32>
      %84 = vector.shape_cast %83 : vector<1x32xf32> to vector<1x1x32xf32>
      %85 = vector.broadcast %84 : vector<1x1x32xf32> to vector<16x16x32xf32>
      %86 = arith.addf %82, %85 : vector<16x16x32xf32>
      %87 = arith.addf %86, %72 : vector<16x16x32xf32>
      %cst_88 = arith.constant 0.000000e+00 : f32
      %88 = vector.broadcast %cst_88 : f32 to vector<16x16x32xf32>
      %89 = arith.maximumf %87, %88 : vector<16x16x32xf32>
      %90 = vector.extract_strided_slice %89 {offsets = [15, 0, 0], sizes = [1, 16, 32], strides = [1, 1, 1]} : vector<16x16x32xf32> to vector<1x16x32xf32>
      %91 = vector.shape_cast %90 : vector<1x16x32xf32> to vector<16x32xf32>
      %92 = arith.truncf %91 : vector<16x32xf32> to vector<16x32xbf16>
      %c0_89 = arith.constant 0 : index
      %c0_90 = arith.constant 0 : index
      %93 = vector.load %arg10[%c0_89, %c0_90] : memref<8x8xbf16, #tpu.memory_space<vmem>>, vector<8x8xbf16>
      %94 = vector.extract_strided_slice %92 {offsets = [0, 0], sizes = [8, 32], strides = [1, 1]} : vector<16x32xbf16> to vector<8x32xbf16>
      %cst_91 = arith.constant dense<0.000000e+00> : vector<8x32xf32>
      %95 = tpu.matmul %93, %94, %cst_91 {dimension_numbers = #tpu.dot_dimension_numbers<[1], [0], [0], [1], [0, 0, 1, 1], [], []>} : vector<8x8xbf16>, vector<8x32xbf16>, vector<8x32xf32> -> vector<8x32xf32>
      %c0_92 = arith.constant 0 : index
      %c0_93 = arith.constant 0 : index
      %96 = vector.load %arg10[%c0_92, %c0_93] : memref<8x8xbf16, #tpu.memory_space<vmem>>, vector<8x8xbf16>
      %97 = vector.extract_strided_slice %92 {offsets = [8, 0], sizes = [8, 32], strides = [1, 1]} : vector<16x32xbf16> to vector<8x32xbf16>
      %cst_94 = arith.constant dense<0.000000e+00> : vector<8x32xf32>
      %98 = tpu.matmul %96, %97, %cst_94 {dimension_numbers = #tpu.dot_dimension_numbers<[1], [0], [0], [1], [0, 0, 1, 1], [], []>} : vector<8x8xbf16>, vector<8x32xbf16>, vector<8x32xf32> -> vector<8x32xf32>
      %99 = tpu.concatenate %95, %98 in 0 : vector<8x32xf32>, vector<8x32xf32> -> vector<16x32xf32>
      %100 = arith.truncf %99 : vector<16x32xf32> to vector<16x32xbf16>
      %c0_95 = arith.constant 0 : index
      %c0_96 = arith.constant 0 : index
      %101 = vector.load %arg11[%c0_95, %c0_96] : memref<32x32xbf16, #tpu.memory_space<vmem>>, vector<32x32xbf16>
      %cst_97 = arith.constant dense<0.000000e+00> : vector<16x32xf32>
      %102 = tpu.matmul %100, %101, %cst_97 {dimension_numbers = #tpu.dot_dimension_numbers<[1], [0], [0], [1], [0, 0, 1, 1], [], []>} : vector<16x32xbf16>, vector<32x32xbf16>, vector<16x32xf32> -> vector<16x32xf32>
      %c0_98 = arith.constant 0 : index
      %c0_99 = arith.constant 0 : index
      %103 = vector.load %arg12[%c0_98, %c0_99] : memref<1x32xf32, #tpu.memory_space<vmem>>, vector<1x32xf32>
      %104 = vector.broadcast %103 : vector<1x32xf32> to vector<16x32xf32>
      %105 = arith.addf %102, %104 : vector<16x32xf32>
      %cst_100 = arith.constant 0.000000e+00 : f32
      %106 = vector.broadcast %cst_100 : f32 to vector<16x32xf32>
      %107 = arith.maximumf %105, %106 : vector<16x32xf32>
      %c0_101 = arith.constant 0 : index
      %c0_102 = arith.constant 0 : index
      %108 = vector.load %arg13[%c0_101, %c0_102] : memref<1x32xf32, #tpu.memory_space<vmem>>, vector<1x32xf32>
      %109 = vector.broadcast %108 : vector<1x32xf32> to vector<16x32xf32>
      %110 = arith.mulf %107, %109 : vector<16x32xf32>
      %cst_103 = arith.constant dense<0.000000e+00> : vector<16xf32>
      %111 = vector.multi_reduction <add>, %110, %cst_103 [1] : vector<16x32xf32> to vector<16xf32>
      %112 = vector.shape_cast %111 : vector<16xf32> to vector<16x1xf32>
      %c0_104 = arith.constant 0 : index
      %c0_105 = arith.constant 0 : index
      %113 = vector.load %arg14[%c0_104, %c0_105] : memref<1x1xf32, #tpu.memory_space<vmem>>, vector<1x1xf32>
      %114 = vector.broadcast %113 : vector<1x1xf32> to vector<16x1xf32>
      %115 = arith.addf %112, %114 : vector<16x1xf32>
      %116 = arith.negf %115 : vector<16x1xf32>
      %117 = math.exp %116 : vector<16x1xf32>
      %cst_106 = arith.constant 1.000000e+00 : f32
      %118 = vector.broadcast %cst_106 : f32 to vector<16x1xf32>
      %119 = arith.addf %118, %117 : vector<16x1xf32>
      %120 = arith.divf %118, %119 : vector<16x1xf32>
      %c0_107 = arith.constant 0 : index
      %c0_108 = arith.constant 0 : index
      %c0_109 = arith.constant 0 : index
      %121 = vector.load %arg26[%c0_107, %c0_108, %c0_109] : memref<1x16x1xf32, #tpu.memory_space<vmem>>, vector<1x16x1xf32>
      %122 = vector.shape_cast %121 : vector<1x16x1xf32> to vector<16x1xf32>
      %123 = vector.shape_cast %120 : vector<16x1xf32> to vector<1x16x1xf32>
      tpu.vector_store %arg26[%c0_107, %c0_108, %c0_109], %123 {strides = array<i32>} : memref<1x16x1xf32, #tpu.memory_space<vmem>>, vector<1x16x1xf32>,
    } else {
    }
    %c1_i32 = arith.constant 1 : i32
    %15 = arith.cmpi eq, %arg0, %c1_i32 : i32
    %16 = arith.extui %15 : i1 to i32
    %c0_i32_11 = arith.constant 0 : i32
    %17 = arith.cmpi ne, %16, %c0_i32_11 : i32
    scf.if %17 {
      %c0_12 = arith.constant 0 : index
      %c0_13 = arith.constant 0 : index
      %18 = vector.load %arg15[%c0_12, %c0_13] : memref<128x5xf32, #tpu.memory_space<vmem>>, vector<128x5xf32>
      %19 = arith.truncf %18 : vector<128x5xf32> to vector<128x5xbf16>
      %c0_14 = arith.constant 0 : index
      %c0_15 = arith.constant 0 : index
      %20 = vector.load %arg16[%c0_14, %c0_15] : memref<5x128xbf16, #tpu.memory_space<vmem>>, vector<5x128xbf16>
      %cst_16 = arith.constant dense<0.000000e+00> : vector<128x128xf32>
      %21 = tpu.matmul %19, %20, %cst_16 {dimension_numbers = #tpu.dot_dimension_numbers<[1], [0], [0], [1], [0, 0, 1, 1], [], []>} : vector<128x5xbf16>, vector<5x128xbf16>, vector<128x128xf32> -> vector<128x128xf32>
      %22 = vector.shape_cast %21 : vector<128x128xf32> to vector<16x8x128xf32>
      %c0_17 = arith.constant 0 : index
      %c0_18 = arith.constant 0 : index
      %23 = vector.load %arg18[%c0_17, %c0_18] : memref<1x128xf32, #tpu.memory_space<vmem>>, vector<1x128xf32>
      %24 = vector.shape_cast %23 : vector<1x128xf32> to vector<1x1x128xf32>
      %25 = vector.broadcast %24 : vector<1x1x128xf32> to vector<16x8x128xf32>
      %26 = arith.addf %22, %25 : vector<16x8x128xf32>
      %cst_19 = arith.constant 0.000000e+00 : f32
      %27 = vector.broadcast %cst_19 : f32 to vector<8x32xf32>
      %cst_20 = arith.constant 0.000000e+00 : f32
      %28 = vector.broadcast %cst_20 : f32 to vector<8x32xf32>
      %29 = vector.extract_strided_slice %26 {offsets = [0, 0, 0], sizes = [1, 8, 128], strides = [1, 1, 1]} : vector<16x8x128xf32> to vector<1x8x128xf32>
      %30 = vector.shape_cast %29 : vector<1x8x128xf32> to vector<8x128xf32>
      %31 = arith.truncf %27 : vector<8x32xf32> to vector<8x32xbf16>
      %c0_21 = arith.constant 0 : index
      %c0_22 = arith.constant 0 : index
      %32 = vector.load %arg17[%c0_21, %c0_22] : memref<32x128xbf16, #tpu.memory_space<vmem>>, vector<32x128xbf16>
      %cst_23 = arith.constant dense<0.000000e+00> : vector<8x128xf32>
      %33 = tpu.matmul %31, %32, %cst_23 {dimension_numbers = #tpu.dot_dimension_numbers<[1], [0], [0], [1], [0, 0, 1, 1], [], []>} : vector<8x32xbf16>, vector<32x128xbf16>, vector<8x128xf32> -> vector<8x128xf32>
      %34 = arith.addf %30, %33 : vector<8x128xf32>
      %35 = arith.negf %34 : vector<8x128xf32>
      %36 = math.exp %35 : vector<8x128xf32>
      %cst_24 = arith.constant 1.000000e+00 : f32
      %37 = vector.broadcast %cst_24 : f32 to vector<8x128xf32>
      %38 = arith.addf %37, %36 : vector<8x128xf32>
      %39 = arith.divf %37, %38 : vector<8x128xf32>
      %40 = vector.extract_strided_slice %39 {offsets = [0, 0], sizes = [8, 32], strides = [1, 1]} : vector<8x128xf32> to vector<8x32xf32>
      %41 = vector.extract_strided_slice %39 {offsets = [0, 32], sizes = [8, 32], strides = [1, 1]} : vector<8x128xf32> to vector<8x32xf32>
      %42 = vector.extract_strided_slice %39 {offsets = [0, 96], sizes = [8, 32], strides = [1, 1]} : vector<8x128xf32> to vector<8x32xf32>
      %43 = vector.extract_strided_slice %34 {offsets = [0, 64], sizes = [8, 32], strides = [1, 1]} : vector<8x128xf32> to vector<8x32xf32>
      %44 = math.tanh %43 : vector<8x32xf32>
      %45 = arith.mulf %41, %28 : vector<8x32xf32>
      %46 = arith.mulf %40, %44 : vector<8x32xf32>
      %47 = arith.addf %45, %46 : vector<8x32xf32>
      %48 = math.tanh %47 : vector<8x32xf32>
      %49 = arith.mulf %42, %48 : vector<8x32xf32>
      %c0_25 = arith.constant 0 : index
      %c0_26 = arith.constant 0 : index
      %c0_27 = arith.constant 0 : index
      %50 = vector.load %arg31[%c0_25, %c0_26, %c0_27] : memref<16x8x32xf32, #tpu.memory_space<vmem>>, vector<1x8x32xf32>
      %51 = vector.shape_cast %50 : vector<1x8x32xf32> to vector<8x32xf32>
      %52 = vector.shape_cast %49 : vector<8x32xf32> to vector<1x8x32xf32>
      tpu.vector_store %arg31[%c0_25, %c0_26, %c0_27], %52 {strides = array<i32>} : memref<16x8x32xf32, #tpu.memory_space<vmem>>, vector<1x8x32xf32>,
      %53 = vector.extract_strided_slice %26 {offsets = [1, 0, 0], sizes = [1, 8, 128], strides = [1, 1, 1]} : vector<16x8x128xf32> to vector<1x8x128xf32>
      %54 = vector.shape_cast %53 : vector<1x8x128xf32> to vector<8x128xf32>
      %55 = arith.truncf %49 : vector<8x32xf32> to vector<8x32xbf16>
      %c0_28 = arith.constant 0 : index
      %c0_29 = arith.constant 0 : index
      %56 = vector.load %arg17[%c0_28, %c0_29] : memref<32x128xbf16, #tpu.memory_space<vmem>>, vector<32x128xbf16>
      %cst_30 = arith.constant dense<0.000000e+00> : vector<8x128xf32>
      %57 = tpu.matmul %55, %56, %cst_30 {dimension_numbers = #tpu.dot_dimension_numbers<[1], [0], [0], [1], [0, 0, 1, 1], [], []>} : vector<8x32xbf16>, vector<32x128xbf16>, vector<8x128xf32> -> vector<8x128xf32>
      %58 = arith.addf %54, %57 : vector<8x128xf32>
      %59 = arith.negf %58 : vector<8x128xf32>
      %60 = math.exp %59 : vector<8x128xf32>
      %cst_31 = arith.constant 1.000000e+00 : f32
      %61 = vector.broadcast %cst_31 : f32 to vector<8x128xf32>
      %62 = arith.addf %61, %60 : vector<8x128xf32>
      %63 = arith.divf %61, %62 : vector<8x128xf32>
      %64 = vector.extract_strided_slice %63 {offsets = [0, 0], sizes = [8, 32], strides = [1, 1]} : vector<8x128xf32> to vector<8x32xf32>
      %65 = vector.extract_strided_slice %63 {offsets = [0, 32], sizes = [8, 32], strides = [1, 1]} : vector<8x128xf32> to vector<8x32xf32>
      %66 = vector.extract_strided_slice %63 {offsets = [0, 96], sizes = [8, 32], strides = [1, 1]} : vector<8x128xf32> to vector<8x32xf32>
      %67 = vector.extract_strided_slice %58 {offsets = [0, 64], sizes = [8, 32], strides = [1, 1]} : vector<8x128xf32> to vector<8x32xf32>
      %68 = math.tanh %67 : vector<8x32xf32>
      %69 = arith.mulf %65, %47 : vector<8x32xf32>
      %70 = arith.mulf %64, %68 : vector<8x32xf32>
      %71 = arith.addf %69, %70 : vector<8x32xf32>
      %72 = math.tanh %71 : vector<8x32xf32>
      %73 = arith.mulf %66, %72 : vector<8x32xf32>
      %c1 = arith.constant 1 : index
      %c0_32 = arith.constant 0 : index
      %c0_33 = arith.constant 0 : index
      %74 = vector.load %arg31[%c1, %c0_32, %c0_33] : memref<16x8x32xf32, #tpu.memory_space<vmem>>, vector<1x8x32xf32>
      %75 = vector.shape_cast %74 : vector<1x8x32xf32> to vector<8x32xf32>
      %76 = vector.shape_cast %73 : vector<8x32xf32> to vector<1x8x32xf32>
      tpu.vector_store %arg31[%c1, %c0_32, %c0_33], %76 {strides = array<i32>} : memref<16x8x32xf32, #tpu.memory_space<vmem>>, vector<1x8x32xf32>,
      %77 = vector.extract_strided_slice %26 {offsets = [2, 0, 0], sizes = [1, 8, 128], strides = [1, 1, 1]} : vector<16x8x128xf32> to vector<1x8x128xf32>
      %78 = vector.shape_cast %77 : vector<1x8x128xf32> to vector<8x128xf32>
      %79 = arith.truncf %73 : vector<8x32xf32> to vector<8x32xbf16>
      %c0_34 = arith.constant 0 : index
      %c0_35 = arith.constant 0 : index
      %80 = vector.load %arg17[%c0_34, %c0_35] : memref<32x128xbf16, #tpu.memory_space<vmem>>, vector<32x128xbf16>
      %cst_36 = arith.constant dense<0.000000e+00> : vector<8x128xf32>
      %81 = tpu.matmul %79, %80, %cst_36 {dimension_numbers = #tpu.dot_dimension_numbers<[1], [0], [0], [1], [0, 0, 1, 1], [], []>} : vector<8x32xbf16>, vector<32x128xbf16>, vector<8x128xf32> -> vector<8x128xf32>
      %82 = arith.addf %78, %81 : vector<8x128xf32>
      %83 = arith.negf %82 : vector<8x128xf32>
      %84 = math.exp %83 : vector<8x128xf32>
      %cst_37 = arith.constant 1.000000e+00 : f32
      %85 = vector.broadcast %cst_37 : f32 to vector<8x128xf32>
      %86 = arith.addf %85, %84 : vector<8x128xf32>
      %87 = arith.divf %85, %86 : vector<8x128xf32>
      %88 = vector.extract_strided_slice %87 {offsets = [0, 0], sizes = [8, 32], strides = [1, 1]} : vector<8x128xf32> to vector<8x32xf32>
      %89 = vector.extract_strided_slice %87 {offsets = [0, 32], sizes = [8, 32], strides = [1, 1]} : vector<8x128xf32> to vector<8x32xf32>
      %90 = vector.extract_strided_slice %87 {offsets = [0, 96], sizes = [8, 32], strides = [1, 1]} : vector<8x128xf32> to vector<8x32xf32>
      %91 = vector.extract_strided_slice %82 {offsets = [0, 64], sizes = [8, 32], strides = [1, 1]} : vector<8x128xf32> to vector<8x32xf32>
      %92 = math.tanh %91 : vector<8x32xf32>
      %93 = arith.mulf %89, %71 : vector<8x32xf32>
      %94 = arith.mulf %88, %92 : vector<8x32xf32>
      %95 = arith.addf %93, %94 : vector<8x32xf32>
      %96 = math.tanh %95 : vector<8x32xf32>
      %97 = arith.mulf %90, %96 : vector<8x32xf32>
      %c2 = arith.constant 2 : index
      %c0_38 = arith.constant 0 : index
      %c0_39 = arith.constant 0 : index
      %98 = vector.load %arg31[%c2, %c0_38, %c0_39] : memref<16x8x32xf32, #tpu.memory_space<vmem>>, vector<1x8x32xf32>
      %99 = vector.shape_cast %98 : vector<1x8x32xf32> to vector<8x32xf32>
      %100 = vector.shape_cast %97 : vector<8x32xf32> to vector<1x8x32xf32>
      tpu.vector_store %arg31[%c2, %c0_38, %c0_39], %100 {strides = array<i32>} : memref<16x8x32xf32, #tpu.memory_space<vmem>>, vector<1x8x32xf32>,
      %101 = vector.extract_strided_slice %26 {offsets = [3, 0, 0], sizes = [1, 8, 128], strides = [1, 1, 1]} : vector<16x8x128xf32> to vector<1x8x128xf32>
      %102 = vector.shape_cast %101 : vector<1x8x128xf32> to vector<8x128xf32>
      %103 = arith.truncf %97 : vector<8x32xf32> to vector<8x32xbf16>
      %c0_40 = arith.constant 0 : index
      %c0_41 = arith.constant 0 : index
      %104 = vector.load %arg17[%c0_40, %c0_41] : memref<32x128xbf16, #tpu.memory_space<vmem>>, vector<32x128xbf16>
      %cst_42 = arith.constant dense<0.000000e+00> : vector<8x128xf32>
      %105 = tpu.matmul %103, %104, %cst_42 {dimension_numbers = #tpu.dot_dimension_numbers<[1], [0], [0], [1], [0, 0, 1, 1], [], []>} : vector<8x32xbf16>, vector<32x128xbf16>, vector<8x128xf32> -> vector<8x128xf32>
      %106 = arith.addf %102, %105 : vector<8x128xf32>
      %107 = arith.negf %106 : vector<8x128xf32>
      %108 = math.exp %107 : vector<8x128xf32>
      %cst_43 = arith.constant 1.000000e+00 : f32
      %109 = vector.broadcast %cst_43 : f32 to vector<8x128xf32>
      %110 = arith.addf %109, %108 : vector<8x128xf32>
      %111 = arith.divf %109, %110 : vector<8x128xf32>
      %112 = vector.extract_strided_slice %111 {offsets = [0, 0], sizes = [8, 32], strides = [1, 1]} : vector<8x128xf32> to vector<8x32xf32>
      %113 = vector.extract_strided_slice %111 {offsets = [0, 32], sizes = [8, 32], strides = [1, 1]} : vector<8x128xf32> to vector<8x32xf32>
      %114 = vector.extract_strided_slice %111 {offsets = [0, 96], sizes = [8, 32], strides = [1, 1]} : vector<8x128xf32> to vector<8x32xf32>
      %115 = vector.extract_strided_slice %106 {offsets = [0, 64], sizes = [8, 32], strides = [1, 1]} : vector<8x128xf32> to vector<8x32xf32>
      %116 = math.tanh %115 : vector<8x32xf32>
      %117 = arith.mulf %113, %95 : vector<8x32xf32>
      %118 = arith.mulf %112, %116 : vector<8x32xf32>
      %119 = arith.addf %117, %118 : vector<8x32xf32>
      %120 = math.tanh %119 : vector<8x32xf32>
      %121 = arith.mulf %114, %120 : vector<8x32xf32>
      %c3 = arith.constant 3 : index
      %c0_44 = arith.constant 0 : index
      %c0_45 = arith.constant 0 : index
      %122 = vector.load %arg31[%c3, %c0_44, %c0_45] : memref<16x8x32xf32, #tpu.memory_space<vmem>>, vector<1x8x32xf32>
      %123 = vector.shape_cast %122 : vector<1x8x32xf32> to vector<8x32xf32>
      %124 = vector.shape_cast %121 : vector<8x32xf32> to vector<1x8x32xf32>
      tpu.vector_store %arg31[%c3, %c0_44, %c0_45], %124 {strides = array<i32>} : memref<16x8x32xf32, #tpu.memory_space<vmem>>, vector<1x8x32xf32>,
      %125 = vector.extract_strided_slice %26 {offsets = [4, 0, 0], sizes = [1, 8, 128], strides = [1, 1, 1]} : vector<16x8x128xf32> to vector<1x8x128xf32>
      %126 = vector.shape_cast %125 : vector<1x8x128xf32> to vector<8x128xf32>
      %127 = arith.truncf %121 : vector<8x32xf32> to vector<8x32xbf16>
      %c0_46 = arith.constant 0 : index
      %c0_47 = arith.constant 0 : index
      %128 = vector.load %arg17[%c0_46, %c0_47] : memref<32x128xbf16, #tpu.memory_space<vmem>>, vector<32x128xbf16>
      %cst_48 = arith.constant dense<0.000000e+00> : vector<8x128xf32>
      %129 = tpu.matmul %127, %128, %cst_48 {dimension_numbers = #tpu.dot_dimension_numbers<[1], [0], [0], [1], [0, 0, 1, 1], [], []>} : vector<8x32xbf16>, vector<32x128xbf16>, vector<8x128xf32> -> vector<8x128xf32>
      %130 = arith.addf %126, %129 : vector<8x128xf32>
      %131 = arith.negf %130 : vector<8x128xf32>
      %132 = math.exp %131 : vector<8x128xf32>
      %cst_49 = arith.constant 1.000000e+00 : f32
      %133 = vector.broadcast %cst_49 : f32 to vector<8x128xf32>
      %134 = arith.addf %133, %132 : vector<8x128xf32>
      %135 = arith.divf %133, %134 : vector<8x128xf32>
      %136 = vector.extract_strided_slice %135 {offsets = [0, 0], sizes = [8, 32], strides = [1, 1]} : vector<8x128xf32> to vector<8x32xf32>
      %137 = vector.extract_strided_slice %135 {offsets = [0, 32], sizes = [8, 32], strides = [1, 1]} : vector<8x128xf32> to vector<8x32xf32>
      %138 = vector.extract_strided_slice %135 {offsets = [0, 96], sizes = [8, 32], strides = [1, 1]} : vector<8x128xf32> to vector<8x32xf32>
      %139 = vector.extract_strided_slice %130 {offsets = [0, 64], sizes = [8, 32], strides = [1, 1]} : vector<8x128xf32> to vector<8x32xf32>
      %140 = math.tanh %139 : vector<8x32xf32>
      %141 = arith.mulf %137, %119 : vector<8x32xf32>
      %142 = arith.mulf %136, %140 : vector<8x32xf32>
      %143 = arith.addf %141, %142 : vector<8x32xf32>
      %144 = math.tanh %143 : vector<8x32xf32>
      %145 = arith.mulf %138, %144 : vector<8x32xf32>
      %c4 = arith.constant 4 : index
      %c0_50 = arith.constant 0 : index
      %c0_51 = arith.constant 0 : index
      %146 = vector.load %arg31[%c4, %c0_50, %c0_51] : memref<16x8x32xf32, #tpu.memory_space<vmem>>, vector<1x8x32xf32>
      %147 = vector.shape_cast %146 : vector<1x8x32xf32> to vector<8x32xf32>
      %148 = vector.shape_cast %145 : vector<8x32xf32> to vector<1x8x32xf32>
      tpu.vector_store %arg31[%c4, %c0_50, %c0_51], %148 {strides = array<i32>} : memref<16x8x32xf32, #tpu.memory_space<vmem>>, vector<1x8x32xf32>,
      %149 = vector.extract_strided_slice %26 {offsets = [5, 0, 0], sizes = [1, 8, 128], strides = [1, 1, 1]} : vector<16x8x128xf32> to vector<1x8x128xf32>
      %150 = vector.shape_cast %149 : vector<1x8x128xf32> to vector<8x128xf32>
      %151 = arith.truncf %145 : vector<8x32xf32> to vector<8x32xbf16>
      %c0_52 = arith.constant 0 : index
      %c0_53 = arith.constant 0 : index
      %152 = vector.load %arg17[%c0_52, %c0_53] : memref<32x128xbf16, #tpu.memory_space<vmem>>, vector<32x128xbf16>
      %cst_54 = arith.constant dense<0.000000e+00> : vector<8x128xf32>
      %153 = tpu.matmul %151, %152, %cst_54 {dimension_numbers = #tpu.dot_dimension_numbers<[1], [0], [0], [1], [0, 0, 1, 1], [], []>} : vector<8x32xbf16>, vector<32x128xbf16>, vector<8x128xf32> -> vector<8x128xf32>
      %154 = arith.addf %150, %153 : vector<8x128xf32>
      %155 = arith.negf %154 : vector<8x128xf32>
      %156 = math.exp %155 : vector<8x128xf32>
      %cst_55 = arith.constant 1.000000e+00 : f32
      %157 = vector.broadcast %cst_55 : f32 to vector<8x128xf32>
      %158 = arith.addf %157, %156 : vector<8x128xf32>
      %159 = arith.divf %157, %158 : vector<8x128xf32>
      %160 = vector.extract_strided_slice %159 {offsets = [0, 0], sizes = [8, 32], strides = [1, 1]} : vector<8x128xf32> to vector<8x32xf32>
      %161 = vector.extract_strided_slice %159 {offsets = [0, 32], sizes = [8, 32], strides = [1, 1]} : vector<8x128xf32> to vector<8x32xf32>
      %162 = vector.extract_strided_slice %159 {offsets = [0, 96], sizes = [8, 32], strides = [1, 1]} : vector<8x128xf32> to vector<8x32xf32>
      %163 = vector.extract_strided_slice %154 {offsets = [0, 64], sizes = [8, 32], strides = [1, 1]} : vector<8x128xf32> to vector<8x32xf32>
      %164 = math.tanh %163 : vector<8x32xf32>
      %165 = arith.mulf %161, %143 : vector<8x32xf32>
      %166 = arith.mulf %160, %164 : vector<8x32xf32>
      %167 = arith.addf %165, %166 : vector<8x32xf32>
      %168 = math.tanh %167 : vector<8x32xf32>
      %169 = arith.mulf %162, %168 : vector<8x32xf32>
      %c5 = arith.constant 5 : index
      %c0_56 = arith.constant 0 : index
      %c0_57 = arith.constant 0 : index
      %170 = vector.load %arg31[%c5, %c0_56, %c0_57] : memref<16x8x32xf32, #tpu.memory_space<vmem>>, vector<1x8x32xf32>
      %171 = vector.shape_cast %170 : vector<1x8x32xf32> to vector<8x32xf32>
      %172 = vector.shape_cast %169 : vector<8x32xf32> to vector<1x8x32xf32>
      tpu.vector_store %arg31[%c5, %c0_56, %c0_57], %172 {strides = array<i32>} : memref<16x8x32xf32, #tpu.memory_space<vmem>>, vector<1x8x32xf32>,
      %173 = vector.extract_strided_slice %26 {offsets = [6, 0, 0], sizes = [1, 8, 128], strides = [1, 1, 1]} : vector<16x8x128xf32> to vector<1x8x128xf32>
      %174 = vector.shape_cast %173 : vector<1x8x128xf32> to vector<8x128xf32>
      %175 = arith.truncf %169 : vector<8x32xf32> to vector<8x32xbf16>
      %c0_58 = arith.constant 0 : index
      %c0_59 = arith.constant 0 : index
      %176 = vector.load %arg17[%c0_58, %c0_59] : memref<32x128xbf16, #tpu.memory_space<vmem>>, vector<32x128xbf16>
      %cst_60 = arith.constant dense<0.000000e+00> : vector<8x128xf32>
      %177 = tpu.matmul %175, %176, %cst_60 {dimension_numbers = #tpu.dot_dimension_numbers<[1], [0], [0], [1], [0, 0, 1, 1], [], []>} : vector<8x32xbf16>, vector<32x128xbf16>, vector<8x128xf32> -> vector<8x128xf32>
      %178 = arith.addf %174, %177 : vector<8x128xf32>
      %179 = arith.negf %178 : vector<8x128xf32>
      %180 = math.exp %179 : vector<8x128xf32>
      %cst_61 = arith.constant 1.000000e+00 : f32
      %181 = vector.broadcast %cst_61 : f32 to vector<8x128xf32>
      %182 = arith.addf %181, %180 : vector<8x128xf32>
      %183 = arith.divf %181, %182 : vector<8x128xf32>
      %184 = vector.extract_strided_slice %183 {offsets = [0, 0], sizes = [8, 32], strides = [1, 1]} : vector<8x128xf32> to vector<8x32xf32>
      %185 = vector.extract_strided_slice %183 {offsets = [0, 32], sizes = [8, 32], strides = [1, 1]} : vector<8x128xf32> to vector<8x32xf32>
      %186 = vector.extract_strided_slice %183 {offsets = [0, 96], sizes = [8, 32], strides = [1, 1]} : vector<8x128xf32> to vector<8x32xf32>
      %187 = vector.extract_strided_slice %178 {offsets = [0, 64], sizes = [8, 32], strides = [1, 1]} : vector<8x128xf32> to vector<8x32xf32>
      %188 = math.tanh %187 : vector<8x32xf32>
      %189 = arith.mulf %185, %167 : vector<8x32xf32>
      %190 = arith.mulf %184, %188 : vector<8x32xf32>
      %191 = arith.addf %189, %190 : vector<8x32xf32>
      %192 = math.tanh %191 : vector<8x32xf32>
      %193 = arith.mulf %186, %192 : vector<8x32xf32>
      %c6 = arith.constant 6 : index
      %c0_62 = arith.constant 0 : index
      %c0_63 = arith.constant 0 : index
      %194 = vector.load %arg31[%c6, %c0_62, %c0_63] : memref<16x8x32xf32, #tpu.memory_space<vmem>>, vector<1x8x32xf32>
      %195 = vector.shape_cast %194 : vector<1x8x32xf32> to vector<8x32xf32>
      %196 = vector.shape_cast %193 : vector<8x32xf32> to vector<1x8x32xf32>
      tpu.vector_store %arg31[%c6, %c0_62, %c0_63], %196 {strides = array<i32>} : memref<16x8x32xf32, #tpu.memory_space<vmem>>, vector<1x8x32xf32>,
      %197 = vector.extract_strided_slice %26 {offsets = [7, 0, 0], sizes = [1, 8, 128], strides = [1, 1, 1]} : vector<16x8x128xf32> to vector<1x8x128xf32>
      %198 = vector.shape_cast %197 : vector<1x8x128xf32> to vector<8x128xf32>
      %199 = arith.truncf %193 : vector<8x32xf32> to vector<8x32xbf16>
      %c0_64 = arith.constant 0 : index
      %c0_65 = arith.constant 0 : index
      %200 = vector.load %arg17[%c0_64, %c0_65] : memref<32x128xbf16, #tpu.memory_space<vmem>>, vector<32x128xbf16>
      %cst_66 = arith.constant dense<0.000000e+00> : vector<8x128xf32>
      %201 = tpu.matmul %199, %200, %cst_66 {dimension_numbers = #tpu.dot_dimension_numbers<[1], [0], [0], [1], [0, 0, 1, 1], [], []>} : vector<8x32xbf16>, vector<32x128xbf16>, vector<8x128xf32> -> vector<8x128xf32>
      %202 = arith.addf %198, %201 : vector<8x128xf32>
      %203 = arith.negf %202 : vector<8x128xf32>
      %204 = math.exp %203 : vector<8x128xf32>
      %cst_67 = arith.constant 1.000000e+00 : f32
      %205 = vector.broadcast %cst_67 : f32 to vector<8x128xf32>
      %206 = arith.addf %205, %204 : vector<8x128xf32>
      %207 = arith.divf %205, %206 : vector<8x128xf32>
      %208 = vector.extract_strided_slice %207 {offsets = [0, 0], sizes = [8, 32], strides = [1, 1]} : vector<8x128xf32> to vector<8x32xf32>
      %209 = vector.extract_strided_slice %207 {offsets = [0, 32], sizes = [8, 32], strides = [1, 1]} : vector<8x128xf32> to vector<8x32xf32>
      %210 = vector.extract_strided_slice %207 {offsets = [0, 96], sizes = [8, 32], strides = [1, 1]} : vector<8x128xf32> to vector<8x32xf32>
      %211 = vector.extract_strided_slice %202 {offsets = [0, 64], sizes = [8, 32], strides = [1, 1]} : vector<8x128xf32> to vector<8x32xf32>
      %212 = math.tanh %211 : vector<8x32xf32>
      %213 = arith.mulf %209, %191 : vector<8x32xf32>
      %214 = arith.mulf %208, %212 : vector<8x32xf32>
      %215 = arith.addf %213, %214 : vector<8x32xf32>
      %216 = math.tanh %215 : vector<8x32xf32>
      %217 = arith.mulf %210, %216 : vector<8x32xf32>
      %c7 = arith.constant 7 : index
      %c0_68 = arith.constant 0 : index
      %c0_69 = arith.constant 0 : index
      %218 = vector.load %arg31[%c7, %c0_68, %c0_69] : memref<16x8x32xf32, #tpu.memory_space<vmem>>, vector<1x8x32xf32>
      %219 = vector.shape_cast %218 : vector<1x8x32xf32> to vector<8x32xf32>
      %220 = vector.shape_cast %217 : vector<8x32xf32> to vector<1x8x32xf32>
      tpu.vector_store %arg31[%c7, %c0_68, %c0_69], %220 {strides = array<i32>} : memref<16x8x32xf32, #tpu.memory_space<vmem>>, vector<1x8x32xf32>,
      %221 = vector.extract_strided_slice %26 {offsets = [8, 0, 0], sizes = [1, 8, 128], strides = [1, 1, 1]} : vector<16x8x128xf32> to vector<1x8x128xf32>
      %222 = vector.shape_cast %221 : vector<1x8x128xf32> to vector<8x128xf32>
      %223 = arith.truncf %217 : vector<8x32xf32> to vector<8x32xbf16>
      %c0_70 = arith.constant 0 : index
      %c0_71 = arith.constant 0 : index
      %224 = vector.load %arg17[%c0_70, %c0_71] : memref<32x128xbf16, #tpu.memory_space<vmem>>, vector<32x128xbf16>
      %cst_72 = arith.constant dense<0.000000e+00> : vector<8x128xf32>
      %225 = tpu.matmul %223, %224, %cst_72 {dimension_numbers = #tpu.dot_dimension_numbers<[1], [0], [0], [1], [0, 0, 1, 1], [], []>} : vector<8x32xbf16>, vector<32x128xbf16>, vector<8x128xf32> -> vector<8x128xf32>
      %226 = arith.addf %222, %225 : vector<8x128xf32>
      %227 = arith.negf %226 : vector<8x128xf32>
      %228 = math.exp %227 : vector<8x128xf32>
      %cst_73 = arith.constant 1.000000e+00 : f32
      %229 = vector.broadcast %cst_73 : f32 to vector<8x128xf32>
      %230 = arith.addf %229, %228 : vector<8x128xf32>
      %231 = arith.divf %229, %230 : vector<8x128xf32>
      %232 = vector.extract_strided_slice %231 {offsets = [0, 0], sizes = [8, 32], strides = [1, 1]} : vector<8x128xf32> to vector<8x32xf32>
      %233 = vector.extract_strided_slice %231 {offsets = [0, 32], sizes = [8, 32], strides = [1, 1]} : vector<8x128xf32> to vector<8x32xf32>
      %234 = vector.extract_strided_slice %231 {offsets = [0, 96], sizes = [8, 32], strides = [1, 1]} : vector<8x128xf32> to vector<8x32xf32>
      %235 = vector.extract_strided_slice %226 {offsets = [0, 64], sizes = [8, 32], strides = [1, 1]} : vector<8x128xf32> to vector<8x32xf32>
      %236 = math.tanh %235 : vector<8x32xf32>
      %237 = arith.mulf %233, %215 : vector<8x32xf32>
      %238 = arith.mulf %232, %236 : vector<8x32xf32>
      %239 = arith.addf %237, %238 : vector<8x32xf32>
      %240 = math.tanh %239 : vector<8x32xf32>
      %241 = arith.mulf %234, %240 : vector<8x32xf32>
      %c8 = arith.constant 8 : index
      %c0_74 = arith.constant 0 : index
      %c0_75 = arith.constant 0 : index
      %242 = vector.load %arg31[%c8, %c0_74, %c0_75] : memref<16x8x32xf32, #tpu.memory_space<vmem>>, vector<1x8x32xf32>
      %243 = vector.shape_cast %242 : vector<1x8x32xf32> to vector<8x32xf32>
      %244 = vector.shape_cast %241 : vector<8x32xf32> to vector<1x8x32xf32>
      tpu.vector_store %arg31[%c8, %c0_74, %c0_75], %244 {strides = array<i32>} : memref<16x8x32xf32, #tpu.memory_space<vmem>>, vector<1x8x32xf32>,
      %245 = vector.extract_strided_slice %26 {offsets = [9, 0, 0], sizes = [1, 8, 128], strides = [1, 1, 1]} : vector<16x8x128xf32> to vector<1x8x128xf32>
      %246 = vector.shape_cast %245 : vector<1x8x128xf32> to vector<8x128xf32>
      %247 = arith.truncf %241 : vector<8x32xf32> to vector<8x32xbf16>
      %c0_76 = arith.constant 0 : index
      %c0_77 = arith.constant 0 : index
      %248 = vector.load %arg17[%c0_76, %c0_77] : memref<32x128xbf16, #tpu.memory_space<vmem>>, vector<32x128xbf16>
      %cst_78 = arith.constant dense<0.000000e+00> : vector<8x128xf32>
      %249 = tpu.matmul %247, %248, %cst_78 {dimension_numbers = #tpu.dot_dimension_numbers<[1], [0], [0], [1], [0, 0, 1, 1], [], []>} : vector<8x32xbf16>, vector<32x128xbf16>, vector<8x128xf32> -> vector<8x128xf32>
      %250 = arith.addf %246, %249 : vector<8x128xf32>
      %251 = arith.negf %250 : vector<8x128xf32>
      %252 = math.exp %251 : vector<8x128xf32>
      %cst_79 = arith.constant 1.000000e+00 : f32
      %253 = vector.broadcast %cst_79 : f32 to vector<8x128xf32>
      %254 = arith.addf %253, %252 : vector<8x128xf32>
      %255 = arith.divf %253, %254 : vector<8x128xf32>
      %256 = vector.extract_strided_slice %255 {offsets = [0, 0], sizes = [8, 32], strides = [1, 1]} : vector<8x128xf32> to vector<8x32xf32>
      %257 = vector.extract_strided_slice %255 {offsets = [0, 32], sizes = [8, 32], strides = [1, 1]} : vector<8x128xf32> to vector<8x32xf32>
      %258 = vector.extract_strided_slice %255 {offsets = [0, 96], sizes = [8, 32], strides = [1, 1]} : vector<8x128xf32> to vector<8x32xf32>
      %259 = vector.extract_strided_slice %250 {offsets = [0, 64], sizes = [8, 32], strides = [1, 1]} : vector<8x128xf32> to vector<8x32xf32>
      %260 = math.tanh %259 : vector<8x32xf32>
      %261 = arith.mulf %257, %239 : vector<8x32xf32>
      %262 = arith.mulf %256, %260 : vector<8x32xf32>
      %263 = arith.addf %261, %262 : vector<8x32xf32>
      %264 = math.tanh %263 : vector<8x32xf32>
      %265 = arith.mulf %258, %264 : vector<8x32xf32>
      %c9 = arith.constant 9 : index
      %c0_80 = arith.constant 0 : index
      %c0_81 = arith.constant 0 : index
      %266 = vector.load %arg31[%c9, %c0_80, %c0_81] : memref<16x8x32xf32, #tpu.memory_space<vmem>>, vector<1x8x32xf32>
      %267 = vector.shape_cast %266 : vector<1x8x32xf32> to vector<8x32xf32>
      %268 = vector.shape_cast %265 : vector<8x32xf32> to vector<1x8x32xf32>
      tpu.vector_store %arg31[%c9, %c0_80, %c0_81], %268 {strides = array<i32>} : memref<16x8x32xf32, #tpu.memory_space<vmem>>, vector<1x8x32xf32>,
      %269 = vector.extract_strided_slice %26 {offsets = [10, 0, 0], sizes = [1, 8, 128], strides = [1, 1, 1]} : vector<16x8x128xf32> to vector<1x8x128xf32>
      %270 = vector.shape_cast %269 : vector<1x8x128xf32> to vector<8x128xf32>
      %271 = arith.truncf %265 : vector<8x32xf32> to vector<8x32xbf16>
      %c0_82 = arith.constant 0 : index
      %c0_83 = arith.constant 0 : index
      %272 = vector.load %arg17[%c0_82, %c0_83] : memref<32x128xbf16, #tpu.memory_space<vmem>>, vector<32x128xbf16>
      %cst_84 = arith.constant dense<0.000000e+00> : vector<8x128xf32>
      %273 = tpu.matmul %271, %272, %cst_84 {dimension_numbers = #tpu.dot_dimension_numbers<[1], [0], [0], [1], [0, 0, 1, 1], [], []>} : vector<8x32xbf16>, vector<32x128xbf16>, vector<8x128xf32> -> vector<8x128xf32>
      %274 = arith.addf %270, %273 : vector<8x128xf32>
      %275 = arith.negf %274 : vector<8x128xf32>
      %276 = math.exp %275 : vector<8x128xf32>
      %cst_85 = arith.constant 1.000000e+00 : f32
      %277 = vector.broadcast %cst_85 : f32 to vector<8x128xf32>
      %278 = arith.addf %277, %276 : vector<8x128xf32>
      %279 = arith.divf %277, %278 : vector<8x128xf32>
      %280 = vector.extract_strided_slice %279 {offsets = [0, 0], sizes = [8, 32], strides = [1, 1]} : vector<8x128xf32> to vector<8x32xf32>
      %281 = vector.extract_strided_slice %279 {offsets = [0, 32], sizes = [8, 32], strides = [1, 1]} : vector<8x128xf32> to vector<8x32xf32>
      %282 = vector.extract_strided_slice %279 {offsets = [0, 96], sizes = [8, 32], strides = [1, 1]} : vector<8x128xf32> to vector<8x32xf32>
      %283 = vector.extract_strided_slice %274 {offsets = [0, 64], sizes = [8, 32], strides = [1, 1]} : vector<8x128xf32> to vector<8x32xf32>
      %284 = math.tanh %283 : vector<8x32xf32>
      %285 = arith.mulf %281, %263 : vector<8x32xf32>
      %286 = arith.mulf %280, %284 : vector<8x32xf32>
      %287 = arith.addf %285, %286 : vector<8x32xf32>
      %288 = math.tanh %287 : vector<8x32xf32>
      %289 = arith.mulf %282, %288 : vector<8x32xf32>
      %c10 = arith.constant 10 : index
      %c0_86 = arith.constant 0 : index
      %c0_87 = arith.constant 0 : index
      %290 = vector.load %arg31[%c10, %c0_86, %c0_87] : memref<16x8x32xf32, #tpu.memory_space<vmem>>, vector<1x8x32xf32>
      %291 = vector.shape_cast %290 : vector<1x8x32xf32> to vector<8x32xf32>
      %292 = vector.shape_cast %289 : vector<8x32xf32> to vector<1x8x32xf32>
      tpu.vector_store %arg31[%c10, %c0_86, %c0_87], %292 {strides = array<i32>} : memref<16x8x32xf32, #tpu.memory_space<vmem>>, vector<1x8x32xf32>,
      %293 = vector.extract_strided_slice %26 {offsets = [11, 0, 0], sizes = [1, 8, 128], strides = [1, 1, 1]} : vector<16x8x128xf32> to vector<1x8x128xf32>
      %294 = vector.shape_cast %293 : vector<1x8x128xf32> to vector<8x128xf32>
      %295 = arith.truncf %289 : vector<8x32xf32> to vector<8x32xbf16>
      %c0_88 = arith.constant 0 : index
      %c0_89 = arith.constant 0 : index
      %296 = vector.load %arg17[%c0_88, %c0_89] : memref<32x128xbf16, #tpu.memory_space<vmem>>, vector<32x128xbf16>
      %cst_90 = arith.constant dense<0.000000e+00> : vector<8x128xf32>
      %297 = tpu.matmul %295, %296, %cst_90 {dimension_numbers = #tpu.dot_dimension_numbers<[1], [0], [0], [1], [0, 0, 1, 1], [], []>} : vector<8x32xbf16>, vector<32x128xbf16>, vector<8x128xf32> -> vector<8x128xf32>
      %298 = arith.addf %294, %297 : vector<8x128xf32>
      %299 = arith.negf %298 : vector<8x128xf32>
      %300 = math.exp %299 : vector<8x128xf32>
      %cst_91 = arith.constant 1.000000e+00 : f32
      %301 = vector.broadcast %cst_91 : f32 to vector<8x128xf32>
      %302 = arith.addf %301, %300 : vector<8x128xf32>
      %303 = arith.divf %301, %302 : vector<8x128xf32>
      %304 = vector.extract_strided_slice %303 {offsets = [0, 0], sizes = [8, 32], strides = [1, 1]} : vector<8x128xf32> to vector<8x32xf32>
      %305 = vector.extract_strided_slice %303 {offsets = [0, 32], sizes = [8, 32], strides = [1, 1]} : vector<8x128xf32> to vector<8x32xf32>
      %306 = vector.extract_strided_slice %303 {offsets = [0, 96], sizes = [8, 32], strides = [1, 1]} : vector<8x128xf32> to vector<8x32xf32>
      %307 = vector.extract_strided_slice %298 {offsets = [0, 64], sizes = [8, 32], strides = [1, 1]} : vector<8x128xf32> to vector<8x32xf32>
      %308 = math.tanh %307 : vector<8x32xf32>
      %309 = arith.mulf %305, %287 : vector<8x32xf32>
      %310 = arith.mulf %304, %308 : vector<8x32xf32>
      %311 = arith.addf %309, %310 : vector<8x32xf32>
      %312 = math.tanh %311 : vector<8x32xf32>
      %313 = arith.mulf %306, %312 : vector<8x32xf32>
      %c11 = arith.constant 11 : index
      %c0_92 = arith.constant 0 : index
      %c0_93 = arith.constant 0 : index
      %314 = vector.load %arg31[%c11, %c0_92, %c0_93] : memref<16x8x32xf32, #tpu.memory_space<vmem>>, vector<1x8x32xf32>
      %315 = vector.shape_cast %314 : vector<1x8x32xf32> to vector<8x32xf32>
      %316 = vector.shape_cast %313 : vector<8x32xf32> to vector<1x8x32xf32>
      tpu.vector_store %arg31[%c11, %c0_92, %c0_93], %316 {strides = array<i32>} : memref<16x8x32xf32, #tpu.memory_space<vmem>>, vector<1x8x32xf32>,
      %317 = vector.extract_strided_slice %26 {offsets = [12, 0, 0], sizes = [1, 8, 128], strides = [1, 1, 1]} : vector<16x8x128xf32> to vector<1x8x128xf32>
      %318 = vector.shape_cast %317 : vector<1x8x128xf32> to vector<8x128xf32>
      %319 = arith.truncf %313 : vector<8x32xf32> to vector<8x32xbf16>
      %c0_94 = arith.constant 0 : index
      %c0_95 = arith.constant 0 : index
      %320 = vector.load %arg17[%c0_94, %c0_95] : memref<32x128xbf16, #tpu.memory_space<vmem>>, vector<32x128xbf16>
      %cst_96 = arith.constant dense<0.000000e+00> : vector<8x128xf32>
      %321 = tpu.matmul %319, %320, %cst_96 {dimension_numbers = #tpu.dot_dimension_numbers<[1], [0], [0], [1], [0, 0, 1, 1], [], []>} : vector<8x32xbf16>, vector<32x128xbf16>, vector<8x128xf32> -> vector<8x128xf32>
      %322 = arith.addf %318, %321 : vector<8x128xf32>
      %323 = arith.negf %322 : vector<8x128xf32>
      %324 = math.exp %323 : vector<8x128xf32>
      %cst_97 = arith.constant 1.000000e+00 : f32
      %325 = vector.broadcast %cst_97 : f32 to vector<8x128xf32>
      %326 = arith.addf %325, %324 : vector<8x128xf32>
      %327 = arith.divf %325, %326 : vector<8x128xf32>
      %328 = vector.extract_strided_slice %327 {offsets = [0, 0], sizes = [8, 32], strides = [1, 1]} : vector<8x128xf32> to vector<8x32xf32>
      %329 = vector.extract_strided_slice %327 {offsets = [0, 32], sizes = [8, 32], strides = [1, 1]} : vector<8x128xf32> to vector<8x32xf32>
      %330 = vector.extract_strided_slice %327 {offsets = [0, 96], sizes = [8, 32], strides = [1, 1]} : vector<8x128xf32> to vector<8x32xf32>
      %331 = vector.extract_strided_slice %322 {offsets = [0, 64], sizes = [8, 32], strides = [1, 1]} : vector<8x128xf32> to vector<8x32xf32>
      %332 = math.tanh %331 : vector<8x32xf32>
      %333 = arith.mulf %329, %311 : vector<8x32xf32>
      %334 = arith.mulf %328, %332 : vector<8x32xf32>
      %335 = arith.addf %333, %334 : vector<8x32xf32>
      %336 = math.tanh %335 : vector<8x32xf32>
      %337 = arith.mulf %330, %336 : vector<8x32xf32>
      %c12 = arith.constant 12 : index
      %c0_98 = arith.constant 0 : index
      %c0_99 = arith.constant 0 : index
      %338 = vector.load %arg31[%c12, %c0_98, %c0_99] : memref<16x8x32xf32, #tpu.memory_space<vmem>>, vector<1x8x32xf32>
      %339 = vector.shape_cast %338 : vector<1x8x32xf32> to vector<8x32xf32>
      %340 = vector.shape_cast %337 : vector<8x32xf32> to vector<1x8x32xf32>
      tpu.vector_store %arg31[%c12, %c0_98, %c0_99], %340 {strides = array<i32>} : memref<16x8x32xf32, #tpu.memory_space<vmem>>, vector<1x8x32xf32>,
      %341 = vector.extract_strided_slice %26 {offsets = [13, 0, 0], sizes = [1, 8, 128], strides = [1, 1, 1]} : vector<16x8x128xf32> to vector<1x8x128xf32>
      %342 = vector.shape_cast %341 : vector<1x8x128xf32> to vector<8x128xf32>
      %343 = arith.truncf %337 : vector<8x32xf32> to vector<8x32xbf16>
      %c0_100 = arith.constant 0 : index
      %c0_101 = arith.constant 0 : index
      %344 = vector.load %arg17[%c0_100, %c0_101] : memref<32x128xbf16, #tpu.memory_space<vmem>>, vector<32x128xbf16>
      %cst_102 = arith.constant dense<0.000000e+00> : vector<8x128xf32>
      %345 = tpu.matmul %343, %344, %cst_102 {dimension_numbers = #tpu.dot_dimension_numbers<[1], [0], [0], [1], [0, 0, 1, 1], [], []>} : vector<8x32xbf16>, vector<32x128xbf16>, vector<8x128xf32> -> vector<8x128xf32>
      %346 = arith.addf %342, %345 : vector<8x128xf32>
      %347 = arith.negf %346 : vector<8x128xf32>
      %348 = math.exp %347 : vector<8x128xf32>
      %cst_103 = arith.constant 1.000000e+00 : f32
      %349 = vector.broadcast %cst_103 : f32 to vector<8x128xf32>
      %350 = arith.addf %349, %348 : vector<8x128xf32>
      %351 = arith.divf %349, %350 : vector<8x128xf32>
      %352 = vector.extract_strided_slice %351 {offsets = [0, 0], sizes = [8, 32], strides = [1, 1]} : vector<8x128xf32> to vector<8x32xf32>
      %353 = vector.extract_strided_slice %351 {offsets = [0, 32], sizes = [8, 32], strides = [1, 1]} : vector<8x128xf32> to vector<8x32xf32>
      %354 = vector.extract_strided_slice %351 {offsets = [0, 96], sizes = [8, 32], strides = [1, 1]} : vector<8x128xf32> to vector<8x32xf32>
      %355 = vector.extract_strided_slice %346 {offsets = [0, 64], sizes = [8, 32], strides = [1, 1]} : vector<8x128xf32> to vector<8x32xf32>
      %356 = math.tanh %355 : vector<8x32xf32>
      %357 = arith.mulf %353, %335 : vector<8x32xf32>
      %358 = arith.mulf %352, %356 : vector<8x32xf32>
      %359 = arith.addf %357, %358 : vector<8x32xf32>
      %360 = math.tanh %359 : vector<8x32xf32>
      %361 = arith.mulf %354, %360 : vector<8x32xf32>
      %c13 = arith.constant 13 : index
      %c0_104 = arith.constant 0 : index
      %c0_105 = arith.constant 0 : index
      %362 = vector.load %arg31[%c13, %c0_104, %c0_105] : memref<16x8x32xf32, #tpu.memory_space<vmem>>, vector<1x8x32xf32>
      %363 = vector.shape_cast %362 : vector<1x8x32xf32> to vector<8x32xf32>
      %364 = vector.shape_cast %361 : vector<8x32xf32> to vector<1x8x32xf32>
      tpu.vector_store %arg31[%c13, %c0_104, %c0_105], %364 {strides = array<i32>} : memref<16x8x32xf32, #tpu.memory_space<vmem>>, vector<1x8x32xf32>,
      %365 = vector.extract_strided_slice %26 {offsets = [14, 0, 0], sizes = [1, 8, 128], strides = [1, 1, 1]} : vector<16x8x128xf32> to vector<1x8x128xf32>
      %366 = vector.shape_cast %365 : vector<1x8x128xf32> to vector<8x128xf32>
      %367 = arith.truncf %361 : vector<8x32xf32> to vector<8x32xbf16>
      %c0_106 = arith.constant 0 : index
      %c0_107 = arith.constant 0 : index
      %368 = vector.load %arg17[%c0_106, %c0_107] : memref<32x128xbf16, #tpu.memory_space<vmem>>, vector<32x128xbf16>
      %cst_108 = arith.constant dense<0.000000e+00> : vector<8x128xf32>
      %369 = tpu.matmul %367, %368, %cst_108 {dimension_numbers = #tpu.dot_dimension_numbers<[1], [0], [0], [1], [0, 0, 1, 1], [], []>} : vector<8x32xbf16>, vector<32x128xbf16>, vector<8x128xf32> -> vector<8x128xf32>
      %370 = arith.addf %366, %369 : vector<8x128xf32>
      %371 = arith.negf %370 : vector<8x128xf32>
      %372 = math.exp %371 : vector<8x128xf32>
      %cst_109 = arith.constant 1.000000e+00 : f32
      %373 = vector.broadcast %cst_109 : f32 to vector<8x128xf32>
      %374 = arith.addf %373, %372 : vector<8x128xf32>
      %375 = arith.divf %373, %374 : vector<8x128xf32>
      %376 = vector.extract_strided_slice %375 {offsets = [0, 0], sizes = [8, 32], strides = [1, 1]} : vector<8x128xf32> to vector<8x32xf32>
      %377 = vector.extract_strided_slice %375 {offsets = [0, 32], sizes = [8, 32], strides = [1, 1]} : vector<8x128xf32> to vector<8x32xf32>
      %378 = vector.extract_strided_slice %375 {offsets = [0, 96], sizes = [8, 32], strides = [1, 1]} : vector<8x128xf32> to vector<8x32xf32>
      %379 = vector.extract_strided_slice %370 {offsets = [0, 64], sizes = [8, 32], strides = [1, 1]} : vector<8x128xf32> to vector<8x32xf32>
      %380 = math.tanh %379 : vector<8x32xf32>
      %381 = arith.mulf %377, %359 : vector<8x32xf32>
      %382 = arith.mulf %376, %380 : vector<8x32xf32>
      %383 = arith.addf %381, %382 : vector<8x32xf32>
      %384 = math.tanh %383 : vector<8x32xf32>
      %385 = arith.mulf %378, %384 : vector<8x32xf32>
      %c14 = arith.constant 14 : index
      %c0_110 = arith.constant 0 : index
      %c0_111 = arith.constant 0 : index
      %386 = vector.load %arg31[%c14, %c0_110, %c0_111] : memref<16x8x32xf32, #tpu.memory_space<vmem>>, vector<1x8x32xf32>
      %387 = vector.shape_cast %386 : vector<1x8x32xf32> to vector<8x32xf32>
      %388 = vector.shape_cast %385 : vector<8x32xf32> to vector<1x8x32xf32>
      tpu.vector_store %arg31[%c14, %c0_110, %c0_111], %388 {strides = array<i32>} : memref<16x8x32xf32, #tpu.memory_space<vmem>>, vector<1x8x32xf32>,
      %389 = vector.extract_strided_slice %26 {offsets = [15, 0, 0], sizes = [1, 8, 128], strides = [1, 1, 1]} : vector<16x8x128xf32> to vector<1x8x128xf32>
      %390 = vector.shape_cast %389 : vector<1x8x128xf32> to vector<8x128xf32>
      %391 = arith.truncf %385 : vector<8x32xf32> to vector<8x32xbf16>
      %c0_112 = arith.constant 0 : index
      %c0_113 = arith.constant 0 : index
      %392 = vector.load %arg17[%c0_112, %c0_113] : memref<32x128xbf16, #tpu.memory_space<vmem>>, vector<32x128xbf16>
      %cst_114 = arith.constant dense<0.000000e+00> : vector<8x128xf32>
      %393 = tpu.matmul %391, %392, %cst_114 {dimension_numbers = #tpu.dot_dimension_numbers<[1], [0], [0], [1], [0, 0, 1, 1], [], []>} : vector<8x32xbf16>, vector<32x128xbf16>, vector<8x128xf32> -> vector<8x128xf32>
      %394 = arith.addf %390, %393 : vector<8x128xf32>
      %395 = arith.negf %394 : vector<8x128xf32>
      %396 = math.exp %395 : vector<8x128xf32>
      %cst_115 = arith.constant 1.000000e+00 : f32
      %397 = vector.broadcast %cst_115 : f32 to vector<8x128xf32>
      %398 = arith.addf %397, %396 : vector<8x128xf32>
      %399 = arith.divf %397, %398 : vector<8x128xf32>
      %400 = vector.extract_strided_slice %399 {offsets = [0, 0], sizes = [8, 32], strides = [1, 1]} : vector<8x128xf32> to vector<8x32xf32>
      %401 = vector.extract_strided_slice %399 {offsets = [0, 32], sizes = [8, 32], strides = [1, 1]} : vector<8x128xf32> to vector<8x32xf32>
      %402 = vector.extract_strided_slice %399 {offsets = [0, 96], sizes = [8, 32], strides = [1, 1]} : vector<8x128xf32> to vector<8x32xf32>
      %403 = vector.extract_strided_slice %394 {offsets = [0, 64], sizes = [8, 32], strides = [1, 1]} : vector<8x128xf32> to vector<8x32xf32>
      %404 = math.tanh %403 : vector<8x32xf32>
      %405 = arith.mulf %401, %383 : vector<8x32xf32>
      %406 = arith.mulf %400, %404 : vector<8x32xf32>
      %407 = arith.addf %405, %406 : vector<8x32xf32>
      %408 = math.tanh %407 : vector<8x32xf32>
      %409 = arith.mulf %402, %408 : vector<8x32xf32>
      %c15 = arith.constant 15 : index
      %c0_116 = arith.constant 0 : index
      %c0_117 = arith.constant 0 : index
      %410 = vector.load %arg31[%c15, %c0_116, %c0_117] : memref<16x8x32xf32, #tpu.memory_space<vmem>>, vector<1x8x32xf32>
      %411 = vector.shape_cast %410 : vector<1x8x32xf32> to vector<8x32xf32>
      %412 = vector.shape_cast %409 : vector<8x32xf32> to vector<1x8x32xf32>
      tpu.vector_store %arg31[%c15, %c0_116, %c0_117], %412 {strides = array<i32>} : memref<16x8x32xf32, #tpu.memory_space<vmem>>, vector<1x8x32xf32>,
      %c0_118 = arith.constant 0 : index
      %c0_119 = arith.constant 0 : index
      %c0_120 = arith.constant 0 : index
      %413 = vector.load %arg31[%c0_118, %c0_119, %c0_120] : memref<16x8x32xf32, #tpu.memory_space<vmem>>, vector<16x8x32xf32>
      %414 = vector.shape_cast %413 : vector<16x8x32xf32> to vector<128x32xf32>
      %415 = arith.truncf %414 : vector<128x32xf32> to vector<128x32xbf16>
      %c0_121 = arith.constant 0 : index
      %c0_122 = arith.constant 0 : index
      %416 = vector.load %arg19[%c0_121, %c0_122] : memref<32x128xbf16, #tpu.memory_space<vmem>>, vector<32x128xbf16>
      %cst_123 = arith.constant dense<0.000000e+00> : vector<128x128xf32>
      %417 = tpu.matmul %415, %416, %cst_123 {dimension_numbers = #tpu.dot_dimension_numbers<[1], [0], [0], [1], [0, 0, 1, 1], [], []>} : vector<128x32xbf16>, vector<32x128xbf16>, vector<128x128xf32> -> vector<128x128xf32>
      %418 = vector.shape_cast %417 : vector<128x128xf32> to vector<16x8x128xf32>
      %c0_124 = arith.constant 0 : index
      %c0_125 = arith.constant 0 : index
      %419 = vector.load %arg21[%c0_124, %c0_125] : memref<1x128xf32, #tpu.memory_space<vmem>>, vector<1x128xf32>
      %420 = vector.shape_cast %419 : vector<1x128xf32> to vector<1x1x128xf32>
      %421 = vector.broadcast %420 : vector<1x1x128xf32> to vector<16x8x128xf32>
      %422 = arith.addf %418, %421 : vector<16x8x128xf32>
      %cst_126 = arith.constant 0.000000e+00 : f32
      %423 = vector.broadcast %cst_126 : f32 to vector<8x32xf32>
      %cst_127 = arith.constant 0.000000e+00 : f32
      %424 = vector.broadcast %cst_127 : f32 to vector<8x32xf32>
      %425 = vector.extract_strided_slice %422 {offsets = [0, 0, 0], sizes = [1, 8, 128], strides = [1, 1, 1]} : vector<16x8x128xf32> to vector<1x8x128xf32>
      %426 = vector.shape_cast %425 : vector<1x8x128xf32> to vector<8x128xf32>
      %427 = arith.truncf %423 : vector<8x32xf32> to vector<8x32xbf16>
      %c0_128 = arith.constant 0 : index
      %c0_129 = arith.constant 0 : index
      %428 = vector.load %arg20[%c0_128, %c0_129] : memref<32x128xbf16, #tpu.memory_space<vmem>>, vector<32x128xbf16>
      %cst_130 = arith.constant dense<0.000000e+00> : vector<8x128xf32>
      %429 = tpu.matmul %427, %428, %cst_130 {dimension_numbers = #tpu.dot_dimension_numbers<[1], [0], [0], [1], [0, 0, 1, 1], [], []>} : vector<8x32xbf16>, vector<32x128xbf16>, vector<8x128xf32> -> vector<8x128xf32>
      %430 = arith.addf %426, %429 : vector<8x128xf32>
      %431 = arith.negf %430 : vector<8x128xf32>
      %432 = math.exp %431 : vector<8x128xf32>
      %cst_131 = arith.constant 1.000000e+00 : f32
      %433 = vector.broadcast %cst_131 : f32 to vector<8x128xf32>
      %434 = arith.addf %433, %432 : vector<8x128xf32>
      %435 = arith.divf %433, %434 : vector<8x128xf32>
      %436 = vector.extract_strided_slice %435 {offsets = [0, 0], sizes = [8, 32], strides = [1, 1]} : vector<8x128xf32> to vector<8x32xf32>
      %437 = vector.extract_strided_slice %435 {offsets = [0, 32], sizes = [8, 32], strides = [1, 1]} : vector<8x128xf32> to vector<8x32xf32>
      %438 = vector.extract_strided_slice %435 {offsets = [0, 96], sizes = [8, 32], strides = [1, 1]} : vector<8x128xf32> to vector<8x32xf32>
      %439 = vector.extract_strided_slice %430 {offsets = [0, 64], sizes = [8, 32], strides = [1, 1]} : vector<8x128xf32> to vector<8x32xf32>
      %440 = math.tanh %439 : vector<8x32xf32>
      %441 = arith.mulf %437, %424 : vector<8x32xf32>
      %442 = arith.mulf %436, %440 : vector<8x32xf32>
      %443 = arith.addf %441, %442 : vector<8x32xf32>
      %444 = math.tanh %443 : vector<8x32xf32>
      %445 = arith.mulf %438, %444 : vector<8x32xf32>
      %446 = vector.extract_strided_slice %422 {offsets = [1, 0, 0], sizes = [1, 8, 128], strides = [1, 1, 1]} : vector<16x8x128xf32> to vector<1x8x128xf32>
      %447 = vector.shape_cast %446 : vector<1x8x128xf32> to vector<8x128xf32>
      %448 = arith.truncf %445 : vector<8x32xf32> to vector<8x32xbf16>
      %c0_132 = arith.constant 0 : index
      %c0_133 = arith.constant 0 : index
      %449 = vector.load %arg20[%c0_132, %c0_133] : memref<32x128xbf16, #tpu.memory_space<vmem>>, vector<32x128xbf16>
      %cst_134 = arith.constant dense<0.000000e+00> : vector<8x128xf32>
      %450 = tpu.matmul %448, %449, %cst_134 {dimension_numbers = #tpu.dot_dimension_numbers<[1], [0], [0], [1], [0, 0, 1, 1], [], []>} : vector<8x32xbf16>, vector<32x128xbf16>, vector<8x128xf32> -> vector<8x128xf32>
      %451 = arith.addf %447, %450 : vector<8x128xf32>
      %452 = arith.negf %451 : vector<8x128xf32>
      %453 = math.exp %452 : vector<8x128xf32>
      %cst_135 = arith.constant 1.000000e+00 : f32
      %454 = vector.broadcast %cst_135 : f32 to vector<8x128xf32>
      %455 = arith.addf %454, %453 : vector<8x128xf32>
      %456 = arith.divf %454, %455 : vector<8x128xf32>
      %457 = vector.extract_strided_slice %456 {offsets = [0, 0], sizes = [8, 32], strides = [1, 1]} : vector<8x128xf32> to vector<8x32xf32>
      %458 = vector.extract_strided_slice %456 {offsets = [0, 32], sizes = [8, 32], strides = [1, 1]} : vector<8x128xf32> to vector<8x32xf32>
      %459 = vector.extract_strided_slice %456 {offsets = [0, 96], sizes = [8, 32], strides = [1, 1]} : vector<8x128xf32> to vector<8x32xf32>
      %460 = vector.extract_strided_slice %451 {offsets = [0, 64], sizes = [8, 32], strides = [1, 1]} : vector<8x128xf32> to vector<8x32xf32>
      %461 = math.tanh %460 : vector<8x32xf32>
      %462 = arith.mulf %458, %443 : vector<8x32xf32>
      %463 = arith.mulf %457, %461 : vector<8x32xf32>
      %464 = arith.addf %462, %463 : vector<8x32xf32>
      %465 = math.tanh %464 : vector<8x32xf32>
      %466 = arith.mulf %459, %465 : vector<8x32xf32>
      %467 = vector.extract_strided_slice %422 {offsets = [2, 0, 0], sizes = [1, 8, 128], strides = [1, 1, 1]} : vector<16x8x128xf32> to vector<1x8x128xf32>
      %468 = vector.shape_cast %467 : vector<1x8x128xf32> to vector<8x128xf32>
      %469 = arith.truncf %466 : vector<8x32xf32> to vector<8x32xbf16>
      %c0_136 = arith.constant 0 : index
      %c0_137 = arith.constant 0 : index
      %470 = vector.load %arg20[%c0_136, %c0_137] : memref<32x128xbf16, #tpu.memory_space<vmem>>, vector<32x128xbf16>
      %cst_138 = arith.constant dense<0.000000e+00> : vector<8x128xf32>
      %471 = tpu.matmul %469, %470, %cst_138 {dimension_numbers = #tpu.dot_dimension_numbers<[1], [0], [0], [1], [0, 0, 1, 1], [], []>} : vector<8x32xbf16>, vector<32x128xbf16>, vector<8x128xf32> -> vector<8x128xf32>
      %472 = arith.addf %468, %471 : vector<8x128xf32>
      %473 = arith.negf %472 : vector<8x128xf32>
      %474 = math.exp %473 : vector<8x128xf32>
      %cst_139 = arith.constant 1.000000e+00 : f32
      %475 = vector.broadcast %cst_139 : f32 to vector<8x128xf32>
      %476 = arith.addf %475, %474 : vector<8x128xf32>
      %477 = arith.divf %475, %476 : vector<8x128xf32>
      %478 = vector.extract_strided_slice %477 {offsets = [0, 0], sizes = [8, 32], strides = [1, 1]} : vector<8x128xf32> to vector<8x32xf32>
      %479 = vector.extract_strided_slice %477 {offsets = [0, 32], sizes = [8, 32], strides = [1, 1]} : vector<8x128xf32> to vector<8x32xf32>
      %480 = vector.extract_strided_slice %477 {offsets = [0, 96], sizes = [8, 32], strides = [1, 1]} : vector<8x128xf32> to vector<8x32xf32>
      %481 = vector.extract_strided_slice %472 {offsets = [0, 64], sizes = [8, 32], strides = [1, 1]} : vector<8x128xf32> to vector<8x32xf32>
      %482 = math.tanh %481 : vector<8x32xf32>
      %483 = arith.mulf %479, %464 : vector<8x32xf32>
      %484 = arith.mulf %478, %482 : vector<8x32xf32>
      %485 = arith.addf %483, %484 : vector<8x32xf32>
      %486 = math.tanh %485 : vector<8x32xf32>
      %487 = arith.mulf %480, %486 : vector<8x32xf32>
      %488 = vector.extract_strided_slice %422 {offsets = [3, 0, 0], sizes = [1, 8, 128], strides = [1, 1, 1]} : vector<16x8x128xf32> to vector<1x8x128xf32>
      %489 = vector.shape_cast %488 : vector<1x8x128xf32> to vector<8x128xf32>
      %490 = arith.truncf %487 : vector<8x32xf32> to vector<8x32xbf16>
      %c0_140 = arith.constant 0 : index
      %c0_141 = arith.constant 0 : index
      %491 = vector.load %arg20[%c0_140, %c0_141] : memref<32x128xbf16, #tpu.memory_space<vmem>>, vector<32x128xbf16>
      %cst_142 = arith.constant dense<0.000000e+00> : vector<8x128xf32>
      %492 = tpu.matmul %490, %491, %cst_142 {dimension_numbers = #tpu.dot_dimension_numbers<[1], [0], [0], [1], [0, 0, 1, 1], [], []>} : vector<8x32xbf16>, vector<32x128xbf16>, vector<8x128xf32> -> vector<8x128xf32>
      %493 = arith.addf %489, %492 : vector<8x128xf32>
      %494 = arith.negf %493 : vector<8x128xf32>
      %495 = math.exp %494 : vector<8x128xf32>
      %cst_143 = arith.constant 1.000000e+00 : f32
      %496 = vector.broadcast %cst_143 : f32 to vector<8x128xf32>
      %497 = arith.addf %496, %495 : vector<8x128xf32>
      %498 = arith.divf %496, %497 : vector<8x128xf32>
      %499 = vector.extract_strided_slice %498 {offsets = [0, 0], sizes = [8, 32], strides = [1, 1]} : vector<8x128xf32> to vector<8x32xf32>
      %500 = vector.extract_strided_slice %498 {offsets = [0, 32], sizes = [8, 32], strides = [1, 1]} : vector<8x128xf32> to vector<8x32xf32>
      %501 = vector.extract_strided_slice %498 {offsets = [0, 96], sizes = [8, 32], strides = [1, 1]} : vector<8x128xf32> to vector<8x32xf32>
      %502 = vector.extract_strided_slice %493 {offsets = [0, 64], sizes = [8, 32], strides = [1, 1]} : vector<8x128xf32> to vector<8x32xf32>
      %503 = math.tanh %502 : vector<8x32xf32>
      %504 = arith.mulf %500, %485 : vector<8x32xf32>
      %505 = arith.mulf %499, %503 : vector<8x32xf32>
      %506 = arith.addf %504, %505 : vector<8x32xf32>
      %507 = math.tanh %506 : vector<8x32xf32>
      %508 = arith.mulf %501, %507 : vector<8x32xf32>
      %509 = vector.extract_strided_slice %422 {offsets = [4, 0, 0], sizes = [1, 8, 128], strides = [1, 1, 1]} : vector<16x8x128xf32> to vector<1x8x128xf32>
      %510 = vector.shape_cast %509 : vector<1x8x128xf32> to vector<8x128xf32>
      %511 = arith.truncf %508 : vector<8x32xf32> to vector<8x32xbf16>
      %c0_144 = arith.constant 0 : index
      %c0_145 = arith.constant 0 : index
      %512 = vector.load %arg20[%c0_144, %c0_145] : memref<32x128xbf16, #tpu.memory_space<vmem>>, vector<32x128xbf16>
      %cst_146 = arith.constant dense<0.000000e+00> : vector<8x128xf32>
      %513 = tpu.matmul %511, %512, %cst_146 {dimension_numbers = #tpu.dot_dimension_numbers<[1], [0], [0], [1], [0, 0, 1, 1], [], []>} : vector<8x32xbf16>, vector<32x128xbf16>, vector<8x128xf32> -> vector<8x128xf32>
      %514 = arith.addf %510, %513 : vector<8x128xf32>
      %515 = arith.negf %514 : vector<8x128xf32>
      %516 = math.exp %515 : vector<8x128xf32>
      %cst_147 = arith.constant 1.000000e+00 : f32
      %517 = vector.broadcast %cst_147 : f32 to vector<8x128xf32>
      %518 = arith.addf %517, %516 : vector<8x128xf32>
      %519 = arith.divf %517, %518 : vector<8x128xf32>
      %520 = vector.extract_strided_slice %519 {offsets = [0, 0], sizes = [8, 32], strides = [1, 1]} : vector<8x128xf32> to vector<8x32xf32>
      %521 = vector.extract_strided_slice %519 {offsets = [0, 32], sizes = [8, 32], strides = [1, 1]} : vector<8x128xf32> to vector<8x32xf32>
      %522 = vector.extract_strided_slice %519 {offsets = [0, 96], sizes = [8, 32], strides = [1, 1]} : vector<8x128xf32> to vector<8x32xf32>
      %523 = vector.extract_strided_slice %514 {offsets = [0, 64], sizes = [8, 32], strides = [1, 1]} : vector<8x128xf32> to vector<8x32xf32>
      %524 = math.tanh %523 : vector<8x32xf32>
      %525 = arith.mulf %521, %506 : vector<8x32xf32>
      %526 = arith.mulf %520, %524 : vector<8x32xf32>
      %527 = arith.addf %525, %526 : vector<8x32xf32>
      %528 = math.tanh %527 : vector<8x32xf32>
      %529 = arith.mulf %522, %528 : vector<8x32xf32>
      %530 = vector.extract_strided_slice %422 {offsets = [5, 0, 0], sizes = [1, 8, 128], strides = [1, 1, 1]} : vector<16x8x128xf32> to vector<1x8x128xf32>
      %531 = vector.shape_cast %530 : vector<1x8x128xf32> to vector<8x128xf32>
      %532 = arith.truncf %529 : vector<8x32xf32> to vector<8x32xbf16>
      %c0_148 = arith.constant 0 : index
      %c0_149 = arith.constant 0 : index
      %533 = vector.load %arg20[%c0_148, %c0_149] : memref<32x128xbf16, #tpu.memory_space<vmem>>, vector<32x128xbf16>
      %cst_150 = arith.constant dense<0.000000e+00> : vector<8x128xf32>
      %534 = tpu.matmul %532, %533, %cst_150 {dimension_numbers = #tpu.dot_dimension_numbers<[1], [0], [0], [1], [0, 0, 1, 1], [], []>} : vector<8x32xbf16>, vector<32x128xbf16>, vector<8x128xf32> -> vector<8x128xf32>
      %535 = arith.addf %531, %534 : vector<8x128xf32>
      %536 = arith.negf %535 : vector<8x128xf32>
      %537 = math.exp %536 : vector<8x128xf32>
      %cst_151 = arith.constant 1.000000e+00 : f32
      %538 = vector.broadcast %cst_151 : f32 to vector<8x128xf32>
      %539 = arith.addf %538, %537 : vector<8x128xf32>
      %540 = arith.divf %538, %539 : vector<8x128xf32>
      %541 = vector.extract_strided_slice %540 {offsets = [0, 0], sizes = [8, 32], strides = [1, 1]} : vector<8x128xf32> to vector<8x32xf32>
      %542 = vector.extract_strided_slice %540 {offsets = [0, 32], sizes = [8, 32], strides = [1, 1]} : vector<8x128xf32> to vector<8x32xf32>
      %543 = vector.extract_strided_slice %540 {offsets = [0, 96], sizes = [8, 32], strides = [1, 1]} : vector<8x128xf32> to vector<8x32xf32>
      %544 = vector.extract_strided_slice %535 {offsets = [0, 64], sizes = [8, 32], strides = [1, 1]} : vector<8x128xf32> to vector<8x32xf32>
      %545 = math.tanh %544 : vector<8x32xf32>
      %546 = arith.mulf %542, %527 : vector<8x32xf32>
      %547 = arith.mulf %541, %545 : vector<8x32xf32>
      %548 = arith.addf %546, %547 : vector<8x32xf32>
      %549 = math.tanh %548 : vector<8x32xf32>
      %550 = arith.mulf %543, %549 : vector<8x32xf32>
      %551 = vector.extract_strided_slice %422 {offsets = [6, 0, 0], sizes = [1, 8, 128], strides = [1, 1, 1]} : vector<16x8x128xf32> to vector<1x8x128xf32>
      %552 = vector.shape_cast %551 : vector<1x8x128xf32> to vector<8x128xf32>
      %553 = arith.truncf %550 : vector<8x32xf32> to vector<8x32xbf16>
      %c0_152 = arith.constant 0 : index
      %c0_153 = arith.constant 0 : index
      %554 = vector.load %arg20[%c0_152, %c0_153] : memref<32x128xbf16, #tpu.memory_space<vmem>>, vector<32x128xbf16>
      %cst_154 = arith.constant dense<0.000000e+00> : vector<8x128xf32>
      %555 = tpu.matmul %553, %554, %cst_154 {dimension_numbers = #tpu.dot_dimension_numbers<[1], [0], [0], [1], [0, 0, 1, 1], [], []>} : vector<8x32xbf16>, vector<32x128xbf16>, vector<8x128xf32> -> vector<8x128xf32>
      %556 = arith.addf %552, %555 : vector<8x128xf32>
      %557 = arith.negf %556 : vector<8x128xf32>
      %558 = math.exp %557 : vector<8x128xf32>
      %cst_155 = arith.constant 1.000000e+00 : f32
      %559 = vector.broadcast %cst_155 : f32 to vector<8x128xf32>
      %560 = arith.addf %559, %558 : vector<8x128xf32>
      %561 = arith.divf %559, %560 : vector<8x128xf32>
      %562 = vector.extract_strided_slice %561 {offsets = [0, 0], sizes = [8, 32], strides = [1, 1]} : vector<8x128xf32> to vector<8x32xf32>
      %563 = vector.extract_strided_slice %561 {offsets = [0, 32], sizes = [8, 32], strides = [1, 1]} : vector<8x128xf32> to vector<8x32xf32>
      %564 = vector.extract_strided_slice %561 {offsets = [0, 96], sizes = [8, 32], strides = [1, 1]} : vector<8x128xf32> to vector<8x32xf32>
      %565 = vector.extract_strided_slice %556 {offsets = [0, 64], sizes = [8, 32], strides = [1, 1]} : vector<8x128xf32> to vector<8x32xf32>
      %566 = math.tanh %565 : vector<8x32xf32>
      %567 = arith.mulf %563, %548 : vector<8x32xf32>
      %568 = arith.mulf %562, %566 : vector<8x32xf32>
      %569 = arith.addf %567, %568 : vector<8x32xf32>
      %570 = math.tanh %569 : vector<8x32xf32>
      %571 = arith.mulf %564, %570 : vector<8x32xf32>
      %572 = vector.extract_strided_slice %422 {offsets = [7, 0, 0], sizes = [1, 8, 128], strides = [1, 1, 1]} : vector<16x8x128xf32> to vector<1x8x128xf32>
      %573 = vector.shape_cast %572 : vector<1x8x128xf32> to vector<8x128xf32>
      %574 = arith.truncf %571 : vector<8x32xf32> to vector<8x32xbf16>
      %c0_156 = arith.constant 0 : index
      %c0_157 = arith.constant 0 : index
      %575 = vector.load %arg20[%c0_156, %c0_157] : memref<32x128xbf16, #tpu.memory_space<vmem>>, vector<32x128xbf16>
      %cst_158 = arith.constant dense<0.000000e+00> : vector<8x128xf32>
      %576 = tpu.matmul %574, %575, %cst_158 {dimension_numbers = #tpu.dot_dimension_numbers<[1], [0], [0], [1], [0, 0, 1, 1], [], []>} : vector<8x32xbf16>, vector<32x128xbf16>, vector<8x128xf32> -> vector<8x128xf32>
      %577 = arith.addf %573, %576 : vector<8x128xf32>
      %578 = arith.negf %577 : vector<8x128xf32>
      %579 = math.exp %578 : vector<8x128xf32>
      %cst_159 = arith.constant 1.000000e+00 : f32
      %580 = vector.broadcast %cst_159 : f32 to vector<8x128xf32>
      %581 = arith.addf %580, %579 : vector<8x128xf32>
      %582 = arith.divf %580, %581 : vector<8x128xf32>
      %583 = vector.extract_strided_slice %582 {offsets = [0, 0], sizes = [8, 32], strides = [1, 1]} : vector<8x128xf32> to vector<8x32xf32>
      %584 = vector.extract_strided_slice %582 {offsets = [0, 32], sizes = [8, 32], strides = [1, 1]} : vector<8x128xf32> to vector<8x32xf32>
      %585 = vector.extract_strided_slice %582 {offsets = [0, 96], sizes = [8, 32], strides = [1, 1]} : vector<8x128xf32> to vector<8x32xf32>
      %586 = vector.extract_strided_slice %577 {offsets = [0, 64], sizes = [8, 32], strides = [1, 1]} : vector<8x128xf32> to vector<8x32xf32>
      %587 = math.tanh %586 : vector<8x32xf32>
      %588 = arith.mulf %584, %569 : vector<8x32xf32>
      %589 = arith.mulf %583, %587 : vector<8x32xf32>
      %590 = arith.addf %588, %589 : vector<8x32xf32>
      %591 = math.tanh %590 : vector<8x32xf32>
      %592 = arith.mulf %585, %591 : vector<8x32xf32>
      %593 = vector.extract_strided_slice %422 {offsets = [8, 0, 0], sizes = [1, 8, 128], strides = [1, 1, 1]} : vector<16x8x128xf32> to vector<1x8x128xf32>
      %594 = vector.shape_cast %593 : vector<1x8x128xf32> to vector<8x128xf32>
      %595 = arith.truncf %592 : vector<8x32xf32> to vector<8x32xbf16>
      %c0_160 = arith.constant 0 : index
      %c0_161 = arith.constant 0 : index
      %596 = vector.load %arg20[%c0_160, %c0_161] : memref<32x128xbf16, #tpu.memory_space<vmem>>, vector<32x128xbf16>
      %cst_162 = arith.constant dense<0.000000e+00> : vector<8x128xf32>
      %597 = tpu.matmul %595, %596, %cst_162 {dimension_numbers = #tpu.dot_dimension_numbers<[1], [0], [0], [1], [0, 0, 1, 1], [], []>} : vector<8x32xbf16>, vector<32x128xbf16>, vector<8x128xf32> -> vector<8x128xf32>
      %598 = arith.addf %594, %597 : vector<8x128xf32>
      %599 = arith.negf %598 : vector<8x128xf32>
      %600 = math.exp %599 : vector<8x128xf32>
      %cst_163 = arith.constant 1.000000e+00 : f32
      %601 = vector.broadcast %cst_163 : f32 to vector<8x128xf32>
      %602 = arith.addf %601, %600 : vector<8x128xf32>
      %603 = arith.divf %601, %602 : vector<8x128xf32>
      %604 = vector.extract_strided_slice %603 {offsets = [0, 0], sizes = [8, 32], strides = [1, 1]} : vector<8x128xf32> to vector<8x32xf32>
      %605 = vector.extract_strided_slice %603 {offsets = [0, 32], sizes = [8, 32], strides = [1, 1]} : vector<8x128xf32> to vector<8x32xf32>
      %606 = vector.extract_strided_slice %603 {offsets = [0, 96], sizes = [8, 32], strides = [1, 1]} : vector<8x128xf32> to vector<8x32xf32>
      %607 = vector.extract_strided_slice %598 {offsets = [0, 64], sizes = [8, 32], strides = [1, 1]} : vector<8x128xf32> to vector<8x32xf32>
      %608 = math.tanh %607 : vector<8x32xf32>
      %609 = arith.mulf %605, %590 : vector<8x32xf32>
      %610 = arith.mulf %604, %608 : vector<8x32xf32>
      %611 = arith.addf %609, %610 : vector<8x32xf32>
      %612 = math.tanh %611 : vector<8x32xf32>
      %613 = arith.mulf %606, %612 : vector<8x32xf32>
      %614 = vector.extract_strided_slice %422 {offsets = [9, 0, 0], sizes = [1, 8, 128], strides = [1, 1, 1]} : vector<16x8x128xf32> to vector<1x8x128xf32>
      %615 = vector.shape_cast %614 : vector<1x8x128xf32> to vector<8x128xf32>
      %616 = arith.truncf %613 : vector<8x32xf32> to vector<8x32xbf16>
      %c0_164 = arith.constant 0 : index
      %c0_165 = arith.constant 0 : index
      %617 = vector.load %arg20[%c0_164, %c0_165] : memref<32x128xbf16, #tpu.memory_space<vmem>>, vector<32x128xbf16>
      %cst_166 = arith.constant dense<0.000000e+00> : vector<8x128xf32>
      %618 = tpu.matmul %616, %617, %cst_166 {dimension_numbers = #tpu.dot_dimension_numbers<[1], [0], [0], [1], [0, 0, 1, 1], [], []>} : vector<8x32xbf16>, vector<32x128xbf16>, vector<8x128xf32> -> vector<8x128xf32>
      %619 = arith.addf %615, %618 : vector<8x128xf32>
      %620 = arith.negf %619 : vector<8x128xf32>
      %621 = math.exp %620 : vector<8x128xf32>
      %cst_167 = arith.constant 1.000000e+00 : f32
      %622 = vector.broadcast %cst_167 : f32 to vector<8x128xf32>
      %623 = arith.addf %622, %621 : vector<8x128xf32>
      %624 = arith.divf %622, %623 : vector<8x128xf32>
      %625 = vector.extract_strided_slice %624 {offsets = [0, 0], sizes = [8, 32], strides = [1, 1]} : vector<8x128xf32> to vector<8x32xf32>
      %626 = vector.extract_strided_slice %624 {offsets = [0, 32], sizes = [8, 32], strides = [1, 1]} : vector<8x128xf32> to vector<8x32xf32>
      %627 = vector.extract_strided_slice %624 {offsets = [0, 96], sizes = [8, 32], strides = [1, 1]} : vector<8x128xf32> to vector<8x32xf32>
      %628 = vector.extract_strided_slice %619 {offsets = [0, 64], sizes = [8, 32], strides = [1, 1]} : vector<8x128xf32> to vector<8x32xf32>
      %629 = math.tanh %628 : vector<8x32xf32>
      %630 = arith.mulf %626, %611 : vector<8x32xf32>
      %631 = arith.mulf %625, %629 : vector<8x32xf32>
      %632 = arith.addf %630, %631 : vector<8x32xf32>
      %633 = math.tanh %632 : vector<8x32xf32>
      %634 = arith.mulf %627, %633 : vector<8x32xf32>
      %635 = vector.extract_strided_slice %422 {offsets = [10, 0, 0], sizes = [1, 8, 128], strides = [1, 1, 1]} : vector<16x8x128xf32> to vector<1x8x128xf32>
      %636 = vector.shape_cast %635 : vector<1x8x128xf32> to vector<8x128xf32>
      %637 = arith.truncf %634 : vector<8x32xf32> to vector<8x32xbf16>
      %c0_168 = arith.constant 0 : index
      %c0_169 = arith.constant 0 : index
      %638 = vector.load %arg20[%c0_168, %c0_169] : memref<32x128xbf16, #tpu.memory_space<vmem>>, vector<32x128xbf16>
      %cst_170 = arith.constant dense<0.000000e+00> : vector<8x128xf32>
      %639 = tpu.matmul %637, %638, %cst_170 {dimension_numbers = #tpu.dot_dimension_numbers<[1], [0], [0], [1], [0, 0, 1, 1], [], []>} : vector<8x32xbf16>, vector<32x128xbf16>, vector<8x128xf32> -> vector<8x128xf32>
      %640 = arith.addf %636, %639 : vector<8x128xf32>
      %641 = arith.negf %640 : vector<8x128xf32>
      %642 = math.exp %641 : vector<8x128xf32>
      %cst_171 = arith.constant 1.000000e+00 : f32
      %643 = vector.broadcast %cst_171 : f32 to vector<8x128xf32>
      %644 = arith.addf %643, %642 : vector<8x128xf32>
      %645 = arith.divf %643, %644 : vector<8x128xf32>
      %646 = vector.extract_strided_slice %645 {offsets = [0, 0], sizes = [8, 32], strides = [1, 1]} : vector<8x128xf32> to vector<8x32xf32>
      %647 = vector.extract_strided_slice %645 {offsets = [0, 32], sizes = [8, 32], strides = [1, 1]} : vector<8x128xf32> to vector<8x32xf32>
      %648 = vector.extract_strided_slice %645 {offsets = [0, 96], sizes = [8, 32], strides = [1, 1]} : vector<8x128xf32> to vector<8x32xf32>
      %649 = vector.extract_strided_slice %640 {offsets = [0, 64], sizes = [8, 32], strides = [1, 1]} : vector<8x128xf32> to vector<8x32xf32>
      %650 = math.tanh %649 : vector<8x32xf32>
      %651 = arith.mulf %647, %632 : vector<8x32xf32>
      %652 = arith.mulf %646, %650 : vector<8x32xf32>
      %653 = arith.addf %651, %652 : vector<8x32xf32>
      %654 = math.tanh %653 : vector<8x32xf32>
      %655 = arith.mulf %648, %654 : vector<8x32xf32>
      %656 = vector.extract_strided_slice %422 {offsets = [11, 0, 0], sizes = [1, 8, 128], strides = [1, 1, 1]} : vector<16x8x128xf32> to vector<1x8x128xf32>
      %657 = vector.shape_cast %656 : vector<1x8x128xf32> to vector<8x128xf32>
      %658 = arith.truncf %655 : vector<8x32xf32> to vector<8x32xbf16>
      %c0_172 = arith.constant 0 : index
      %c0_173 = arith.constant 0 : index
      %659 = vector.load %arg20[%c0_172, %c0_173] : memref<32x128xbf16, #tpu.memory_space<vmem>>, vector<32x128xbf16>
      %cst_174 = arith.constant dense<0.000000e+00> : vector<8x128xf32>
      %660 = tpu.matmul %658, %659, %cst_174 {dimension_numbers = #tpu.dot_dimension_numbers<[1], [0], [0], [1], [0, 0, 1, 1], [], []>} : vector<8x32xbf16>, vector<32x128xbf16>, vector<8x128xf32> -> vector<8x128xf32>
      %661 = arith.addf %657, %660 : vector<8x128xf32>
      %662 = arith.negf %661 : vector<8x128xf32>
      %663 = math.exp %662 : vector<8x128xf32>
      %cst_175 = arith.constant 1.000000e+00 : f32
      %664 = vector.broadcast %cst_175 : f32 to vector<8x128xf32>
      %665 = arith.addf %664, %663 : vector<8x128xf32>
      %666 = arith.divf %664, %665 : vector<8x128xf32>
      %667 = vector.extract_strided_slice %666 {offsets = [0, 0], sizes = [8, 32], strides = [1, 1]} : vector<8x128xf32> to vector<8x32xf32>
      %668 = vector.extract_strided_slice %666 {offsets = [0, 32], sizes = [8, 32], strides = [1, 1]} : vector<8x128xf32> to vector<8x32xf32>
      %669 = vector.extract_strided_slice %666 {offsets = [0, 96], sizes = [8, 32], strides = [1, 1]} : vector<8x128xf32> to vector<8x32xf32>
      %670 = vector.extract_strided_slice %661 {offsets = [0, 64], sizes = [8, 32], strides = [1, 1]} : vector<8x128xf32> to vector<8x32xf32>
      %671 = math.tanh %670 : vector<8x32xf32>
      %672 = arith.mulf %668, %653 : vector<8x32xf32>
      %673 = arith.mulf %667, %671 : vector<8x32xf32>
      %674 = arith.addf %672, %673 : vector<8x32xf32>
      %675 = math.tanh %674 : vector<8x32xf32>
      %676 = arith.mulf %669, %675 : vector<8x32xf32>
      %677 = vector.extract_strided_slice %422 {offsets = [12, 0, 0], sizes = [1, 8, 128], strides = [1, 1, 1]} : vector<16x8x128xf32> to vector<1x8x128xf32>
      %678 = vector.shape_cast %677 : vector<1x8x128xf32> to vector<8x128xf32>
      %679 = arith.truncf %676 : vector<8x32xf32> to vector<8x32xbf16>
      %c0_176 = arith.constant 0 : index
      %c0_177 = arith.constant 0 : index
      %680 = vector.load %arg20[%c0_176, %c0_177] : memref<32x128xbf16, #tpu.memory_space<vmem>>, vector<32x128xbf16>
      %cst_178 = arith.constant dense<0.000000e+00> : vector<8x128xf32>
      %681 = tpu.matmul %679, %680, %cst_178 {dimension_numbers = #tpu.dot_dimension_numbers<[1], [0], [0], [1], [0, 0, 1, 1], [], []>} : vector<8x32xbf16>, vector<32x128xbf16>, vector<8x128xf32> -> vector<8x128xf32>
      %682 = arith.addf %678, %681 : vector<8x128xf32>
      %683 = arith.negf %682 : vector<8x128xf32>
      %684 = math.exp %683 : vector<8x128xf32>
      %cst_179 = arith.constant 1.000000e+00 : f32
      %685 = vector.broadcast %cst_179 : f32 to vector<8x128xf32>
      %686 = arith.addf %685, %684 : vector<8x128xf32>
      %687 = arith.divf %685, %686 : vector<8x128xf32>
      %688 = vector.extract_strided_slice %687 {offsets = [0, 0], sizes = [8, 32], strides = [1, 1]} : vector<8x128xf32> to vector<8x32xf32>
      %689 = vector.extract_strided_slice %687 {offsets = [0, 32], sizes = [8, 32], strides = [1, 1]} : vector<8x128xf32> to vector<8x32xf32>
      %690 = vector.extract_strided_slice %687 {offsets = [0, 96], sizes = [8, 32], strides = [1, 1]} : vector<8x128xf32> to vector<8x32xf32>
      %691 = vector.extract_strided_slice %682 {offsets = [0, 64], sizes = [8, 32], strides = [1, 1]} : vector<8x128xf32> to vector<8x32xf32>
      %692 = math.tanh %691 : vector<8x32xf32>
      %693 = arith.mulf %689, %674 : vector<8x32xf32>
      %694 = arith.mulf %688, %692 : vector<8x32xf32>
      %695 = arith.addf %693, %694 : vector<8x32xf32>
      %696 = math.tanh %695 : vector<8x32xf32>
      %697 = arith.mulf %690, %696 : vector<8x32xf32>
      %698 = vector.extract_strided_slice %422 {offsets = [13, 0, 0], sizes = [1, 8, 128], strides = [1, 1, 1]} : vector<16x8x128xf32> to vector<1x8x128xf32>
      %699 = vector.shape_cast %698 : vector<1x8x128xf32> to vector<8x128xf32>
      %700 = arith.truncf %697 : vector<8x32xf32> to vector<8x32xbf16>
      %c0_180 = arith.constant 0 : index
      %c0_181 = arith.constant 0 : index
      %701 = vector.load %arg20[%c0_180, %c0_181] : memref<32x128xbf16, #tpu.memory_space<vmem>>, vector<32x128xbf16>
      %cst_182 = arith.constant dense<0.000000e+00> : vector<8x128xf32>
      %702 = tpu.matmul %700, %701, %cst_182 {dimension_numbers = #tpu.dot_dimension_numbers<[1], [0], [0], [1], [0, 0, 1, 1], [], []>} : vector<8x32xbf16>, vector<32x128xbf16>, vector<8x128xf32> -> vector<8x128xf32>
      %703 = arith.addf %699, %702 : vector<8x128xf32>
      %704 = arith.negf %703 : vector<8x128xf32>
      %705 = math.exp %704 : vector<8x128xf32>
      %cst_183 = arith.constant 1.000000e+00 : f32
      %706 = vector.broadcast %cst_183 : f32 to vector<8x128xf32>
      %707 = arith.addf %706, %705 : vector<8x128xf32>
      %708 = arith.divf %706, %707 : vector<8x128xf32>
      %709 = vector.extract_strided_slice %708 {offsets = [0, 0], sizes = [8, 32], strides = [1, 1]} : vector<8x128xf32> to vector<8x32xf32>
      %710 = vector.extract_strided_slice %708 {offsets = [0, 32], sizes = [8, 32], strides = [1, 1]} : vector<8x128xf32> to vector<8x32xf32>
      %711 = vector.extract_strided_slice %708 {offsets = [0, 96], sizes = [8, 32], strides = [1, 1]} : vector<8x128xf32> to vector<8x32xf32>
      %712 = vector.extract_strided_slice %703 {offsets = [0, 64], sizes = [8, 32], strides = [1, 1]} : vector<8x128xf32> to vector<8x32xf32>
      %713 = math.tanh %712 : vector<8x32xf32>
      %714 = arith.mulf %710, %695 : vector<8x32xf32>
      %715 = arith.mulf %709, %713 : vector<8x32xf32>
      %716 = arith.addf %714, %715 : vector<8x32xf32>
      %717 = math.tanh %716 : vector<8x32xf32>
      %718 = arith.mulf %711, %717 : vector<8x32xf32>
      %719 = vector.extract_strided_slice %422 {offsets = [14, 0, 0], sizes = [1, 8, 128], strides = [1, 1, 1]} : vector<16x8x128xf32> to vector<1x8x128xf32>
      %720 = vector.shape_cast %719 : vector<1x8x128xf32> to vector<8x128xf32>
      %721 = arith.truncf %718 : vector<8x32xf32> to vector<8x32xbf16>
      %c0_184 = arith.constant 0 : index
      %c0_185 = arith.constant 0 : index
      %722 = vector.load %arg20[%c0_184, %c0_185] : memref<32x128xbf16, #tpu.memory_space<vmem>>, vector<32x128xbf16>
      %cst_186 = arith.constant dense<0.000000e+00> : vector<8x128xf32>
      %723 = tpu.matmul %721, %722, %cst_186 {dimension_numbers = #tpu.dot_dimension_numbers<[1], [0], [0], [1], [0, 0, 1, 1], [], []>} : vector<8x32xbf16>, vector<32x128xbf16>, vector<8x128xf32> -> vector<8x128xf32>
      %724 = arith.addf %720, %723 : vector<8x128xf32>
      %725 = arith.negf %724 : vector<8x128xf32>
      %726 = math.exp %725 : vector<8x128xf32>
      %cst_187 = arith.constant 1.000000e+00 : f32
      %727 = vector.broadcast %cst_187 : f32 to vector<8x128xf32>
      %728 = arith.addf %727, %726 : vector<8x128xf32>
      %729 = arith.divf %727, %728 : vector<8x128xf32>
      %730 = vector.extract_strided_slice %729 {offsets = [0, 0], sizes = [8, 32], strides = [1, 1]} : vector<8x128xf32> to vector<8x32xf32>
      %731 = vector.extract_strided_slice %729 {offsets = [0, 32], sizes = [8, 32], strides = [1, 1]} : vector<8x128xf32> to vector<8x32xf32>
      %732 = vector.extract_strided_slice %729 {offsets = [0, 96], sizes = [8, 32], strides = [1, 1]} : vector<8x128xf32> to vector<8x32xf32>
      %733 = vector.extract_strided_slice %724 {offsets = [0, 64], sizes = [8, 32], strides = [1, 1]} : vector<8x128xf32> to vector<8x32xf32>
      %734 = math.tanh %733 : vector<8x32xf32>
      %735 = arith.mulf %731, %716 : vector<8x32xf32>
      %736 = arith.mulf %730, %734 : vector<8x32xf32>
      %737 = arith.addf %735, %736 : vector<8x32xf32>
      %738 = math.tanh %737 : vector<8x32xf32>
      %739 = arith.mulf %732, %738 : vector<8x32xf32>
      %740 = vector.extract_strided_slice %422 {offsets = [15, 0, 0], sizes = [1, 8, 128], strides = [1, 1, 1]} : vector<16x8x128xf32> to vector<1x8x128xf32>
      %741 = vector.shape_cast %740 : vector<1x8x128xf32> to vector<8x128xf32>
      %742 = arith.truncf %739 : vector<8x32xf32> to vector<8x32xbf16>
      %c0_188 = arith.constant 0 : index
      %c0_189 = arith.constant 0 : index
      %743 = vector.load %arg20[%c0_188, %c0_189] : memref<32x128xbf16, #tpu.memory_space<vmem>>, vector<32x128xbf16>
      %cst_190 = arith.constant dense<0.000000e+00> : vector<8x128xf32>
      %744 = tpu.matmul %742, %743, %cst_190 {dimension_numbers = #tpu.dot_dimension_numbers<[1], [0], [0], [1], [0, 0, 1, 1], [], []>} : vector<8x32xbf16>, vector<32x128xbf16>, vector<8x128xf32> -> vector<8x128xf32>
      %745 = arith.addf %741, %744 : vector<8x128xf32>
      %746 = arith.negf %745 : vector<8x128xf32>
      %747 = math.exp %746 : vector<8x128xf32>
      %cst_191 = arith.constant 1.000000e+00 : f32
      %748 = vector.broadcast %cst_191 : f32 to vector<8x128xf32>
      %749 = arith.addf %748, %747 : vector<8x128xf32>
      %750 = arith.divf %748, %749 : vector<8x128xf32>
      %751 = vector.extract_strided_slice %750 {offsets = [0, 0], sizes = [8, 32], strides = [1, 1]} : vector<8x128xf32> to vector<8x32xf32>
      %752 = vector.extract_strided_slice %750 {offsets = [0, 32], sizes = [8, 32], strides = [1, 1]} : vector<8x128xf32> to vector<8x32xf32>
      %753 = vector.extract_strided_slice %750 {offsets = [0, 96], sizes = [8, 32], strides = [1, 1]} : vector<8x128xf32> to vector<8x32xf32>
      %754 = vector.extract_strided_slice %745 {offsets = [0, 64], sizes = [8, 32], strides = [1, 1]} : vector<8x128xf32> to vector<8x32xf32>
      %755 = math.tanh %754 : vector<8x32xf32>
      %756 = arith.mulf %752, %737 : vector<8x32xf32>
      %757 = arith.mulf %751, %755 : vector<8x32xf32>
      %758 = arith.addf %756, %757 : vector<8x32xf32>
      %759 = math.tanh %758 : vector<8x32xf32>
      %760 = arith.mulf %753, %759 : vector<8x32xf32>
      %c0_192 = arith.constant 0 : index
      %c0_193 = arith.constant 0 : index
      %761 = vector.load %arg22[%c0_192, %c0_193] : memref<1x32xf32, #tpu.memory_space<vmem>>, vector<1x32xf32>
      %762 = vector.broadcast %761 : vector<1x32xf32> to vector<8x32xf32>
      %763 = arith.mulf %760, %762 : vector<8x32xf32>
      %cst_194 = arith.constant dense<0.000000e+00> : vector<8xf32>
      %764 = vector.multi_reduction <add>, %763, %cst_194 [1] : vector<8x32xf32> to vector<8xf32>
      %765 = vector.shape_cast %764 : vector<8xf32> to vector<8x1xf32>
      %c0_195 = arith.constant 0 : index
      %c0_196 = arith.constant 0 : index
      %766 = vector.load %arg23[%c0_195, %c0_196] : memref<1x1xf32, #tpu.memory_space<vmem>>, vector<1x1xf32>
      %767 = vector.broadcast %766 : vector<1x1xf32> to vector<8x1xf32>
      %768 = arith.addf %765, %767 : vector<8x1xf32>
      %c0_197 = arith.constant 0 : index
      %c0_198 = arith.constant 0 : index
      %769 = vector.load %arg24[%c0_197, %c0_198] : memref<1x32xf32, #tpu.memory_space<vmem>>, vector<1x32xf32>
      %770 = vector.broadcast %769 : vector<1x32xf32> to vector<8x32xf32>
      %771 = arith.mulf %760, %770 : vector<8x32xf32>
      %cst_199 = arith.constant dense<0.000000e+00> : vector<8xf32>
      %772 = vector.multi_reduction <add>, %771, %cst_199 [1] : vector<8x32xf32> to vector<8xf32>
      %773 = vector.shape_cast %772 : vector<8xf32> to vector<8x1xf32>
      %c0_200 = arith.constant 0 : index
      %c0_201 = arith.constant 0 : index
      %774 = vector.load %arg25[%c0_200, %c0_201] : memref<1x1xf32, #tpu.memory_space<vmem>>, vector<1x1xf32>
      %775 = vector.broadcast %774 : vector<1x1xf32> to vector<8x1xf32>
      %776 = arith.addf %773, %775 : vector<8x1xf32>
      %777 = vector.extract_strided_slice %768 {offsets = [0, 0], sizes = [2, 1], strides = [1, 1]} : vector<8x1xf32> to vector<2x1xf32>
      %778 = arith.negf %777 : vector<2x1xf32>
      %779 = math.exp %778 : vector<2x1xf32>
      %cst_202 = arith.constant 1.000000e+00 : f32
      %780 = vector.broadcast %cst_202 : f32 to vector<2x1xf32>
      %781 = arith.addf %780, %779 : vector<2x1xf32>
      %782 = arith.divf %780, %781 : vector<2x1xf32>
      %c0_203 = arith.constant 0 : index
      %c0_204 = arith.constant 0 : index
      %c0_205 = arith.constant 0 : index
      %783 = vector.load %arg27[%c0_203, %c0_204, %c0_205] : memref<1x2x1xf32, #tpu.memory_space<vmem>>, vector<1x2x1xf32>
      %784 = vector.shape_cast %783 : vector<1x2x1xf32> to vector<2x1xf32>
      %785 = vector.shape_cast %782 : vector<2x1xf32> to vector<1x2x1xf32>
      tpu.vector_store %arg27[%c0_203, %c0_204, %c0_205], %785 {strides = array<i32>} : memref<1x2x1xf32, #tpu.memory_space<vmem>>, vector<1x2x1xf32>,
      %786 = vector.extract_strided_slice %776 {offsets = [0, 0], sizes = [2, 1], strides = [1, 1]} : vector<8x1xf32> to vector<2x1xf32>
      %cst_206 = arith.constant 0.000000e+00 : f32
      %787 = vector.broadcast %cst_206 : f32 to vector<2x1xf32>
      %788 = arith.maximumf %786, %787 : vector<2x1xf32>
      %789 = math.absf %786 : vector<2x1xf32>
      %cst_207 = arith.constant 0.000000e+00 : f32
      %790 = vector.broadcast %cst_207 : f32 to vector<2x1xf32>
      %791 = arith.subf %790, %789 : vector<2x1xf32>
      %792 = math.exp %791 : vector<2x1xf32>
      %cst_208 = arith.constant 1.000000e+00 : f32
      %793 = vector.broadcast %cst_208 : f32 to vector<2x1xf32>
      %794 = arith.addf %793, %792 : vector<2x1xf32>
      %795 = math.log %794 : vector<2x1xf32>
      %796 = arith.addf %788, %795 : vector<2x1xf32>
      %c0_209 = arith.constant 0 : index
      %c0_210 = arith.constant 0 : index
      %c0_211 = arith.constant 0 : index
      %797 = vector.load %arg28[%c0_209, %c0_210, %c0_211] : memref<1x2x1xf32, #tpu.memory_space<vmem>>, vector<1x2x1xf32>
      %798 = vector.shape_cast %797 : vector<1x2x1xf32> to vector<2x1xf32>
      %799 = vector.shape_cast %796 : vector<2x1xf32> to vector<1x2x1xf32>
      tpu.vector_store %arg28[%c0_209, %c0_210, %c0_211], %799 {strides = array<i32>} : memref<1x2x1xf32, #tpu.memory_space<vmem>>, vector<1x2x1xf32>,
    } else {
    }
    return
  }
  func.func @transform_0(%arg0: i32) -> (i32, i32, i32) {
    %c0_i32 = arith.constant 0 : i32
    %c0_i32_0 = arith.constant 0 : i32
    %c0_i32_1 = arith.constant 0 : i32
    %c0_i32_2 = arith.constant 0 : i32
    return %c0_i32, %c0_i32_0, %c0_i32_1 : i32, i32, i32
  }
  func.func @transform_1(%arg0: i32) -> (i32, i32) {
    %c0_i32 = arith.constant 0 : i32
    %c0_i32_0 = arith.constant 0 : i32
    %c0_i32_1 = arith.constant 0 : i32
    return %c0_i32, %c0_i32_0 : i32, i32
  }
  func.func @transform_2(%arg0: i32) -> (i32, i32) {
    %c0_i32 = arith.constant 0 : i32
    %c0_i32_0 = arith.constant 0 : i32
    %c0_i32_1 = arith.constant 0 : i32
    return %c0_i32, %c0_i32_0 : i32, i32
  }
  func.func @transform_3(%arg0: i32) -> (i32, i32) {
    %c0_i32 = arith.constant 0 : i32
    %c0_i32_0 = arith.constant 0 : i32
    %c0_i32_1 = arith.constant 0 : i32
    return %c0_i32, %c0_i32_0 : i32, i32
  }
  func.func @transform_4(%arg0: i32) -> (i32, i32) {
    %c0_i32 = arith.constant 0 : i32
    %c0_i32_0 = arith.constant 0 : i32
    %c0_i32_1 = arith.constant 0 : i32
    return %c0_i32, %c0_i32_0 : i32, i32
  }
  func.func @transform_5(%arg0: i32) -> (i32, i32) {
    %c0_i32 = arith.constant 0 : i32
    %c0_i32_0 = arith.constant 0 : i32
    %c0_i32_1 = arith.constant 0 : i32
    return %c0_i32, %c0_i32_0 : i32, i32
  }
  func.func @transform_6(%arg0: i32) -> (i32, i32) {
    %c0_i32 = arith.constant 0 : i32
    %c0_i32_0 = arith.constant 0 : i32
    %c0_i32_1 = arith.constant 0 : i32
    return %c0_i32, %c0_i32_0 : i32, i32
  }
  func.func @transform_7(%arg0: i32) -> (i32, i32) {
    %c0_i32 = arith.constant 0 : i32
    %c0_i32_0 = arith.constant 0 : i32
    %c0_i32_1 = arith.constant 0 : i32
    return %c0_i32, %c0_i32_0 : i32, i32
  }
  func.func @transform_8(%arg0: i32) -> (i32, i32) {
    %c0_i32 = arith.constant 0 : i32
    %c0_i32_0 = arith.constant 0 : i32
    %c0_i32_1 = arith.constant 0 : i32
    return %c0_i32, %c0_i32_0 : i32, i32
  }
  func.func @transform_9(%arg0: i32) -> (i32, i32) {
    %c0_i32 = arith.constant 0 : i32
    %c0_i32_0 = arith.constant 0 : i32
    %c0_i32_1 = arith.constant 0 : i32
    return %c0_i32, %c0_i32_0 : i32, i32
  }
  func.func @transform_10(%arg0: i32) -> (i32, i32) {
    %c0_i32 = arith.constant 0 : i32
    %c0_i32_0 = arith.constant 0 : i32
    %c0_i32_1 = arith.constant 0 : i32
    return %c0_i32, %c0_i32_0 : i32, i32
  }
  func.func @transform_11(%arg0: i32) -> (i32, i32) {
    %c0_i32 = arith.constant 0 : i32
    %c0_i32_0 = arith.constant 0 : i32
    %c0_i32_1 = arith.constant 0 : i32
    return %c0_i32, %c0_i32_0 : i32, i32
  }
  func.func @transform_12(%arg0: i32) -> (i32, i32) {
    %c0_i32 = arith.constant 0 : i32
    %c0_i32_0 = arith.constant 0 : i32
    %c0_i32_1 = arith.constant 0 : i32
    return %c0_i32, %c0_i32_0 : i32, i32
  }
  func.func @transform_13(%arg0: i32) -> (i32, i32) {
    %c0_i32 = arith.constant 0 : i32
    %c0_i32_0 = arith.constant 0 : i32
    %c0_i32_1 = arith.constant 0 : i32
    return %c0_i32, %c0_i32_0 : i32, i32
  }
  func.func @transform_14(%arg0: i32) -> (i32, i32) {
    %c0_i32 = arith.constant 0 : i32
    %c0_i32_0 = arith.constant 0 : i32
    %c0_i32_1 = arith.constant 0 : i32
    return %c0_i32, %c0_i32_0 : i32, i32
  }
  func.func @transform_15(%arg0: i32) -> (i32, i32) {
    %c0_i32 = arith.constant 0 : i32
    %c0_i32_0 = arith.constant 0 : i32
    %c0_i32_1 = arith.constant 0 : i32
    return %c0_i32, %c0_i32_0 : i32, i32
  }
  func.func @transform_16(%arg0: i32) -> (i32, i32) {
    %c0_i32 = arith.constant 0 : i32
    %c0_i32_0 = arith.constant 0 : i32
    %c0_i32_1 = arith.constant 0 : i32
    return %c0_i32, %c0_i32_0 : i32, i32
  }
  func.func @transform_17(%arg0: i32) -> (i32, i32) {
    %c0_i32 = arith.constant 0 : i32
    %c0_i32_0 = arith.constant 0 : i32
    %c0_i32_1 = arith.constant 0 : i32
    return %c0_i32, %c0_i32_0 : i32, i32
  }
  func.func @transform_18(%arg0: i32) -> (i32, i32) {
    %c0_i32 = arith.constant 0 : i32
    %c0_i32_0 = arith.constant 0 : i32
    %c0_i32_1 = arith.constant 0 : i32
    return %c0_i32, %c0_i32_0 : i32, i32
  }
  func.func @transform_19(%arg0: i32) -> (i32, i32) {
    %c0_i32 = arith.constant 0 : i32
    %c0_i32_0 = arith.constant 0 : i32
    %c0_i32_1 = arith.constant 0 : i32
    return %c0_i32, %c0_i32_0 : i32, i32
  }
  func.func @transform_20(%arg0: i32) -> (i32, i32) {
    %c0_i32 = arith.constant 0 : i32
    %c0_i32_0 = arith.constant 0 : i32
    %c0_i32_1 = arith.constant 0 : i32
    return %c0_i32, %c0_i32_0 : i32, i32
  }
  func.func @transform_21(%arg0: i32) -> (i32, i32) {
    %c0_i32 = arith.constant 0 : i32
    %c0_i32_0 = arith.constant 0 : i32
    %c0_i32_1 = arith.constant 0 : i32
    return %c0_i32, %c0_i32_0 : i32, i32
  }
  func.func @transform_22(%arg0: i32) -> (i32, i32) {
    %c0_i32 = arith.constant 0 : i32
    %c0_i32_0 = arith.constant 0 : i32
    %c0_i32_1 = arith.constant 0 : i32
    return %c0_i32, %c0_i32_0 : i32, i32
  }
  func.func @transform_23(%arg0: i32) -> (i32, i32) {
    %c0_i32 = arith.constant 0 : i32
    %c0_i32_0 = arith.constant 0 : i32
    %c0_i32_1 = arith.constant 0 : i32
    return %c0_i32, %c0_i32_0 : i32, i32
  }
  func.func @transform_24(%arg0: i32) -> (i32, i32) {
    %c0_i32 = arith.constant 0 : i32
    %c0_i32_0 = arith.constant 0 : i32
    %c0_i32_1 = arith.constant 0 : i32
    return %c0_i32, %c0_i32_0 : i32, i32
  }
  func.func @transform_25(%arg0: i32) -> (i32, i32, i32) {
    %c0_i32 = arith.constant 0 : i32
    %c0_i32_0 = arith.constant 0 : i32
    %c0_i32_1 = arith.constant 0 : i32
    return %arg0, %c0_i32, %c0_i32_0 : i32, i32, i32
  }
  func.func @transform_26(%arg0: i32) -> (i32, i32, i32) {
    %c0_i32 = arith.constant 0 : i32
    %c0_i32_0 = arith.constant 0 : i32
    %c0_i32_1 = arith.constant 0 : i32
    return %arg0, %c0_i32, %c0_i32_0 : i32, i32, i32
  }
  func.func @transform_27(%arg0: i32) -> (i32, i32, i32) {
    %c0_i32 = arith.constant 0 : i32
    %c0_i32_0 = arith.constant 0 : i32
    %c0_i32_1 = arith.constant 0 : i32
    return %arg0, %c0_i32, %c0_i32_0 : i32, i32, i32
  }
}

</mosaic_0001>

<llo_original>
// kernel: squeeze.3
$region0: #{squeeze.3}
  %s0 = inlined_call_operand.vmem [shape: f32[16], index: 0, kind: input, shape index: {}]
  %s1 = inlined_call_operand.vmem [shape: f32[2,8], index: 1, kind: output, shape index: {}]
  $region1: #{squeeze.3} parent=0
    #allocation0 [shape = 'u8[4096]{0}', space=vmem, size = 0x1000, scoped, tag = 'scoped mem for output reshape']
    #allocation1 [shape = 'u8[4096]{0}', space=vmem, size = 0x1000, scoped, tag = 'scoped mem for input reshape']
    %s3 = sshllo.u32 0, 1
    %v4 = vld [vmem:[%s0] sm:%s3]
    %5 = vst [vmem:[#allocation1] sm:%s3] %v4
    %v6 = vld [vmem:[#allocation1] sm:$0x1]
    %vm7 = vcmask 64512
    %8 = vst.msk [vmem:[#allocation0] sm:$0x1] %vm7, %v6
    %v9 = vld [vmem:[#allocation1] sm:$0x1]
    %10 = vrot.lane.b32.xlu0 %v9, 120
    %v11 = vpop.permute.xlu0 %10
    %vm12 = vcmask 64512
    %s13 = scalar_lea.vmem [#allocation0], 1
    %14 = vst.msk [vmem:[%s13] sm:$0x1] %vm12, %v11
    %s16 = sshllo.u32 0, 2
    %v18 = vld [vmem:[#allocation0] sm:%s16]
    %s19 = sshllo.u32 0, 2
    %20 = vst [vmem:[%s1] sm:%s19] %v18

// kernel: neg.1
$region0: #{neg.1}
  #allocation0 [shape = 's32[1]{0}', space=sflag, size = 0x4, scoped, tag = 'scoped memory for neg.1']
  %s0 = inlined_call_operand.vmem [shape: f32[2,8], index: 0, kind: input, shape index: {}]
  %s1 = inlined_call_operand.vmem [shape: f32[2,8], index: 1, kind: output, shape index: {}]
  %v2 = vld [vmem:[%s0] sm:$0xff]
  %3 = xla_tuple %v2
  %4 = xla_tuple %3
  %v5 = vxor.u32 %v2, 2147483648
  %6 = xla_tuple %v5
  %7 = vst [vmem:[%s1] sm:$0xff] %v5

// kernel: deeptrader_forward.1
$region0: #{deeptrader_forward.1}
  #allocation0 [shape = 'u32[]', space=smem, size = 0x4, offset = 0x4, fixed_abs, tag = 'smem constant byte address 0x4 - core index']
  #allocation1 [shape = 'u32[144,128]{1,0:T(1,128)}', space=vmem, size = 0x12000, scoped, tag = 'internal scratch']
  #allocation2 [shape = 'f32[18,16,4]{2,1,0:T(8,128)}', space=vmem, size = 0x24000, scoped, tag = 'scratch operand']
  #allocation3 [shape = 'f32[32,16,32]{2,1,0:T(8,128)}', space=vmem, size = 0x40000, scoped, tag = 'scratch operand']
  #allocation4 [shape = 'f32[16,8,32]{2,1,0:T(8,128)}', space=vmem, size = 0x10000, scoped, tag = 'scratch operand']
  #allocation5 [shape = 'f32[1,1]{1,0:T(1,128)S(1)}', space=vmem, size = 0x200, scoped, tag = 'scoped memory for deeptrader_forward.1']
  #allocation6 [shape = 'f32[1,1]{1,0:T(1,128)S(1)}', space=vmem, size = 0x200, scoped, tag = 'scoped memory for deeptrader_forward.1']
  #allocation7 [shape = 'f32[1,1]{1,0:T(1,128)S(1)}', space=vmem, size = 0x200, scoped, tag = 'scoped memory for deeptrader_forward.1']
  %s0 = inlined_call_operand.vmem [shape: f32[16,16,4], index: 0, kind: input, shape index: {}]
  %s1 = inlined_call_operand.vmem [shape: bf16[12,32], index: 1, kind: input, shape index: {}]
  %s2 = inlined_call_operand.vmem [shape: f32[1,32], index: 2, kind: input, shape index: {}]
  %s3 = inlined_call_operand.vmem [shape: bf16[96,32], index: 3, kind: input, shape index: {}]
  %s4 = inlined_call_operand.vmem [shape: f32[1,32], index: 4, kind: input, shape index: {}]
  %s5 = inlined_call_operand.vmem [shape: bf16[96,32], index: 5, kind: input, shape index: {}]
  %s6 = inlined_call_operand.vmem [shape: f32[1,32], index: 6, kind: input, shape index: {}]
  %s7 = inlined_call_operand.vmem [shape: bf16[96,32], index: 7, kind: input, shape index: {}]
  %s8 = inlined_call_operand.vmem [shape: f32[1,32], index: 8, kind: input, shape index: {}]
  %s9 = inlined_call_operand.vmem [shape: bf16[8,8], index: 9, kind: input, shape index: {}]
  %s10 = inlined_call_operand.vmem [shape: bf16[32,32], index: 10, kind: input, shape index: {}]
  %s11 = inlined_call_operand.vmem [shape: f32[1,32], index: 11, kind: input, shape index: {}]
  %s12 = inlined_call_operand.vmem [shape: f32[1,32], index: 12, kind: input, shape index: {}]
  %s13 = inlined_call_operand.<no memory space> [shape: f32[1,1], index: 13, kind: input, shape index: {}]
  %s14 = inlined_call_operand.vmem [shape: f32[128,5], index: 14, kind: input, shape index: {}]
  %s15 = inlined_call_operand.vmem [shape: bf16[5,128], index: 15, kind: input, shape index: {}]
  %s16 = inlined_call_operand.vmem [shape: bf16[32,128], index: 16, kind: input, shape index: {}]
  %s17 = inlined_call_operand.vmem [shape: f32[1,128], index: 17, kind: input, shape index: {}]
  %s18 = inlined_call_operand.vmem [shape: bf16[32,128], index: 18, kind: input, shape index: {}]
  %s19 = inlined_call_operand.vmem [shape: bf16[32,128], index: 19, kind: input, shape index: {}]
  %s20 = inlined_call_operand.vmem [shape: f32[1,128], index: 20, kind: input, shape index: {}]
  %s21 = inlined_call_operand.vmem [shape: f32[1,32], index: 21, kind: input, shape index: {}]
  %s22 = inlined_call_operand.<no memory space> [shape: f32[1,1], index: 22, kind: input, shape index: {}]
  %s23 = inlined_call_operand.vmem [shape: f32[1,32], index: 23, kind: input, shape index: {}]
  %s24 = inlined_call_operand.<no memory space> [shape: f32[1,1], index: 24, kind: input, shape index: {}]
  %s25 = inlined_call_operand.vmem [shape: f32[2,16,1], index: 25, kind: output, shape index: {0}]
  %s26 = inlined_call_operand.vmem [shape: f32[2,2,1], index: 26, kind: output, shape index: {1}]
  %s27 = inlined_call_operand.vmem [shape: f32[2,2,1], index: 27, kind: output, shape index: {2}]
  %28 = xla_tuple %s25, %s26, %s27
  %s29 = sld [smem:[#allocation0]]
  $region157: #{deeptrader_forward.1} parent=0
    _
  %s31 = ssub.s32 1, %s29
  %s32 = scalar_select 0, %s31, %s29
  %v33 = vstv %s13
  %34 = vst [vmem:[#allocation5] sm:$0x1] %v33
  %v35 = vstv %s22
  %36 = vst [vmem:[#allocation6] sm:$0x1] %v35
  %v37 = vstv %s24
  %38 = vst [vmem:[#allocation7] sm:$0x1] %v37
  loop: start=0, step=1, limit=4
  $region2: #{deeptrader_forward.1} parent=0 // loop_pre_header
    _
  $region3: #{deeptrader_forward.1} parent=0 // loop_header
    %s40 = sphi 0, %s44
    %p41 = scmp.ge.s32.totalorder %s40, 4
    %s48 = sphi 0, %s48
    %s50 = sphi 0, %s48
    %s51 = sphi 0, %s50
    %s65 = sphi 0, %s51
    %s69 = sphi 0, %s69
    %s71 = sphi 0, %s69
    %s72 = sphi 0, %s71
    %s86 = sphi 0, %s72
    %s90 = sphi 0, %s90
    %s92 = sphi 0, %s90
    %s93 = sphi 0, %s92
    %s107 = sphi 0, %s93
    %s111 = sphi 0, %s111
    %s113 = sphi 0, %s111
    %s114 = sphi 0, %s113
    %s128 = sphi 0, %s114
    %s132 = sphi 0, %s132
    %s134 = sphi 0, %s132
    %s135 = sphi 0, %s134
    %s149 = sphi 0, %s135
    %s153 = sphi 0, %s153
    %s155 = sphi 0, %s153
    %s156 = sphi 0, %s155
    %s170 = sphi 0, %s156
    %s174 = sphi 0, %s174
    %s176 = sphi 0, %s174
    %s177 = sphi 0, %s176
    %s191 = sphi 0, %s177
    %s195 = sphi 0, %s195
    %s197 = sphi 0, %s195
    %s198 = sphi 0, %s197
    %s212 = sphi 0, %s198
    %s216 = sphi 0, %s216
    %s218 = sphi 0, %s216
    %s219 = sphi 0, %s218
    %s233 = sphi 0, %s219
    %s237 = sphi 0, %s237
    %s239 = sphi 0, %s237
    %s240 = sphi 0, %s239
    %s254 = sphi 0, %s240
    %s258 = sphi 0, %s258
    %s260 = sphi 0, %s258
    %s261 = sphi 0, %s260
    %s275 = sphi 0, %s261
    %s279 = sphi 0, %s279
    %s281 = sphi 0, %s279
    %s282 = sphi 0, %s281
    %s296 = sphi 0, %s282
    %s300 = sphi 0, %s300
    %s302 = sphi 0, %s300
    %s303 = sphi 0, %s302
    %s317 = sphi 0, %s303
    %s321 = sphi 0, %s321
    %s323 = sphi 0, %s321
    %s324 = sphi 0, %s323
    %s338 = sphi 0, %s324
    %s342 = sphi 0, %s342
    %s344 = sphi 0, %s342
    %s345 = sphi 0, %s344
    %s359 = sphi 0, %s345
    %s363 = sphi 0, %s363
    %s365 = sphi 0, %s363
    %s366 = sphi 0, %s365
    %s380 = sphi 0, %s366
    %s384 = sphi 0, %s384
    %s386 = sphi 0, %s384
    %s387 = sphi 0, %s386
    %s401 = sphi 0, %s387
    %s405 = sphi 0, %s405
    %s407 = sphi 0, %s405
    %s408 = sphi 0, %s407
    %s422 = sphi 0, %s408
    %s426 = sphi 0, %s426
    %s428 = sphi 0, %s426
    %s429 = sphi 0, %s428
    %s443 = sphi 0, %s429
    %s447 = sphi 0, %s447
    %s449 = sphi 0, %s447
    %s450 = sphi 0, %s449
    %s464 = sphi 0, %s450
    %s468 = sphi 0, %s468
    %s470 = sphi 0, %s468
    %s471 = sphi 0, %s470
    %s485 = sphi 0, %s471
    %s489 = sphi 0, %s489
    %s491 = sphi 0, %s489
    %s492 = sphi 0, %s491
    %s506 = sphi 0, %s492
    %s510 = sphi 0, %s510
    %s512 = sphi 0, %s510
    %s513 = sphi 0, %s512
    %s527 = sphi 0, %s513
    %s531 = sphi 0, %s531
    %s533 = sphi 0, %s531
    %s534 = sphi 0, %s533
    %s548 = sphi 0, %s534
    %s552 = sphi 0, %s552
    %s554 = sphi 0, %s552
    %s555 = sphi 0, %s554
    %s569 = sphi 0, %s555
    %s575 = sphi 0, %s577
    %s578 = sphi 0, %s575
    %s579 = sphi 0, %s578
    %s595 = sphi 0, %s579
    %s601 = sphi 0, %s603
    %s604 = sphi 0, %s601
    %s605 = sphi 0, %s604
    %s621 = sphi 0, %s605
    %s627 = sphi 0, %s629
    %s630 = sphi 0, %s627
    %s631 = sphi 0, %s630
    %s647 = sphi 0, %s631
  $region4: #{deeptrader_forward.1} parent=0 // loop_header_branch
    %43 = sbr.rel (%p41) target = $region8
  $region5: #{deeptrader_forward.1} parent=0 // loop_body
    %s45 = ssub.s32 %s40, 1
    %s46 = ssub.s32 %s40, 2
    %s47 = sadd.s32 %s40, 1
    %s49 = sadd.s32 %s48, 1
    %p52 = scmp.eq.s32.totalorder %s40, 1
    %p53 = scmp.ne.s32.totalorder %s48, %s50
    %p54 = scmp.eq.s32.totalorder %s40, 0
    %p55 = por %p53, %p54
    %p56 = scmp.ne.s32.totalorder %s48, %s50
    %p57 = scmp.eq.s32.totalorder %s45, 1
    %p58 = por %p56, %p57
    %p59 = scmp.ne.s32.totalorder %s50, %s51
    %p60 = scmp.eq.s32.totalorder %s45, 0
    %p61 = por %p59, %p60
    %p62 = scmp.ne.s32.totalorder %s50, %s51
    %p63 = scmp.eq.s32.totalorder %s46, 1
    %p64 = por %p62, %p63
    %p66 = scmp.ne.s32.totalorder %s51, %s65
    %p67 = scmp.eq.s32.totalorder %s46, 0
    %p68 = por %p66, %p67
    %s70 = sadd.s32 %s69, 1
    %p73 = scmp.eq.s32.totalorder %s40, 1
    %p74 = scmp.ne.s32.totalorder %s69, %s71
    %p75 = scmp.eq.s32.totalorder %s40, 0
    %p76 = por %p74, %p75
    %p77 = scmp.ne.s32.totalorder %s69, %s71
    %p78 = scmp.eq.s32.totalorder %s45, 1
    %p79 = por %p77, %p78
    %p80 = scmp.ne.s32.totalorder %s71, %s72
    %p81 = scmp.eq.s32.totalorder %s45, 0
    %p82 = por %p80, %p81
    %p83 = scmp.ne.s32.totalorder %s71, %s72
    %p84 = scmp.eq.s32.totalorder %s46, 1
    %p85 = por %p83, %p84
    %p87 = scmp.ne.s32.totalorder %s72, %s86
    %p88 = scmp.eq.s32.totalorder %s46, 0
    %p89 = por %p87, %p88
    %s91 = sadd.s32 %s90, 1
    %p94 = scmp.eq.s32.totalorder %s40, 1
    %p95 = scmp.ne.s32.totalorder %s90, %s92
    %p96 = scmp.eq.s32.totalorder %s40, 0
    %p97 = por %p95, %p96
    %p98 = scmp.ne.s32.totalorder %s90, %s92
    %p99 = scmp.eq.s32.totalorder %s45, 1
    %p100 = por %p98, %p99
    %p101 = scmp.ne.s32.totalorder %s92, %s93
    %p102 = scmp.eq.s32.totalorder %s45, 0
    %p103 = por %p101, %p102
    %p104 = scmp.ne.s32.totalorder %s92, %s93
    %p105 = scmp.eq.s32.totalorder %s46, 1
    %p106 = por %p104, %p105
    %p108 = scmp.ne.s32.totalorder %s93, %s107
    %p109 = scmp.eq.s32.totalorder %s46, 0
    %p110 = por %p108, %p109
    %s112 = sadd.s32 %s111, 1
    %p115 = scmp.eq.s32.totalorder %s40, 1
    %p116 = scmp.ne.s32.totalorder %s111, %s113
    %p117 = scmp.eq.s32.totalorder %s40, 0
    %p118 = por %p116, %p117
    %p119 = scmp.ne.s32.totalorder %s111, %s113
    %p120 = scmp.eq.s32.totalorder %s45, 1
    %p121 = por %p119, %p120
    %p122 = scmp.ne.s32.totalorder %s113, %s114
    %p123 = scmp.eq.s32.totalorder %s45, 0
    %p124 = por %p122, %p123
    %p125 = scmp.ne.s32.totalorder %s113, %s114
    %p126 = scmp.eq.s32.totalorder %s46, 1
    %p127 = por %p125, %p126
    %p129 = scmp.ne.s32.totalorder %s114, %s128
    %p130 = scmp.eq.s32.totalorder %s46, 0
    %p131 = por %p129, %p130
    %s133 = sadd.s32 %s132, 1
    %p136 = scmp.eq.s32.totalorder %s40, 1
    %p137 = scmp.ne.s32.totalorder %s132, %s134
    %p138 = scmp.eq.s32.totalorder %s40, 0
    %p139 = por %p137, %p138
    %p140 = scmp.ne.s32.totalorder %s132, %s134
    %p141 = scmp.eq.s32.totalorder %s45, 1
    %p142 = por %p140, %p141
    %p143 = scmp.ne.s32.totalorder %s134, %s135
    %p144 = scmp.eq.s32.totalorder %s45, 0
    %p145 = por %p143, %p144
    %p146 = scmp.ne.s32.totalorder %s134, %s135
    %p147 = scmp.eq.s32.totalorder %s46, 1
    %p148 = por %p146, %p147
    %p150 = scmp.ne.s32.totalorder %s135, %s149
    %p151 = scmp.eq.s32.totalorder %s46, 0
    %p152 = por %p150, %p151
    %s154 = sadd.s32 %s153, 1
    %p157 = scmp.eq.s32.totalorder %s40, 1
    %p158 = scmp.ne.s32.totalorder %s153, %s155
    %p159 = scmp.eq.s32.totalorder %s40, 0
    %p160 = por %p158, %p159
    %p161 = scmp.ne.s32.totalorder %s153, %s155
    %p162 = scmp.eq.s32.totalorder %s45, 1
    %p163 = por %p161, %p162
    %p164 = scmp.ne.s32.totalorder %s155, %s156
    %p165 = scmp.eq.s32.totalorder %s45, 0
    %p166 = por %p164, %p165
    %p167 = scmp.ne.s32.totalorder %s155, %s156
    %p168 = scmp.eq.s32.totalorder %s46, 1
    %p169 = por %p167, %p168
    %p171 = scmp.ne.s32.totalorder %s156, %s170
    %p172 = scmp.eq.s32.totalorder %s46, 0
    %p173 = por %p171, %p172
    %s175 = sadd.s32 %s174, 1
    %p178 = scmp.eq.s32.totalorder %s40, 1
    %p179 = scmp.ne.s32.totalorder %s174, %s176
    %p180 = scmp.eq.s32.totalorder %s40, 0
    %p181 = por %p179, %p180
    %p182 = scmp.ne.s32.totalorder %s174, %s176
    %p183 = scmp.eq.s32.totalorder %s45, 1
    %p184 = por %p182, %p183
    %p185 = scmp.ne.s32.totalorder %s176, %s177
    %p186 = scmp.eq.s32.totalorder %s45, 0
    %p187 = por %p185, %p186
    %p188 = scmp.ne.s32.totalorder %s176, %s177
    %p189 = scmp.eq.s32.totalorder %s46, 1
    %p190 = por %p188, %p189
    %p192 = scmp.ne.s32.totalorder %s177, %s191
    %p193 = scmp.eq.s32.totalorder %s46, 0
    %p194 = por %p192, %p193
    %s196 = sadd.s32 %s195, 1
    %p199 = scmp.eq.s32.totalorder %s40, 1
    %p200 = scmp.ne.s32.totalorder %s195, %s197
    %p201 = scmp.eq.s32.totalorder %s40, 0
    %p202 = por %p200, %p201
    %p203 = scmp.ne.s32.totalorder %s195, %s197
    %p204 = scmp.eq.s32.totalorder %s45, 1
    %p205 = por %p203, %p204
    %p206 = scmp.ne.s32.totalorder %s197, %s198
    %p207 = scmp.eq.s32.totalorder %s45, 0
    %p208 = por %p206, %p207
    %p209 = scmp.ne.s32.totalorder %s197, %s198
    %p210 = scmp.eq.s32.totalorder %s46, 1
    %p211 = por %p209, %p210
    %p213 = scmp.ne.s32.totalorder %s198, %s212
    %p214 = scmp.eq.s32.totalorder %s46, 0
    %p215 = por %p213, %p214
    %s217 = sadd.s32 %s216, 1
    %p220 = scmp.eq.s32.totalorder %s40, 1
    %p221 = scmp.ne.s32.totalorder %s216, %s218
    %p222 = scmp.eq.s32.totalorder %s40, 0
    %p223 = por %p221, %p222
    %p224 = scmp.ne.s32.totalorder %s216, %s218
    %p225 = scmp.eq.s32.totalorder %s45, 1
    %p226 = por %p224, %p225
    %p227 = scmp.ne.s32.totalorder %s218, %s219
    %p228 = scmp.eq.s32.totalorder %s45, 0
    %p229 = por %p227, %p228
    %p230 = scmp.ne.s32.totalorder %s218, %s219
    %p231 = scmp.eq.s32.totalorder %s46, 1
    %p232 = por %p230, %p231
    %p234 = scmp.ne.s32.totalorder %s219, %s233
    %p235 = scmp.eq.s32.totalorder %s46, 0
    %p236 = por %p234, %p235
    %s238 = sadd.s32 %s237, 1
    %p241 = scmp.eq.s32.totalorder %s40, 1
    %p242 = scmp.ne.s32.totalorder %s237, %s239
    %p243 = scmp.eq.s32.totalorder %s40, 0
    %p244 = por %p242, %p243
    %p245 = scmp.ne.s32.totalorder %s237, %s239
    %p246 = scmp.eq.s32.totalorder %s45, 1
    %p247 = por %p245, %p246
    %p248 = scmp.ne.s32.totalorder %s239, %s240
    %p249 = scmp.eq.s32.totalorder %s45, 0
    %p250 = por %p248, %p249
    %p251 = scmp.ne.s32.totalorder %s239, %s240
    %p252 = scmp.eq.s32.totalorder %s46, 1
    %p253 = por %p251, %p252
    %p255 = scmp.ne.s32.totalorder %s240, %s254
    %p256 = scmp.eq.s32.totalorder %s46, 0
    %p257 = por %p255, %p256
    %s259 = sadd.s32 %s258, 1
    %p262 = scmp.eq.s32.totalorder %s40, 1
    %p263 = scmp.ne.s32.totalorder %s258, %s260
    %p264 = scmp.eq.s32.totalorder %s40, 0
    %p265 = por %p263, %p264
    %p266 = scmp.ne.s32.totalorder %s258, %s260
    %p267 = scmp.eq.s32.totalorder %s45, 1
    %p268 = por %p266, %p267
    %p269 = scmp.ne.s32.totalorder %s260, %s261
    %p270 = scmp.eq.s32.totalorder %s45, 0
    %p271 = por %p269, %p270
    %p272 = scmp.ne.s32.totalorder %s260, %s261
    %p273 = scmp.eq.s32.totalorder %s46, 1
    %p274 = por %p272, %p273
    %p276 = scmp.ne.s32.totalorder %s261, %s275
    %p277 = scmp.eq.s32.totalorder %s46, 0
    %p278 = por %p276, %p277
    %s280 = sadd.s32 %s279, 1
    %p283 = scmp.eq.s32.totalorder %s40, 1
    %p284 = scmp.ne.s32.totalorder %s279, %s281
    %p285 = scmp.eq.s32.totalorder %s40, 0
    %p286 = por %p284, %p285
    %p287 = scmp.ne.s32.totalorder %s279, %s281
    %p288 = scmp.eq.s32.totalorder %s45, 1
    %p289 = por %p287, %p288
    %p290 = scmp.ne.s32.totalorder %s281, %s282
    %p291 = scmp.eq.s32.totalorder %s45, 0
    %p292 = por %p290, %p291
    %p293 = scmp.ne.s32.totalorder %s281, %s282
    %p294 = scmp.eq.s32.totalorder %s46, 1
    %p295 = por %p293, %p294
    %p297 = scmp.ne.s32.totalorder %s282, %s296
    %p298 = scmp.eq.s32.totalorder %s46, 0
    %p299 = por %p297, %p298
    %s301 = sadd.s32 %s300, 1
    %p304 = scmp.eq.s32.totalorder %s40, 1
    %p305 = scmp.ne.s32.totalorder %s300, %s302
    %p306 = scmp.eq.s32.totalorder %s40, 0
    %p307 = por %p305, %p306
    %p308 = scmp.ne.s32.totalorder %s300, %s302
    %p309 = scmp.eq.s32.totalorder %s45, 1
    %p310 = por %p308, %p309
    %p311 = scmp.ne.s32.totalorder %s302, %s303
    %p312 = scmp.eq.s32.totalorder %s45, 0
    %p313 = por %p311, %p312
    %p314 = scmp.ne.s32.totalorder %s302, %s303
    %p315 = scmp.eq.s32.totalorder %s46, 1
    %p316 = por %p314, %p315
    %p318 = scmp.ne.s32.totalorder %s303, %s317
    %p319 = scmp.eq.s32.totalorder %s46, 0
    %p320 = por %p318, %p319
    %s322 = sadd.s32 %s321, 1
    %p325 = scmp.eq.s32.totalorder %s40, 1
    %p326 = scmp.ne.s32.totalorder %s321, %s323
    %p327 = scmp.eq.s32.totalorder %s40, 0
    %p328 = por %p326, %p327
    %p329 = scmp.ne.s32.totalorder %s321, %s323
    %p330 = scmp.eq.s32.totalorder %s45, 1
    %p331 = por %p329, %p330
    %p332 = scmp.ne.s32.totalorder %s323, %s324
    %p333 = scmp.eq.s32.totalorder %s45, 0
    %p334 = por %p332, %p333
    %p335 = scmp.ne.s32.totalorder %s323, %s324
    %p336 = scmp.eq.s32.totalorder %s46, 1
    %p337 = por %p335, %p336
    %p339 = scmp.ne.s32.totalorder %s324, %s338
    %p340 = scmp.eq.s32.totalorder %s46, 0
    %p341 = por %p339, %p340
    %s343 = sadd.s32 %s342, 1
    %p346 = scmp.eq.s32.totalorder %s40, 1
    %p347 = scmp.ne.s32.totalorder %s342, %s344
    %p348 = scmp.eq.s32.totalorder %s40, 0
    %p349 = por %p347, %p348
    %p350 = scmp.ne.s32.totalorder %s342, %s344
    %p351 = scmp.eq.s32.totalorder %s45, 1
    %p352 = por %p350, %p351
    %p353 = scmp.ne.s32.totalorder %s344, %s345
    %p354 = scmp.eq.s32.totalorder %s45, 0
    %p355 = por %p353, %p354
    %p356 = scmp.ne.s32.totalorder %s344, %s345
    %p357 = scmp.eq.s32.totalorder %s46, 1
    %p358 = por %p356, %p357
    %p360 = scmp.ne.s32.totalorder %s345, %s359
    %p361 = scmp.eq.s32.totalorder %s46, 0
    %p362 = por %p360, %p361
    %s364 = sadd.s32 %s363, 1
    %p367 = scmp.eq.s32.totalorder %s40, 1
    %p368 = scmp.ne.s32.totalorder %s363, %s365
    %p369 = scmp.eq.s32.totalorder %s40, 0
    %p370 = por %p368, %p369
    %p371 = scmp.ne.s32.totalorder %s363, %s365
    %p372 = scmp.eq.s32.totalorder %s45, 1
    %p373 = por %p371, %p372
    %p374 = scmp.ne.s32.totalorder %s365, %s366
    %p375 = scmp.eq.s32.totalorder %s45, 0
    %p376 = por %p374, %p375
    %p377 = scmp.ne.s32.totalorder %s365, %s366
    %p378 = scmp.eq.s32.totalorder %s46, 1
    %p379 = por %p377, %p378
    %p381 = scmp.ne.s32.totalorder %s366, %s380
    %p382 = scmp.eq.s32.totalorder %s46, 0
    %p383 = por %p381, %p382
    %s385 = sadd.s32 %s384, 1
    %p388 = scmp.eq.s32.totalorder %s40, 1
    %p389 = scmp.ne.s32.totalorder %s384, %s386
    %p390 = scmp.eq.s32.totalorder %s40, 0
    %p391 = por %p389, %p390
    %p392 = scmp.ne.s32.totalorder %s384, %s386
    %p393 = scmp.eq.s32.totalorder %s45, 1
    %p394 = por %p392, %p393
    %p395 = scmp.ne.s32.totalorder %s386, %s387
    %p396 = scmp.eq.s32.totalorder %s45, 0
    %p397 = por %p395, %p396
    %p398 = scmp.ne.s32.totalorder %s386, %s387
    %p399 = scmp.eq.s32.totalorder %s46, 1
    %p400 = por %p398, %p399
    %p402 = scmp.ne.s32.totalorder %s387, %s401
    %p403 = scmp.eq.s32.totalorder %s46, 0
    %p404 = por %p402, %p403
    %s406 = sadd.s32 %s405, 1
    %p409 = scmp.eq.s32.totalorder %s40, 1
    %p410 = scmp.ne.s32.totalorder %s405, %s407
    %p411 = scmp.eq.s32.totalorder %s40, 0
    %p412 = por %p410, %p411
    %p413 = scmp.ne.s32.totalorder %s405, %s407
    %p414 = scmp.eq.s32.totalorder %s45, 1
    %p415 = por %p413, %p414
    %p416 = scmp.ne.s32.totalorder %s407, %s408
    %p417 = scmp.eq.s32.totalorder %s45, 0
    %p418 = por %p416, %p417
    %p419 = scmp.ne.s32.totalorder %s407, %s408
    %p420 = scmp.eq.s32.totalorder %s46, 1
    %p421 = por %p419, %p420
    %p423 = scmp.ne.s32.totalorder %s408, %s422
    %p424 = scmp.eq.s32.totalorder %s46, 0
    %p425 = por %p423, %p424
    %s427 = sadd.s32 %s426, 1
    %p430 = scmp.eq.s32.totalorder %s40, 1
    %p431 = scmp.ne.s32.totalorder %s426, %s428
    %p432 = scmp.eq.s32.totalorder %s40, 0
    %p433 = por %p431, %p432
    %p434 = scmp.ne.s32.totalorder %s426, %s428
    %p435 = scmp.eq.s32.totalorder %s45, 1
    %p436 = por %p434, %p435
    %p437 = scmp.ne.s32.totalorder %s428, %s429
    %p438 = scmp.eq.s32.totalorder %s45, 0
    %p439 = por %p437, %p438
    %p440 = scmp.ne.s32.totalorder %s428, %s429
    %p441 = scmp.eq.s32.totalorder %s46, 1
    %p442 = por %p440, %p441
    %p444 = scmp.ne.s32.totalorder %s429, %s443
    %p445 = scmp.eq.s32.totalorder %s46, 0
    %p446 = por %p444, %p445
    %s448 = sadd.s32 %s447, 1
    %p451 = scmp.eq.s32.totalorder %s40, 1
    %p452 = scmp.ne.s32.totalorder %s447, %s449
    %p453 = scmp.eq.s32.totalorder %s40, 0
    %p454 = por %p452, %p453
    %p455 = scmp.ne.s32.totalorder %s447, %s449
    %p456 = scmp.eq.s32.totalorder %s45, 1
    %p457 = por %p455, %p456
    %p458 = scmp.ne.s32.totalorder %s449, %s450
    %p459 = scmp.eq.s32.totalorder %s45, 0
    %p460 = por %p458, %p459
    %p461 = scmp.ne.s32.totalorder %s449, %s450
    %p462 = scmp.eq.s32.totalorder %s46, 1
    %p463 = por %p461, %p462
    %p465 = scmp.ne.s32.totalorder %s450, %s464
    %p466 = scmp.eq.s32.totalorder %s46, 0
    %p467 = por %p465, %p466
    %s469 = sadd.s32 %s468, 1
    %p472 = scmp.eq.s32.totalorder %s40, 1
    %p473 = scmp.ne.s32.totalorder %s468, %s470
    %p474 = scmp.eq.s32.totalorder %s40, 0
    %p475 = por %p473, %p474
    %p476 = scmp.ne.s32.totalorder %s468, %s470
    %p477 = scmp.eq.s32.totalorder %s45, 1
    %p478 = por %p476, %p477
    %p479 = scmp.ne.s32.totalorder %s470, %s471
    %p480 = scmp.eq.s32.totalorder %s45, 0
    %p481 = por %p479, %p480
    %p482 = scmp.ne.s32.totalorder %s470, %s471
    %p483 = scmp.eq.s32.totalorder %s46, 1
    %p484 = por %p482, %p483
    %p486 = scmp.ne.s32.totalorder %s471, %s485
    %p487 = scmp.eq.s32.totalorder %s46, 0
    %p488 = por %p486, %p487
    %s490 = sadd.s32 %s489, 1
    %p493 = scmp.eq.s32.totalorder %s40, 1
    %p494 = scmp.ne.s32.totalorder %s489, %s491
    %p495 = scmp.eq.s32.totalorder %s40, 0
    %p496 = por %p494, %p495
    %p497 = scmp.ne.s32.totalorder %s489, %s491
    %p498 = scmp.eq.s32.totalorder %s45, 1
    %p499 = por %p497, %p498
    %p500 = scmp.ne.s32.totalorder %s491, %s492
    %p501 = scmp.eq.s32.totalorder %s45, 0
    %p502 = por %p500, %p501
    %p503 = scmp.ne.s32.totalorder %s491, %s492
    %p504 = scmp.eq.s32.totalorder %s46, 1
    %p505 = por %p503, %p504
    %p507 = scmp.ne.s32.totalorder %s492, %s506
    %p508 = scmp.eq.s32.totalorder %s46, 0
    %p509 = por %p507, %p508
    %s511 = sadd.s32 %s510, 1
    %p514 = scmp.eq.s32.totalorder %s40, 1
    %p515 = scmp.ne.s32.totalorder %s510, %s512
    %p516 = scmp.eq.s32.totalorder %s40, 0
    %p517 = por %p515, %p516
    %p518 = scmp.ne.s32.totalorder %s510, %s512
    %p519 = scmp.eq.s32.totalorder %s45, 1
    %p520 = por %p518, %p519
    %p521 = scmp.ne.s32.totalorder %s512, %s513
    %p522 = scmp.eq.s32.totalorder %s45, 0
    %p523 = por %p521, %p522
    %p524 = scmp.ne.s32.totalorder %s512, %s513
    %p525 = scmp.eq.s32.totalorder %s46, 1
    %p526 = por %p524, %p525
    %p528 = scmp.ne.s32.totalorder %s513, %s527
    %p529 = scmp.eq.s32.totalorder %s46, 0
    %p530 = por %p528, %p529
    %s532 = sadd.s32 %s531, 1
    %p535 = scmp.eq.s32.totalorder %s40, 1
    %p536 = scmp.ne.s32.totalorder %s531, %s533
    %p537 = scmp.eq.s32.totalorder %s40, 0
    %p538 = por %p536, %p537
    %p539 = scmp.ne.s32.totalorder %s531, %s533
    %p540 = scmp.eq.s32.totalorder %s45, 1
    %p541 = por %p539, %p540
    %p542 = scmp.ne.s32.totalorder %s533, %s534
    %p543 = scmp.eq.s32.totalorder %s45, 0
    %p544 = por %p542, %p543
    %p545 = scmp.ne.s32.totalorder %s533, %s534
    %p546 = scmp.eq.s32.totalorder %s46, 1
    %p547 = por %p545, %p546
    %p549 = scmp.ne.s32.totalorder %s534, %s548
    %p550 = scmp.eq.s32.totalorder %s46, 0
    %p551 = por %p549, %p550
    %s553 = sadd.s32 %s552, 1
    %p556 = scmp.eq.s32.totalorder %s40, 1
    %p557 = scmp.ne.s32.totalorder %s552, %s554
    %p558 = scmp.eq.s32.totalorder %s40, 0
    %p559 = por %p557, %p558
    %p560 = scmp.ne.s32.totalorder %s552, %s554
    %p561 = scmp.eq.s32.totalorder %s45, 1
    %p562 = por %p560, %p561
    %p563 = scmp.ne.s32.totalorder %s554, %s555
    %p564 = scmp.eq.s32.totalorder %s45, 0
    %p565 = por %p563, %p564
    %p566 = scmp.ne.s32.totalorder %s554, %s555
    %p567 = scmp.eq.s32.totalorder %s46, 1
    %p568 = por %p566, %p567
    %p570 = scmp.ne.s32.totalorder %s555, %s569
    %p571 = scmp.eq.s32.totalorder %s46, 0
    %p572 = por %p570, %p571
    %s573 = ssub.s32 %s40, %s47
    %p574 = scmp.eq.s32.totalorder %s573, 0
    %s576 = sadd.s32 %s575, 1
    %s577 = scalar_select %p574, %s575, %s576
    %p580 = pneg %p574
    %p581 = scmp.eq.s32.totalorder %s40, 1
    %p582 = por %p580, %p581
    %p583 = scmp.ne.s32.totalorder %s575, %s578
    %p584 = scmp.eq.s32.totalorder %s40, 0
    %p585 = por %p583, %p584
    %p586 = scmp.ne.s32.totalorder %s575, %s578
    %p587 = scmp.eq.s32.totalorder %s45, 1
    %p588 = por %p586, %p587
    %p589 = scmp.ne.s32.totalorder %s578, %s579
    %p590 = scmp.eq.s32.totalorder %s45, 0
    %p591 = por %p589, %p590
    %p592 = scmp.ne.s32.totalorder %s578, %s579
    %p593 = scmp.eq.s32.totalorder %s46, 1
    %p594 = por %p592, %p593
    %p596 = scmp.ne.s32.totalorder %s579, %s595
    %p597 = scmp.eq.s32.totalorder %s46, 0
    %p598 = por %p596, %p597
    %s599 = ssub.s32 %s40, %s47
    %p600 = scmp.eq.s32.totalorder %s599, 0
    %s602 = sadd.s32 %s601, 1
    %s603 = scalar_select %p600, %s601, %s602
    %p606 = pneg %p600
    %p607 = scmp.eq.s32.totalorder %s40, 1
    %p608 = por %p606, %p607
    %p609 = scmp.ne.s32.totalorder %s601, %s604
    %p610 = scmp.eq.s32.totalorder %s40, 0
    %p611 = por %p609, %p610
    %p612 = scmp.ne.s32.totalorder %s601, %s604
    %p613 = scmp.eq.s32.totalorder %s45, 1
    %p614 = por %p612, %p613
    %p615 = scmp.ne.s32.totalorder %s604, %s605
    %p616 = scmp.eq.s32.totalorder %s45, 0
    %p617 = por %p615, %p616
    %p618 = scmp.ne.s32.totalorder %s604, %s605
    %p619 = scmp.eq.s32.totalorder %s46, 1
    %p620 = por %p618, %p619
    %p622 = scmp.ne.s32.totalorder %s605, %s621
    %p623 = scmp.eq.s32.totalorder %s46, 0
    %p624 = por %p622, %p623
    %s625 = ssub.s32 %s40, %s47
    %p626 = scmp.eq.s32.totalorder %s625, 0
    %s628 = sadd.s32 %s627, 1
    %s629 = scalar_select %p626, %s627, %s628
    %p632 = pneg %p626
    %p633 = scmp.eq.s32.totalorder %s40, 1
    %p634 = por %p632, %p633
    %p635 = scmp.ne.s32.totalorder %s627, %s630
    %p636 = scmp.eq.s32.totalorder %s40, 0
    %p637 = por %p635, %p636
    %p638 = scmp.ne.s32.totalorder %s627, %s630
    %p639 = scmp.eq.s32.totalorder %s45, 1
    %p640 = por %p638, %p639
    %p641 = scmp.ne.s32.totalorder %s630, %s631
    %p642 = scmp.eq.s32.totalorder %s45, 0
    %p643 = por %p641, %p642
    %p644 = scmp.ne.s32.totalorder %s630, %s631
    %p645 = scmp.eq.s32.totalorder %s46, 1
    %p646 = por %p644, %p645
    %p648 = scmp.ne.s32.totalorder %s631, %s647
    %p649 = scmp.eq.s32.totalorder %s46, 0
    %p650 = por %p648, %p649
    %p651 = scmp.le.s32.totalorder 1, %s40
    %p652 = scmp.lt.s32.totalorder %s40, 3
    %p653 = pnand %p651, %p652
    %p654 = pneg %p653
    // Predicated region
    $region9: #{deeptrader_forward.1} parent=5 // pred_check
      _
    $region10: #{deeptrader_forward.1} parent=5 // pred_check_branch
      %656 = sbr.rel (%p653) target = $region12
    $region11: #{deeptrader_forward.1} parent=5 // pred_region
      %s657 = ssub.s32 %s40, 1
      // Predicated region
      $region13: #{deeptrader_forward.1} parent=11 // pred_check
        %p658 = pneg %p61
      $region14: #{deeptrader_forward.1} parent=11 // pred_check_branch
        %660 = sbr.rel (%p658) target = $region16
      $region15: #{deeptrader_forward.1} parent=11 // pred_region
        _
      $region16: #{deeptrader_forward.1} parent=11 // pred_fallthru
        _
      // Predicated region
      $region17: #{deeptrader_forward.1} parent=11 // pred_check
        %p661 = pneg %p82
      $region18: #{deeptrader_forward.1} parent=11 // pred_check_branch
        %663 = sbr.rel (%p661) target = $region20
      $region19: #{deeptrader_forward.1} parent=11 // pred_region
        _
      $region20: #{deeptrader_forward.1} parent=11 // pred_fallthru
        _
      // Predicated region
      $region21: #{deeptrader_forward.1} parent=11 // pred_check
        %p664 = pneg %p103
      $region22: #{deeptrader_forward.1} parent=11 // pred_check_branch
        %666 = sbr.rel (%p664) target = $region24
      $region23: #{deeptrader_forward.1} parent=11 // pred_region
        _
      $region24: #{deeptrader_forward.1} parent=11 // pred_fallthru
        _
      // Predicated region
      $region25: #{deeptrader_forward.1} parent=11 // pred_check
        %p667 = pneg %p124
      $region26: #{deeptrader_forward.1} parent=11 // pred_check_branch
        %669 = sbr.rel (%p667) target = $region28
      $region27: #{deeptrader_forward.1} parent=11 // pred_region
        _
      $region28: #{deeptrader_forward.1} parent=11 // pred_fallthru
        _
      // Predicated region
      $region29: #{deeptrader_forward.1} parent=11 // pred_check
        %p670 = pneg %p145
      $region30: #{deeptrader_forward.1} parent=11 // pred_check_branch
        %672 = sbr.rel (%p670) target = $region32
      $region31: #{deeptrader_forward.1} parent=11 // pred_region
        _
      $region32: #{deeptrader_forward.1} parent=11 // pred_fallthru
        _
      // Predicated region
      $region33: #{deeptrader_forward.1} parent=11 // pred_check
        %p673 = pneg %p166
      $region34: #{deeptrader_forward.1} parent=11 // pred_check_branch
        %675 = sbr.rel (%p673) target = $region36
      $region35: #{deeptrader_forward.1} parent=11 // pred_region
        _
      $region36: #{deeptrader_forward.1} parent=11 // pred_fallthru
        _
      // Predicated region
      $region37: #{deeptrader_forward.1} parent=11 // pred_check
        %p676 = pneg %p187
      $region38: #{deeptrader_forward.1} parent=11 // pred_check_branch
        %678 = sbr.rel (%p676) target = $region40
      $region39: #{deeptrader_forward.1} parent=11 // pred_region
        _
      $region40: #{deeptrader_forward.1} parent=11 // pred_fallthru
        _
      // Predicated region
      $region41: #{deeptrader_forward.1} parent=11 // pred_check
        %p679 = pneg %p208
      $region42: #{deeptrader_forward.1} parent=11 // pred_check_branch
        %681 = sbr.rel (%p679) target = $region44
      $region43: #{deeptrader_forward.1} parent=11 // pred_region
        _
      $region44: #{deeptrader_forward.1} parent=11 // pred_fallthru
        _
      // Predicated region
      $region45: #{deeptrader_forward.1} parent=11 // pred_check
        %p682 = pneg %p229
      $region46: #{deeptrader_forward.1} parent=11 // pred_check_branch
        %684 = sbr.rel (%p682) target = $region48
      $region47: #{deeptrader_forward.1} parent=11 // pred_region
        _
      $region48: #{deeptrader_forward.1} parent=11 // pred_fallthru
        _
      // Predicated region
      $region49: #{deeptrader_forward.1} parent=11 // pred_check
        %p685 = pneg %p250
      $region50: #{deeptrader_forward.1} parent=11 // pred_check_branch
        %687 = sbr.rel (%p685) target = $region52
      $region51: #{deeptrader_forward.1} parent=11 // pred_region
        _
      $region52: #{deeptrader_forward.1} parent=11 // pred_fallthru
        _
      // Predicated region
      $region53: #{deeptrader_forward.1} parent=11 // pred_check
        %p688 = pneg %p271
      $region54: #{deeptrader_forward.1} parent=11 // pred_check_branch
        %690 = sbr.rel (%p688) target = $region56
      $region55: #{deeptrader_forward.1} parent=11 // pred_region
        _
      $region56: #{deeptrader_forward.1} parent=11 // pred_fallthru
        _
      // Predicated region
      $region57: #{deeptrader_forward.1} parent=11 // pred_check
        %p691 = pneg %p292
      $region58: #{deeptrader_forward.1} parent=11 // pred_check_branch
        %693 = sbr.rel (%p691) target = $region60
      $region59: #{deeptrader_forward.1} parent=11 // pred_region
        _
      $region60: #{deeptrader_forward.1} parent=11 // pred_fallthru
        _
      // Predicated region
      $region61: #{deeptrader_forward.1} parent=11 // pred_check
        %p694 = pneg %p313
      $region62: #{deeptrader_forward.1} parent=11 // pred_check_branch
        %696 = sbr.rel (%p694) target = $region64
      $region63: #{deeptrader_forward.1} parent=11 // pred_region
        _
      $region64: #{deeptrader_forward.1} parent=11 // pred_fallthru
        _
      // Predicated region
      $region65: #{deeptrader_forward.1} parent=11 // pred_check
        %p697 = pneg %p334
      $region66: #{deeptrader_forward.1} parent=11 // pred_check_branch
        %699 = sbr.rel (%p697) target = $region68
      $region67: #{deeptrader_forward.1} parent=11 // pred_region
        _
      $region68: #{deeptrader_forward.1} parent=11 // pred_fallthru
        _
      // Predicated region
      $region69: #{deeptrader_forward.1} parent=11 // pred_check
        %p700 = pneg %p355
      $region70: #{deeptrader_forward.1} parent=11 // pred_check_branch
        %702 = sbr.rel (%p700) target = $region72
      $region71: #{deeptrader_forward.1} parent=11 // pred_region
        _
      $region72: #{deeptrader_forward.1} parent=11 // pred_fallthru
        _
      // Predicated region
      $region73: #{deeptrader_forward.1} parent=11 // pred_check
        %p703 = pneg %p376
      $region74: #{deeptrader_forward.1} parent=11 // pred_check_branch
        %705 = sbr.rel (%p703) target = $region76
      $region75: #{deeptrader_forward.1} parent=11 // pred_region
        _
      $region76: #{deeptrader_forward.1} parent=11 // pred_fallthru
        _
      // Predicated region
      $region77: #{deeptrader_forward.1} parent=11 // pred_check
        %p706 = pneg %p397
      $region78: #{deeptrader_forward.1} parent=11 // pred_check_branch
        %708 = sbr.rel (%p706) target = $region80
      $region79: #{deeptrader_forward.1} parent=11 // pred_region
        _
      $region80: #{deeptrader_forward.1} parent=11 // pred_fallthru
        _
      // Predicated region
      $region81: #{deeptrader_forward.1} parent=11 // pred_check
        %p709 = pneg %p418
      $region82: #{deeptrader_forward.1} parent=11 // pred_check_branch
        %711 = sbr.rel (%p709) target = $region84
      $region83: #{deeptrader_forward.1} parent=11 // pred_region
        _
      $region84: #{deeptrader_forward.1} parent=11 // pred_fallthru
        _
      // Predicated region
      $region85: #{deeptrader_forward.1} parent=11 // pred_check
        %p712 = pneg %p439
      $region86: #{deeptrader_forward.1} parent=11 // pred_check_branch
        %714 = sbr.rel (%p712) target = $region88
      $region87: #{deeptrader_forward.1} parent=11 // pred_region
        _
      $region88: #{deeptrader_forward.1} parent=11 // pred_fallthru
        _
      // Predicated region
      $region89: #{deeptrader_forward.1} parent=11 // pred_check
        %p715 = pneg %p460
      $region90: #{deeptrader_forward.1} parent=11 // pred_check_branch
        %717 = sbr.rel (%p715) target = $region92
      $region91: #{deeptrader_forward.1} parent=11 // pred_region
        _
      $region92: #{deeptrader_forward.1} parent=11 // pred_fallthru
        _
      // Predicated region
      $region93: #{deeptrader_forward.1} parent=11 // pred_check
        %p718 = pneg %p481
      $region94: #{deeptrader_forward.1} parent=11 // pred_check_branch
        %720 = sbr.rel (%p718) target = $region96
      $region95: #{deeptrader_forward.1} parent=11 // pred_region
        _
      $region96: #{deeptrader_forward.1} parent=11 // pred_fallthru
        _
      // Predicated region
      $region97: #{deeptrader_forward.1} parent=11 // pred_check
        %p721 = pneg %p502
      $region98: #{deeptrader_forward.1} parent=11 // pred_check_branch
        %723 = sbr.rel (%p721) target = $region100
      $region99: #{deeptrader_forward.1} parent=11 // pred_region
        _
      $region100: #{deeptrader_forward.1} parent=11 // pred_fallthru
        _
      // Predicated region
      $region101: #{deeptrader_forward.1} parent=11 // pred_check
        %p724 = pneg %p523
      $region102: #{deeptrader_forward.1} parent=11 // pred_check_branch
        %726 = sbr.rel (%p724) target = $region104
      $region103: #{deeptrader_forward.1} parent=11 // pred_region
        _
      $region104: #{deeptrader_forward.1} parent=11 // pred_fallthru
        _
      // Predicated region
      $region105: #{deeptrader_forward.1} parent=11 // pred_check
        %p727 = pneg %p544
      $region106: #{deeptrader_forward.1} parent=11 // pred_check_branch
        %729 = sbr.rel (%p727) target = $region108
      $region107: #{deeptrader_forward.1} parent=11 // pred_region
        _
      $region108: #{deeptrader_forward.1} parent=11 // pred_fallthru
        _
      // Predicated region
      $region109: #{deeptrader_forward.1} parent=11 // pred_check
        %p730 = pneg %p565
      $region110: #{deeptrader_forward.1} parent=11 // pred_check_branch
        %732 = sbr.rel (%p730) target = $region112
      $region111: #{deeptrader_forward.1} parent=11 // pred_region
        _
      $region112: #{deeptrader_forward.1} parent=11 // pred_fallthru
        _
    $region12: #{deeptrader_forward.1} parent=5 // pred_fallthru
      _
    %p733 = scmp.lt.s32.totalorder %s40, 2
    // Predicated region
    $region113: #{deeptrader_forward.1} parent=5 // pred_check
      %p734 = pneg %p733
    $region114: #{deeptrader_forward.1} parent=5 // pred_check_branch
      %736 = sbr.rel (%p734) target = $region116
    $region115: #{deeptrader_forward.1} parent=5 // pred_region
      _
    $region116: #{deeptrader_forward.1} parent=5 // pred_fallthru
      _
    %p737 = scmp.le.s32.totalorder 1, %s40
    %p738 = scmp.lt.s32.totalorder %s40, 3
    %p739 = pnand %p737, %p738
    %p740 = pneg %p739
    // Predicated region
    $region117: #{deeptrader_forward.1} parent=5 // pred_check
      _
    $region118: #{deeptrader_forward.1} parent=5 // pred_check_branch
      %742 = sbr.rel (%p739) target = $region120
    $region119: #{deeptrader_forward.1} parent=5 // pred_region
      %s743 = ssub.s32 %s40, 1
      %p744 = pneg %p61
      %p745 = pneg %p58
      %p746 = pneg %p82
      %p747 = pneg %p79
      %p748 = pneg %p103
      %p749 = pneg %p100
      %p750 = pneg %p124
      %p751 = pneg %p121
      %p752 = pneg %p145
      %p753 = pneg %p142
      %p754 = pneg %p166
      %p755 = pneg %p163
      %p756 = pneg %p187
      %p757 = pneg %p184
      %p758 = pneg %p208
      %p759 = pneg %p205
      %p760 = pneg %p229
      %p761 = pneg %p226
      %p762 = pneg %p250
      %p763 = pneg %p247
      %p764 = pneg %p271
      %p765 = pneg %p268
      %p766 = pneg %p292
      %p767 = pneg %p289
      %p768 = pneg %p313
      %p769 = pneg %p310
      %p770 = pneg %p334
      %p771 = pneg %p331
      %p772 = pneg %p355
      %p773 = pneg %p352
      %p774 = pneg %p376
      %p775 = pneg %p373
      %p776 = pneg %p397
      %p777 = pneg %p394
      %p778 = pneg %p418
      %p779 = pneg %p415
      %p780 = pneg %p439
      %p781 = pneg %p436
      %p782 = pneg %p460
      %p783 = pneg %p457
      %p784 = pneg %p481
      %p785 = pneg %p478
      %p786 = pneg %p502
      %p787 = pneg %p499
      %p788 = pneg %p523
      %p789 = pneg %p520
      %p790 = pneg %p544
      %p791 = pneg %p541
      %p792 = pneg %p565
      %p793 = pneg %p562
      %p794 = pneg %p591
      %p795 = pneg %p588
      %p796 = scmp.lt.s32.totalorder %s45, 1
      %s797 = scalar_select %p796, %s45, 1
      %s798 = smul.addr %s797, 2
      %s799 = smul.addr %s798, 8
      %s800 = scalar_lea.vmem %s25, %s799
      %p801 = pneg %p617
      %p802 = pneg %p614
      %p803 = scmp.lt.s32.totalorder %s45, 1
      %s804 = scalar_select %p803, %s45, 1
      %s805 = smul.addr %s804, 2
      %s806 = scalar_lea.vmem %s26, %s805
      %p807 = pneg %p643
      %p808 = pneg %p640
      %p809 = scmp.lt.s32.totalorder %s45, 1
      %s810 = scalar_select %p809, %s45, 1
      %s811 = smul.addr %s810, 2
      %s812 = scalar_lea.vmem %s27, %s811
      %p813 = scmp.lt.s32.totalorder %s45, 1
      %s814 = scalar_select %p813, %s45, 1
      %s815 = smul.addr %s814, 2
      %s816 = smul.addr %s815, 8
      %s817 = scalar_lea.vmem %s25, %s816
      %p818 = scmp.lt.s32.totalorder %s45, 1
      %s819 = scalar_select %p818, %s45, 1
      %s820 = smul.addr %s819, 2
      %s821 = scalar_lea.vmem %s26, %s820
      %p822 = scmp.lt.s32.totalorder %s45, 1
      %s823 = scalar_select %p822, %s45, 1
      %s824 = smul.addr %s823, 2
      %s825 = scalar_lea.vmem %s27, %s824
      %vm827 = vcmask 7168
      %828 = vst.msk [vmem:[%s817] sm:$0xff] %vm827, 0.0
      %829 = vst.msk [vmem:[%s817 + $0x8] sm:$0xff] %vm827, 0.0
      %vm830 = vcmask 1024
      %831 = vst.msk [vmem:[%s821] sm:$0x3] %vm830, 0.0
      %832 = vst.msk [vmem:[%s825] sm:$0x3] %vm830, 0.0
      %p833 = scmp.eq.s32.totalorder %s45, 0
      // Predicated region
      $region121: #{deeptrader_forward.1} parent=119 // pred_check
        %p834 = pneg %p833
      $region122: #{deeptrader_forward.1} parent=119 // pred_check_branch
        %836 = sbr.rel (%p834) target = $region124
      $region123: #{deeptrader_forward.1} parent=119 // pred_region
        %vm837 = vcmask 31744
        %838 = vst.msk [vmem:[#allocation2] sm:$0xff] %vm837, 0.0
        %839 = vst.msk [vmem:[#allocation2 + $0x8] sm:$0xff] %vm837, 0.0
        %840 = vst.msk [vmem:[#allocation2 + $0x10] sm:$0xff] %vm837, 0.0
        %841 = vst.msk [vmem:[#allocation2 + $0x18] sm:$0xff] %vm837, 0.0
        %v842 = vld [vmem:[%s0] sm:$0xff]
        %v843 = vld [vmem:[%s0 + $0x8] sm:$0xff]
        %v844 = vld [vmem:[%s0 + $0x10] sm:$0xff]
        %v845 = vld [vmem:[%s0 + $0x18] sm:$0xff]
        %v846 = vld [vmem:[%s0 + $0x20] sm:$0xff]
        %v847 = vld [vmem:[%s0 + $0x28] sm:$0xff]
        %v848 = vld [vmem:[%s0 + $0x30] sm:$0xff]
        %v849 = vld [vmem:[%s0 + $0x38] sm:$0xff]
        %v850 = vld [vmem:[%s0 + $0x40] sm:$0xff]
        %v851 = vld [vmem:[%s0 + $0x48] sm:$0xff]
        %v852 = vld [vmem:[%s0 + $0x50] sm:$0xff]
        %v853 = vld [vmem:[%s0 + $0x58] sm:$0xff]
        %v854 = vld [vmem:[%s0 + $0x60] sm:$0xff]
        %v855 = vld [vmem:[%s0 + $0x68] sm:$0xff]
        %v856 = vld [vmem:[%s0 + $0x70] sm:$0xff]
        %v857 = vld [vmem:[%s0 + $0x78] sm:$0xff]
        %v858 = vld [vmem:[%s0 + $0x80] sm:$0xff]
        %v859 = vld [vmem:[%s0 + $0x88] sm:$0xff]
        %v860 = vld [vmem:[%s0 + $0x90] sm:$0xff]
        %v861 = vld [vmem:[%s0 + $0x98] sm:$0xff]
        %v862 = vld [vmem:[%s0 + $0xa0] sm:$0xff]
        %v863 = vld [vmem:[%s0 + $0xa8] sm:$0xff]
        %v864 = vld [vmem:[%s0 + $0xb0] sm:$0xff]
        %v865 = vld [vmem:[%s0 + $0xb8] sm:$0xff]
        %v866 = vld [vmem:[%s0 + $0xc0] sm:$0xff]
        %v867 = vld [vmem:[%s0 + $0xc8] sm:$0xff]
        %v868 = vld [vmem:[%s0 + $0xd0] sm:$0xff]
        %v869 = vld [vmem:[%s0 + $0xd8] sm:$0xff]
        %v870 = vld [vmem:[%s0 + $0xe0] sm:$0xff]
        %v871 = vld [vmem:[%s0 + $0xe8] sm:$0xff]
        %v872 = vld [vmem:[%s0 + $0xf0] sm:$0xff]
        %v873 = vld [vmem:[%s0 + $0xf8] sm:$0xff]
        %s874 = scalar_lea.vmem [#allocation2], 32
        %875 = vst.msk [vmem:[%s874] sm:$0xff] %vm837, %v842
        %876 = vst.msk [vmem:[%s874 + $0x8] sm:$0xff] %vm837, %v843
        %877 = vst.msk [vmem:[%s874 + $0x10] sm:$0xff] %vm837, %v844
        %878 = vst.msk [vmem:[%s874 + $0x18] sm:$0xff] %vm837, %v845
        %879 = vst.msk [vmem:[%s874 + $0x20] sm:$0xff] %vm837, %v846
        %880 = vst.msk [vmem:[%s874 + $0x28] sm:$0xff] %vm837, %v847
        %881 = vst.msk [vmem:[%s874 + $0x30] sm:$0xff] %vm837, %v848
        %882 = vst.msk [vmem:[%s874 + $0x38] sm:$0xff] %vm837, %v849
        %883 = vst.msk [vmem:[%s874 + $0x40] sm:$0xff] %vm837, %v850
        %884 = vst.msk [vmem:[%s874 + $0x48] sm:$0xff] %vm837, %v851
        %885 = vst.msk [vmem:[%s874 + $0x50] sm:$0xff] %vm837, %v852
        %886 = vst.msk [vmem:[%s874 + $0x58] sm:$0xff] %vm837, %v853
        %887 = vst.msk [vmem:[%s874 + $0x60] sm:$0xff] %vm837, %v854
        %888 = vst.msk [vmem:[%s874 + $0x68] sm:$0xff] %vm837, %v855
        %889 = vst.msk [vmem:[%s874 + $0x70] sm:$0xff] %vm837, %v856
        %890 = vst.msk [vmem:[%s874 + $0x78] sm:$0xff] %vm837, %v857
        %891 = vst.msk [vmem:[%s874 + $0x80] sm:$0xff] %vm837, %v858
        %892 = vst.msk [vmem:[%s874 + $0x88] sm:$0xff] %vm837, %v859
        %893 = vst.msk [vmem:[%s874 + $0x90] sm:$0xff] %vm837, %v860
        %894 = vst.msk [vmem:[%s874 + $0x98] sm:$0xff] %vm837, %v861
        %895 = vst.msk [vmem:[%s874 + $0xa0] sm:$0xff] %vm837, %v862
        %896 = vst.msk [vmem:[%s874 + $0xa8] sm:$0xff] %vm837, %v863
        %897 = vst.msk [vmem:[%s874 + $0xb0] sm:$0xff] %vm837, %v864
        %898 = vst.msk [vmem:[%s874 + $0xb8] sm:$0xff] %vm837, %v865
        %899 = vst.msk [vmem:[%s874 + $0xc0] sm:$0xff] %vm837, %v866
        %900 = vst.msk [vmem:[%s874 + $0xc8] sm:$0xff] %vm837, %v867
        %901 = vst.msk [vmem:[%s874 + $0xd0] sm:$0xff] %vm837, %v868
        %902 = vst.msk [vmem:[%s874 + $0xd8] sm:$0xff] %vm837, %v869
        %903 = vst.msk [vmem:[%s874 + $0xe0] sm:$0xff] %vm837, %v870
        %904 = vst.msk [vmem:[%s874 + $0xe8] sm:$0xff] %vm837, %v871
        %905 = vst.msk [vmem:[%s874 + $0xf0] sm:$0xff] %vm837, %v872
        %906 = vst.msk [vmem:[%s874 + $0xf8] sm:$0xff] %vm837, %v873
        %vm907 = vcmask 261120
        %908 = vst.msk [vmem:[#allocation3] sm:$0xff] %vm907, 0.0
        %909 = vst.msk [vmem:[#allocation3 + $0x8] sm:$0xff] %vm907, 0.0
        %910 = vst.msk [vmem:[#allocation3 + $0x10] sm:$0xff] %vm907, 0.0
        %911 = vst.msk [vmem:[#allocation3 + $0x18] sm:$0xff] %vm907, 0.0
        %912 = vst.msk [vmem:[#allocation3 + $0x20] sm:$0xff] %vm907, 0.0
        %913 = vst.msk [vmem:[#allocation3 + $0x28] sm:$0xff] %vm907, 0.0
        %914 = vst.msk [vmem:[#allocation3 + $0x30] sm:$0xff] %vm907, 0.0
        %915 = vst.msk [vmem:[#allocation3 + $0x38] sm:$0xff] %vm907, 0.0
        %916 = vst.msk [vmem:[#allocation3 + $0x40] sm:$0xff] %vm907, 0.0
        %917 = vst.msk [vmem:[#allocation3 + $0x48] sm:$0xff] %vm907, 0.0
        %918 = vst.msk [vmem:[#allocation3 + $0x50] sm:$0xff] %vm907, 0.0
        %919 = vst.msk [vmem:[#allocation3 + $0x58] sm:$0xff] %vm907, 0.0
        %920 = vst.msk [vmem:[#allocation3 + $0x60] sm:$0xff] %vm907, 0.0
        %921 = vst.msk [vmem:[#allocation3 + $0x68] sm:$0xff] %vm907, 0.0
        %922 = vst.msk [vmem:[#allocation3 + $0x70] sm:$0xff] %vm907, 0.0
        %923 = vst.msk [vmem:[#allocation3 + $0x78] sm:$0xff] %vm907, 0.0
        %924 = vst.msk [vmem:[#allocation3 + $0x80] sm:$0xff] %vm907, 0.0
        %925 = vst.msk [vmem:[#allocation3 + $0x88] sm:$0xff] %vm907, 0.0
        %926 = vst.msk [vmem:[#allocation3 + $0x90] sm:$0xff] %vm907, 0.0
        %927 = vst.msk [vmem:[#allocation3 + $0x98] sm:$0xff] %vm907, 0.0
        %928 = vst.msk [vmem:[#allocation3 + $0xa0] sm:$0xff] %vm907, 0.0
        %929 = vst.msk [vmem:[#allocation3 + $0xa8] sm:$0xff] %vm907, 0.0
        %930 = vst.msk [vmem:[#allocation3 + $0xb0] sm:$0xff] %vm907, 0.0
        %931 = vst.msk [vmem:[#allocation3 + $0xb8] sm:$0xff] %vm907, 0.0
        %932 = vst.msk [vmem:[#allocation3 + $0xc0] sm:$0xff] %vm907, 0.0
        %933 = vst.msk [vmem:[#allocation3 + $0xc8] sm:$0xff] %vm907, 0.0
        %934 = vst.msk [vmem:[#allocation3 + $0xd0] sm:$0xff] %vm907, 0.0
        %935 = vst.msk [vmem:[#allocation3 + $0xd8] sm:$0xff] %vm907, 0.0
        %936 = vst.msk [vmem:[#allocation3 + $0xe0] sm:$0xff] %vm907, 0.0
        %937 = vst.msk [vmem:[#allocation3 + $0xe8] sm:$0xff] %vm907, 0.0
        %938 = vst.msk [vmem:[#allocation3 + $0xf0] sm:$0xff] %vm907, 0.0
        %939 = vst.msk [vmem:[#allocation3 + $0xf8] sm:$0xff] %vm907, 0.0
        %v940 = vld [vmem:[#allocation2] sm:$0xff]
        %v941 = vld [vmem:[#allocation2 + $0x8] sm:$0xff]
        %v942 = vld [vmem:[#allocation2 + $0x10] sm:$0xff]
        %v943 = vld [vmem:[#allocation2 + $0x18] sm:$0xff]
        %v944 = vld [vmem:[#allocation2 + $0x20] sm:$0xff]
        %v945 = vld [vmem:[#allocation2 + $0x28] sm:$0xff]
        %v946 = vld [vmem:[#allocation2 + $0x30] sm:$0xff]
        %v947 = vld [vmem:[#allocation2 + $0x38] sm:$0xff]
        %v948 = vld [vmem:[#allocation2 + $0x40] sm:$0xff]
        %v949 = vld [vmem:[#allocation2 + $0x48] sm:$0xff]
        %v950 = vld [vmem:[#allocation2 + $0x50] sm:$0xff]
        %v951 = vld [vmem:[#allocation2 + $0x58] sm:$0xff]
        %v952 = vld [vmem:[#allocation2 + $0x60] sm:$0xff]
        %v953 = vld [vmem:[#allocation2 + $0x68] sm:$0xff]
        %v954 = vld [vmem:[#allocation2 + $0x70] sm:$0xff]
        %v955 = vld [vmem:[#allocation2 + $0x78] sm:$0xff]
        %v956 = vld [vmem:[#allocation2 + $0x80] sm:$0xff]
        %v957 = vld [vmem:[#allocation2 + $0x88] sm:$0xff]
        %v958 = vld [vmem:[#allocation2 + $0x90] sm:$0xff]
        %v959 = vld [vmem:[#allocation2 + $0x98] sm:$0xff]
        %v960 = vld [vmem:[#allocation2 + $0xa0] sm:$0xff]
        %v961 = vld [vmem:[#allocation2 + $0xa8] sm:$0xff]
        %v962 = vld [vmem:[#allocation2 + $0xb0] sm:$0xff]
        %v963 = vld [vmem:[#allocation2 + $0xb8] sm:$0xff]
        %v964 = vld [vmem:[#allocation2 + $0xc0] sm:$0xff]
        %v965 = vld [vmem:[#allocation2 + $0xc8] sm:$0xff]
        %v966 = vld [vmem:[#allocation2 + $0xd0] sm:$0xff]
        %v967 = vld [vmem:[#allocation2 + $0xd8] sm:$0xff]
        %v968 = vld [vmem:[#allocation2 + $0xe0] sm:$0xff]
        %v969 = vld [vmem:[#allocation2 + $0xe8] sm:$0xff]
        %v970 = vld [vmem:[#allocation2 + $0xf0] sm:$0xff]
        %v971 = vld [vmem:[#allocation2 + $0xf8] sm:$0xff]
        %s972 = scalar_lea.vmem [#allocation2], 16
        %v973 = vld [vmem:[%s972] sm:$0xff]
        %v974 = vld [vmem:[%s972 + $0x8] sm:$0xff]
        %v975 = vld [vmem:[%s972 + $0x10] sm:$0xff]
        %v976 = vld [vmem:[%s972 + $0x18] sm:$0xff]
        %v977 = vld [vmem:[%s972 + $0x20] sm:$0xff]
        %v978 = vld [vmem:[%s972 + $0x28] sm:$0xff]
        %v979 = vld [vmem:[%s972 + $0x30] sm:$0xff]
        %v980 = vld [vmem:[%s972 + $0x38] sm:$0xff]
        %v981 = vld [vmem:[%s972 + $0x40] sm:$0xff]
        %v982 = vld [vmem:[%s972 + $0x48] sm:$0xff]
        %v983 = vld [vmem:[%s972 + $0x50] sm:$0xff]
        %v984 = vld [vmem:[%s972 + $0x58] sm:$0xff]
        %v985 = vld [vmem:[%s972 + $0x60] sm:$0xff]
        %v986 = vld [vmem:[%s972 + $0x68] sm:$0xff]
        %v987 = vld [vmem:[%s972 + $0x70] sm:$0xff]
        %v988 = vld [vmem:[%s972 + $0x78] sm:$0xff]
        %v989 = vld [vmem:[%s972 + $0x80] sm:$0xff]
        %v990 = vld [vmem:[%s972 + $0x88] sm:$0xff]
        %v991 = vld [vmem:[%s972 + $0x90] sm:$0xff]
        %v992 = vld [vmem:[%s972 + $0x98] sm:$0xff]
        %v993 = vld [vmem:[%s972 + $0xa0] sm:$0xff]
        %v994 = vld [vmem:[%s972 + $0xa8] sm:$0xff]
        %v995 = vld [vmem:[%s972 + $0xb0] sm:$0xff]
        %v996 = vld [vmem:[%s972 + $0xb8] sm:$0xff]
        %v997 = vld [vmem:[%s972 + $0xc0] sm:$0xff]
        %v998 = vld [vmem:[%s972 + $0xc8] sm:$0xff]
        %v999 = vld [vmem:[%s972 + $0xd0] sm:$0xff]
        %v1000 = vld [vmem:[%s972 + $0xd8] sm:$0xff]
        %v1001 = vld [vmem:[%s972 + $0xe0] sm:$0xff]
        %v1002 = vld [vmem:[%s972 + $0xe8] sm:$0xff]
        %v1003 = vld [vmem:[%s972 + $0xf0] sm:$0xff]
        %v1004 = vld [vmem:[%s972 + $0xf8] sm:$0xff]
        %v1005 = vld [vmem:[%s874] sm:$0xff]
        %v1006 = vld [vmem:[%s874 + $0x8] sm:$0xff]
        %v1007 = vld [vmem:[%s874 + $0x10] sm:$0xff]
        %v1008 = vld [vmem:[%s874 + $0x18] sm:$0xff]
        %v1009 = vld [vmem:[%s874 + $0x20] sm:$0xff]
        %v1010 = vld [vmem:[%s874 + $0x28] sm:$0xff]
        %v1011 = vld [vmem:[%s874 + $0x30] sm:$0xff]
        %v1012 = vld [vmem:[%s874 + $0x38] sm:$0xff]
        %v1013 = vld [vmem:[%s874 + $0x40] sm:$0xff]
        %v1014 = vld [vmem:[%s874 + $0x48] sm:$0xff]
        %v1015 = vld [vmem:[%s874 + $0x50] sm:$0xff]
        %v1016 = vld [vmem:[%s874 + $0x58] sm:$0xff]
        %v1017 = vld [vmem:[%s874 + $0x60] sm:$0xff]
        %v1018 = vld [vmem:[%s874 + $0x68] sm:$0xff]
        %v1019 = vld [vmem:[%s874 + $0x70] sm:$0xff]
        %v1020 = vld [vmem:[%s874 + $0x78] sm:$0xff]
        %v1021 = vld [vmem:[%s874 + $0x80] sm:$0xff]
        %v1022 = vld [vmem:[%s874 + $0x88] sm:$0xff]
        %v1023 = vld [vmem:[%s874 + $0x90] sm:$0xff]
        %v1024 = vld [vmem:[%s874 + $0x98] sm:$0xff]
        %v1025 = vld [vmem:[%s874 + $0xa0] sm:$0xff]
        %v1026 = vld [vmem:[%s874 + $0xa8] sm:$0xff]
        %v1027 = vld [vmem:[%s874 + $0xb0] sm:$0xff]
        %v1028 = vld [vmem:[%s874 + $0xb8] sm:$0xff]
        %v1029 = vld [vmem:[%s874 + $0xc0] sm:$0xff]
        %v1030 = vld [vmem:[%s874 + $0xc8] sm:$0xff]
        %v1031 = vld [vmem:[%s874 + $0xd0] sm:$0xff]
        %v1032 = vld [vmem:[%s874 + $0xd8] sm:$0xff]
        %v1033 = vld [vmem:[%s874 + $0xe0] sm:$0xff]
        %v1034 = vld [vmem:[%s874 + $0xe8] sm:$0xff]
        %v1035 = vld [vmem:[%s874 + $0xf0] sm:$0xff]
        %v1036 = vld [vmem:[%s874 + $0xf8] sm:$0xff]
        %1069 = vrot.lane.b32.xlu0 %v973, 4
        %v1070 = vpop.permute.xlu0 %1069
        %1071 = vrot.lane.b32.xlu0 %v974, 4
        %v1072 = vpop.permute.xlu0 %1071
        %1073 = vrot.lane.b32.xlu0 %v975, 4
        %v1074 = vpop.permute.xlu0 %1073
        %1075 = vrot.lane.b32.xlu0 %v976, 4
        %v1076 = vpop.permute.xlu0 %1075
        %1077 = vrot.lane.b32.xlu0 %v977, 4
        %v1078 = vpop.permute.xlu0 %1077
        %1079 = vrot.lane.b32.xlu0 %v978, 4
        %v1080 = vpop.permute.xlu0 %1079
        %1081 = vrot.lane.b32.xlu0 %v979, 4
        %v1082 = vpop.permute.xlu0 %1081
        %1083 = vrot.lane.b32.xlu0 %v980, 4
        %v1084 = vpop.permute.xlu0 %1083
        %1085 = vrot.lane.b32.xlu0 %v981, 4
        %v1086 = vpop.permute.xlu0 %1085
        %1087 = vrot.lane.b32.xlu0 %v982, 4
        %v1088 = vpop.permute.xlu0 %1087
        %1089 = vrot.lane.b32.xlu0 %v983, 4
        %v1090 = vpop.permute.xlu0 %1089
        %1091 = vrot.lane.b32.xlu0 %v984, 4
        %v1092 = vpop.permute.xlu0 %1091
        %1093 = vrot.lane.b32.xlu0 %v985, 4
        %v1094 = vpop.permute.xlu0 %1093
        %1095 = vrot.lane.b32.xlu0 %v986, 4
        %v1096 = vpop.permute.xlu0 %1095
        %1097 = vrot.lane.b32.xlu0 %v987, 4
        %v1098 = vpop.permute.xlu0 %1097
        %1099 = vrot.lane.b32.xlu0 %v988, 4
        %v1100 = vpop.permute.xlu0 %1099
        %1101 = vrot.lane.b32.xlu0 %v989, 4
        %v1102 = vpop.permute.xlu0 %1101
        %1103 = vrot.lane.b32.xlu0 %v990, 4
        %v1104 = vpop.permute.xlu0 %1103
        %1105 = vrot.lane.b32.xlu0 %v991, 4
        %v1106 = vpop.permute.xlu0 %1105
        %1107 = vrot.lane.b32.xlu0 %v992, 4
        %v1108 = vpop.permute.xlu0 %1107
        %1109 = vrot.lane.b32.xlu0 %v993, 4
        %v1110 = vpop.permute.xlu0 %1109
        %1111 = vrot.lane.b32.xlu0 %v994, 4
        %v1112 = vpop.permute.xlu0 %1111
        %1113 = vrot.lane.b32.xlu0 %v995, 4
        %v1114 = vpop.permute.xlu0 %1113
        %1115 = vrot.lane.b32.xlu0 %v996, 4
        %v1116 = vpop.permute.xlu0 %1115
        %1117 = vrot.lane.b32.xlu0 %v997, 4
        %v1118 = vpop.permute.xlu0 %1117
        %1119 = vrot.lane.b32.xlu0 %v998, 4
        %v1120 = vpop.permute.xlu0 %1119
        %1121 = vrot.lane.b32.xlu0 %v999, 4
        %v1122 = vpop.permute.xlu0 %1121
        %1123 = vrot.lane.b32.xlu0 %v1000, 4
        %v1124 = vpop.permute.xlu0 %1123
        %1125 = vrot.lane.b32.xlu0 %v1001, 4
        %v1126 = vpop.permute.xlu0 %1125
        %1127 = vrot.lane.b32.xlu0 %v1002, 4
        %v1128 = vpop.permute.xlu0 %1127
        %1129 = vrot.lane.b32.xlu0 %v1003, 4
        %v1130 = vpop.permute.xlu0 %1129
        %1131 = vrot.lane.b32.xlu0 %v1004, 4
        %v1132 = vpop.permute.xlu0 %1131
        %1197 = vrot.lane.b32.xlu0 %v1005, 8
        %v1198 = vpop.permute.xlu0 %1197
        %1199 = vrot.lane.b32.xlu0 %v1006, 8
        %v1200 = vpop.permute.xlu0 %1199
        %1201 = vrot.lane.b32.xlu0 %v1007, 8
        %v1202 = vpop.permute.xlu0 %1201
        %1203 = vrot.lane.b32.xlu0 %v1008, 8
        %v1204 = vpop.permute.xlu0 %1203
        %1205 = vrot.lane.b32.xlu0 %v1009, 8
        %v1206 = vpop.permute.xlu0 %1205
        %1207 = vrot.lane.b32.xlu0 %v1010, 8
        %v1208 = vpop.permute.xlu0 %1207
        %1209 = vrot.lane.b32.xlu0 %v1011, 8
        %v1210 = vpop.permute.xlu0 %1209
        %1211 = vrot.lane.b32.xlu0 %v1012, 8
        %v1212 = vpop.permute.xlu0 %1211
        %1213 = vrot.lane.b32.xlu0 %v1013, 8
        %v1214 = vpop.permute.xlu0 %1213
        %1215 = vrot.lane.b32.xlu0 %v1014, 8
        %v1216 = vpop.permute.xlu0 %1215
        %1217 = vrot.lane.b32.xlu0 %v1015, 8
        %v1218 = vpop.permute.xlu0 %1217
        %1219 = vrot.lane.b32.xlu0 %v1016, 8
        %v1220 = vpop.permute.xlu0 %1219
        %1221 = vrot.lane.b32.xlu0 %v1017, 8
        %v1222 = vpop.permute.xlu0 %1221
        %1223 = vrot.lane.b32.xlu0 %v1018, 8
        %v1224 = vpop.permute.xlu0 %1223
        %1225 = vrot.lane.b32.xlu0 %v1019, 8
        %v1226 = vpop.permute.xlu0 %1225
        %1227 = vrot.lane.b32.xlu0 %v1020, 8
        %v1228 = vpop.permute.xlu0 %1227
        %1229 = vrot.lane.b32.xlu0 %v1021, 8
        %v1230 = vpop.permute.xlu0 %1229
        %1231 = vrot.lane.b32.xlu0 %v1022, 8
        %v1232 = vpop.permute.xlu0 %1231
        %1233 = vrot.lane.b32.xlu0 %v1023, 8
        %v1234 = vpop.permute.xlu0 %1233
        %1235 = vrot.lane.b32.xlu0 %v1024, 8
        %v1236 = vpop.permute.xlu0 %1235
        %1237 = vrot.lane.b32.xlu0 %v1025, 8
        %v1238 = vpop.permute.xlu0 %1237
        %1239 = vrot.lane.b32.xlu0 %v1026, 8
        %v1240 = vpop.permute.xlu0 %1239
        %1241 = vrot.lane.b32.xlu0 %v1027, 8
        %v1242 = vpop.permute.xlu0 %1241
        %1243 = vrot.lane.b32.xlu0 %v1028, 8
        %v1244 = vpop.permute.xlu0 %1243
        %1245 = vrot.lane.b32.xlu0 %v1029, 8
        %v1246 = vpop.permute.xlu0 %1245
        %1247 = vrot.lane.b32.xlu0 %v1030, 8
        %v1248 = vpop.permute.xlu0 %1247
        %1249 = vrot.lane.b32.xlu0 %v1031, 8
        %v1250 = vpop.permute.xlu0 %1249
        %1251 = vrot.lane.b32.xlu0 %v1032, 8
        %v1252 = vpop.permute.xlu0 %1251
        %1253 = vrot.lane.b32.xlu0 %v1033, 8
        %v1254 = vpop.permute.xlu0 %1253
        %1255 = vrot.lane.b32.xlu0 %v1034, 8
        %v1256 = vpop.permute.xlu0 %1255
        %1257 = vrot.lane.b32.xlu0 %v1035, 8
        %v1258 = vpop.permute.xlu0 %1257
        %1259 = vrot.lane.b32.xlu0 %v1036, 8
        %v1260 = vpop.permute.xlu0 %1259
        %v1293 = vsel %vm837, %v940, %v1070
        %v1294 = vsel %vm837, %v941, %v1072
        %v1295 = vsel %vm837, %v942, %v1074
        %v1296 = vsel %vm837, %v943, %v1076
        %v1297 = vsel %vm837, %v944, %v1078
        %v1298 = vsel %vm837, %v945, %v1080
        %v1299 = vsel %vm837, %v946, %v1082
        %v1300 = vsel %vm837, %v947, %v1084
        %v1301 = vsel %vm837, %v948, %v1086
        %v1302 = vsel %vm837, %v949, %v1088
        %v1303 = vsel %vm837, %v950, %v1090
        %v1304 = vsel %vm837, %v951, %v1092
        %v1305 = vsel %vm837, %v952, %v1094
        %v1306 = vsel %vm837, %v953, %v1096
        %v1307 = vsel %vm837, %v954, %v1098
        %v1308 = vsel %vm837, %v955, %v1100
        %v1309 = vsel %vm837, %v956, %v1102
        %v1310 = vsel %vm837, %v957, %v1104
        %v1311 = vsel %vm837, %v958, %v1106
        %v1312 = vsel %vm837, %v959, %v1108
        %v1313 = vsel %vm837, %v960, %v1110
        %v1314 = vsel %vm837, %v961, %v1112
        %v1315 = vsel %vm837, %v962, %v1114
        %v1316 = vsel %vm837, %v963, %v1116
        %v1317 = vsel %vm837, %v964, %v1118
        %v1318 = vsel %vm837, %v965, %v1120
        %v1319 = vsel %vm837, %v966, %v1122
        %v1320 = vsel %vm837, %v967, %v1124
        %v1321 = vsel %vm837, %v968, %v1126
        %v1322 = vsel %vm837, %v969, %v1128
        %v1323 = vsel %vm837, %v970, %v1130
        %v1324 = vsel %vm837, %v971, %v1132
        %vm1325 = vcmask 64512
        %v1326 = vsel %vm1325, %v1293, %v1198
        %v1327 = vsel %vm1325, %v1294, %v1200
        %v1328 = vsel %vm1325, %v1295, %v1202
        %v1329 = vsel %vm1325, %v1296, %v1204
        %v1330 = vsel %vm1325, %v1297, %v1206
        %v1331 = vsel %vm1325, %v1298, %v1208
        %v1332 = vsel %vm1325, %v1299, %v1210
        %v1333 = vsel %vm1325, %v1300, %v1212
        %v1334 = vsel %vm1325, %v1301, %v1214
        %v1335 = vsel %vm1325, %v1302, %v1216
        %v1336 = vsel %vm1325, %v1303, %v1218
        %v1337 = vsel %vm1325, %v1304, %v1220
        %v1338 = vsel %vm1325, %v1305, %v1222
        %v1339 = vsel %vm1325, %v1306, %v1224
        %v1340 = vsel %vm1325, %v1307, %v1226
        %v1341 = vsel %vm1325, %v1308, %v1228
        %v1342 = vsel %vm1325, %v1309, %v1230
        %v1343 = vsel %vm1325, %v1310, %v1232
        %v1344 = vsel %vm1325, %v1311, %v1234
        %v1345 = vsel %vm1325, %v1312, %v1236
        %v1346 = vsel %vm1325, %v1313, %v1238
        %v1347 = vsel %vm1325, %v1314, %v1240
        %v1348 = vsel %vm1325, %v1315, %v1242
        %v1349 = vsel %vm1325, %v1316, %v1244
        %v1350 = vsel %vm1325, %v1317, %v1246
        %v1351 = vsel %vm1325, %v1318, %v1248
        %v1352 = vsel %vm1325, %v1319, %v1250
        %v1353 = vsel %vm1325, %v1320, %v1252
        %v1354 = vsel %vm1325, %v1321, %v1254
        %v1355 = vsel %vm1325, %v1322, %v1256
        %v1356 = vsel %vm1325, %v1323, %v1258
        %v1357 = vsel %vm1325, %v1324, %v1260
        %v1358 = vpack.c.bf16 %v1327, %v1326
        %v1359 = vpack.c.bf16 %v1329, %v1328
        %v1360 = vpack.c.bf16 %v1331, %v1330
        %v1361 = vpack.c.bf16 %v1333, %v1332
        %v1362 = vpack.c.bf16 %v1335, %v1334
        %v1363 = vpack.c.bf16 %v1337, %v1336
        %v1364 = vpack.c.bf16 %v1339, %v1338
        %v1365 = vpack.c.bf16 %v1341, %v1340
        %v1366 = vpack.c.bf16 %v1343, %v1342
        %v1367 = vpack.c.bf16 %v1345, %v1344
        %v1368 = vpack.c.bf16 %v1347, %v1346
        %v1369 = vpack.c.bf16 %v1349, %v1348
        %v1370 = vpack.c.bf16 %v1351, %v1350
        %v1371 = vpack.c.bf16 %v1353, %v1352
        %v1372 = vpack.c.bf16 %v1355, %v1354
        %v1373 = vpack.c.bf16 %v1357, %v1356
        %v1374 = vld [vmem:[%s1] sm:$0xf]
        %v1375 = vld [vmem:[%s1 + $0x4] sm:$0x3]
        %v1378 = vunpack.c.l.b16 %v1374
        %v1379 = vunpack.c.l.b16 %v1375
        %v1380 = vpack.c.b16 %v1379, %v1378
        %vm1381 = vcmask 97280
        %v1383 = vsel %vm1381, %v1358, 0
        %v1386 = vsel %vm1381, %v1359, 0
        %v1389 = vsel %vm1381, %v1360, 0
        %v1392 = vsel %vm1381, %v1361, 0
        %v1395 = vsel %vm1381, %v1362, 0
        %v1398 = vsel %vm1381, %v1363, 0
        %v1401 = vsel %vm1381, %v1364, 0
        %v1404 = vsel %vm1381, %v1365, 0
        %v1407 = vsel %vm1381, %v1366, 0
        %v1410 = vsel %vm1381, %v1367, 0
        %v1413 = vsel %vm1381, %v1368, 0
        %v1416 = vsel %vm1381, %v1369, 0
        %v1419 = vsel %vm1381, %v1370, 0
        %v1422 = vsel %vm1381, %v1371, 0
        %v1425 = vsel %vm1381, %v1372, 0
        %v1428 = vsel %vm1381, %v1373, 0
        %vm1430 = vcmask 1045504
        %v1432 = vsel %vm1430, %v1380, 0
        %1434 = vmatprep.subr.bf16.mxu0 0
        %1435 = vmatpush1.bf16.msra.mxu0 %v1432
        %1436 = vmatprep.subr.bf16.mxu0 0
        %1437 = vmatpush1.bf16.msra.mxu0 0
        %1438 = vmatprep.subr.bf16.mxu0 0
        %1439 = vmatpush1.bf16.msra.mxu0 0
        %1440 = vmatprep.subr.bf16.mxu0 0
        %1441 = vmatpush1.bf16.msra.mxu0 0
        %1442 = vmatprep.subr.bf16.mxu0 0
        %1443 = vmatpush1.bf16.msra.mxu0 0
        %1444 = vmatprep.subr.bf16.mxu0 0
        %1445 = vmatpush1.bf16.msra.mxu0 0
        %1446 = vmatprep.subr.bf16.mxu0 0
        %1447 = vmatpush1.bf16.msra.mxu0 0
        %1448 = vmatprep.subr.bf16.mxu0 0
        %1449 = vmatpush1.bf16.msra.mxu0 0
        %1450 = vmatprep.subr.bf16.mxu0 0
        %1451 = vmatpush1.bf16.msra.mxu0 0
        %1452 = vmatprep.subr.bf16.mxu0 0
        %1453 = vmatpush1.bf16.msra.mxu0 0
        %1454 = vmatprep.subr.bf16.mxu0 0
        %1455 = vmatpush1.bf16.msra.mxu0 0
        %1456 = vmatprep.subr.bf16.mxu0 0
        %1457 = vmatpush1.bf16.msra.mxu0 0
        %1458 = vmatprep.subr.bf16.mxu0 0
        %1459 = vmatpush1.bf16.msra.mxu0 0
        %1460 = vmatprep.subr.bf16.mxu0 0
        %1461 = vmatpush1.bf16.msra.mxu0 0
        %1462 = vmatprep.subr.bf16.mxu0 0
        %1463 = vmatpush1.bf16.msra.mxu0 0
        %1464 = vmatprep.subr.bf16.mxu0 0
        %1465 = vmatpush1.bf16.msra.mxu0 0
        %1466 = vmatprep.mubr.bf16.mxu0 0
        %1467 = vmatmul.mubr.bf16.gmra.mrb[0].mxu0 %v1383
        %v1468 = vpop.f32.mrb[0].mxu0
        %v1469 = vadd.f32 0.0, %v1468
        %v1470 = vpop.f32.mrb[0].mxu0
        %v1471 = vpop.f32.mrb[0].mxu0
        %v1472 = vadd.f32 0.0, %v1471
        %v1473 = vpop.f32.mrb[0].mxu0
        %1474 = vmatprep.mubr.bf16.mxu0 0
        %1475 = vmatmul.mubr.bf16.gmra.mrb[0].mxu0 %v1386
        %v1476 = vpop.f32.mrb[0].mxu0
        %v1477 = vadd.f32 0.0, %v1476
        %v1478 = vpop.f32.mrb[0].mxu0
        %v1479 = vpop.f32.mrb[0].mxu0
        %v1480 = vadd.f32 0.0, %v1479
        %v1481 = vpop.f32.mrb[0].mxu0
        %1482 = vmatprep.mubr.bf16.mxu0 0
        %1483 = vmatmul.mubr.bf16.gmra.mrb[0].mxu0 %v1389
        %v1484 = vpop.f32.mrb[0].mxu0
        %v1485 = vadd.f32 0.0, %v1484
        %v1486 = vpop.f32.mrb[0].mxu0
        %v1487 = vpop.f32.mrb[0].mxu0
        %v1488 = vadd.f32 0.0, %v1487
        %v1489 = vpop.f32.mrb[0].mxu0
        %1490 = vmatprep.mubr.bf16.mxu0 0
        %1491 = vmatmul.mubr.bf16.gmra.mrb[0].mxu0 %v1392
        %v1492 = vpop.f32.mrb[0].mxu0
        %v1493 = vadd.f32 0.0, %v1492
        %v1494 = vpop.f32.mrb[0].mxu0
        %v1495 = vpop.f32.mrb[0].mxu0
        %v1496 = vadd.f32 0.0, %v1495
        %v1497 = vpop.f32.mrb[0].mxu0
        %1498 = vmatprep.mubr.bf16.mxu0 0
        %1499 = vmatmul.mubr.bf16.gmra.mrb[0].mxu0 %v1395
        %v1500 = vpop.f32.mrb[0].mxu0
        %v1501 = vadd.f32 0.0, %v1500
        %v1502 = vpop.f32.mrb[0].mxu0
        %v1503 = vpop.f32.mrb[0].mxu0
        %v1504 = vadd.f32 0.0, %v1503
        %v1505 = vpop.f32.mrb[0].mxu0
        %1506 = vmatprep.mubr.bf16.mxu0 0
        %1507 = vmatmul.mubr.bf16.gmra.mrb[0].mxu0 %v1398
        %v1508 = vpop.f32.mrb[0].mxu0
        %v1509 = vadd.f32 0.0, %v1508
        %v1510 = vpop.f32.mrb[0].mxu0
        %v1511 = vpop.f32.mrb[0].mxu0
        %v1512 = vadd.f32 0.0, %v1511
        %v1513 = vpop.f32.mrb[0].mxu0
        %1514 = vmatprep.mubr.bf16.mxu0 0
        %1515 = vmatmul.mubr.bf16.gmra.mrb[0].mxu0 %v1401
        %v1516 = vpop.f32.mrb[0].mxu0
        %v1517 = vadd.f32 0.0, %v1516
        %v1518 = vpop.f32.mrb[0].mxu0
        %v1519 = vpop.f32.mrb[0].mxu0
        %v1520 = vadd.f32 0.0, %v1519
        %v1521 = vpop.f32.mrb[0].mxu0
        %1522 = vmatprep.mubr.bf16.mxu0 0
        %1523 = vmatmul.mubr.bf16.gmra.mrb[0].mxu0 %v1404
        %v1524 = vpop.f32.mrb[0].mxu0
        %v1525 = vadd.f32 0.0, %v1524
        %v1526 = vpop.f32.mrb[0].mxu0
        %v1527 = vpop.f32.mrb[0].mxu0
        %v1528 = vadd.f32 0.0, %v1527
        %v1529 = vpop.f32.mrb[0].mxu0
        %1530 = vmatprep.mubr.bf16.mxu0 0
        %1531 = vmatmul.mubr.bf16.gmra.mrb[0].mxu0 %v1407
        %v1532 = vpop.f32.mrb[0].mxu0
        %v1533 = vadd.f32 0.0, %v1532
        %v1534 = vpop.f32.mrb[0].mxu0
        %v1535 = vpop.f32.mrb[0].mxu0
        %v1536 = vadd.f32 0.0, %v1535
        %v1537 = vpop.f32.mrb[0].mxu0
        %1538 = vmatprep.mubr.bf16.mxu0 0
        %1539 = vmatmul.mubr.bf16.gmra.mrb[0].mxu0 %v1410
        %v1540 = vpop.f32.mrb[0].mxu0
        %v1541 = vadd.f32 0.0, %v1540
        %v1542 = vpop.f32.mrb[0].mxu0
        %v1543 = vpop.f32.mrb[0].mxu0
        %v1544 = vadd.f32 0.0, %v1543
        %v1545 = vpop.f32.mrb[0].mxu0
        %1546 = vmatprep.mubr.bf16.mxu0 0
        %1547 = vmatmul.mubr.bf16.gmra.mrb[0].mxu0 %v1413
        %v1548 = vpop.f32.mrb[0].mxu0
        %v1549 = vadd.f32 0.0, %v1548
        %v1550 = vpop.f32.mrb[0].mxu0
        %v1551 = vpop.f32.mrb[0].mxu0
        %v1552 = vadd.f32 0.0, %v1551
        %v1553 = vpop.f32.mrb[0].mxu0
        %1554 = vmatprep.mubr.bf16.mxu0 0
        %1555 = vmatmul.mubr.bf16.gmra.mrb[0].mxu0 %v1416
        %v1556 = vpop.f32.mrb[0].mxu0
        %v1557 = vadd.f32 0.0, %v1556
        %v1558 = vpop.f32.mrb[0].mxu0
        %v1559 = vpop.f32.mrb[0].mxu0
        %v1560 = vadd.f32 0.0, %v1559
        %v1561 = vpop.f32.mrb[0].mxu0
        %1562 = vmatprep.mubr.bf16.mxu0 0
        %1563 = vmatmul.mubr.bf16.gmra.mrb[0].mxu0 %v1419
        %v1564 = vpop.f32.mrb[0].mxu0
        %v1565 = vadd.f32 0.0, %v1564
        %v1566 = vpop.f32.mrb[0].mxu0
        %v1567 = vpop.f32.mrb[0].mxu0
        %v1568 = vadd.f32 0.0, %v1567
        %v1569 = vpop.f32.mrb[0].mxu0
        %1570 = vmatprep.mubr.bf16.mxu0 0
        %1571 = vmatmul.mubr.bf16.gmra.mrb[0].mxu0 %v1422
        %v1572 = vpop.f32.mrb[0].mxu0
        %v1573 = vadd.f32 0.0, %v1572
        %v1574 = vpop.f32.mrb[0].mxu0
        %v1575 = vpop.f32.mrb[0].mxu0
        %v1576 = vadd.f32 0.0, %v1575
        %v1577 = vpop.f32.mrb[0].mxu0
        %1578 = vmatprep.mubr.bf16.mxu0 0
        %1579 = vmatmul.mubr.bf16.gmra.mrb[0].mxu0 %v1425
        %v1580 = vpop.f32.mrb[0].mxu0
        %v1581 = vadd.f32 0.0, %v1580
        %v1582 = vpop.f32.mrb[0].mxu0
        %v1583 = vpop.f32.mrb[0].mxu0
        %v1584 = vadd.f32 0.0, %v1583
        %v1585 = vpop.f32.mrb[0].mxu0
        %1586 = vmatprep.mubr.bf16.mxu0 0
        %1587 = vmatmul.mubr.bf16.gmra.mrb[0].mxu0 %v1428
        %v1588 = vpop.f32.mrb[0].mxu0
        %v1589 = vadd.f32 0.0, %v1588
        %v1590 = vpop.f32.mrb[0].mxu0
        %v1591 = vpop.f32.mrb[0].mxu0
        %v1592 = vadd.f32 0.0, %v1591
        %v1593 = vpop.f32.mrb[0].mxu0
        %1594 = vdwg.mxu0
        %v1595 = vld [vmem:[%s2] sm:$0x1]
        %v1597 = vlaneseq
        %v1598 = vshrl.u32 %v1597, 7
        %v1599 = vsub.s32 0, %v1598
        %v1600 = vrot.slane %v1595, %v1599
        %v1602 = vadd.f32 %v1469, %v1600
        %v1603 = vadd.f32 %v1472, %v1600
        %v1604 = vadd.f32 %v1477, %v1600
        %v1605 = vadd.f32 %v1480, %v1600
        %v1606 = vadd.f32 %v1485, %v1600
        %v1607 = vadd.f32 %v1488, %v1600
        %v1608 = vadd.f32 %v1493, %v1600
        %v1609 = vadd.f32 %v1496, %v1600
        %v1610 = vadd.f32 %v1501, %v1600
        %v1611 = vadd.f32 %v1504, %v1600
        %v1612 = vadd.f32 %v1509, %v1600
        %v1613 = vadd.f32 %v1512, %v1600
        %v1614 = vadd.f32 %v1517, %v1600
        %v1615 = vadd.f32 %v1520, %v1600
        %v1616 = vadd.f32 %v1525, %v1600
        %v1617 = vadd.f32 %v1528, %v1600
        %v1618 = vadd.f32 %v1533, %v1600
        %v1619 = vadd.f32 %v1536, %v1600
        %v1620 = vadd.f32 %v1541, %v1600
        %v1621 = vadd.f32 %v1544, %v1600
        %v1622 = vadd.f32 %v1549, %v1600
        %v1623 = vadd.f32 %v1552, %v1600
        %v1624 = vadd.f32 %v1557, %v1600
        %v1625 = vadd.f32 %v1560, %v1600
        %v1626 = vadd.f32 %v1565, %v1600
        %v1627 = vadd.f32 %v1568, %v1600
        %v1628 = vadd.f32 %v1573, %v1600
        %v1629 = vadd.f32 %v1576, %v1600
        %v1630 = vadd.f32 %v1581, %v1600
        %v1631 = vadd.f32 %v1584, %v1600
        %v1632 = vadd.f32 %v1589, %v1600
        %v1633 = vadd.f32 %v1592, %v1600
        %v1634 = vmax.f32 %v1602, 0.0
        %v1635 = vmax.f32 %v1603, 0.0
        %v1636 = vmax.f32 %v1604, 0.0
        %v1637 = vmax.f32 %v1605, 0.0
        %v1638 = vmax.f32 %v1606, 0.0
        %v1639 = vmax.f32 %v1607, 0.0
        %v1640 = vmax.f32 %v1608, 0.0
        %v1641 = vmax.f32 %v1609, 0.0
        %v1642 = vmax.f32 %v1610, 0.0
        %v1643 = vmax.f32 %v1611, 0.0
        %v1644 = vmax.f32 %v1612, 0.0
        %v1645 = vmax.f32 %v1613, 0.0
        %v1646 = vmax.f32 %v1614, 0.0
        %v1647 = vmax.f32 %v1615, 0.0
        %v1648 = vmax.f32 %v1616, 0.0
        %v1649 = vmax.f32 %v1617, 0.0
        %v1650 = vmax.f32 %v1618, 0.0
        %v1651 = vmax.f32 %v1619, 0.0
        %v1652 = vmax.f32 %v1620, 0.0
        %v1653 = vmax.f32 %v1621, 0.0
        %v1654 = vmax.f32 %v1622, 0.0
        %v1655 = vmax.f32 %v1623, 0.0
        %v1656 = vmax.f32 %v1624, 0.0
        %v1657 = vmax.f32 %v1625, 0.0
        %v1658 = vmax.f32 %v1626, 0.0
        %v1659 = vmax.f32 %v1627, 0.0
        %v1660 = vmax.f32 %v1628, 0.0
        %v1661 = vmax.f32 %v1629, 0.0
        %v1662 = vmax.f32 %v1630, 0.0
        %v1663 = vmax.f32 %v1631, 0.0
        %v1664 = vmax.f32 %v1632, 0.0
        %v1665 = vmax.f32 %v1633, 0.0
        %s1666 = scalar_lea.vmem [#allocation3], 256
        %1667 = vst.msk [vmem:[%s1666] sm:$0xff] %vm907, %v1634
        %1668 = vst.msk [vmem:[%s1666 + $0x8] sm:$0xff] %vm907, %v1635
        %1669 = vst.msk [vmem:[%s1666 + $0x10] sm:$0xff] %vm907, %v1636
        %1670 = vst.msk [vmem:[%s1666 + $0x18] sm:$0xff] %vm907, %v1637
        %1671 = vst.msk [vmem:[%s1666 + $0x20] sm:$0xff] %vm907, %v1638
        %1672 = vst.msk [vmem:[%s1666 + $0x28] sm:$0xff] %vm907, %v1639
        %1673 = vst.msk [vmem:[%s1666 + $0x30] sm:$0xff] %vm907, %v1640
        %1674 = vst.msk [vmem:[%s1666 + $0x38] sm:$0xff] %vm907, %v1641
        %1675 = vst.msk [vmem:[%s1666 + $0x40] sm:$0xff] %vm907, %v1642
        %1676 = vst.msk [vmem:[%s1666 + $0x48] sm:$0xff] %vm907, %v1643
        %1677 = vst.msk [vmem:[%s1666 + $0x50] sm:$0xff] %vm907, %v1644
        %1678 = vst.msk [vmem:[%s1666 + $0x58] sm:$0xff] %vm907, %v1645
        %1679 = vst.msk [vmem:[%s1666 + $0x60] sm:$0xff] %vm907, %v1646
        %1680 = vst.msk [vmem:[%s1666 + $0x68] sm:$0xff] %vm907, %v1647
        %1681 = vst.msk [vmem:[%s1666 + $0x70] sm:$0xff] %vm907, %v1648
        %1682 = vst.msk [vmem:[%s1666 + $0x78] sm:$0xff] %vm907, %v1649
        %1683 = vst.msk [vmem:[%s1666 + $0x80] sm:$0xff] %vm907, %v1650
        %1684 = vst.msk [vmem:[%s1666 + $0x88] sm:$0xff] %vm907, %v1651
        %1685 = vst.msk [vmem:[%s1666 + $0x90] sm:$0xff] %vm907, %v1652
        %1686 = vst.msk [vmem:[%s1666 + $0x98] sm:$0xff] %vm907, %v1653
        %1687 = vst.msk [vmem:[%s1666 + $0xa0] sm:$0xff] %vm907, %v1654
        %1688 = vst.msk [vmem:[%s1666 + $0xa8] sm:$0xff] %vm907, %v1655
        %1689 = vst.msk [vmem:[%s1666 + $0xb0] sm:$0xff] %vm907, %v1656
        %1690 = vst.msk [vmem:[%s1666 + $0xb8] sm:$0xff] %vm907, %v1657
        %1691 = vst.msk [vmem:[%s1666 + $0xc0] sm:$0xff] %vm907, %v1658
        %1692 = vst.msk [vmem:[%s1666 + $0xc8] sm:$0xff] %vm907, %v1659
        %1693 = vst.msk [vmem:[%s1666 + $0xd0] sm:$0xff] %vm907, %v1660
        %1694 = vst.msk [vmem:[%s1666 + $0xd8] sm:$0xff] %vm907, %v1661
        %1695 = vst.msk [vmem:[%s1666 + $0xe0] sm:$0xff] %vm907, %v1662
        %1696 = vst.msk [vmem:[%s1666 + $0xe8] sm:$0xff] %vm907, %v1663
        %1697 = vst.msk [vmem:[%s1666 + $0xf0] sm:$0xff] %vm907, %v1664
        %1698 = vst.msk [vmem:[%s1666 + $0xf8] sm:$0xff] %vm907, %v1665
        %s1699 = scalar_lea.vmem [#allocation3], 192
        %v1700 = vld [vmem:[%s1699] sm:$0xff]
        %v1701 = vld [vmem:[%s1699 + $0x8] sm:$0xff]
        %v1702 = vld [vmem:[%s1699 + $0x10] sm:$0xff]
        %v1703 = vld [vmem:[%s1699 + $0x18] sm:$0xff]
        %v1704 = vld [vmem:[%s1699 + $0x20] sm:$0xff]
        %v1705 = vld [vmem:[%s1699 + $0x28] sm:$0xff]
        %v1706 = vld [vmem:[%s1699 + $0x30] sm:$0xff]
        %v1707 = vld [vmem:[%s1699 + $0x38] sm:$0xff]
        %v1708 = vld [vmem:[%s1699 + $0x40] sm:$0xff]
        %v1709 = vld [vmem:[%s1699 + $0x48] sm:$0xff]
        %v1710 = vld [vmem:[%s1699 + $0x50] sm:$0xff]
        %v1711 = vld [vmem:[%s1699 + $0x58] sm:$0xff]
        %v1712 = vld [vmem:[%s1699 + $0x60] sm:$0xff]
        %v1713 = vld [vmem:[%s1699 + $0x68] sm:$0xff]
        %v1714 = vld [vmem:[%s1699 + $0x70] sm:$0xff]
        %v1715 = vld [vmem:[%s1699 + $0x78] sm:$0xff]
        %v1716 = vld [vmem:[%s1699 + $0x80] sm:$0xff]
        %v1717 = vld [vmem:[%s1699 + $0x88] sm:$0xff]
        %v1718 = vld [vmem:[%s1699 + $0x90] sm:$0xff]
        %v1719 = vld [vmem:[%s1699 + $0x98] sm:$0xff]
        %v1720 = vld [vmem:[%s1699 + $0xa0] sm:$0xff]
        %v1721 = vld [vmem:[%s1699 + $0xa8] sm:$0xff]
        %v1722 = vld [vmem:[%s1699 + $0xb0] sm:$0xff]
        %v1723 = vld [vmem:[%s1699 + $0xb8] sm:$0xff]
        %v1724 = vld [vmem:[%s1699 + $0xc0] sm:$0xff]
        %v1725 = vld [vmem:[%s1699 + $0xc8] sm:$0xff]
        %v1726 = vld [vmem:[%s1699 + $0xd0] sm:$0xff]
        %v1727 = vld [vmem:[%s1699 + $0xd8] sm:$0xff]
        %v1728 = vld [vmem:[%s1699 + $0xe0] sm:$0xff]
        %v1729 = vld [vmem:[%s1699 + $0xe8] sm:$0xff]
        %v1730 = vld [vmem:[%s1699 + $0xf0] sm:$0xff]
        %v1731 = vld [vmem:[%s1699 + $0xf8] sm:$0xff]
        %s1732 = scalar_lea.vmem [#allocation3], 224
        %v1733 = vld [vmem:[%s1732] sm:$0xff]
        %v1734 = vld [vmem:[%s1732 + $0x8] sm:$0xff]
        %v1735 = vld [vmem:[%s1732 + $0x10] sm:$0xff]
        %v1736 = vld [vmem:[%s1732 + $0x18] sm:$0xff]
        %v1737 = vld [vmem:[%s1732 + $0x20] sm:$0xff]
        %v1738 = vld [vmem:[%s1732 + $0x28] sm:$0xff]
        %v1739 = vld [vmem:[%s1732 + $0x30] sm:$0xff]
        %v1740 = vld [vmem:[%s1732 + $0x38] sm:$0xff]
        %v1741 = vld [vmem:[%s1732 + $0x40] sm:$0xff]
        %v1742 = vld [vmem:[%s1732 + $0x48] sm:$0xff]
        %v1743 = vld [vmem:[%s1732 + $0x50] sm:$0xff]
        %v1744 = vld [vmem:[%s1732 + $0x58] sm:$0xff]
        %v1745 = vld [vmem:[%s1732 + $0x60] sm:$0xff]
        %v1746 = vld [vmem:[%s1732 + $0x68] sm:$0xff]
        %v1747 = vld [vmem:[%s1732 + $0x70] sm:$0xff]
        %v1748 = vld [vmem:[%s1732 + $0x78] sm:$0xff]
        %v1749 = vld [vmem:[%s1732 + $0x80] sm:$0xff]
        %v1750 = vld [vmem:[%s1732 + $0x88] sm:$0xff]
        %v1751 = vld [vmem:[%s1732 + $0x90] sm:$0xff]
        %v1752 = vld [vmem:[%s1732 + $0x98] sm:$0xff]
        %v1753 = vld [vmem:[%s1732 + $0xa0] sm:$0xff]
        %v1754 = vld [vmem:[%s1732 + $0xa8] sm:$0xff]
        %v1755 = vld [vmem:[%s1732 + $0xb0] sm:$0xff]
        %v1756 = vld [vmem:[%s1732 + $0xb8] sm:$0xff]
        %v1757 = vld [vmem:[%s1732 + $0xc0] sm:$0xff]
        %v1758 = vld [vmem:[%s1732 + $0xc8] sm:$0xff]
        %v1759 = vld [vmem:[%s1732 + $0xd0] sm:$0xff]
        %v1760 = vld [vmem:[%s1732 + $0xd8] sm:$0xff]
        %v1761 = vld [vmem:[%s1732 + $0xe0] sm:$0xff]
        %v1762 = vld [vmem:[%s1732 + $0xe8] sm:$0xff]
        %v1763 = vld [vmem:[%s1732 + $0xf0] sm:$0xff]
        %v1764 = vld [vmem:[%s1732 + $0xf8] sm:$0xff]
        %v1765 = vld [vmem:[%s1666] sm:$0xff]
        %v1766 = vld [vmem:[%s1666 + $0x8] sm:$0xff]
        %v1767 = vld [vmem:[%s1666 + $0x10] sm:$0xff]
        %v1768 = vld [vmem:[%s1666 + $0x18] sm:$0xff]
        %v1769 = vld [vmem:[%s1666 + $0x20] sm:$0xff]
        %v1770 = vld [vmem:[%s1666 + $0x28] sm:$0xff]
        %v1771 = vld [vmem:[%s1666 + $0x30] sm:$0xff]
        %v1772 = vld [vmem:[%s1666 + $0x38] sm:$0xff]
        %v1773 = vld [vmem:[%s1666 + $0x40] sm:$0xff]
        %v1774 = vld [vmem:[%s1666 + $0x48] sm:$0xff]
        %v1775 = vld [vmem:[%s1666 + $0x50] sm:$0xff]
        %v1776 = vld [vmem:[%s1666 + $0x58] sm:$0xff]
        %v1777 = vld [vmem:[%s1666 + $0x60] sm:$0xff]
        %v1778 = vld [vmem:[%s1666 + $0x68] sm:$0xff]
        %v1779 = vld [vmem:[%s1666 + $0x70] sm:$0xff]
        %v1780 = vld [vmem:[%s1666 + $0x78] sm:$0xff]
        %v1781 = vld [vmem:[%s1666 + $0x80] sm:$0xff]
        %v1782 = vld [vmem:[%s1666 + $0x88] sm:$0xff]
        %v1783 = vld [vmem:[%s1666 + $0x90] sm:$0xff]
        %v1784 = vld [vmem:[%s1666 + $0x98] sm:$0xff]
        %v1785 = vld [vmem:[%s1666 + $0xa0] sm:$0xff]
        %v1786 = vld [vmem:[%s1666 + $0xa8] sm:$0xff]
        %v1787 = vld [vmem:[%s1666 + $0xb0] sm:$0xff]
        %v1788 = vld [vmem:[%s1666 + $0xb8] sm:$0xff]
        %v1789 = vld [vmem:[%s1666 + $0xc0] sm:$0xff]
        %v1790 = vld [vmem:[%s1666 + $0xc8] sm:$0xff]
        %v1791 = vld [vmem:[%s1666 + $0xd0] sm:$0xff]
        %v1792 = vld [vmem:[%s1666 + $0xd8] sm:$0xff]
        %v1793 = vld [vmem:[%s1666 + $0xe0] sm:$0xff]
        %v1794 = vld [vmem:[%s1666 + $0xe8] sm:$0xff]
        %v1795 = vld [vmem:[%s1666 + $0xf0] sm:$0xff]
        %v1796 = vld [vmem:[%s1666 + $0xf8] sm:$0xff]
        %1829 = vrot.lane.b32.xlu0 %v1733, 32
        %v1830 = vpop.permute.xlu0 %1829
        %1831 = vrot.lane.b32.xlu0 %v1734, 32
        %v1832 = vpop.permute.xlu0 %1831
        %1833 = vrot.lane.b32.xlu0 %v1735, 32
        %v1834 = vpop.permute.xlu0 %1833
        %1835 = vrot.lane.b32.xlu0 %v1736, 32
        %v1836 = vpop.permute.xlu0 %1835
        %1837 = vrot.lane.b32.xlu0 %v1737, 32
        %v1838 = vpop.permute.xlu0 %1837
        %1839 = vrot.lane.b32.xlu0 %v1738, 32
        %v1840 = vpop.permute.xlu0 %1839
        %1841 = vrot.lane.b32.xlu0 %v1739, 32
        %v1842 = vpop.permute.xlu0 %1841
        %1843 = vrot.lane.b32.xlu0 %v1740, 32
        %v1844 = vpop.permute.xlu0 %1843
        %1845 = vrot.lane.b32.xlu0 %v1741, 32
        %v1846 = vpop.permute.xlu0 %1845
        %1847 = vrot.lane.b32.xlu0 %v1742, 32
        %v1848 = vpop.permute.xlu0 %1847
        %1849 = vrot.lane.b32.xlu0 %v1743, 32
        %v1850 = vpop.permute.xlu0 %1849
        %1851 = vrot.lane.b32.xlu0 %v1744, 32
        %v1852 = vpop.permute.xlu0 %1851
        %1853 = vrot.lane.b32.xlu0 %v1745, 32
        %v1854 = vpop.permute.xlu0 %1853
        %1855 = vrot.lane.b32.xlu0 %v1746, 32
        %v1856 = vpop.permute.xlu0 %1855
        %1857 = vrot.lane.b32.xlu0 %v1747, 32
        %v1858 = vpop.permute.xlu0 %1857
        %1859 = vrot.lane.b32.xlu0 %v1748, 32
        %v1860 = vpop.permute.xlu0 %1859
        %1861 = vrot.lane.b32.xlu0 %v1749, 32
        %v1862 = vpop.permute.xlu0 %1861
        %1863 = vrot.lane.b32.xlu0 %v1750, 32
        %v1864 = vpop.permute.xlu0 %1863
        %1865 = vrot.lane.b32.xlu0 %v1751, 32
        %v1866 = vpop.permute.xlu0 %1865
        %1867 = vrot.lane.b32.xlu0 %v1752, 32
        %v1868 = vpop.permute.xlu0 %1867
        %1869 = vrot.lane.b32.xlu0 %v1753, 32
        %v1870 = vpop.permute.xlu0 %1869
        %1871 = vrot.lane.b32.xlu0 %v1754, 32
        %v1872 = vpop.permute.xlu0 %1871
        %1873 = vrot.lane.b32.xlu0 %v1755, 32
        %v1874 = vpop.permute.xlu0 %1873
        %1875 = vrot.lane.b32.xlu0 %v1756, 32
        %v1876 = vpop.permute.xlu0 %1875
        %1877 = vrot.lane.b32.xlu0 %v1757, 32
        %v1878 = vpop.permute.xlu0 %1877
        %1879 = vrot.lane.b32.xlu0 %v1758, 32
        %v1880 = vpop.permute.xlu0 %1879
        %1881 = vrot.lane.b32.xlu0 %v1759, 32
        %v1882 = vpop.permute.xlu0 %1881
        %1883 = vrot.lane.b32.xlu0 %v1760, 32
        %v1884 = vpop.permute.xlu0 %1883
        %1885 = vrot.lane.b32.xlu0 %v1761, 32
        %v1886 = vpop.permute.xlu0 %1885
        %1887 = vrot.lane.b32.xlu0 %v1762, 32
        %v1888 = vpop.permute.xlu0 %1887
        %1889 = vrot.lane.b32.xlu0 %v1763, 32
        %v1890 = vpop.permute.xlu0 %1889
        %1891 = vrot.lane.b32.xlu0 %v1764, 32
        %v1892 = vpop.permute.xlu0 %1891
        %1957 = vrot.lane.b32.xlu0 %v1765, 64
        %v1958 = vpop.permute.xlu0 %1957
        %1959 = vrot.lane.b32.xlu0 %v1766, 64
        %v1960 = vpop.permute.xlu0 %1959
        %1961 = vrot.lane.b32.xlu0 %v1767, 64
        %v1962 = vpop.permute.xlu0 %1961
        %1963 = vrot.lane.b32.xlu0 %v1768, 64
        %v1964 = vpop.permute.xlu0 %1963
        %1965 = vrot.lane.b32.xlu0 %v1769, 64
        %v1966 = vpop.permute.xlu0 %1965
        %1967 = vrot.lane.b32.xlu0 %v1770, 64
        %v1968 = vpop.permute.xlu0 %1967
        %1969 = vrot.lane.b32.xlu0 %v1771, 64
        %v1970 = vpop.permute.xlu0 %1969
        %1971 = vrot.lane.b32.xlu0 %v1772, 64
        %v1972 = vpop.permute.xlu0 %1971
        %1973 = vrot.lane.b32.xlu0 %v1773, 64
        %v1974 = vpop.permute.xlu0 %1973
        %1975 = vrot.lane.b32.xlu0 %v1774, 64
        %v1976 = vpop.permute.xlu0 %1975
        %1977 = vrot.lane.b32.xlu0 %v1775, 64
        %v1978 = vpop.permute.xlu0 %1977
        %1979 = vrot.lane.b32.xlu0 %v1776, 64
        %v1980 = vpop.permute.xlu0 %1979
        %1981 = vrot.lane.b32.xlu0 %v1777, 64
        %v1982 = vpop.permute.xlu0 %1981
        %1983 = vrot.lane.b32.xlu0 %v1778, 64
        %v1984 = vpop.permute.xlu0 %1983
        %1985 = vrot.lane.b32.xlu0 %v1779, 64
        %v1986 = vpop.permute.xlu0 %1985
        %1987 = vrot.lane.b32.xlu0 %v1780, 64
        %v1988 = vpop.permute.xlu0 %1987
        %1989 = vrot.lane.b32.xlu0 %v1781, 64
        %v1990 = vpop.permute.xlu0 %1989
        %1991 = vrot.lane.b32.xlu0 %v1782, 64
        %v1992 = vpop.permute.xlu0 %1991
        %1993 = vrot.lane.b32.xlu0 %v1783, 64
        %v1994 = vpop.permute.xlu0 %1993
        %1995 = vrot.lane.b32.xlu0 %v1784, 64
        %v1996 = vpop.permute.xlu0 %1995
        %1997 = vrot.lane.b32.xlu0 %v1785, 64
        %v1998 = vpop.permute.xlu0 %1997
        %1999 = vrot.lane.b32.xlu0 %v1786, 64
        %v2000 = vpop.permute.xlu0 %1999
        %2001 = vrot.lane.b32.xlu0 %v1787, 64
        %v2002 = vpop.permute.xlu0 %2001
        %2003 = vrot.lane.b32.xlu0 %v1788, 64
        %v2004 = vpop.permute.xlu0 %2003
        %2005 = vrot.lane.b32.xlu0 %v1789, 64
        %v2006 = vpop.permute.xlu0 %2005
        %2007 = vrot.lane.b32.xlu0 %v1790, 64
        %v2008 = vpop.permute.xlu0 %2007
        %2009 = vrot.lane.b32.xlu0 %v1791, 64
        %v2010 = vpop.permute.xlu0 %2009
        %2011 = vrot.lane.b32.xlu0 %v1792, 64
        %v2012 = vpop.permute.xlu0 %2011
        %2013 = vrot.lane.b32.xlu0 %v1793, 64
        %v2014 = vpop.permute.xlu0 %2013
        %2015 = vrot.lane.b32.xlu0 %v1794, 64
        %v2016 = vpop.permute.xlu0 %2015
        %2017 = vrot.lane.b32.xlu0 %v1795, 64
        %v2018 = vpop.permute.xlu0 %2017
        %2019 = vrot.lane.b32.xlu0 %v1796, 64
        %v2020 = vpop.permute.xlu0 %2019
        %v2053 = vsel %vm907, %v1700, %v1830
        %v2054 = vsel %vm907, %v1701, %v1832
        %v2055 = vsel %vm907, %v1702, %v1834
        %v2056 = vsel %vm907, %v1703, %v1836
        %v2057 = vsel %vm907, %v1704, %v1838
        %v2058 = vsel %vm907, %v1705, %v1840
        %v2059 = vsel %vm907, %v1706, %v1842
        %v2060 = vsel %vm907, %v1707, %v1844
        %v2061 = vsel %vm907, %v1708, %v1846
        %v2062 = vsel %vm907, %v1709, %v1848
        %v2063 = vsel %vm907, %v1710, %v1850
        %v2064 = vsel %vm907, %v1711, %v1852
        %v2065 = vsel %vm907, %v1712, %v1854
        %v2066 = vsel %vm907, %v1713, %v1856
        %v2067 = vsel %vm907, %v1714, %v1858
        %v2068 = vsel %vm907, %v1715, %v1860
        %v2069 = vsel %vm907, %v1716, %v1862
        %v2070 = vsel %vm907, %v1717, %v1864
        %v2071 = vsel %vm907, %v1718, %v1866
        %v2072 = vsel %vm907, %v1719, %v1868
        %v2073 = vsel %vm907, %v1720, %v1870
        %v2074 = vsel %vm907, %v1721, %v1872
        %v2075 = vsel %vm907, %v1722, %v1874
        %v2076 = vsel %vm907, %v1723, %v1876
        %v2077 = vsel %vm907, %v1724, %v1878
        %v2078 = vsel %vm907, %v1725, %v1880
        %v2079 = vsel %vm907, %v1726, %v1882
        %v2080 = vsel %vm907, %v1727, %v1884
        %v2081 = vsel %vm907, %v1728, %v1886
        %v2082 = vsel %vm907, %v1729, %v1888
        %v2083 = vsel %vm907, %v1730, %v1890
        %v2084 = vsel %vm907, %v1731, %v1892
        %vm2085 = vcmask 523264
        %v2086 = vsel %vm2085, %v2053, %v1958
        %v2087 = vsel %vm2085, %v2054, %v1960
        %v2088 = vsel %vm2085, %v2055, %v1962
        %v2089 = vsel %vm2085, %v2056, %v1964
        %v2090 = vsel %vm2085, %v2057, %v1966
        %v2091 = vsel %vm2085, %v2058, %v1968
        %v2092 = vsel %vm2085, %v2059, %v1970
        %v2093 = vsel %vm2085, %v2060, %v1972
        %v2094 = vsel %vm2085, %v2061, %v1974
        %v2095 = vsel %vm2085, %v2062, %v1976
        %v2096 = vsel %vm2085, %v2063, %v1978
        %v2097 = vsel %vm2085, %v2064, %v1980
        %v2098 = vsel %vm2085, %v2065, %v1982
        %v2099 = vsel %vm2085, %v2066, %v1984
        %v2100 = vsel %vm2085, %v2067, %v1986
        %v2101 = vsel %vm2085, %v2068, %v1988
        %v2102 = vsel %vm2085, %v2069, %v1990
        %v2103 = vsel %vm2085, %v2070, %v1992
        %v2104 = vsel %vm2085, %v2071, %v1994
        %v2105 = vsel %vm2085, %v2072, %v1996
        %v2106 = vsel %vm2085, %v2073, %v1998
        %v2107 = vsel %vm2085, %v2074, %v2000
        %v2108 = vsel %vm2085, %v2075, %v2002
        %v2109 = vsel %vm2085, %v2076, %v2004
        %v2110 = vsel %vm2085, %v2077, %v2006
        %v2111 = vsel %vm2085, %v2078, %v2008
        %v2112 = vsel %vm2085, %v2079, %v2010
        %v2113 = vsel %vm2085, %v2080, %v2012
        %v2114 = vsel %vm2085, %v2081, %v2014
        %v2115 = vsel %vm2085, %v2082, %v2016
        %v2116 = vsel %vm2085, %v2083, %v2018
        %v2117 = vsel %vm2085, %v2084, %v2020
        %v2118 = vpack.c.bf16 %v2087, %v2086
        %v2119 = vpack.c.bf16 %v2089, %v2088
        %v2120 = vpack.c.bf16 %v2091, %v2090
        %v2121 = vpack.c.bf16 %v2093, %v2092
        %v2122 = vpack.c.bf16 %v2095, %v2094
        %v2123 = vpack.c.bf16 %v2097, %v2096
        %v2124 = vpack.c.bf16 %v2099, %v2098
        %v2125 = vpack.c.bf16 %v2101, %v2100
        %v2126 = vpack.c.bf16 %v2103, %v2102
        %v2127 = vpack.c.bf16 %v2105, %v2104
        %v2128 = vpack.c.bf16 %v2107, %v2106
        %v2129 = vpack.c.bf16 %v2109, %v2108
        %v2130 = vpack.c.bf16 %v2111, %v2110
        %v2131 = vpack.c.bf16 %v2113, %v2112
        %v2132 = vpack.c.bf16 %v2115, %v2114
        %v2133 = vpack.c.bf16 %v2117, %v2116
        %v2134 = vld [vmem:[%s3] sm:$0xf]
        %v2135 = vld [vmem:[%s3 + $0x4] sm:$0xf]
        %v2136 = vld [vmem:[%s3 + $0x8] sm:$0xf]
        %v2137 = vld [vmem:[%s3 + $0xc] sm:$0xf]
        %v2138 = vld [vmem:[%s3 + $0x10] sm:$0xf]
        %v2139 = vld [vmem:[%s3 + $0x14] sm:$0xf]
        %v2140 = vld [vmem:[%s3 + $0x18] sm:$0xf]
        %v2141 = vld [vmem:[%s3 + $0x1c] sm:$0xf]
        %v2142 = vld [vmem:[%s3 + $0x20] sm:$0xf]
        %v2143 = vld [vmem:[%s3 + $0x24] sm:$0xf]
        %v2144 = vld [vmem:[%s3 + $0x28] sm:$0xf]
        %v2145 = vld [vmem:[%s3 + $0x2c] sm:$0xf]
        %v2158 = vunpack.c.l.b16 %v2134
        %v2159 = vunpack.c.l.b16 %v2135
        %v2160 = vunpack.c.l.b16 %v2136
        %v2161 = vunpack.c.l.b16 %v2137
        %v2162 = vunpack.c.l.b16 %v2138
        %v2163 = vunpack.c.l.b16 %v2139
        %v2164 = vunpack.c.l.b16 %v2140
        %v2165 = vunpack.c.l.b16 %v2141
        %v2166 = vunpack.c.l.b16 %v2142
        %v2167 = vunpack.c.l.b16 %v2143
        %v2168 = vunpack.c.l.b16 %v2144
        %v2169 = vunpack.c.l.b16 %v2145
        %v2170 = vpack.c.b16 %v2159, %v2158
        %v2171 = vpack.c.b16 %v2161, %v2160
        %v2172 = vpack.c.b16 %v2163, %v2162
        %v2173 = vpack.c.b16 %v2165, %v2164
        %v2174 = vpack.c.b16 %v2167, %v2166
        %v2175 = vpack.c.b16 %v2169, %v2168
        %vm2182 = vcmask 785408
        %v2184 = vsel %vm2182, %v2118, 0
        %v2187 = vsel %vm2182, %v2119, 0
        %v2190 = vsel %vm2182, %v2120, 0
        %v2193 = vsel %vm2182, %v2121, 0
        %v2196 = vsel %vm2182, %v2122, 0
        %v2199 = vsel %vm2182, %v2123, 0
        %v2202 = vsel %vm2182, %v2124, 0
        %v2205 = vsel %vm2182, %v2125, 0
        %v2208 = vsel %vm2182, %v2126, 0
        %v2211 = vsel %vm2182, %v2127, 0
        %v2214 = vsel %vm2182, %v2128, 0
        %v2217 = vsel %vm2182, %v2129, 0
        %v2220 = vsel %vm2182, %v2130, 0
        %v2223 = vsel %vm2182, %v2131, 0
        %v2226 = vsel %vm2182, %v2132, 0
        %v2229 = vsel %vm2182, %v2133, 0
        %2231 = vmatprep.subr.bf16.mxu0 0
        %2232 = vmatpush1.bf16.msra.mxu0 %v2170
        %2233 = vmatprep.subr.bf16.mxu0 0
        %2234 = vmatpush1.bf16.msra.mxu0 %v2171
        %2235 = vmatprep.subr.bf16.mxu0 0
        %2236 = vmatpush1.bf16.msra.mxu0 %v2172
        %2237 = vmatprep.subr.bf16.mxu0 0
        %2238 = vmatpush1.bf16.msra.mxu0 %v2173
        %2239 = vmatprep.subr.bf16.mxu0 0
        %2240 = vmatpush1.bf16.msra.mxu0 %v2174
        %2241 = vmatprep.subr.bf16.mxu0 0
        %2242 = vmatpush1.bf16.msra.mxu0 %v2175
        %2243 = vmatprep.subr.bf16.mxu0 0
        %2244 = vmatpush1.bf16.msra.mxu0 0
        %2245 = vmatprep.subr.bf16.mxu0 0
        %2246 = vmatpush1.bf16.msra.mxu0 0
        %2247 = vmatprep.subr.bf16.mxu0 0
        %2248 = vmatpush1.bf16.msra.mxu0 0
        %2249 = vmatprep.subr.bf16.mxu0 0
        %2250 = vmatpush1.bf16.msra.mxu0 0
        %2251 = vmatprep.subr.bf16.mxu0 0
        %2252 = vmatpush1.bf16.msra.mxu0 0
        %2253 = vmatprep.subr.bf16.mxu0 0
        %2254 = vmatpush1.bf16.msra.mxu0 0
        %2255 = vmatprep.subr.bf16.mxu0 0
        %2256 = vmatpush1.bf16.msra.mxu0 0
        %2257 = vmatprep.subr.bf16.mxu0 0
        %2258 = vmatpush1.bf16.msra.mxu0 0
        %2259 = vmatprep.subr.bf16.mxu0 0
        %2260 = vmatpush1.bf16.msra.mxu0 0
        %2261 = vmatprep.subr.bf16.mxu0 0
        %2262 = vmatpush1.bf16.msra.mxu0 0
        %2263 = vmatprep.mubr.bf16.mxu0 0
        %2264 = vmatmul.mubr.bf16.gmra.mrb[0].mxu0 %v2184
        %v2265 = vpop.f32.mrb[0].mxu0
        %v2266 = vadd.f32 0.0, %v2265
        %v2267 = vpop.f32.mrb[0].mxu0
        %v2268 = vpop.f32.mrb[0].mxu0
        %v2269 = vadd.f32 0.0, %v2268
        %v2270 = vpop.f32.mrb[0].mxu0
        %2271 = vmatprep.mubr.bf16.mxu0 0
        %2272 = vmatmul.mubr.bf16.gmra.mrb[0].mxu0 %v2187
        %v2273 = vpop.f32.mrb[0].mxu0
        %v2274 = vadd.f32 0.0, %v2273
        %v2275 = vpop.f32.mrb[0].mxu0
        %v2276 = vpop.f32.mrb[0].mxu0
        %v2277 = vadd.f32 0.0, %v2276
        %v2278 = vpop.f32.mrb[0].mxu0
        %2279 = vmatprep.mubr.bf16.mxu0 0
        %2280 = vmatmul.mubr.bf16.gmra.mrb[0].mxu0 %v2190
        %v2281 = vpop.f32.mrb[0].mxu0
        %v2282 = vadd.f32 0.0, %v2281
        %v2283 = vpop.f32.mrb[0].mxu0
        %v2284 = vpop.f32.mrb[0].mxu0
        %v2285 = vadd.f32 0.0, %v2284
        %v2286 = vpop.f32.mrb[0].mxu0
        %2287 = vmatprep.mubr.bf16.mxu0 0
        %2288 = vmatmul.mubr.bf16.gmra.mrb[0].mxu0 %v2193
        %v2289 = vpop.f32.mrb[0].mxu0
        %v2290 = vadd.f32 0.0, %v2289
        %v2291 = vpop.f32.mrb[0].mxu0
        %v2292 = vpop.f32.mrb[0].mxu0
        %v2293 = vadd.f32 0.0, %v2292
        %v2294 = vpop.f32.mrb[0].mxu0
        %2295 = vmatprep.mubr.bf16.mxu0 0
        %2296 = vmatmul.mubr.bf16.gmra.mrb[0].mxu0 %v2196
        %v2297 = vpop.f32.mrb[0].mxu0
        %v2298 = vadd.f32 0.0, %v2297
        %v2299 = vpop.f32.mrb[0].mxu0
        %v2300 = vpop.f32.mrb[0].mxu0
        %v2301 = vadd.f32 0.0, %v2300
        %v2302 = vpop.f32.mrb[0].mxu0
        %2303 = vmatprep.mubr.bf16.mxu0 0
        %2304 = vmatmul.mubr.bf16.gmra.mrb[0].mxu0 %v2199
        %v2305 = vpop.f32.mrb[0].mxu0
        %v2306 = vadd.f32 0.0, %v2305
        %v2307 = vpop.f32.mrb[0].mxu0
        %v2308 = vpop.f32.mrb[0].mxu0
        %v2309 = vadd.f32 0.0, %v2308
        %v2310 = vpop.f32.mrb[0].mxu0
        %2311 = vmatprep.mubr.bf16.mxu0 0
        %2312 = vmatmul.mubr.bf16.gmra.mrb[0].mxu0 %v2202
        %v2313 = vpop.f32.mrb[0].mxu0
        %v2314 = vadd.f32 0.0, %v2313
        %v2315 = vpop.f32.mrb[0].mxu0
        %v2316 = vpop.f32.mrb[0].mxu0
        %v2317 = vadd.f32 0.0, %v2316
        %v2318 = vpop.f32.mrb[0].mxu0
        %2319 = vmatprep.mubr.bf16.mxu0 0
        %2320 = vmatmul.mubr.bf16.gmra.mrb[0].mxu0 %v2205
        %v2321 = vpop.f32.mrb[0].mxu0
        %v2322 = vadd.f32 0.0, %v2321
        %v2323 = vpop.f32.mrb[0].mxu0
        %v2324 = vpop.f32.mrb[0].mxu0
        %v2325 = vadd.f32 0.0, %v2324
        %v2326 = vpop.f32.mrb[0].mxu0
        %2327 = vmatprep.mubr.bf16.mxu0 0
        %2328 = vmatmul.mubr.bf16.gmra.mrb[0].mxu0 %v2208
        %v2329 = vpop.f32.mrb[0].mxu0
        %v2330 = vadd.f32 0.0, %v2329
        %v2331 = vpop.f32.mrb[0].mxu0
        %v2332 = vpop.f32.mrb[0].mxu0
        %v2333 = vadd.f32 0.0, %v2332
        %v2334 = vpop.f32.mrb[0].mxu0
        %2335 = vmatprep.mubr.bf16.mxu0 0
        %2336 = vmatmul.mubr.bf16.gmra.mrb[0].mxu0 %v2211
        %v2337 = vpop.f32.mrb[0].mxu0
        %v2338 = vadd.f32 0.0, %v2337
        %v2339 = vpop.f32.mrb[0].mxu0
        %v2340 = vpop.f32.mrb[0].mxu0
        %v2341 = vadd.f32 0.0, %v2340
        %v2342 = vpop.f32.mrb[0].mxu0
        %2343 = vmatprep.mubr.bf16.mxu0 0
        %2344 = vmatmul.mubr.bf16.gmra.mrb[0].mxu0 %v2214
        %v2345 = vpop.f32.mrb[0].mxu0
        %v2346 = vadd.f32 0.0, %v2345
        %v2347 = vpop.f32.mrb[0].mxu0
        %v2348 = vpop.f32.mrb[0].mxu0
        %v2349 = vadd.f32 0.0, %v2348
        %v2350 = vpop.f32.mrb[0].mxu0
        %2351 = vmatprep.mubr.bf16.mxu0 0
        %2352 = vmatmul.mubr.bf16.gmra.mrb[0].mxu0 %v2217
        %v2353 = vpop.f32.mrb[0].mxu0
        %v2354 = vadd.f32 0.0, %v2353
        %v2355 = vpop.f32.mrb[0].mxu0
        %v2356 = vpop.f32.mrb[0].mxu0
        %v2357 = vadd.f32 0.0, %v2356
        %v2358 = vpop.f32.mrb[0].mxu0
        %2359 = vmatprep.mubr.bf16.mxu0 0
        %2360 = vmatmul.mubr.bf16.gmra.mrb[0].mxu0 %v2220
        %v2361 = vpop.f32.mrb[0].mxu0
        %v2362 = vadd.f32 0.0, %v2361
        %v2363 = vpop.f32.mrb[0].mxu0
        %v2364 = vpop.f32.mrb[0].mxu0
        %v2365 = vadd.f32 0.0, %v2364
        %v2366 = vpop.f32.mrb[0].mxu0
        %2367 = vmatprep.mubr.bf16.mxu0 0
        %2368 = vmatmul.mubr.bf16.gmra.mrb[0].mxu0 %v2223
        %v2369 = vpop.f32.mrb[0].mxu0
        %v2370 = vadd.f32 0.0, %v2369
        %v2371 = vpop.f32.mrb[0].mxu0
        %v2372 = vpop.f32.mrb[0].mxu0
        %v2373 = vadd.f32 0.0, %v2372
        %v2374 = vpop.f32.mrb[0].mxu0
        %2375 = vmatprep.mubr.bf16.mxu0 0
        %2376 = vmatmul.mubr.bf16.gmra.mrb[0].mxu0 %v2226
        %v2377 = vpop.f32.mrb[0].mxu0
        %v2378 = vadd.f32 0.0, %v2377
        %v2379 = vpop.f32.mrb[0].mxu0
        %v2380 = vpop.f32.mrb[0].mxu0
        %v2381 = vadd.f32 0.0, %v2380
        %v2382 = vpop.f32.mrb[0].mxu0
        %2383 = vmatprep.mubr.bf16.mxu0 0
        %2384 = vmatmul.mubr.bf16.gmra.mrb[0].mxu0 %v2229
        %v2385 = vpop.f32.mrb[0].mxu0
        %v2386 = vadd.f32 0.0, %v2385
        %v2387 = vpop.f32.mrb[0].mxu0
        %v2388 = vpop.f32.mrb[0].mxu0
        %v2389 = vadd.f32 0.0, %v2388
        %v2390 = vpop.f32.mrb[0].mxu0
        %2391 = vdwg.mxu0
        %v2392 = vld [vmem:[%s4] sm:$0x1]
        %v2394 = vlaneseq
        %v2395 = vshrl.u32 %v2394, 7
        %v2396 = vsub.s32 0, %v2395
        %v2397 = vrot.slane %v2392, %v2396
        %v2399 = vadd.f32 %v2266, %v2397
        %v2400 = vadd.f32 %v2269, %v2397
        %v2401 = vadd.f32 %v2274, %v2397
        %v2402 = vadd.f32 %v2277, %v2397
        %v2403 = vadd.f32 %v2282, %v2397
        %v2404 = vadd.f32 %v2285, %v2397
        %v2405 = vadd.f32 %v2290, %v2397
        %v2406 = vadd.f32 %v2293, %v2397
        %v2407 = vadd.f32 %v2298, %v2397
        %v2408 = vadd.f32 %v2301, %v2397
        %v2409 = vadd.f32 %v2306, %v2397
        %v2410 = vadd.f32 %v2309, %v2397
        %v2411 = vadd.f32 %v2314, %v2397
        %v2412 = vadd.f32 %v2317, %v2397
        %v2413 = vadd.f32 %v2322, %v2397
        %v2414 = vadd.f32 %v2325, %v2397
        %v2415 = vadd.f32 %v2330, %v2397
        %v2416 = vadd.f32 %v2333, %v2397
        %v2417 = vadd.f32 %v2338, %v2397
        %v2418 = vadd.f32 %v2341, %v2397
        %v2419 = vadd.f32 %v2346, %v2397
        %v2420 = vadd.f32 %v2349, %v2397
        %v2421 = vadd.f32 %v2354, %v2397
        %v2422 = vadd.f32 %v2357, %v2397
        %v2423 = vadd.f32 %v2362, %v2397
        %v2424 = vadd.f32 %v2365, %v2397
        %v2425 = vadd.f32 %v2370, %v2397
        %v2426 = vadd.f32 %v2373, %v2397
        %v2427 = vadd.f32 %v2378, %v2397
        %v2428 = vadd.f32 %v2381, %v2397
        %v2429 = vadd.f32 %v2386, %v2397
        %v2430 = vadd.f32 %v2389, %v2397
        %v2431 = vadd.f32 %v2399, %v1634
        %v2432 = vadd.f32 %v2400, %v1635
        %v2433 = vadd.f32 %v2401, %v1636
        %v2434 = vadd.f32 %v2402, %v1637
        %v2435 = vadd.f32 %v2403, %v1638
        %v2436 = vadd.f32 %v2404, %v1639
        %v2437 = vadd.f32 %v2405, %v1640
        %v2438 = vadd.f32 %v2406, %v1641
        %v2439 = vadd.f32 %v2407, %v1642
        %v2440 = vadd.f32 %v2408, %v1643
        %v2441 = vadd.f32 %v2409, %v1644
        %v2442 = vadd.f32 %v2410, %v1645
        %v2443 = vadd.f32 %v2411, %v1646
        %v2444 = vadd.f32 %v2412, %v1647
        %v2445 = vadd.f32 %v2413, %v1648
        %v2446 = vadd.f32 %v2414, %v1649
        %v2447 = vadd.f32 %v2415, %v1650
        %v2448 = vadd.f32 %v2416, %v1651
        %v2449 = vadd.f32 %v2417, %v1652
        %v2450 = vadd.f32 %v2418, %v1653
        %v2451 = vadd.f32 %v2419, %v1654
        %v2452 = vadd.f32 %v2420, %v1655
        %v2453 = vadd.f32 %v2421, %v1656
        %v2454 = vadd.f32 %v2422, %v1657
        %v2455 = vadd.f32 %v2423, %v1658
        %v2456 = vadd.f32 %v2424, %v1659
        %v2457 = vadd.f32 %v2425, %v1660
        %v2458 = vadd.f32 %v2426, %v1661
        %v2459 = vadd.f32 %v2427, %v1662
        %v2460 = vadd.f32 %v2428, %v1663
        %v2461 = vadd.f32 %v2429, %v1664
        %v2462 = vadd.f32 %v2430, %v1665
        %v2463 = vmax.f32 %v2431, 0.0
        %v2464 = vmax.f32 %v2432, 0.0
        %v2465 = vmax.f32 %v2433, 0.0
        %v2466 = vmax.f32 %v2434, 0.0
        %v2467 = vmax.f32 %v2435, 0.0
        %v2468 = vmax.f32 %v2436, 0.0
        %v2469 = vmax.f32 %v2437, 0.0
        %v2470 = vmax.f32 %v2438, 0.0
        %v2471 = vmax.f32 %v2439, 0.0
        %v2472 = vmax.f32 %v2440, 0.0
        %v2473 = vmax.f32 %v2441, 0.0
        %v2474 = vmax.f32 %v2442, 0.0
        %v2475 = vmax.f32 %v2443, 0.0
        %v2476 = vmax.f32 %v2444, 0.0
        %v2477 = vmax.f32 %v2445, 0.0
        %v2478 = vmax.f32 %v2446, 0.0
        %v2479 = vmax.f32 %v2447, 0.0
        %v2480 = vmax.f32 %v2448, 0.0
        %v2481 = vmax.f32 %v2449, 0.0
        %v2482 = vmax.f32 %v2450, 0.0
        %v2483 = vmax.f32 %v2451, 0.0
        %v2484 = vmax.f32 %v2452, 0.0
        %v2485 = vmax.f32 %v2453, 0.0
        %v2486 = vmax.f32 %v2454, 0.0
        %v2487 = vmax.f32 %v2455, 0.0
        %v2488 = vmax.f32 %v2456, 0.0
        %v2489 = vmax.f32 %v2457, 0.0
        %v2490 = vmax.f32 %v2458, 0.0
        %v2491 = vmax.f32 %v2459, 0.0
        %v2492 = vmax.f32 %v2460, 0.0
        %v2493 = vmax.f32 %v2461, 0.0
        %v2494 = vmax.f32 %v2462, 0.0
        %2495 = vst.msk [vmem:[%s1666] sm:$0xff] %vm907, %v2463
        %2496 = vst.msk [vmem:[%s1666 + $0x8] sm:$0xff] %vm907, %v2464
        %2497 = vst.msk [vmem:[%s1666 + $0x10] sm:$0xff] %vm907, %v2465
        %2498 = vst.msk [vmem:[%s1666 + $0x18] sm:$0xff] %vm907, %v2466
        %2499 = vst.msk [vmem:[%s1666 + $0x20] sm:$0xff] %vm907, %v2467
        %2500 = vst.msk [vmem:[%s1666 + $0x28] sm:$0xff] %vm907, %v2468
        %2501 = vst.msk [vmem:[%s1666 + $0x30] sm:$0xff] %vm907, %v2469
        %2502 = vst.msk [vmem:[%s1666 + $0x38] sm:$0xff] %vm907, %v2470
        %2503 = vst.msk [vmem:[%s1666 + $0x40] sm:$0xff] %vm907, %v2471
        %2504 = vst.msk [vmem:[%s1666 + $0x48] sm:$0xff] %vm907, %v2472
        %2505 = vst.msk [vmem:[%s1666 + $0x50] sm:$0xff] %vm907, %v2473
        %2506 = vst.msk [vmem:[%s1666 + $0x58] sm:$0xff] %vm907, %v2474
        %2507 = vst.msk [vmem:[%s1666 + $0x60] sm:$0xff] %vm907, %v2475
        %2508 = vst.msk [vmem:[%s1666 + $0x68] sm:$0xff] %vm907, %v2476
        %2509 = vst.msk [vmem:[%s1666 + $0x70] sm:$0xff] %vm907, %v2477
        %2510 = vst.msk [vmem:[%s1666 + $0x78] sm:$0xff] %vm907, %v2478
        %2511 = vst.msk [vmem:[%s1666 + $0x80] sm:$0xff] %vm907, %v2479
        %2512 = vst.msk [vmem:[%s1666 + $0x88] sm:$0xff] %vm907, %v2480
        %2513 = vst.msk [vmem:[%s1666 + $0x90] sm:$0xff] %vm907, %v2481
        %2514 = vst.msk [vmem:[%s1666 + $0x98] sm:$0xff] %vm907, %v2482
        %2515 = vst.msk [vmem:[%s1666 + $0xa0] sm:$0xff] %vm907, %v2483
        %2516 = vst.msk [vmem:[%s1666 + $0xa8] sm:$0xff] %vm907, %v2484
        %2517 = vst.msk [vmem:[%s1666 + $0xb0] sm:$0xff] %vm907, %v2485
        %2518 = vst.msk [vmem:[%s1666 + $0xb8] sm:$0xff] %vm907, %v2486
        %2519 = vst.msk [vmem:[%s1666 + $0xc0] sm:$0xff] %vm907, %v2487
        %2520 = vst.msk [vmem:[%s1666 + $0xc8] sm:$0xff] %vm907, %v2488
        %2521 = vst.msk [vmem:[%s1666 + $0xd0] sm:$0xff] %vm907, %v2489
        %2522 = vst.msk [vmem:[%s1666 + $0xd8] sm:$0xff] %vm907, %v2490
        %2523 = vst.msk [vmem:[%s1666 + $0xe0] sm:$0xff] %vm907, %v2491
        %2524 = vst.msk [vmem:[%s1666 + $0xe8] sm:$0xff] %vm907, %v2492
        %2525 = vst.msk [vmem:[%s1666 + $0xf0] sm:$0xff] %vm907, %v2493
        %2526 = vst.msk [vmem:[%s1666 + $0xf8] sm:$0xff] %vm907, %v2494
        %s2527 = scalar_lea.vmem [#allocation3], 128
        %v2528 = vld [vmem:[%s2527] sm:$0xff]
        %v2529 = vld [vmem:[%s2527 + $0x8] sm:$0xff]
        %v2530 = vld [vmem:[%s2527 + $0x10] sm:$0xff]
        %v2531 = vld [vmem:[%s2527 + $0x18] sm:$0xff]
        %v2532 = vld [vmem:[%s2527 + $0x20] sm:$0xff]
        %v2533 = vld [vmem:[%s2527 + $0x28] sm:$0xff]
        %v2534 = vld [vmem:[%s2527 + $0x30] sm:$0xff]
        %v2535 = vld [vmem:[%s2527 + $0x38] sm:$0xff]
        %v2536 = vld [vmem:[%s2527 + $0x40] sm:$0xff]
        %v2537 = vld [vmem:[%s2527 + $0x48] sm:$0xff]
        %v2538 = vld [vmem:[%s2527 + $0x50] sm:$0xff]
        %v2539 = vld [vmem:[%s2527 + $0x58] sm:$0xff]
        %v2540 = vld [vmem:[%s2527 + $0x60] sm:$0xff]
        %v2541 = vld [vmem:[%s2527 + $0x68] sm:$0xff]
        %v2542 = vld [vmem:[%s2527 + $0x70] sm:$0xff]
        %v2543 = vld [vmem:[%s2527 + $0x78] sm:$0xff]
        %v2544 = vld [vmem:[%s2527 + $0x80] sm:$0xff]
        %v2545 = vld [vmem:[%s2527 + $0x88] sm:$0xff]
        %v2546 = vld [vmem:[%s2527 + $0x90] sm:$0xff]
        %v2547 = vld [vmem:[%s2527 + $0x98] sm:$0xff]
        %v2548 = vld [vmem:[%s2527 + $0xa0] sm:$0xff]
        %v2549 = vld [vmem:[%s2527 + $0xa8] sm:$0xff]
        %v2550 = vld [vmem:[%s2527 + $0xb0] sm:$0xff]
        %v2551 = vld [vmem:[%s2527 + $0xb8] sm:$0xff]
        %v2552 = vld [vmem:[%s2527 + $0xc0] sm:$0xff]
        %v2553 = vld [vmem:[%s2527 + $0xc8] sm:$0xff]
        %v2554 = vld [vmem:[%s2527 + $0xd0] sm:$0xff]
        %v2555 = vld [vmem:[%s2527 + $0xd8] sm:$0xff]
        %v2556 = vld [vmem:[%s2527 + $0xe0] sm:$0xff]
        %v2557 = vld [vmem:[%s2527 + $0xe8] sm:$0xff]
        %v2558 = vld [vmem:[%s2527 + $0xf0] sm:$0xff]
        %v2559 = vld [vmem:[%s2527 + $0xf8] sm:$0xff]
        %v2560 = vld [vmem:[%s1699] sm:$0xff]
        %v2561 = vld [vmem:[%s1699 + $0x8] sm:$0xff]
        %v2562 = vld [vmem:[%s1699 + $0x10] sm:$0xff]
        %v2563 = vld [vmem:[%s1699 + $0x18] sm:$0xff]
        %v2564 = vld [vmem:[%s1699 + $0x20] sm:$0xff]
        %v2565 = vld [vmem:[%s1699 + $0x28] sm:$0xff]
        %v2566 = vld [vmem:[%s1699 + $0x30] sm:$0xff]
        %v2567 = vld [vmem:[%s1699 + $0x38] sm:$0xff]
        %v2568 = vld [vmem:[%s1699 + $0x40] sm:$0xff]
        %v2569 = vld [vmem:[%s1699 + $0x48] sm:$0xff]
        %v2570 = vld [vmem:[%s1699 + $0x50] sm:$0xff]
        %v2571 = vld [vmem:[%s1699 + $0x58] sm:$0xff]
        %v2572 = vld [vmem:[%s1699 + $0x60] sm:$0xff]
        %v2573 = vld [vmem:[%s1699 + $0x68] sm:$0xff]
        %v2574 = vld [vmem:[%s1699 + $0x70] sm:$0xff]
        %v2575 = vld [vmem:[%s1699 + $0x78] sm:$0xff]
        %v2576 = vld [vmem:[%s1699 + $0x80] sm:$0xff]
        %v2577 = vld [vmem:[%s1699 + $0x88] sm:$0xff]
        %v2578 = vld [vmem:[%s1699 + $0x90] sm:$0xff]
        %v2579 = vld [vmem:[%s1699 + $0x98] sm:$0xff]
        %v2580 = vld [vmem:[%s1699 + $0xa0] sm:$0xff]
        %v2581 = vld [vmem:[%s1699 + $0xa8] sm:$0xff]
        %v2582 = vld [vmem:[%s1699 + $0xb0] sm:$0xff]
        %v2583 = vld [vmem:[%s1699 + $0xb8] sm:$0xff]
        %v2584 = vld [vmem:[%s1699 + $0xc0] sm:$0xff]
        %v2585 = vld [vmem:[%s1699 + $0xc8] sm:$0xff]
        %v2586 = vld [vmem:[%s1699 + $0xd0] sm:$0xff]
        %v2587 = vld [vmem:[%s1699 + $0xd8] sm:$0xff]
        %v2588 = vld [vmem:[%s1699 + $0xe0] sm:$0xff]
        %v2589 = vld [vmem:[%s1699 + $0xe8] sm:$0xff]
        %v2590 = vld [vmem:[%s1699 + $0xf0] sm:$0xff]
        %v2591 = vld [vmem:[%s1699 + $0xf8] sm:$0xff]
        %v2592 = vld [vmem:[%s1666] sm:$0xff]
        %v2593 = vld [vmem:[%s1666 + $0x8] sm:$0xff]
        %v2594 = vld [vmem:[%s1666 + $0x10] sm:$0xff]
        %v2595 = vld [vmem:[%s1666 + $0x18] sm:$0xff]
        %v2596 = vld [vmem:[%s1666 + $0x20] sm:$0xff]
        %v2597 = vld [vmem:[%s1666 + $0x28] sm:$0xff]
        %v2598 = vld [vmem:[%s1666 + $0x30] sm:$0xff]
        %v2599 = vld [vmem:[%s1666 + $0x38] sm:$0xff]
        %v2600 = vld [vmem:[%s1666 + $0x40] sm:$0xff]
        %v2601 = vld [vmem:[%s1666 + $0x48] sm:$0xff]
        %v2602 = vld [vmem:[%s1666 + $0x50] sm:$0xff]
        %v2603 = vld [vmem:[%s1666 + $0x58] sm:$0xff]
        %v2604 = vld [vmem:[%s1666 + $0x60] sm:$0xff]
        %v2605 = vld [vmem:[%s1666 + $0x68] sm:$0xff]
        %v2606 = vld [vmem:[%s1666 + $0x70] sm:$0xff]
        %v2607 = vld [vmem:[%s1666 + $0x78] sm:$0xff]
        %v2608 = vld [vmem:[%s1666 + $0x80] sm:$0xff]
        %v2609 = vld [vmem:[%s1666 + $0x88] sm:$0xff]
        %v2610 = vld [vmem:[%s1666 + $0x90] sm:$0xff]
        %v2611 = vld [vmem:[%s1666 + $0x98] sm:$0xff]
        %v2612 = vld [vmem:[%s1666 + $0xa0] sm:$0xff]
        %v2613 = vld [vmem:[%s1666 + $0xa8] sm:$0xff]
        %v2614 = vld [vmem:[%s1666 + $0xb0] sm:$0xff]
        %v2615 = vld [vmem:[%s1666 + $0xb8] sm:$0xff]
        %v2616 = vld [vmem:[%s1666 + $0xc0] sm:$0xff]
        %v2617 = vld [vmem:[%s1666 + $0xc8] sm:$0xff]
        %v2618 = vld [vmem:[%s1666 + $0xd0] sm:$0xff]
        %v2619 = vld [vmem:[%s1666 + $0xd8] sm:$0xff]
        %v2620 = vld [vmem:[%s1666 + $0xe0] sm:$0xff]
        %v2621 = vld [vmem:[%s1666 + $0xe8] sm:$0xff]
        %v2622 = vld [vmem:[%s1666 + $0xf0] sm:$0xff]
        %v2623 = vld [vmem:[%s1666 + $0xf8] sm:$0xff]
        %2656 = vrot.lane.b32.xlu0 %v2560, 32
        %v2657 = vpop.permute.xlu0 %2656
        %2658 = vrot.lane.b32.xlu0 %v2561, 32
        %v2659 = vpop.permute.xlu0 %2658
        %2660 = vrot.lane.b32.xlu0 %v2562, 32
        %v2661 = vpop.permute.xlu0 %2660
        %2662 = vrot.lane.b32.xlu0 %v2563, 32
        %v2663 = vpop.permute.xlu0 %2662
        %2664 = vrot.lane.b32.xlu0 %v2564, 32
        %v2665 = vpop.permute.xlu0 %2664
        %2666 = vrot.lane.b32.xlu0 %v2565, 32
        %v2667 = vpop.permute.xlu0 %2666
        %2668 = vrot.lane.b32.xlu0 %v2566, 32
        %v2669 = vpop.permute.xlu0 %2668
        %2670 = vrot.lane.b32.xlu0 %v2567, 32
        %v2671 = vpop.permute.xlu0 %2670
        %2672 = vrot.lane.b32.xlu0 %v2568, 32
        %v2673 = vpop.permute.xlu0 %2672
        %2674 = vrot.lane.b32.xlu0 %v2569, 32
        %v2675 = vpop.permute.xlu0 %2674
        %2676 = vrot.lane.b32.xlu0 %v2570, 32
        %v2677 = vpop.permute.xlu0 %2676
        %2678 = vrot.lane.b32.xlu0 %v2571, 32
        %v2679 = vpop.permute.xlu0 %2678
        %2680 = vrot.lane.b32.xlu0 %v2572, 32
        %v2681 = vpop.permute.xlu0 %2680
        %2682 = vrot.lane.b32.xlu0 %v2573, 32
        %v2683 = vpop.permute.xlu0 %2682
        %2684 = vrot.lane.b32.xlu0 %v2574, 32
        %v2685 = vpop.permute.xlu0 %2684
        %2686 = vrot.lane.b32.xlu0 %v2575, 32
        %v2687 = vpop.permute.xlu0 %2686
        %2688 = vrot.lane.b32.xlu0 %v2576, 32
        %v2689 = vpop.permute.xlu0 %2688
        %2690 = vrot.lane.b32.xlu0 %v2577, 32
        %v2691 = vpop.permute.xlu0 %2690
        %2692 = vrot.lane.b32.xlu0 %v2578, 32
        %v2693 = vpop.permute.xlu0 %2692
        %2694 = vrot.lane.b32.xlu0 %v2579, 32
        %v2695 = vpop.permute.xlu0 %2694
        %2696 = vrot.lane.b32.xlu0 %v2580, 32
        %v2697 = vpop.permute.xlu0 %2696
        %2698 = vrot.lane.b32.xlu0 %v2581, 32
        %v2699 = vpop.permute.xlu0 %2698
        %2700 = vrot.lane.b32.xlu0 %v2582, 32
        %v2701 = vpop.permute.xlu0 %2700
        %2702 = vrot.lane.b32.xlu0 %v2583, 32
        %v2703 = vpop.permute.xlu0 %2702
        %2704 = vrot.lane.b32.xlu0 %v2584, 32
        %v2705 = vpop.permute.xlu0 %2704
        %2706 = vrot.lane.b32.xlu0 %v2585, 32
        %v2707 = vpop.permute.xlu0 %2706
        %2708 = vrot.lane.b32.xlu0 %v2586, 32
        %v2709 = vpop.permute.xlu0 %2708
        %2710 = vrot.lane.b32.xlu0 %v2587, 32
        %v2711 = vpop.permute.xlu0 %2710
        %2712 = vrot.lane.b32.xlu0 %v2588, 32
        %v2713 = vpop.permute.xlu0 %2712
        %2714 = vrot.lane.b32.xlu0 %v2589, 32
        %v2715 = vpop.permute.xlu0 %2714
        %2716 = vrot.lane.b32.xlu0 %v2590, 32
        %v2717 = vpop.permute.xlu0 %2716
        %2718 = vrot.lane.b32.xlu0 %v2591, 32
        %v2719 = vpop.permute.xlu0 %2718
        %2784 = vrot.lane.b32.xlu0 %v2592, 64
        %v2785 = vpop.permute.xlu0 %2784
        %2786 = vrot.lane.b32.xlu0 %v2593, 64
        %v2787 = vpop.permute.xlu0 %2786
        %2788 = vrot.lane.b32.xlu0 %v2594, 64
        %v2789 = vpop.permute.xlu0 %2788
        %2790 = vrot.lane.b32.xlu0 %v2595, 64
        %v2791 = vpop.permute.xlu0 %2790
        %2792 = vrot.lane.b32.xlu0 %v2596, 64
        %v2793 = vpop.permute.xlu0 %2792
        %2794 = vrot.lane.b32.xlu0 %v2597, 64
        %v2795 = vpop.permute.xlu0 %2794
        %2796 = vrot.lane.b32.xlu0 %v2598, 64
        %v2797 = vpop.permute.xlu0 %2796
        %2798 = vrot.lane.b32.xlu0 %v2599, 64
        %v2799 = vpop.permute.xlu0 %2798
        %2800 = vrot.lane.b32.xlu0 %v2600, 64
        %v2801 = vpop.permute.xlu0 %2800
        %2802 = vrot.lane.b32.xlu0 %v2601, 64
        %v2803 = vpop.permute.xlu0 %2802
        %2804 = vrot.lane.b32.xlu0 %v2602, 64
        %v2805 = vpop.permute.xlu0 %2804
        %2806 = vrot.lane.b32.xlu0 %v2603, 64
        %v2807 = vpop.permute.xlu0 %2806
        %2808 = vrot.lane.b32.xlu0 %v2604, 64
        %v2809 = vpop.permute.xlu0 %2808
        %2810 = vrot.lane.b32.xlu0 %v2605, 64
        %v2811 = vpop.permute.xlu0 %2810
        %2812 = vrot.lane.b32.xlu0 %v2606, 64
        %v2813 = vpop.permute.xlu0 %2812
        %2814 = vrot.lane.b32.xlu0 %v2607, 64
        %v2815 = vpop.permute.xlu0 %2814
        %2816 = vrot.lane.b32.xlu0 %v2608, 64
        %v2817 = vpop.permute.xlu0 %2816
        %2818 = vrot.lane.b32.xlu0 %v2609, 64
        %v2819 = vpop.permute.xlu0 %2818
        %2820 = vrot.lane.b32.xlu0 %v2610, 64
        %v2821 = vpop.permute.xlu0 %2820
        %2822 = vrot.lane.b32.xlu0 %v2611, 64
        %v2823 = vpop.permute.xlu0 %2822
        %2824 = vrot.lane.b32.xlu0 %v2612, 64
        %v2825 = vpop.permute.xlu0 %2824
        %2826 = vrot.lane.b32.xlu0 %v2613, 64
        %v2827 = vpop.permute.xlu0 %2826
        %2828 = vrot.lane.b32.xlu0 %v2614, 64
        %v2829 = vpop.permute.xlu0 %2828
        %2830 = vrot.lane.b32.xlu0 %v2615, 64
        %v2831 = vpop.permute.xlu0 %2830
        %2832 = vrot.lane.b32.xlu0 %v2616, 64
        %v2833 = vpop.permute.xlu0 %2832
        %2834 = vrot.lane.b32.xlu0 %v2617, 64
        %v2835 = vpop.permute.xlu0 %2834
        %2836 = vrot.lane.b32.xlu0 %v2618, 64
        %v2837 = vpop.permute.xlu0 %2836
        %2838 = vrot.lane.b32.xlu0 %v2619, 64
        %v2839 = vpop.permute.xlu0 %2838
        %2840 = vrot.lane.b32.xlu0 %v2620, 64
        %v2841 = vpop.permute.xlu0 %2840
        %2842 = vrot.lane.b32.xlu0 %v2621, 64
        %v2843 = vpop.permute.xlu0 %2842
        %2844 = vrot.lane.b32.xlu0 %v2622, 64
        %v2845 = vpop.permute.xlu0 %2844
        %2846 = vrot.lane.b32.xlu0 %v2623, 64
        %v2847 = vpop.permute.xlu0 %2846
        %v2880 = vsel %vm907, %v2528, %v2657
        %v2881 = vsel %vm907, %v2529, %v2659
        %v2882 = vsel %vm907, %v2530, %v2661
        %v2883 = vsel %vm907, %v2531, %v2663
        %v2884 = vsel %vm907, %v2532, %v2665
        %v2885 = vsel %vm907, %v2533, %v2667
        %v2886 = vsel %vm907, %v2534, %v2669
        %v2887 = vsel %vm907, %v2535, %v2671
        %v2888 = vsel %vm907, %v2536, %v2673
        %v2889 = vsel %vm907, %v2537, %v2675
        %v2890 = vsel %vm907, %v2538, %v2677
        %v2891 = vsel %vm907, %v2539, %v2679
        %v2892 = vsel %vm907, %v2540, %v2681
        %v2893 = vsel %vm907, %v2541, %v2683
        %v2894 = vsel %vm907, %v2542, %v2685
        %v2895 = vsel %vm907, %v2543, %v2687
        %v2896 = vsel %vm907, %v2544, %v2689
        %v2897 = vsel %vm907, %v2545, %v2691
        %v2898 = vsel %vm907, %v2546, %v2693
        %v2899 = vsel %vm907, %v2547, %v2695
        %v2900 = vsel %vm907, %v2548, %v2697
        %v2901 = vsel %vm907, %v2549, %v2699
        %v2902 = vsel %vm907, %v2550, %v2701
        %v2903 = vsel %vm907, %v2551, %v2703
        %v2904 = vsel %vm907, %v2552, %v2705
        %v2905 = vsel %vm907, %v2553, %v2707
        %v2906 = vsel %vm907, %v2554, %v2709
        %v2907 = vsel %vm907, %v2555, %v2711
        %v2908 = vsel %vm907, %v2556, %v2713
        %v2909 = vsel %vm907, %v2557, %v2715
        %v2910 = vsel %vm907, %v2558, %v2717
        %v2911 = vsel %vm907, %v2559, %v2719
        %v2912 = vsel %vm2085, %v2880, %v2785
        %v2913 = vsel %vm2085, %v2881, %v2787
        %v2914 = vsel %vm2085, %v2882, %v2789
        %v2915 = vsel %vm2085, %v2883, %v2791
        %v2916 = vsel %vm2085, %v2884, %v2793
        %v2917 = vsel %vm2085, %v2885, %v2795
        %v2918 = vsel %vm2085, %v2886, %v2797
        %v2919 = vsel %vm2085, %v2887, %v2799
        %v2920 = vsel %vm2085, %v2888, %v2801
        %v2921 = vsel %vm2085, %v2889, %v2803
        %v2922 = vsel %vm2085, %v2890, %v2805
        %v2923 = vsel %vm2085, %v2891, %v2807
        %v2924 = vsel %vm2085, %v2892, %v2809
        %v2925 = vsel %vm2085, %v2893, %v2811
        %v2926 = vsel %vm2085, %v2894, %v2813
        %v2927 = vsel %vm2085, %v2895, %v2815
        %v2928 = vsel %vm2085, %v2896, %v2817
        %v2929 = vsel %vm2085, %v2897, %v2819
        %v2930 = vsel %vm2085, %v2898, %v2821
        %v2931 = vsel %vm2085, %v2899, %v2823
        %v2932 = vsel %vm2085, %v2900, %v2825
        %v2933 = vsel %vm2085, %v2901, %v2827
        %v2934 = vsel %vm2085, %v2902, %v2829
        %v2935 = vsel %vm2085, %v2903, %v2831
        %v2936 = vsel %vm2085, %v2904, %v2833
        %v2937 = vsel %vm2085, %v2905, %v2835
        %v2938 = vsel %vm2085, %v2906, %v2837
        %v2939 = vsel %vm2085, %v2907, %v2839
        %v2940 = vsel %vm2085, %v2908, %v2841
        %v2941 = vsel %vm2085, %v2909, %v2843
        %v2942 = vsel %vm2085, %v2910, %v2845
        %v2943 = vsel %vm2085, %v2911, %v2847
        %v2944 = vpack.c.bf16 %v2913, %v2912
        %v2945 = vpack.c.bf16 %v2915, %v2914
        %v2946 = vpack.c.bf16 %v2917, %v2916
        %v2947 = vpack.c.bf16 %v2919, %v2918
        %v2948 = vpack.c.bf16 %v2921, %v2920
        %v2949 = vpack.c.bf16 %v2923, %v2922
        %v2950 = vpack.c.bf16 %v2925, %v2924
        %v2951 = vpack.c.bf16 %v2927, %v2926
        %v2952 = vpack.c.bf16 %v2929, %v2928
        %v2953 = vpack.c.bf16 %v2931, %v2930
        %v2954 = vpack.c.bf16 %v2933, %v2932
        %v2955 = vpack.c.bf16 %v2935, %v2934
        %v2956 = vpack.c.bf16 %v2937, %v2936
        %v2957 = vpack.c.bf16 %v2939, %v2938
        %v2958 = vpack.c.bf16 %v2941, %v2940
        %v2959 = vpack.c.bf16 %v2943, %v2942
        %v2960 = vld [vmem:[%s5] sm:$0xf]
        %v2961 = vld [vmem:[%s5 + $0x4] sm:$0xf]
        %v2962 = vld [vmem:[%s5 + $0x8] sm:$0xf]
        %v2963 = vld [vmem:[%s5 + $0xc] sm:$0xf]
        %v2964 = vld [vmem:[%s5 + $0x10] sm:$0xf]
        %v2965 = vld [vmem:[%s5 + $0x14] sm:$0xf]
        %v2966 = vld [vmem:[%s5 + $0x18] sm:$0xf]
        %v2967 = vld [vmem:[%s5 + $0x1c] sm:$0xf]
        %v2968 = vld [vmem:[%s5 + $0x20] sm:$0xf]
        %v2969 = vld [vmem:[%s5 + $0x24] sm:$0xf]
        %v2970 = vld [vmem:[%s5 + $0x28] sm:$0xf]
        %v2971 = vld [vmem:[%s5 + $0x2c] sm:$0xf]
        %v2984 = vunpack.c.l.b16 %v2960
        %v2985 = vunpack.c.l.b16 %v2961
        %v2986 = vunpack.c.l.b16 %v2962
        %v2987 = vunpack.c.l.b16 %v2963
        %v2988 = vunpack.c.l.b16 %v2964
        %v2989 = vunpack.c.l.b16 %v2965
        %v2990 = vunpack.c.l.b16 %v2966
        %v2991 = vunpack.c.l.b16 %v2967
        %v2992 = vunpack.c.l.b16 %v2968
        %v2993 = vunpack.c.l.b16 %v2969
        %v2994 = vunpack.c.l.b16 %v2970
        %v2995 = vunpack.c.l.b16 %v2971
        %v2996 = vpack.c.b16 %v2985, %v2984
        %v2997 = vpack.c.b16 %v2987, %v2986
        %v2998 = vpack.c.b16 %v2989, %v2988
        %v2999 = vpack.c.b16 %v2991, %v2990
        %v3000 = vpack.c.b16 %v2993, %v2992
        %v3001 = vpack.c.b16 %v2995, %v2994
        %v3009 = vsel %vm2182, %v2944, 0
        %v3012 = vsel %vm2182, %v2945, 0
        %v3015 = vsel %vm2182, %v2946, 0
        %v3018 = vsel %vm2182, %v2947, 0
        %v3021 = vsel %vm2182, %v2948, 0
        %v3024 = vsel %vm2182, %v2949, 0
        %v3027 = vsel %vm2182, %v2950, 0
        %v3030 = vsel %vm2182, %v2951, 0
        %v3033 = vsel %vm2182, %v2952, 0
        %v3036 = vsel %vm2182, %v2953, 0
        %v3039 = vsel %vm2182, %v2954, 0
        %v3042 = vsel %vm2182, %v2955, 0
        %v3045 = vsel %vm2182, %v2956, 0
        %v3048 = vsel %vm2182, %v2957, 0
        %v3051 = vsel %vm2182, %v2958, 0
        %v3054 = vsel %vm2182, %v2959, 0
        %3056 = vmatprep.subr.bf16.mxu0 0
        %3057 = vmatpush1.bf16.msra.mxu0 %v2996
        %3058 = vmatprep.subr.bf16.mxu0 0
        %3059 = vmatpush1.bf16.msra.mxu0 %v2997
        %3060 = vmatprep.subr.bf16.mxu0 0
        %3061 = vmatpush1.bf16.msra.mxu0 %v2998
        %3062 = vmatprep.subr.bf16.mxu0 0
        %3063 = vmatpush1.bf16.msra.mxu0 %v2999
        %3064 = vmatprep.subr.bf16.mxu0 0
        %3065 = vmatpush1.bf16.msra.mxu0 %v3000
        %3066 = vmatprep.subr.bf16.mxu0 0
        %3067 = vmatpush1.bf16.msra.mxu0 %v3001
        %3068 = vmatprep.subr.bf16.mxu0 0
        %3069 = vmatpush1.bf16.msra.mxu0 0
        %3070 = vmatprep.subr.bf16.mxu0 0
        %3071 = vmatpush1.bf16.msra.mxu0 0
        %3072 = vmatprep.subr.bf16.mxu0 0
        %3073 = vmatpush1.bf16.msra.mxu0 0
        %3074 = vmatprep.subr.bf16.mxu0 0
        %3075 = vmatpush1.bf16.msra.mxu0 0
        %3076 = vmatprep.subr.bf16.mxu0 0
        %3077 = vmatpush1.bf16.msra.mxu0 0
        %3078 = vmatprep.subr.bf16.mxu0 0
        %3079 = vmatpush1.bf16.msra.mxu0 0
        %3080 = vmatprep.subr.bf16.mxu0 0
        %3081 = vmatpush1.bf16.msra.mxu0 0
        %3082 = vmatprep.subr.bf16.mxu0 0
        %3083 = vmatpush1.bf16.msra.mxu0 0
        %3084 = vmatprep.subr.bf16.mxu0 0
        %3085 = vmatpush1.bf16.msra.mxu0 0
        %3086 = vmatprep.subr.bf16.mxu0 0
        %3087 = vmatpush1.bf16.msra.mxu0 0
        %3088 = vmatprep.mubr.bf16.mxu0 0
        %3089 = vmatmul.mubr.bf16.gmra.mrb[0].mxu0 %v3009
        %v3090 = vpop.f32.mrb[0].mxu0
        %v3091 = vadd.f32 0.0, %v3090
        %v3092 = vpop.f32.mrb[0].mxu0
        %v3093 = vpop.f32.mrb[0].mxu0
        %v3094 = vadd.f32 0.0, %v3093
        %v3095 = vpop.f32.mrb[0].mxu0
        %3096 = vmatprep.mubr.bf16.mxu0 0
        %3097 = vmatmul.mubr.bf16.gmra.mrb[0].mxu0 %v3012
        %v3098 = vpop.f32.mrb[0].mxu0
        %v3099 = vadd.f32 0.0, %v3098
        %v3100 = vpop.f32.mrb[0].mxu0
        %v3101 = vpop.f32.mrb[0].mxu0
        %v3102 = vadd.f32 0.0, %v3101
        %v3103 = vpop.f32.mrb[0].mxu0
        %3104 = vmatprep.mubr.bf16.mxu0 0
        %3105 = vmatmul.mubr.bf16.gmra.mrb[0].mxu0 %v3015
        %v3106 = vpop.f32.mrb[0].mxu0
        %v3107 = vadd.f32 0.0, %v3106
        %v3108 = vpop.f32.mrb[0].mxu0
        %v3109 = vpop.f32.mrb[0].mxu0
        %v3110 = vadd.f32 0.0, %v3109
        %v3111 = vpop.f32.mrb[0].mxu0
        %3112 = vmatprep.mubr.bf16.mxu0 0
        %3113 = vmatmul.mubr.bf16.gmra.mrb[0].mxu0 %v3018
        %v3114 = vpop.f32.mrb[0].mxu0
        %v3115 = vadd.f32 0.0, %v3114
        %v3116 = vpop.f32.mrb[0].mxu0
        %v3117 = vpop.f32.mrb[0].mxu0
        %v3118 = vadd.f32 0.0, %v3117
        %v3119 = vpop.f32.mrb[0].mxu0
        %3120 = vmatprep.mubr.bf16.mxu0 0
        %3121 = vmatmul.mubr.bf16.gmra.mrb[0].mxu0 %v3021
        %v3122 = vpop.f32.mrb[0].mxu0
        %v3123 = vadd.f32 0.0, %v3122
        %v3124 = vpop.f32.mrb[0].mxu0
        %v3125 = vpop.f32.mrb[0].mxu0
        %v3126 = vadd.f32 0.0, %v3125
        %v3127 = vpop.f32.mrb[0].mxu0
        %3128 = vmatprep.mubr.bf16.mxu0 0
        %3129 = vmatmul.mubr.bf16.gmra.mrb[0].mxu0 %v3024
        %v3130 = vpop.f32.mrb[0].mxu0
        %v3131 = vadd.f32 0.0, %v3130
        %v3132 = vpop.f32.mrb[0].mxu0
        %v3133 = vpop.f32.mrb[0].mxu0
        %v3134 = vadd.f32 0.0, %v3133
        %v3135 = vpop.f32.mrb[0].mxu0
        %3136 = vmatprep.mubr.bf16.mxu0 0
        %3137 = vmatmul.mubr.bf16.gmra.mrb[0].mxu0 %v3027
        %v3138 = vpop.f32.mrb[0].mxu0
        %v3139 = vadd.f32 0.0, %v3138
        %v3140 = vpop.f32.mrb[0].mxu0
        %v3141 = vpop.f32.mrb[0].mxu0
        %v3142 = vadd.f32 0.0, %v3141
        %v3143 = vpop.f32.mrb[0].mxu0
        %3144 = vmatprep.mubr.bf16.mxu0 0
        %3145 = vmatmul.mubr.bf16.gmra.mrb[0].mxu0 %v3030
        %v3146 = vpop.f32.mrb[0].mxu0
        %v3147 = vadd.f32 0.0, %v3146
        %v3148 = vpop.f32.mrb[0].mxu0
        %v3149 = vpop.f32.mrb[0].mxu0
        %v3150 = vadd.f32 0.0, %v3149
        %v3151 = vpop.f32.mrb[0].mxu0
        %3152 = vmatprep.mubr.bf16.mxu0 0
        %3153 = vmatmul.mubr.bf16.gmra.mrb[0].mxu0 %v3033
        %v3154 = vpop.f32.mrb[0].mxu0
        %v3155 = vadd.f32 0.0, %v3154
        %v3156 = vpop.f32.mrb[0].mxu0
        %v3157 = vpop.f32.mrb[0].mxu0
        %v3158 = vadd.f32 0.0, %v3157
        %v3159 = vpop.f32.mrb[0].mxu0
        %3160 = vmatprep.mubr.bf16.mxu0 0
        %3161 = vmatmul.mubr.bf16.gmra.mrb[0].mxu0 %v3036
        %v3162 = vpop.f32.mrb[0].mxu0
        %v3163 = vadd.f32 0.0, %v3162
        %v3164 = vpop.f32.mrb[0].mxu0
        %v3165 = vpop.f32.mrb[0].mxu0
        %v3166 = vadd.f32 0.0, %v3165
        %v3167 = vpop.f32.mrb[0].mxu0
        %3168 = vmatprep.mubr.bf16.mxu0 0
        %3169 = vmatmul.mubr.bf16.gmra.mrb[0].mxu0 %v3039
        %v3170 = vpop.f32.mrb[0].mxu0
        %v3171 = vadd.f32 0.0, %v3170
        %v3172 = vpop.f32.mrb[0].mxu0
        %v3173 = vpop.f32.mrb[0].mxu0
        %v3174 = vadd.f32 0.0, %v3173
        %v3175 = vpop.f32.mrb[0].mxu0
        %3176 = vmatprep.mubr.bf16.mxu0 0
        %3177 = vmatmul.mubr.bf16.gmra.mrb[0].mxu0 %v3042
        %v3178 = vpop.f32.mrb[0].mxu0
        %v3179 = vadd.f32 0.0, %v3178
        %v3180 = vpop.f32.mrb[0].mxu0
        %v3181 = vpop.f32.mrb[0].mxu0
        %v3182 = vadd.f32 0.0, %v3181
        %v3183 = vpop.f32.mrb[0].mxu0
        %3184 = vmatprep.mubr.bf16.mxu0 0
        %3185 = vmatmul.mubr.bf16.gmra.mrb[0].mxu0 %v3045
        %v3186 = vpop.f32.mrb[0].mxu0
        %v3187 = vadd.f32 0.0, %v3186
        %v3188 = vpop.f32.mrb[0].mxu0
        %v3189 = vpop.f32.mrb[0].mxu0
        %v3190 = vadd.f32 0.0, %v3189
        %v3191 = vpop.f32.mrb[0].mxu0
        %3192 = vmatprep.mubr.bf16.mxu0 0
        %3193 = vmatmul.mubr.bf16.gmra.mrb[0].mxu0 %v3048
        %v3194 = vpop.f32.mrb[0].mxu0
        %v3195 = vadd.f32 0.0, %v3194
        %v3196 = vpop.f32.mrb[0].mxu0
        %v3197 = vpop.f32.mrb[0].mxu0
        %v3198 = vadd.f32 0.0, %v3197
        %v3199 = vpop.f32.mrb[0].mxu0
        %3200 = vmatprep.mubr.bf16.mxu0 0
        %3201 = vmatmul.mubr.bf16.gmra.mrb[0].mxu0 %v3051
        %v3202 = vpop.f32.mrb[0].mxu0
        %v3203 = vadd.f32 0.0, %v3202
        %v3204 = vpop.f32.mrb[0].mxu0
        %v3205 = vpop.f32.mrb[0].mxu0
        %v3206 = vadd.f32 0.0, %v3205
        %v3207 = vpop.f32.mrb[0].mxu0
        %3208 = vmatprep.mubr.bf16.mxu0 0
        %3209 = vmatmul.mubr.bf16.gmra.mrb[0].mxu0 %v3054
        %v3210 = vpop.f32.mrb[0].mxu0
        %v3211 = vadd.f32 0.0, %v3210
        %v3212 = vpop.f32.mrb[0].mxu0
        %v3213 = vpop.f32.mrb[0].mxu0
        %v3214 = vadd.f32 0.0, %v3213
        %v3215 = vpop.f32.mrb[0].mxu0
        %3216 = vdwg.mxu0
        %v3217 = vld [vmem:[%s6] sm:$0x1]
        %v3219 = vlaneseq
        %v3220 = vshrl.u32 %v3219, 7
        %v3221 = vsub.s32 0, %v3220
        %v3222 = vrot.slane %v3217, %v3221
        %v3224 = vadd.f32 %v3091, %v3222
        %v3225 = vadd.f32 %v3094, %v3222
        %v3226 = vadd.f32 %v3099, %v3222
        %v3227 = vadd.f32 %v3102, %v3222
        %v3228 = vadd.f32 %v3107, %v3222
        %v3229 = vadd.f32 %v3110, %v3222
        %v3230 = vadd.f32 %v3115, %v3222
        %v3231 = vadd.f32 %v3118, %v3222
        %v3232 = vadd.f32 %v3123, %v3222
        %v3233 = vadd.f32 %v3126, %v3222
        %v3234 = vadd.f32 %v3131, %v3222
        %v3235 = vadd.f32 %v3134, %v3222
        %v3236 = vadd.f32 %v3139, %v3222
        %v3237 = vadd.f32 %v3142, %v3222
        %v3238 = vadd.f32 %v3147, %v3222
        %v3239 = vadd.f32 %v3150, %v3222
        %v3240 = vadd.f32 %v3155, %v3222
        %v3241 = vadd.f32 %v3158, %v3222
        %v3242 = vadd.f32 %v3163, %v3222
        %v3243 = vadd.f32 %v3166, %v3222
        %v3244 = vadd.f32 %v3171, %v3222
        %v3245 = vadd.f32 %v3174, %v3222
        %v3246 = vadd.f32 %v3179, %v3222
        %v3247 = vadd.f32 %v3182, %v3222
        %v3248 = vadd.f32 %v3187, %v3222
        %v3249 = vadd.f32 %v3190, %v3222
        %v3250 = vadd.f32 %v3195, %v3222
        %v3251 = vadd.f32 %v3198, %v3222
        %v3252 = vadd.f32 %v3203, %v3222
        %v3253 = vadd.f32 %v3206, %v3222
        %v3254 = vadd.f32 %v3211, %v3222
        %v3255 = vadd.f32 %v3214, %v3222
        %v3256 = vadd.f32 %v3224, %v2463
        %v3257 = vadd.f32 %v3225, %v2464
        %v3258 = vadd.f32 %v3226, %v2465
        %v3259 = vadd.f32 %v3227, %v2466
        %v3260 = vadd.f32 %v3228, %v2467
        %v3261 = vadd.f32 %v3229, %v2468
        %v3262 = vadd.f32 %v3230, %v2469
        %v3263 = vadd.f32 %v3231, %v2470
        %v3264 = vadd.f32 %v3232, %v2471
        %v3265 = vadd.f32 %v3233, %v2472
        %v3266 = vadd.f32 %v3234, %v2473
        %v3267 = vadd.f32 %v3235, %v2474
        %v3268 = vadd.f32 %v3236, %v2475
        %v3269 = vadd.f32 %v3237, %v2476
        %v3270 = vadd.f32 %v3238, %v2477
        %v3271 = vadd.f32 %v3239, %v2478
        %v3272 = vadd.f32 %v3240, %v2479
        %v3273 = vadd.f32 %v3241, %v2480
        %v3274 = vadd.f32 %v3242, %v2481
        %v3275 = vadd.f32 %v3243, %v2482
        %v3276 = vadd.f32 %v3244, %v2483
        %v3277 = vadd.f32 %v3245, %v2484
        %v3278 = vadd.f32 %v3246, %v2485
        %v3279 = vadd.f32 %v3247, %v2486
        %v3280 = vadd.f32 %v3248, %v2487
        %v3281 = vadd.f32 %v3249, %v2488
        %v3282 = vadd.f32 %v3250, %v2489
        %v3283 = vadd.f32 %v3251, %v2490
        %v3284 = vadd.f32 %v3252, %v2491
        %v3285 = vadd.f32 %v3253, %v2492
        %v3286 = vadd.f32 %v3254, %v2493
        %v3287 = vadd.f32 %v3255, %v2494
        %v3288 = vmax.f32 %v3256, 0.0
        %v3289 = vmax.f32 %v3257, 0.0
        %v3290 = vmax.f32 %v3258, 0.0
        %v3291 = vmax.f32 %v3259, 0.0
        %v3292 = vmax.f32 %v3260, 0.0
        %v3293 = vmax.f32 %v3261, 0.0
        %v3294 = vmax.f32 %v3262, 0.0
        %v3295 = vmax.f32 %v3263, 0.0
        %v3296 = vmax.f32 %v3264, 0.0
        %v3297 = vmax.f32 %v3265, 0.0
        %v3298 = vmax.f32 %v3266, 0.0
        %v3299 = vmax.f32 %v3267, 0.0
        %v3300 = vmax.f32 %v3268, 0.0
        %v3301 = vmax.f32 %v3269, 0.0
        %v3302 = vmax.f32 %v3270, 0.0
        %v3303 = vmax.f32 %v3271, 0.0
        %v3304 = vmax.f32 %v3272, 0.0
        %v3305 = vmax.f32 %v3273, 0.0
        %v3306 = vmax.f32 %v3274, 0.0
        %v3307 = vmax.f32 %v3275, 0.0
        %v3308 = vmax.f32 %v3276, 0.0
        %v3309 = vmax.f32 %v3277, 0.0
        %v3310 = vmax.f32 %v3278, 0.0
        %v3311 = vmax.f32 %v3279, 0.0
        %v3312 = vmax.f32 %v3280, 0.0
        %v3313 = vmax.f32 %v3281, 0.0
        %v3314 = vmax.f32 %v3282, 0.0
        %v3315 = vmax.f32 %v3283, 0.0
        %v3316 = vmax.f32 %v3284, 0.0
        %v3317 = vmax.f32 %v3285, 0.0
        %v3318 = vmax.f32 %v3286, 0.0
        %v3319 = vmax.f32 %v3287, 0.0
        %3320 = vst.msk [vmem:[%s1666] sm:$0xff] %vm907, %v3288
        %3321 = vst.msk [vmem:[%s1666 + $0x8] sm:$0xff] %vm907, %v3289
        %3322 = vst.msk [vmem:[%s1666 + $0x10] sm:$0xff] %vm907, %v3290
        %3323 = vst.msk [vmem:[%s1666 + $0x18] sm:$0xff] %vm907, %v3291
        %3324 = vst.msk [vmem:[%s1666 + $0x20] sm:$0xff] %vm907, %v3292
        %3325 = vst.msk [vmem:[%s1666 + $0x28] sm:$0xff] %vm907, %v3293
        %3326 = vst.msk [vmem:[%s1666 + $0x30] sm:$0xff] %vm907, %v3294
        %3327 = vst.msk [vmem:[%s1666 + $0x38] sm:$0xff] %vm907, %v3295
        %3328 = vst.msk [vmem:[%s1666 + $0x40] sm:$0xff] %vm907, %v3296
        %3329 = vst.msk [vmem:[%s1666 + $0x48] sm:$0xff] %vm907, %v3297
        %3330 = vst.msk [vmem:[%s1666 + $0x50] sm:$0xff] %vm907, %v3298
        %3331 = vst.msk [vmem:[%s1666 + $0x58] sm:$0xff] %vm907, %v3299
        %3332 = vst.msk [vmem:[%s1666 + $0x60] sm:$0xff] %vm907, %v3300
        %3333 = vst.msk [vmem:[%s1666 + $0x68] sm:$0xff] %vm907, %v3301
        %3334 = vst.msk [vmem:[%s1666 + $0x70] sm:$0xff] %vm907, %v3302
        %3335 = vst.msk [vmem:[%s1666 + $0x78] sm:$0xff] %vm907, %v3303
        %3336 = vst.msk [vmem:[%s1666 + $0x80] sm:$0xff] %vm907, %v3304
        %3337 = vst.msk [vmem:[%s1666 + $0x88] sm:$0xff] %vm907, %v3305
        %3338 = vst.msk [vmem:[%s1666 + $0x90] sm:$0xff] %vm907, %v3306
        %3339 = vst.msk [vmem:[%s1666 + $0x98] sm:$0xff] %vm907, %v3307
        %3340 = vst.msk [vmem:[%s1666 + $0xa0] sm:$0xff] %vm907, %v3308
        %3341 = vst.msk [vmem:[%s1666 + $0xa8] sm:$0xff] %vm907, %v3309
        %3342 = vst.msk [vmem:[%s1666 + $0xb0] sm:$0xff] %vm907, %v3310
        %3343 = vst.msk [vmem:[%s1666 + $0xb8] sm:$0xff] %vm907, %v3311
        %3344 = vst.msk [vmem:[%s1666 + $0xc0] sm:$0xff] %vm907, %v3312
        %3345 = vst.msk [vmem:[%s1666 + $0xc8] sm:$0xff] %vm907, %v3313
        %3346 = vst.msk [vmem:[%s1666 + $0xd0] sm:$0xff] %vm907, %v3314
        %3347 = vst.msk [vmem:[%s1666 + $0xd8] sm:$0xff] %vm907, %v3315
        %3348 = vst.msk [vmem:[%s1666 + $0xe0] sm:$0xff] %vm907, %v3316
        %3349 = vst.msk [vmem:[%s1666 + $0xe8] sm:$0xff] %vm907, %v3317
        %3350 = vst.msk [vmem:[%s1666 + $0xf0] sm:$0xff] %vm907, %v3318
        %3351 = vst.msk [vmem:[%s1666 + $0xf8] sm:$0xff] %vm907, %v3319
        %v3352 = vld [vmem:[#allocation3] sm:$0xff]
        %v3353 = vld [vmem:[#allocation3 + $0x8] sm:$0xff]
        %v3354 = vld [vmem:[#allocation3 + $0x10] sm:$0xff]
        %v3355 = vld [vmem:[#allocation3 + $0x18] sm:$0xff]
        %v3356 = vld [vmem:[#allocation3 + $0x20] sm:$0xff]
        %v3357 = vld [vmem:[#allocation3 + $0x28] sm:$0xff]
        %v3358 = vld [vmem:[#allocation3 + $0x30] sm:$0xff]
        %v3359 = vld [vmem:[#allocation3 + $0x38] sm:$0xff]
        %v3360 = vld [vmem:[#allocation3 + $0x40] sm:$0xff]
        %v3361 = vld [vmem:[#allocation3 + $0x48] sm:$0xff]
        %v3362 = vld [vmem:[#allocation3 + $0x50] sm:$0xff]
        %v3363 = vld [vmem:[#allocation3 + $0x58] sm:$0xff]
        %v3364 = vld [vmem:[#allocation3 + $0x60] sm:$0xff]
        %v3365 = vld [vmem:[#allocation3 + $0x68] sm:$0xff]
        %v3366 = vld [vmem:[#allocation3 + $0x70] sm:$0xff]
        %v3367 = vld [vmem:[#allocation3 + $0x78] sm:$0xff]
        %v3368 = vld [vmem:[#allocation3 + $0x80] sm:$0xff]
        %v3369 = vld [vmem:[#allocation3 + $0x88] sm:$0xff]
        %v3370 = vld [vmem:[#allocation3 + $0x90] sm:$0xff]
        %v3371 = vld [vmem:[#allocation3 + $0x98] sm:$0xff]
        %v3372 = vld [vmem:[#allocation3 + $0xa0] sm:$0xff]
        %v3373 = vld [vmem:[#allocation3 + $0xa8] sm:$0xff]
        %v3374 = vld [vmem:[#allocation3 + $0xb0] sm:$0xff]
        %v3375 = vld [vmem:[#allocation3 + $0xb8] sm:$0xff]
        %v3376 = vld [vmem:[#allocation3 + $0xc0] sm:$0xff]
        %v3377 = vld [vmem:[#allocation3 + $0xc8] sm:$0xff]
        %v3378 = vld [vmem:[#allocation3 + $0xd0] sm:$0xff]
        %v3379 = vld [vmem:[#allocation3 + $0xd8] sm:$0xff]
        %v3380 = vld [vmem:[#allocation3 + $0xe0] sm:$0xff]
        %v3381 = vld [vmem:[#allocation3 + $0xe8] sm:$0xff]
        %v3382 = vld [vmem:[#allocation3 + $0xf0] sm:$0xff]
        %v3383 = vld [vmem:[#allocation3 + $0xf8] sm:$0xff]
        %v3384 = vld [vmem:[%s2527] sm:$0xff]
        %v3385 = vld [vmem:[%s2527 + $0x8] sm:$0xff]
        %v3386 = vld [vmem:[%s2527 + $0x10] sm:$0xff]
        %v3387 = vld [vmem:[%s2527 + $0x18] sm:$0xff]
        %v3388 = vld [vmem:[%s2527 + $0x20] sm:$0xff]
        %v3389 = vld [vmem:[%s2527 + $0x28] sm:$0xff]
        %v3390 = vld [vmem:[%s2527 + $0x30] sm:$0xff]
        %v3391 = vld [vmem:[%s2527 + $0x38] sm:$0xff]
        %v3392 = vld [vmem:[%s2527 + $0x40] sm:$0xff]
        %v3393 = vld [vmem:[%s2527 + $0x48] sm:$0xff]
        %v3394 = vld [vmem:[%s2527 + $0x50] sm:$0xff]
        %v3395 = vld [vmem:[%s2527 + $0x58] sm:$0xff]
        %v3396 = vld [vmem:[%s2527 + $0x60] sm:$0xff]
        %v3397 = vld [vmem:[%s2527 + $0x68] sm:$0xff]
        %v3398 = vld [vmem:[%s2527 + $0x70] sm:$0xff]
        %v3399 = vld [vmem:[%s2527 + $0x78] sm:$0xff]
        %v3400 = vld [vmem:[%s2527 + $0x80] sm:$0xff]
        %v3401 = vld [vmem:[%s2527 + $0x88] sm:$0xff]
        %v3402 = vld [vmem:[%s2527 + $0x90] sm:$0xff]
        %v3403 = vld [vmem:[%s2527 + $0x98] sm:$0xff]
        %v3404 = vld [vmem:[%s2527 + $0xa0] sm:$0xff]
        %v3405 = vld [vmem:[%s2527 + $0xa8] sm:$0xff]
        %v3406 = vld [vmem:[%s2527 + $0xb0] sm:$0xff]
        %v3407 = vld [vmem:[%s2527 + $0xb8] sm:$0xff]
        %v3408 = vld [vmem:[%s2527 + $0xc0] sm:$0xff]
        %v3409 = vld [vmem:[%s2527 + $0xc8] sm:$0xff]
        %v3410 = vld [vmem:[%s2527 + $0xd0] sm:$0xff]
        %v3411 = vld [vmem:[%s2527 + $0xd8] sm:$0xff]
        %v3412 = vld [vmem:[%s2527 + $0xe0] sm:$0xff]
        %v3413 = vld [vmem:[%s2527 + $0xe8] sm:$0xff]
        %v3414 = vld [vmem:[%s2527 + $0xf0] sm:$0xff]
        %v3415 = vld [vmem:[%s2527 + $0xf8] sm:$0xff]
        %v3416 = vld [vmem:[%s1666] sm:$0xff]
        %v3417 = vld [vmem:[%s1666 + $0x8] sm:$0xff]
        %v3418 = vld [vmem:[%s1666 + $0x10] sm:$0xff]
        %v3419 = vld [vmem:[%s1666 + $0x18] sm:$0xff]
        %v3420 = vld [vmem:[%s1666 + $0x20] sm:$0xff]
        %v3421 = vld [vmem:[%s1666 + $0x28] sm:$0xff]
        %v3422 = vld [vmem:[%s1666 + $0x30] sm:$0xff]
        %v3423 = vld [vmem:[%s1666 + $0x38] sm:$0xff]
        %v3424 = vld [vmem:[%s1666 + $0x40] sm:$0xff]
        %v3425 = vld [vmem:[%s1666 + $0x48] sm:$0xff]
        %v3426 = vld [vmem:[%s1666 + $0x50] sm:$0xff]
        %v3427 = vld [vmem:[%s1666 + $0x58] sm:$0xff]
        %v3428 = vld [vmem:[%s1666 + $0x60] sm:$0xff]
        %v3429 = vld [vmem:[%s1666 + $0x68] sm:$0xff]
        %v3430 = vld [vmem:[%s1666 + $0x70] sm:$0xff]
        %v3431 = vld [vmem:[%s1666 + $0x78] sm:$0xff]
        %v3432 = vld [vmem:[%s1666 + $0x80] sm:$0xff]
        %v3433 = vld [vmem:[%s1666 + $0x88] sm:$0xff]
        %v3434 = vld [vmem:[%s1666 + $0x90] sm:$0xff]
        %v3435 = vld [vmem:[%s1666 + $0x98] sm:$0xff]
        %v3436 = vld [vmem:[%s1666 + $0xa0] sm:$0xff]
        %v3437 = vld [vmem:[%s1666 + $0xa8] sm:$0xff]
        %v3438 = vld [vmem:[%s1666 + $0xb0] sm:$0xff]
        %v3439 = vld [vmem:[%s1666 + $0xb8] sm:$0xff]
        %v3440 = vld [vmem:[%s1666 + $0xc0] sm:$0xff]
        %v3441 = vld [vmem:[%s1666 + $0xc8] sm:$0xff]
        %v3442 = vld [vmem:[%s1666 + $0xd0] sm:$0xff]
        %v3443 = vld [vmem:[%s1666 + $0xd8] sm:$0xff]
        %v3444 = vld [vmem:[%s1666 + $0xe0] sm:$0xff]
        %v3445 = vld [vmem:[%s1666 + $0xe8] sm:$0xff]
        %v3446 = vld [vmem:[%s1666 + $0xf0] sm:$0xff]
        %v3447 = vld [vmem:[%s1666 + $0xf8] sm:$0xff]
        %3480 = vrot.lane.b32.xlu0 %v3384, 32
        %v3481 = vpop.permute.xlu0 %3480
        %3482 = vrot.lane.b32.xlu0 %v3385, 32
        %v3483 = vpop.permute.xlu0 %3482
        %3484 = vrot.lane.b32.xlu0 %v3386, 32
        %v3485 = vpop.permute.xlu0 %3484
        %3486 = vrot.lane.b32.xlu0 %v3387, 32
        %v3487 = vpop.permute.xlu0 %3486
        %3488 = vrot.lane.b32.xlu0 %v3388, 32
        %v3489 = vpop.permute.xlu0 %3488
        %3490 = vrot.lane.b32.xlu0 %v3389, 32
        %v3491 = vpop.permute.xlu0 %3490
        %3492 = vrot.lane.b32.xlu0 %v3390, 32
        %v3493 = vpop.permute.xlu0 %3492
        %3494 = vrot.lane.b32.xlu0 %v3391, 32
        %v3495 = vpop.permute.xlu0 %3494
        %3496 = vrot.lane.b32.xlu0 %v3392, 32
        %v3497 = vpop.permute.xlu0 %3496
        %3498 = vrot.lane.b32.xlu0 %v3393, 32
        %v3499 = vpop.permute.xlu0 %3498
        %3500 = vrot.lane.b32.xlu0 %v3394, 32
        %v3501 = vpop.permute.xlu0 %3500
        %3502 = vrot.lane.b32.xlu0 %v3395, 32
        %v3503 = vpop.permute.xlu0 %3502
        %3504 = vrot.lane.b32.xlu0 %v3396, 32
        %v3505 = vpop.permute.xlu0 %3504
        %3506 = vrot.lane.b32.xlu0 %v3397, 32
        %v3507 = vpop.permute.xlu0 %3506
        %3508 = vrot.lane.b32.xlu0 %v3398, 32
        %v3509 = vpop.permute.xlu0 %3508
        %3510 = vrot.lane.b32.xlu0 %v3399, 32
        %v3511 = vpop.permute.xlu0 %3510
        %3512 = vrot.lane.b32.xlu0 %v3400, 32
        %v3513 = vpop.permute.xlu0 %3512
        %3514 = vrot.lane.b32.xlu0 %v3401, 32
        %v3515 = vpop.permute.xlu0 %3514
        %3516 = vrot.lane.b32.xlu0 %v3402, 32
        %v3517 = vpop.permute.xlu0 %3516
        %3518 = vrot.lane.b32.xlu0 %v3403, 32
        %v3519 = vpop.permute.xlu0 %3518
        %3520 = vrot.lane.b32.xlu0 %v3404, 32
        %v3521 = vpop.permute.xlu0 %3520
        %3522 = vrot.lane.b32.xlu0 %v3405, 32
        %v3523 = vpop.permute.xlu0 %3522
        %3524 = vrot.lane.b32.xlu0 %v3406, 32
        %v3525 = vpop.permute.xlu0 %3524
        %3526 = vrot.lane.b32.xlu0 %v3407, 32
        %v3527 = vpop.permute.xlu0 %3526
        %3528 = vrot.lane.b32.xlu0 %v3408, 32
        %v3529 = vpop.permute.xlu0 %3528
        %3530 = vrot.lane.b32.xlu0 %v3409, 32
        %v3531 = vpop.permute.xlu0 %3530
        %3532 = vrot.lane.b32.xlu0 %v3410, 32
        %v3533 = vpop.permute.xlu0 %3532
        %3534 = vrot.lane.b32.xlu0 %v3411, 32
        %v3535 = vpop.permute.xlu0 %3534
        %3536 = vrot.lane.b32.xlu0 %v3412, 32
        %v3537 = vpop.permute.xlu0 %3536
        %3538 = vrot.lane.b32.xlu0 %v3413, 32
        %v3539 = vpop.permute.xlu0 %3538
        %3540 = vrot.lane.b32.xlu0 %v3414, 32
        %v3541 = vpop.permute.xlu0 %3540
        %3542 = vrot.lane.b32.xlu0 %v3415, 32
        %v3543 = vpop.permute.xlu0 %3542
        %3608 = vrot.lane.b32.xlu0 %v3416, 64
        %v3609 = vpop.permute.xlu0 %3608
        %3610 = vrot.lane.b32.xlu0 %v3417, 64
        %v3611 = vpop.permute.xlu0 %3610
        %3612 = vrot.lane.b32.xlu0 %v3418, 64
        %v3613 = vpop.permute.xlu0 %3612
        %3614 = vrot.lane.b32.xlu0 %v3419, 64
        %v3615 = vpop.permute.xlu0 %3614
        %3616 = vrot.lane.b32.xlu0 %v3420, 64
        %v3617 = vpop.permute.xlu0 %3616
        %3618 = vrot.lane.b32.xlu0 %v3421, 64
        %v3619 = vpop.permute.xlu0 %3618
        %3620 = vrot.lane.b32.xlu0 %v3422, 64
        %v3621 = vpop.permute.xlu0 %3620
        %3622 = vrot.lane.b32.xlu0 %v3423, 64
        %v3623 = vpop.permute.xlu0 %3622
        %3624 = vrot.lane.b32.xlu0 %v3424, 64
        %v3625 = vpop.permute.xlu0 %3624
        %3626 = vrot.lane.b32.xlu0 %v3425, 64
        %v3627 = vpop.permute.xlu0 %3626
        %3628 = vrot.lane.b32.xlu0 %v3426, 64
        %v3629 = vpop.permute.xlu0 %3628
        %3630 = vrot.lane.b32.xlu0 %v3427, 64
        %v3631 = vpop.permute.xlu0 %3630
        %3632 = vrot.lane.b32.xlu0 %v3428, 64
        %v3633 = vpop.permute.xlu0 %3632
        %3634 = vrot.lane.b32.xlu0 %v3429, 64
        %v3635 = vpop.permute.xlu0 %3634
        %3636 = vrot.lane.b32.xlu0 %v3430, 64
        %v3637 = vpop.permute.xlu0 %3636
        %3638 = vrot.lane.b32.xlu0 %v3431, 64
        %v3639 = vpop.permute.xlu0 %3638
        %3640 = vrot.lane.b32.xlu0 %v3432, 64
        %v3641 = vpop.permute.xlu0 %3640
        %3642 = vrot.lane.b32.xlu0 %v3433, 64
        %v3643 = vpop.permute.xlu0 %3642
        %3644 = vrot.lane.b32.xlu0 %v3434, 64
        %v3645 = vpop.permute.xlu0 %3644
        %3646 = vrot.lane.b32.xlu0 %v3435, 64
        %v3647 = vpop.permute.xlu0 %3646
        %3648 = vrot.lane.b32.xlu0 %v3436, 64
        %v3649 = vpop.permute.xlu0 %3648
        %3650 = vrot.lane.b32.xlu0 %v3437, 64
        %v3651 = vpop.permute.xlu0 %3650
        %3652 = vrot.lane.b32.xlu0 %v3438, 64
        %v3653 = vpop.permute.xlu0 %3652
        %3654 = vrot.lane.b32.xlu0 %v3439, 64
        %v3655 = vpop.permute.xlu0 %3654
        %3656 = vrot.lane.b32.xlu0 %v3440, 64
        %v3657 = vpop.permute.xlu0 %3656
        %3658 = vrot.lane.b32.xlu0 %v3441, 64
        %v3659 = vpop.permute.xlu0 %3658
        %3660 = vrot.lane.b32.xlu0 %v3442, 64
        %v3661 = vpop.permute.xlu0 %3660
        %3662 = vrot.lane.b32.xlu0 %v3443, 64
        %v3663 = vpop.permute.xlu0 %3662
        %3664 = vrot.lane.b32.xlu0 %v3444, 64
        %v3665 = vpop.permute.xlu0 %3664
        %3666 = vrot.lane.b32.xlu0 %v3445, 64
        %v3667 = vpop.permute.xlu0 %3666
        %3668 = vrot.lane.b32.xlu0 %v3446, 64
        %v3669 = vpop.permute.xlu0 %3668
        %3670 = vrot.lane.b32.xlu0 %v3447, 64
        %v3671 = vpop.permute.xlu0 %3670
        %v3704 = vsel %vm907, %v3352, %v3481
        %v3705 = vsel %vm907, %v3353, %v3483
        %v3706 = vsel %vm907, %v3354, %v3485
        %v3707 = vsel %vm907, %v3355, %v3487
        %v3708 = vsel %vm907, %v3356, %v3489
        %v3709 = vsel %vm907, %v3357, %v3491
        %v3710 = vsel %vm907, %v3358, %v3493
        %v3711 = vsel %vm907, %v3359, %v3495
        %v3712 = vsel %vm907, %v3360, %v3497
        %v3713 = vsel %vm907, %v3361, %v3499
        %v3714 = vsel %vm907, %v3362, %v3501
        %v3715 = vsel %vm907, %v3363, %v3503
        %v3716 = vsel %vm907, %v3364, %v3505
        %v3717 = vsel %vm907, %v3365, %v3507
        %v3718 = vsel %vm907, %v3366, %v3509
        %v3719 = vsel %vm907, %v3367, %v3511
        %v3720 = vsel %vm907, %v3368, %v3513
        %v3721 = vsel %vm907, %v3369, %v3515
        %v3722 = vsel %vm907, %v3370, %v3517
        %v3723 = vsel %vm907, %v3371, %v3519
        %v3724 = vsel %vm907, %v3372, %v3521
        %v3725 = vsel %vm907, %v3373, %v3523
        %v3726 = vsel %vm907, %v3374, %v3525
        %v3727 = vsel %vm907, %v3375, %v3527
        %v3728 = vsel %vm907, %v3376, %v3529
        %v3729 = vsel %vm907, %v3377, %v3531
        %v3730 = vsel %vm907, %v3378, %v3533
        %v3731 = vsel %vm907, %v3379, %v3535
        %v3732 = vsel %vm907, %v3380, %v3537
        %v3733 = vsel %vm907, %v3381, %v3539
        %v3734 = vsel %vm907, %v3382, %v3541
        %v3735 = vsel %vm907, %v3383, %v3543
        %v3736 = vsel %vm2085, %v3704, %v3609
        %v3737 = vsel %vm2085, %v3705, %v3611
        %v3738 = vsel %vm2085, %v3706, %v3613
        %v3739 = vsel %vm2085, %v3707, %v3615
        %v3740 = vsel %vm2085, %v3708, %v3617
        %v3741 = vsel %vm2085, %v3709, %v3619
        %v3742 = vsel %vm2085, %v3710, %v3621
        %v3743 = vsel %vm2085, %v3711, %v3623
        %v3744 = vsel %vm2085, %v3712, %v3625
        %v3745 = vsel %vm2085, %v3713, %v3627
        %v3746 = vsel %vm2085, %v3714, %v3629
        %v3747 = vsel %vm2085, %v3715, %v3631
        %v3748 = vsel %vm2085, %v3716, %v3633
        %v3749 = vsel %vm2085, %v3717, %v3635
        %v3750 = vsel %vm2085, %v3718, %v3637
        %v3751 = vsel %vm2085, %v3719, %v3639
        %v3752 = vsel %vm2085, %v3720, %v3641
        %v3753 = vsel %vm2085, %v3721, %v3643
        %v3754 = vsel %vm2085, %v3722, %v3645
        %v3755 = vsel %vm2085, %v3723, %v3647
        %v3756 = vsel %vm2085, %v3724, %v3649
        %v3757 = vsel %vm2085, %v3725, %v3651
        %v3758 = vsel %vm2085, %v3726, %v3653
        %v3759 = vsel %vm2085, %v3727, %v3655
        %v3760 = vsel %vm2085, %v3728, %v3657
        %v3761 = vsel %vm2085, %v3729, %v3659
        %v3762 = vsel %vm2085, %v3730, %v3661
        %v3763 = vsel %vm2085, %v3731, %v3663
        %v3764 = vsel %vm2085, %v3732, %v3665
        %v3765 = vsel %vm2085, %v3733, %v3667
        %v3766 = vsel %vm2085, %v3734, %v3669
        %v3767 = vsel %vm2085, %v3735, %v3671
        %v3768 = vpack.c.bf16 %v3737, %v3736
        %v3769 = vpack.c.bf16 %v3739, %v3738
        %v3770 = vpack.c.bf16 %v3741, %v3740
        %v3771 = vpack.c.bf16 %v3743, %v3742
        %v3772 = vpack.c.bf16 %v3745, %v3744
        %v3773 = vpack.c.bf16 %v3747, %v3746
        %v3774 = vpack.c.bf16 %v3749, %v3748
        %v3775 = vpack.c.bf16 %v3751, %v3750
        %v3776 = vpack.c.bf16 %v3753, %v3752
        %v3777 = vpack.c.bf16 %v3755, %v3754
        %v3778 = vpack.c.bf16 %v3757, %v3756
        %v3779 = vpack.c.bf16 %v3759, %v3758
        %v3780 = vpack.c.bf16 %v3761, %v3760
        %v3781 = vpack.c.bf16 %v3763, %v3762
        %v3782 = vpack.c.bf16 %v3765, %v3764
        %v3783 = vpack.c.bf16 %v3767, %v3766
        %v3784 = vld [vmem:[%s7] sm:$0xf]
        %v3785 = vld [vmem:[%s7 + $0x4] sm:$0xf]
        %v3786 = vld [vmem:[%s7 + $0x8] sm:$0xf]
        %v3787 = vld [vmem:[%s7 + $0xc] sm:$0xf]
        %v3788 = vld [vmem:[%s7 + $0x10] sm:$0xf]
        %v3789 = vld [vmem:[%s7 + $0x14] sm:$0xf]
        %v3790 = vld [vmem:[%s7 + $0x18] sm:$0xf]
        %v3791 = vld [vmem:[%s7 + $0x1c] sm:$0xf]
        %v3792 = vld [vmem:[%s7 + $0x20] sm:$0xf]
        %v3793 = vld [vmem:[%s7 + $0x24] sm:$0xf]
        %v3794 = vld [vmem:[%s7 + $0x28] sm:$0xf]
        %v3795 = vld [vmem:[%s7 + $0x2c] sm:$0xf]
        %v3808 = vunpack.c.l.b16 %v3784
        %v3809 = vunpack.c.l.b16 %v3785
        %v3810 = vunpack.c.l.b16 %v3786
        %v3811 = vunpack.c.l.b16 %v3787
        %v3812 = vunpack.c.l.b16 %v3788
        %v3813 = vunpack.c.l.b16 %v3789
        %v3814 = vunpack.c.l.b16 %v3790
        %v3815 = vunpack.c.l.b16 %v3791
        %v3816 = vunpack.c.l.b16 %v3792
        %v3817 = vunpack.c.l.b16 %v3793
        %v3818 = vunpack.c.l.b16 %v3794
        %v3819 = vunpack.c.l.b16 %v3795
        %v3820 = vpack.c.b16 %v3809, %v3808
        %v3821 = vpack.c.b16 %v3811, %v3810
        %v3822 = vpack.c.b16 %v3813, %v3812
        %v3823 = vpack.c.b16 %v3815, %v3814
        %v3824 = vpack.c.b16 %v3817, %v3816
        %v3825 = vpack.c.b16 %v3819, %v3818
        %v3833 = vsel %vm2182, %v3768, 0
        %v3836 = vsel %vm2182, %v3769, 0
        %v3839 = vsel %vm2182, %v3770, 0
        %v3842 = vsel %vm2182, %v3771, 0
        %v3845 = vsel %vm2182, %v3772, 0
        %v3848 = vsel %vm2182, %v3773, 0
        %v3851 = vsel %vm2182, %v3774, 0
        %v3854 = vsel %vm2182, %v3775, 0
        %v3857 = vsel %vm2182, %v3776, 0
        %v3860 = vsel %vm2182, %v3777, 0
        %v3863 = vsel %vm2182, %v3778, 0
        %v3866 = vsel %vm2182, %v3779, 0
        %v3869 = vsel %vm2182, %v3780, 0
        %v3872 = vsel %vm2182, %v3781, 0
        %v3875 = vsel %vm2182, %v3782, 0
        %v3878 = vsel %vm2182, %v3783, 0
        %3880 = vmatprep.subr.bf16.mxu0 0
        %3881 = vmatpush1.bf16.msra.mxu0 %v3820
        %3882 = vmatprep.subr.bf16.mxu0 0
        %3883 = vmatpush1.bf16.msra.mxu0 %v3821
        %3884 = vmatprep.subr.bf16.mxu0 0
        %3885 = vmatpush1.bf16.msra.mxu0 %v3822
        %3886 = vmatprep.subr.bf16.mxu0 0
        %3887 = vmatpush1.bf16.msra.mxu0 %v3823
        %3888 = vmatprep.subr.bf16.mxu0 0
        %3889 = vmatpush1.bf16.msra.mxu0 %v3824
        %3890 = vmatprep.subr.bf16.mxu0 0
        %3891 = vmatpush1.bf16.msra.mxu0 %v3825
        %3892 = vmatprep.subr.bf16.mxu0 0
        %3893 = vmatpush1.bf16.msra.mxu0 0
        %3894 = vmatprep.subr.bf16.mxu0 0
        %3895 = vmatpush1.bf16.msra.mxu0 0
        %3896 = vmatprep.subr.bf16.mxu0 0
        %3897 = vmatpush1.bf16.msra.mxu0 0
        %3898 = vmatprep.subr.bf16.mxu0 0
        %3899 = vmatpush1.bf16.msra.mxu0 0
        %3900 = vmatprep.subr.bf16.mxu0 0
        %3901 = vmatpush1.bf16.msra.mxu0 0
        %3902 = vmatprep.subr.bf16.mxu0 0
        %3903 = vmatpush1.bf16.msra.mxu0 0
        %3904 = vmatprep.subr.bf16.mxu0 0
        %3905 = vmatpush1.bf16.msra.mxu0 0
        %3906 = vmatprep.subr.bf16.mxu0 0
        %3907 = vmatpush1.bf16.msra.mxu0 0
        %3908 = vmatprep.subr.bf16.mxu0 0
        %3909 = vmatpush1.bf16.msra.mxu0 0
        %3910 = vmatprep.subr.bf16.mxu0 0
        %3911 = vmatpush1.bf16.msra.mxu0 0
        %3912 = vmatprep.mubr.bf16.mxu0 0
        %3913 = vmatmul.mubr.bf16.gmra.mrb[0].mxu0 %v3833
        %v3914 = vpop.f32.mrb[0].mxu0
        %v3915 = vpop.f32.mrb[0].mxu0
        %v3916 = vpop.f32.mrb[0].mxu0
        %v3917 = vpop.f32.mrb[0].mxu0
        %3918 = vmatprep.mubr.bf16.mxu0 0
        %3919 = vmatmul.mubr.bf16.gmra.mrb[0].mxu0 %v3836
        %v3920 = vpop.f32.mrb[0].mxu0
        %v3921 = vpop.f32.mrb[0].mxu0
        %v3922 = vpop.f32.mrb[0].mxu0
        %v3923 = vpop.f32.mrb[0].mxu0
        %3924 = vmatprep.mubr.bf16.mxu0 0
        %3925 = vmatmul.mubr.bf16.gmra.mrb[0].mxu0 %v3839
        %v3926 = vpop.f32.mrb[0].mxu0
        %v3927 = vpop.f32.mrb[0].mxu0
        %v3928 = vpop.f32.mrb[0].mxu0
        %v3929 = vpop.f32.mrb[0].mxu0
        %3930 = vmatprep.mubr.bf16.mxu0 0
        %3931 = vmatmul.mubr.bf16.gmra.mrb[0].mxu0 %v3842
        %v3932 = vpop.f32.mrb[0].mxu0
        %v3933 = vpop.f32.mrb[0].mxu0
        %v3934 = vpop.f32.mrb[0].mxu0
        %v3935 = vpop.f32.mrb[0].mxu0
        %3936 = vmatprep.mubr.bf16.mxu0 0
        %3937 = vmatmul.mubr.bf16.gmra.mrb[0].mxu0 %v3845
        %v3938 = vpop.f32.mrb[0].mxu0
        %v3939 = vpop.f32.mrb[0].mxu0
        %v3940 = vpop.f32.mrb[0].mxu0
        %v3941 = vpop.f32.mrb[0].mxu0
        %3942 = vmatprep.mubr.bf16.mxu0 0
        %3943 = vmatmul.mubr.bf16.gmra.mrb[0].mxu0 %v3848
        %v3944 = vpop.f32.mrb[0].mxu0
        %v3945 = vpop.f32.mrb[0].mxu0
        %v3946 = vpop.f32.mrb[0].mxu0
        %v3947 = vpop.f32.mrb[0].mxu0
        %3948 = vmatprep.mubr.bf16.mxu0 0
        %3949 = vmatmul.mubr.bf16.gmra.mrb[0].mxu0 %v3851
        %v3950 = vpop.f32.mrb[0].mxu0
        %v3951 = vpop.f32.mrb[0].mxu0
        %v3952 = vpop.f32.mrb[0].mxu0
        %v3953 = vpop.f32.mrb[0].mxu0
        %3954 = vmatprep.mubr.bf16.mxu0 0
        %3955 = vmatmul.mubr.bf16.gmra.mrb[0].mxu0 %v3854
        %v3956 = vpop.f32.mrb[0].mxu0
        %v3957 = vpop.f32.mrb[0].mxu0
        %v3958 = vpop.f32.mrb[0].mxu0
        %v3959 = vpop.f32.mrb[0].mxu0
        %3960 = vmatprep.mubr.bf16.mxu0 0
        %3961 = vmatmul.mubr.bf16.gmra.mrb[0].mxu0 %v3857
        %v3962 = vpop.f32.mrb[0].mxu0
        %v3963 = vpop.f32.mrb[0].mxu0
        %v3964 = vpop.f32.mrb[0].mxu0
        %v3965 = vpop.f32.mrb[0].mxu0
        %3966 = vmatprep.mubr.bf16.mxu0 0
        %3967 = vmatmul.mubr.bf16.gmra.mrb[0].mxu0 %v3860
        %v3968 = vpop.f32.mrb[0].mxu0
        %v3969 = vpop.f32.mrb[0].mxu0
        %v3970 = vpop.f32.mrb[0].mxu0
        %v3971 = vpop.f32.mrb[0].mxu0
        %3972 = vmatprep.mubr.bf16.mxu0 0
        %3973 = vmatmul.mubr.bf16.gmra.mrb[0].mxu0 %v3863
        %v3974 = vpop.f32.mrb[0].mxu0
        %v3975 = vpop.f32.mrb[0].mxu0
        %v3976 = vpop.f32.mrb[0].mxu0
        %v3977 = vpop.f32.mrb[0].mxu0
        %3978 = vmatprep.mubr.bf16.mxu0 0
        %3979 = vmatmul.mubr.bf16.gmra.mrb[0].mxu0 %v3866
        %v3980 = vpop.f32.mrb[0].mxu0
        %v3981 = vpop.f32.mrb[0].mxu0
        %v3982 = vpop.f32.mrb[0].mxu0
        %v3983 = vpop.f32.mrb[0].mxu0
        %3984 = vmatprep.mubr.bf16.mxu0 0
        %3985 = vmatmul.mubr.bf16.gmra.mrb[0].mxu0 %v3869
        %v3986 = vpop.f32.mrb[0].mxu0
        %v3987 = vpop.f32.mrb[0].mxu0
        %v3988 = vpop.f32.mrb[0].mxu0
        %v3989 = vpop.f32.mrb[0].mxu0
        %3990 = vmatprep.mubr.bf16.mxu0 0
        %3991 = vmatmul.mubr.bf16.gmra.mrb[0].mxu0 %v3872
        %v3992 = vpop.f32.mrb[0].mxu0
        %v3993 = vpop.f32.mrb[0].mxu0
        %v3994 = vpop.f32.mrb[0].mxu0
        %v3995 = vpop.f32.mrb[0].mxu0
        %3996 = vmatprep.mubr.bf16.mxu0 0
        %3997 = vmatmul.mubr.bf16.gmra.mrb[0].mxu0 %v3875
        %v3998 = vpop.f32.mrb[0].mxu0
        %v3999 = vpop.f32.mrb[0].mxu0
        %v4000 = vpop.f32.mrb[0].mxu0
        %v4001 = vpop.f32.mrb[0].mxu0
        %4002 = vmatprep.mubr.bf16.mxu0 0
        %4003 = vmatmul.mubr.bf16.gmra.mrb[0].mxu0 %v3878
        %v4004 = vpop.f32.mrb[0].mxu0
        %v4005 = vadd.f32 0.0, %v4004
        %v4006 = vpop.f32.mrb[0].mxu0
        %v4007 = vpop.f32.mrb[0].mxu0
        %v4008 = vadd.f32 0.0, %v4007
        %v4009 = vpop.f32.mrb[0].mxu0
        %4010 = vdwg.mxu0
        %v4011 = vld [vmem:[%s8] sm:$0x1]
        %v4013 = vlaneseq
        %v4014 = vshrl.u32 %v4013, 7
        %v4015 = vsub.s32 0, %v4014
        %v4016 = vrot.slane %v4011, %v4015
        %v4018 = vadd.f32 %v4005, %v4016
        %v4019 = vadd.f32 %v4008, %v4016
        %v4020 = vadd.f32 %v4018, %v3318
        %v4021 = vadd.f32 %v4019, %v3319
        %v4022 = vmax.f32 %v4020, 0.0
        %v4023 = vmax.f32 %v4021, 0.0
        %v4024 = vpack.c.bf16 %v4023, %v4022
        %v4025 = vld [vmem:[%s9] sm:$0xf]
        %v4027 = vsel %vm1325, %v4025, 0
        %vm4029 = vcmask 1043456
        %v4031 = vsel %vm4029, %v4024, 0
        %4033 = vmatprep.subr.bf16.mxu0 0
        %4034 = vmatpush1.bf16.msra.mxu0 %v4031
        %4035 = vmatprep.subr.bf16.mxu0 0
        %4036 = vmatpush1.bf16.msra.mxu0 0
        %4037 = vmatprep.subr.bf16.mxu0 0
        %4038 = vmatpush1.bf16.msra.mxu0 0
        %4039 = vmatprep.subr.bf16.mxu0 0
        %4040 = vmatpush1.bf16.msra.mxu0 0
        %4041 = vmatprep.subr.bf16.mxu0 0
        %4042 = vmatpush1.bf16.msra.mxu0 0
        %4043 = vmatprep.subr.bf16.mxu0 0
        %4044 = vmatpush1.bf16.msra.mxu0 0
        %4045 = vmatprep.subr.bf16.mxu0 0
        %4046 = vmatpush1.bf16.msra.mxu0 0
        %4047 = vmatprep.subr.bf16.mxu0 0
        %4048 = vmatpush1.bf16.msra.mxu0 0
        %4049 = vmatprep.subr.bf16.mxu0 0
        %4050 = vmatpush1.bf16.msra.mxu0 0
        %4051 = vmatprep.subr.bf16.mxu0 0
        %4052 = vmatpush1.bf16.msra.mxu0 0
        %4053 = vmatprep.subr.bf16.mxu0 0
        %4054 = vmatpush1.bf16.msra.mxu0 0
        %4055 = vmatprep.subr.bf16.mxu0 0
        %4056 = vmatpush1.bf16.msra.mxu0 0
        %4057 = vmatprep.subr.bf16.mxu0 0
        %4058 = vmatpush1.bf16.msra.mxu0 0
        %4059 = vmatprep.subr.bf16.mxu0 0
        %4060 = vmatpush1.bf16.msra.mxu0 0
        %4061 = vmatprep.subr.bf16.mxu0 0
        %4062 = vmatpush1.bf16.msra.mxu0 0
        %4063 = vmatprep.subr.bf16.mxu0 0
        %4064 = vmatpush1.bf16.msra.mxu0 0
        %4065 = vmatprep.mubr.bf16.mxu0 0
        %4066 = vmatmul.mubr.bf16.gmra.mrb[0].mxu0 %v4027
        %v4067 = vpop.f32.mrb[0].mxu0
        %v4068 = vadd.f32 0.0, %v4067
        %v4069 = vpop.f32.mrb[0].mxu0
        %v4070 = vpop.f32.mrb[0].mxu0
        %v4071 = vpop.f32.mrb[0].mxu0
        %4072 = vdwg.mxu0
        %v4074 = vrot.slane %v4024, 4
        %v4076 = vsel %vm4029, %v4074, 0
        %4078 = vmatprep.subr.bf16.mxu0 0
        %4079 = vmatpush1.bf16.msra.mxu0 %v4076
        %4080 = vmatprep.subr.bf16.mxu0 0
        %4081 = vmatpush1.bf16.msra.mxu0 0
        %4082 = vmatprep.subr.bf16.mxu0 0
        %4083 = vmatpush1.bf16.msra.mxu0 0
        %4084 = vmatprep.subr.bf16.mxu0 0
        %4085 = vmatpush1.bf16.msra.mxu0 0
        %4086 = vmatprep.subr.bf16.mxu0 0
        %4087 = vmatpush1.bf16.msra.mxu0 0
        %4088 = vmatprep.subr.bf16.mxu0 0
        %4089 = vmatpush1.bf16.msra.mxu0 0
        %4090 = vmatprep.subr.bf16.mxu0 0
        %4091 = vmatpush1.bf16.msra.mxu0 0
        %4092 = vmatprep.subr.bf16.mxu0 0
        %4093 = vmatpush1.bf16.msra.mxu0 0
        %4094 = vmatprep.subr.bf16.mxu0 0
        %4095 = vmatpush1.bf16.msra.mxu0 0
        %4096 = vmatprep.subr.bf16.mxu0 0
        %4097 = vmatpush1.bf16.msra.mxu0 0
        %4098 = vmatprep.subr.bf16.mxu0 0
        %4099 = vmatpush1.bf16.msra.mxu0 0
        %4100 = vmatprep.subr.bf16.mxu0 0
        %4101 = vmatpush1.bf16.msra.mxu0 0
        %4102 = vmatprep.subr.bf16.mxu0 0
        %4103 = vmatpush1.bf16.msra.mxu0 0
        %4104 = vmatprep.subr.bf16.mxu0 0
        %4105 = vmatpush1.bf16.msra.mxu0 0
        %4106 = vmatprep.subr.bf16.mxu0 0
        %4107 = vmatpush1.bf16.msra.mxu0 0
        %4108 = vmatprep.subr.bf16.mxu0 0
        %4109 = vmatpush1.bf16.msra.mxu0 0
        %4110 = vmatprep.mubr.bf16.mxu0 0
        %4111 = vmatmul.mubr.bf16.gmra.mrb[0].mxu0 %v4027
        %v4112 = vpop.f32.mrb[0].mxu0
        %v4113 = vadd.f32 0.0, %v4112
        %v4114 = vpop.f32.mrb[0].mxu0
        %v4115 = vpop.f32.mrb[0].mxu0
        %v4116 = vpop.f32.mrb[0].mxu0
        %4117 = vdwg.mxu0
        %v4118 = vpack.c.bf16 %v4113, %v4068
        %v4119 = vld [vmem:[%s10] sm:$0xf]
        %v4120 = vld [vmem:[%s10 + $0x4] sm:$0xf]
        %v4121 = vld [vmem:[%s10 + $0x8] sm:$0xf]
        %v4122 = vld [vmem:[%s10 + $0xc] sm:$0xf]
        %v4123 = vld [vmem:[%s11] sm:$0x1]
        %v4125 = vlaneseq
        %v4126 = vshrl.u32 %v4125, 7
        %v4127 = vsub.s32 0, %v4126
        %v4128 = vrot.slane %v4123, %v4127
        %v4134 = vunpack.c.l.b16 %v4119
        %v4135 = vunpack.c.l.b16 %v4120
        %v4136 = vunpack.c.l.b16 %v4121
        %v4137 = vunpack.c.l.b16 %v4122
        %v4138 = vpack.c.b16 %v4135, %v4134
        %v4139 = vpack.c.b16 %v4137, %v4136
        %v4143 = vsel %vm907, %v4118, 0
        %4145 = vmatprep.subr.bf16.mxu0 0
        %4146 = vmatpush1.bf16.msra.mxu0 %v4138
        %4147 = vmatprep.subr.bf16.mxu0 0
        %4148 = vmatpush1.bf16.msra.mxu0 %v4139
        %4149 = vmatprep.subr.bf16.mxu0 0
        %4150 = vmatpush1.bf16.msra.mxu0 0
        %4151 = vmatprep.subr.bf16.mxu0 0
        %4152 = vmatpush1.bf16.msra.mxu0 0
        %4153 = vmatprep.subr.bf16.mxu0 0
        %4154 = vmatpush1.bf16.msra.mxu0 0
        %4155 = vmatprep.subr.bf16.mxu0 0
        %4156 = vmatpush1.bf16.msra.mxu0 0
        %4157 = vmatprep.subr.bf16.mxu0 0
        %4158 = vmatpush1.bf16.msra.mxu0 0
        %4159 = vmatprep.subr.bf16.mxu0 0
        %4160 = vmatpush1.bf16.msra.mxu0 0
        %4161 = vmatprep.subr.bf16.mxu0 0
        %4162 = vmatpush1.bf16.msra.mxu0 0
        %4163 = vmatprep.subr.bf16.mxu0 0
        %4164 = vmatpush1.bf16.msra.mxu0 0
        %4165 = vmatprep.subr.bf16.mxu0 0
        %4166 = vmatpush1.bf16.msra.mxu0 0
        %4167 = vmatprep.subr.bf16.mxu0 0
        %4168 = vmatpush1.bf16.msra.mxu0 0
        %4169 = vmatprep.subr.bf16.mxu0 0
        %4170 = vmatpush1.bf16.msra.mxu0 0
        %4171 = vmatprep.subr.bf16.mxu0 0
        %4172 = vmatpush1.bf16.msra.mxu0 0
        %4173 = vmatprep.subr.bf16.mxu0 0
        %4174 = vmatpush1.bf16.msra.mxu0 0
        %4175 = vmatprep.subr.bf16.mxu0 0
        %4176 = vmatpush1.bf16.msra.mxu0 0
        %4177 = vmatprep.mubr.bf16.mxu0 0
        %4178 = vmatmul.mubr.bf16.gmra.mrb[0].mxu0 %v4143
        %v4179 = vpop.f32.mrb[0].mxu0
        %v4180 = vadd.f32 %v4128, %v4179
        %v4181 = vpop.f32.mrb[0].mxu0
        %v4182 = vpop.f32.mrb[0].mxu0
        %v4183 = vadd.f32 %v4128, %v4182
        %v4184 = vpop.f32.mrb[0].mxu0
        %4185 = vdwg.mxu0
        %v4186 = vmax.f32 %v4180, 0.0
        %v4187 = vmax.f32 %v4183, 0.0
        %v4188 = vld [vmem:[%s12] sm:$0x1]
        %v4190 = vlaneseq
        %v4191 = vshrl.u32 %v4190, 7
        %v4192 = vsub.s32 0, %v4191
        %v4193 = vrot.slane %v4188, %v4192
        %v4195 = vmul.f32 %v4186, %v4193
        %v4196 = vmul.f32 %v4187, %v4193
        %v4197 = vsel %vm907, %v4195, 0.0
        %4198 = vadd.xlane.f32.xlu0 %v4197
        %v4199 = vpop.xlane.xlu0 %4198
        %v4200 = vsel %vm907, %v4196, 0.0
        %4201 = vadd.xlane.f32.xlu0 %v4200
        %v4202 = vpop.xlane.xlu0 %4201
        %v4203 = vld [vmem:[#allocation5] sm:$0x1]
        %v4205 = vlaneseq
        %v4206 = vshrl.u32 %v4205, 7
        %v4207 = vsub.s32 0, %v4206
        %v4208 = vrot.slane %v4203, %v4207
        %v4210 = vadd.f32 %v4199, %v4208
        %v4211 = vadd.f32 %v4202, %v4208
        %v4212 = vxor.u32 %v4210, 2147483648
        %v4213 = vxor.u32 %v4211, 2147483648
        %v4214 = vmul.f32 %v4212, 1.442695
        %v4215 = vpow.pop %v4214
        %v4216 = vmul.f32 %v4213, 1.442695
        %v4217 = vpow.pop %v4216
        %v4218 = vadd.f32 %v4215, 1.0
        %v4219 = vadd.f32 %v4217, 1.0
        %v4220 = vrcp.pop %v4218
        %v4221 = vmul.f32 1.0, %v4220
        %v4222 = vrcp.pop %v4219
        %v4223 = vmul.f32 1.0, %v4222
        %4224 = vst.msk [vmem:[%s817] sm:$0xff] %vm827, %v4221
        %4225 = vst.msk [vmem:[%s817 + $0x8] sm:$0xff] %vm827, %v4223
      $region124: #{deeptrader_forward.1} parent=119 // pred_fallthru
        _
      %p4226 = scmp.eq.s32.totalorder %s45, 1
      // Predicated region
      $region125: #{deeptrader_forward.1} parent=119 // pred_check
        %p4227 = pneg %p4226
      $region126: #{deeptrader_forward.1} parent=119 // pred_check_branch
        %4229 = sbr.rel (%p4227) target = $region128
      $region127: #{deeptrader_forward.1} parent=119 // pred_region
        %v4230 = vld [vmem:[%s14] sm:$0xff]
        %v4231 = vld [vmem:[%s14 + $0x8] sm:$0xff]
        %v4232 = vld [vmem:[%s14 + $0x10] sm:$0xff]
        %v4233 = vld [vmem:[%s14 + $0x18] sm:$0xff]
        %v4234 = vld [vmem:[%s14 + $0x20] sm:$0xff]
        %v4235 = vld [vmem:[%s14 + $0x28] sm:$0xff]
        %v4236 = vld [vmem:[%s14 + $0x30] sm:$0xff]
        %v4237 = vld [vmem:[%s14 + $0x38] sm:$0xff]
        %v4238 = vld [vmem:[%s14 + $0x40] sm:$0xff]
        %v4239 = vld [vmem:[%s14 + $0x48] sm:$0xff]
        %v4240 = vld [vmem:[%s14 + $0x50] sm:$0xff]
        %v4241 = vld [vmem:[%s14 + $0x58] sm:$0xff]
        %v4242 = vld [vmem:[%s14 + $0x60] sm:$0xff]
        %v4243 = vld [vmem:[%s14 + $0x68] sm:$0xff]
        %v4244 = vld [vmem:[%s14 + $0x70] sm:$0xff]
        %v4245 = vld [vmem:[%s14 + $0x78] sm:$0xff]
        %v4246 = vpack.c.bf16 %v4231, %v4230
        %v4247 = vpack.c.bf16 %v4233, %v4232
        %v4248 = vpack.c.bf16 %v4235, %v4234
        %v4249 = vpack.c.bf16 %v4237, %v4236
        %v4250 = vpack.c.bf16 %v4239, %v4238
        %v4251 = vpack.c.bf16 %v4241, %v4240
        %v4252 = vpack.c.bf16 %v4243, %v4242
        %v4253 = vpack.c.bf16 %v4245, %v4244
        %v4254 = vld [vmem:[%s15] sm:$0x7]
        %vm4255 = vcmask 39936
        %v4257 = vsel %vm4255, %v4246, 0
        %v4260 = vsel %vm4255, %v4247, 0
        %v4263 = vsel %vm4255, %v4248, 0
        %v4266 = vsel %vm4255, %v4249, 0
        %v4269 = vsel %vm4255, %v4250, 0
        %v4272 = vsel %vm4255, %v4251, 0
        %v4275 = vsel %vm4255, %v4252, 0
        %v4278 = vsel %vm4255, %v4253, 0
        %vm4280 = vcmask 1041408
        %vm4281 = vcmask 1042432
        %v4282 = vsel %vm4280, 4294967295, 65535
        %v4283 = vsel %vm4281, %v4282, 0
        %v4285 = vand.u32 %v4254, %v4283
        %4287 = vmatprep.subr.bf16.mxu0 0
        %4288 = vmatpush1.bf16.msra.mxu0 %v4285
        %4289 = vmatprep.subr.bf16.mxu0 0
        %4290 = vmatpush1.bf16.msra.mxu0 0
        %4291 = vmatprep.subr.bf16.mxu0 0
        %4292 = vmatpush1.bf16.msra.mxu0 0
        %4293 = vmatprep.subr.bf16.mxu0 0
        %4294 = vmatpush1.bf16.msra.mxu0 0
        %4295 = vmatprep.subr.bf16.mxu0 0
        %4296 = vmatpush1.bf16.msra.mxu0 0
        %4297 = vmatprep.subr.bf16.mxu0 0
        %4298 = vmatpush1.bf16.msra.mxu0 0
        %4299 = vmatprep.subr.bf16.mxu0 0
        %4300 = vmatpush1.bf16.msra.mxu0 0
        %4301 = vmatprep.subr.bf16.mxu0 0
        %4302 = vmatpush1.bf16.msra.mxu0 0
        %4303 = vmatprep.subr.bf16.mxu0 0
        %4304 = vmatpush1.bf16.msra.mxu0 0
        %4305 = vmatprep.subr.bf16.mxu0 0
        %4306 = vmatpush1.bf16.msra.mxu0 0
        %4307 = vmatprep.subr.bf16.mxu0 0
        %4308 = vmatpush1.bf16.msra.mxu0 0
        %4309 = vmatprep.subr.bf16.mxu0 0
        %4310 = vmatpush1.bf16.msra.mxu0 0
        %4311 = vmatprep.subr.bf16.mxu0 0
        %4312 = vmatpush1.bf16.msra.mxu0 0
        %4313 = vmatprep.subr.bf16.mxu0 0
        %4314 = vmatpush1.bf16.msra.mxu0 0
        %4315 = vmatprep.subr.bf16.mxu0 0
        %4316 = vmatpush1.bf16.msra.mxu0 0
        %4317 = vmatprep.subr.bf16.mxu0 0
        %4318 = vmatpush1.bf16.msra.mxu0 0
        %4319 = vmatprep.mubr.bf16.mxu0 0
        %4320 = vmatmul.mubr.bf16.gmra.mrb[0].mxu0 %v4257
        %v4321 = vpop.f32.mrb[0].mxu0
        %v4322 = vadd.f32 0.0, %v4321
        %v4323 = vpop.f32.mrb[0].mxu0
        %v4324 = vpop.f32.mrb[0].mxu0
        %v4325 = vadd.f32 0.0, %v4324
        %v4326 = vpop.f32.mrb[0].mxu0
        %4327 = vmatprep.mubr.bf16.mxu0 0
        %4328 = vmatmul.mubr.bf16.gmra.mrb[0].mxu0 %v4260
        %v4329 = vpop.f32.mrb[0].mxu0
        %v4330 = vadd.f32 0.0, %v4329
        %v4331 = vpop.f32.mrb[0].mxu0
        %v4332 = vpop.f32.mrb[0].mxu0
        %v4333 = vadd.f32 0.0, %v4332
        %v4334 = vpop.f32.mrb[0].mxu0
        %4335 = vmatprep.mubr.bf16.mxu0 0
        %4336 = vmatmul.mubr.bf16.gmra.mrb[0].mxu0 %v4263
        %v4337 = vpop.f32.mrb[0].mxu0
        %v4338 = vadd.f32 0.0, %v4337
        %v4339 = vpop.f32.mrb[0].mxu0
        %v4340 = vpop.f32.mrb[0].mxu0
        %v4341 = vadd.f32 0.0, %v4340
        %v4342 = vpop.f32.mrb[0].mxu0
        %4343 = vmatprep.mubr.bf16.mxu0 0
        %4344 = vmatmul.mubr.bf16.gmra.mrb[0].mxu0 %v4266
        %v4345 = vpop.f32.mrb[0].mxu0
        %v4346 = vadd.f32 0.0, %v4345
        %v4347 = vpop.f32.mrb[0].mxu0
        %v4348 = vpop.f32.mrb[0].mxu0
        %v4349 = vadd.f32 0.0, %v4348
        %v4350 = vpop.f32.mrb[0].mxu0
        %4351 = vmatprep.mubr.bf16.mxu0 0
        %4352 = vmatmul.mubr.bf16.gmra.mrb[0].mxu0 %v4269
        %v4353 = vpop.f32.mrb[0].mxu0
        %v4354 = vadd.f32 0.0, %v4353
        %v4355 = vpop.f32.mrb[0].mxu0
        %v4356 = vpop.f32.mrb[0].mxu0
        %v4357 = vadd.f32 0.0, %v4356
        %v4358 = vpop.f32.mrb[0].mxu0
        %4359 = vmatprep.mubr.bf16.mxu0 0
        %4360 = vmatmul.mubr.bf16.gmra.mrb[0].mxu0 %v4272
        %v4361 = vpop.f32.mrb[0].mxu0
        %v4362 = vadd.f32 0.0, %v4361
        %v4363 = vpop.f32.mrb[0].mxu0
        %v4364 = vpop.f32.mrb[0].mxu0
        %v4365 = vadd.f32 0.0, %v4364
        %v4366 = vpop.f32.mrb[0].mxu0
        %4367 = vmatprep.mubr.bf16.mxu0 0
        %4368 = vmatmul.mubr.bf16.gmra.mrb[0].mxu0 %v4275
        %v4369 = vpop.f32.mrb[0].mxu0
        %v4370 = vadd.f32 0.0, %v4369
        %v4371 = vpop.f32.mrb[0].mxu0
        %v4372 = vpop.f32.mrb[0].mxu0
        %v4373 = vadd.f32 0.0, %v4372
        %v4374 = vpop.f32.mrb[0].mxu0
        %4375 = vmatprep.mubr.bf16.mxu0 0
        %4376 = vmatmul.mubr.bf16.gmra.mrb[0].mxu0 %v4278
        %v4377 = vpop.f32.mrb[0].mxu0
        %v4378 = vadd.f32 0.0, %v4377
        %v4379 = vpop.f32.mrb[0].mxu0
        %v4380 = vpop.f32.mrb[0].mxu0
        %v4381 = vadd.f32 0.0, %v4380
        %v4382 = vpop.f32.mrb[0].mxu0
        %4383 = vdwg.mxu0
        %v4384 = vld [vmem:[%s17] sm:$0x1]
        %v4386 = vlaneseq
        %v4387 = vshrl.u32 %v4386, 7
        %v4388 = vsub.s32 0, %v4387
        %v4389 = vrot.slane %v4384, %v4388
        %v4391 = vadd.f32 %v4322, %v4389
        %v4392 = vadd.f32 %v4325, %v4389
        %v4393 = vadd.f32 %v4330, %v4389
        %v4394 = vadd.f32 %v4333, %v4389
        %v4395 = vadd.f32 %v4338, %v4389
        %v4396 = vadd.f32 %v4341, %v4389
        %v4397 = vadd.f32 %v4346, %v4389
        %v4398 = vadd.f32 %v4349, %v4389
        %v4399 = vadd.f32 %v4354, %v4389
        %v4400 = vadd.f32 %v4357, %v4389
        %v4401 = vadd.f32 %v4362, %v4389
        %v4402 = vadd.f32 %v4365, %v4389
        %v4403 = vadd.f32 %v4370, %v4389
        %v4404 = vadd.f32 %v4373, %v4389
        %v4405 = vadd.f32 %v4378, %v4389
        %v4406 = vadd.f32 %v4381, %v4389
        %v4407 = vld [vmem:[%s16] sm:$0xf]
        %v4408 = vld [vmem:[%s16 + $0x4] sm:$0xf]
        %v4409 = vld [vmem:[%s16 + $0x8] sm:$0xf]
        %v4410 = vld [vmem:[%s16 + $0xc] sm:$0xf]
        %v4415 = vunpack.c.l.b16 %v4407
        %v4416 = vunpack.c.l.b16 %v4408
        %v4417 = vunpack.c.l.b16 %v4409
        %v4418 = vunpack.c.l.b16 %v4410
        %v4419 = vpack.c.b16 %v4416, %v4415
        %v4420 = vpack.c.b16 %v4418, %v4417
        %vm4423 = vcmask 261120
        %v4425 = vsel %vm4423, 0, 0
        %4427 = vmatprep.subr.bf16.mxu0 0
        %4428 = vmatpush1.bf16.msra.mxu0 %v4419
        %4429 = vmatprep.subr.bf16.mxu0 0
        %4430 = vmatpush1.bf16.msra.mxu0 %v4420
        %4431 = vmatprep.subr.bf16.mxu0 0
        %4432 = vmatpush1.bf16.msra.mxu0 0
        %4433 = vmatprep.subr.bf16.mxu0 0
        %4434 = vmatpush1.bf16.msra.mxu0 0
        %4435 = vmatprep.subr.bf16.mxu0 0
        %4436 = vmatpush1.bf16.msra.mxu0 0
        %4437 = vmatprep.subr.bf16.mxu0 0
        %4438 = vmatpush1.bf16.msra.mxu0 0
        %4439 = vmatprep.subr.bf16.mxu0 0
        %4440 = vmatpush1.bf16.msra.mxu0 0
        %4441 = vmatprep.subr.bf16.mxu0 0
        %4442 = vmatpush1.bf16.msra.mxu0 0
        %4443 = vmatprep.subr.bf16.mxu0 0
        %4444 = vmatpush1.bf16.msra.mxu0 0
        %4445 = vmatprep.subr.bf16.mxu0 0
        %4446 = vmatpush1.bf16.msra.mxu0 0
        %4447 = vmatprep.subr.bf16.mxu0 0
        %4448 = vmatpush1.bf16.msra.mxu0 0
        %4449 = vmatprep.subr.bf16.mxu0 0
        %4450 = vmatpush1.bf16.msra.mxu0 0
        %4451 = vmatprep.subr.bf16.mxu0 0
        %4452 = vmatpush1.bf16.msra.mxu0 0
        %4453 = vmatprep.subr.bf16.mxu0 0
        %4454 = vmatpush1.bf16.msra.mxu0 0
        %4455 = vmatprep.subr.bf16.mxu0 0
        %4456 = vmatpush1.bf16.msra.mxu0 0
        %4457 = vmatprep.subr.bf16.mxu0 0
        %4458 = vmatpush1.bf16.msra.mxu0 0
        %4459 = vmatprep.mubr.bf16.mxu0 0
        %4460 = vmatmul.mubr.bf16.gmra.mrb[0].mxu0 %v4425
        %v4461 = vpop.f32.mrb[0].mxu0
        %v4462 = vadd.f32 0.0, %v4461
        %v4463 = vpop.f32.mrb[0].mxu0
        %v4464 = vpop.f32.mrb[0].mxu0
        %v4465 = vpop.f32.mrb[0].mxu0
        %4466 = vdwg.mxu0
        %v4467 = vadd.f32 %v4391, %v4462
        %v4468 = vxor.u32 %v4467, 2147483648
        %v4469 = vmul.f32 %v4468, 1.442695
        %v4470 = vpow.pop %v4469
        %v4471 = vadd.f32 %v4470, 1.0
        %v4472 = vrcp.pop %v4471
        %v4473 = vmul.f32 1.0, %v4472
        %v4474 = vtanh.pop %v4467
        %v4475 = vmul.f32 %v4473, 0.0
        %4477 = vrot.lane.b32.xlu0 %v4474, 64
        %v4478 = vpop.permute.xlu0 %4477
        %v4480 = vmul.f32 %v4473, %v4478
        %4482 = vrot.lane.b32.xlu0 %v4480, 32
        %v4483 = vpop.permute.xlu0 %4482
        %v4485 = vadd.f32 %v4475, %v4483
        %v4486 = vtanh.pop %v4485
        %4488 = vrot.lane.b32.xlu0 %v4486, 64
        %v4489 = vpop.permute.xlu0 %4488
        %v4491 = vmul.f32 %v4473, %v4489
        %4493 = vrot.lane.b32.xlu0 %v4491, 32
        %v4494 = vpop.permute.xlu0 %4493
        %4496 = vst.msk [vmem:[#allocation4] sm:$0xff] %vm4423, %v4494
        %v4497 = vpack.c.bf16 %v4491, %v4491
        %v4498 = vld [vmem:[%s16] sm:$0xf]
        %v4499 = vld [vmem:[%s16 + $0x4] sm:$0xf]
        %v4500 = vld [vmem:[%s16 + $0x8] sm:$0xf]
        %v4501 = vld [vmem:[%s16 + $0xc] sm:$0xf]
        %4503 = vrot.lane.b32.xlu0 %v4497, 32
        %v4504 = vpop.permute.xlu0 %4503
        %v4509 = vunpack.c.l.b16 %v4498
        %v4510 = vunpack.c.l.b16 %v4499
        %v4511 = vunpack.c.l.b16 %v4500
        %v4512 = vunpack.c.l.b16 %v4501
        %v4513 = vpack.c.b16 %v4510, %v4509
        %v4514 = vpack.c.b16 %v4512, %v4511
        %v4518 = vsel %vm4423, %v4504, 0
        %4520 = vmatprep.subr.bf16.mxu0 0
        %4521 = vmatpush1.bf16.msra.mxu0 %v4513
        %4522 = vmatprep.subr.bf16.mxu0 0
        %4523 = vmatpush1.bf16.msra.mxu0 %v4514
        %4524 = vmatprep.subr.bf16.mxu0 0
        %4525 = vmatpush1.bf16.msra.mxu0 0
        %4526 = vmatprep.subr.bf16.mxu0 0
        %4527 = vmatpush1.bf16.msra.mxu0 0
        %4528 = vmatprep.subr.bf16.mxu0 0
        %4529 = vmatpush1.bf16.msra.mxu0 0
        %4530 = vmatprep.subr.bf16.mxu0 0
        %4531 = vmatpush1.bf16.msra.mxu0 0
        %4532 = vmatprep.subr.bf16.mxu0 0
        %4533 = vmatpush1.bf16.msra.mxu0 0
        %4534 = vmatprep.subr.bf16.mxu0 0
        %4535 = vmatpush1.bf16.msra.mxu0 0
        %4536 = vmatprep.subr.bf16.mxu0 0
        %4537 = vmatpush1.bf16.msra.mxu0 0
        %4538 = vmatprep.subr.bf16.mxu0 0
        %4539 = vmatpush1.bf16.msra.mxu0 0
        %4540 = vmatprep.subr.bf16.mxu0 0
        %4541 = vmatpush1.bf16.msra.mxu0 0
        %4542 = vmatprep.subr.bf16.mxu0 0
        %4543 = vmatpush1.bf16.msra.mxu0 0
        %4544 = vmatprep.subr.bf16.mxu0 0
        %4545 = vmatpush1.bf16.msra.mxu0 0
        %4546 = vmatprep.subr.bf16.mxu0 0
        %4547 = vmatpush1.bf16.msra.mxu0 0
        %4548 = vmatprep.subr.bf16.mxu0 0
        %4549 = vmatpush1.bf16.msra.mxu0 0
        %4550 = vmatprep.subr.bf16.mxu0 0
        %4551 = vmatpush1.bf16.msra.mxu0 0
        %4552 = vmatprep.mubr.bf16.mxu0 0
        %4553 = vmatmul.mubr.bf16.gmra.mrb[0].mxu0 %v4518
        %v4554 = vpop.f32.mrb[0].mxu0
        %v4555 = vadd.f32 0.0, %v4554
        %v4556 = vpop.f32.mrb[0].mxu0
        %v4557 = vpop.f32.mrb[0].mxu0
        %v4558 = vpop.f32.mrb[0].mxu0
        %4559 = vdwg.mxu0
        %v4560 = vadd.f32 %v4392, %v4555
        %v4561 = vxor.u32 %v4560, 2147483648
        %v4562 = vmul.f32 %v4561, 1.442695
        %v4563 = vpow.pop %v4562
        %v4564 = vadd.f32 %v4563, 1.0
        %v4565 = vrcp.pop %v4564
        %v4566 = vmul.f32 1.0, %v4565
        %v4567 = vtanh.pop %v4560
        %v4568 = vmul.f32 %v4566, %v4485
        %4570 = vrot.lane.b32.xlu0 %v4567, 64
        %v4571 = vpop.permute.xlu0 %4570
        %v4573 = vmul.f32 %v4566, %v4571
        %4575 = vrot.lane.b32.xlu0 %v4573, 32
        %v4576 = vpop.permute.xlu0 %4575
        %v4578 = vadd.f32 %v4568, %v4576
        %v4579 = vtanh.pop %v4578
        %4581 = vrot.lane.b32.xlu0 %v4579, 64
        %v4582 = vpop.permute.xlu0 %4581
        %v4584 = vmul.f32 %v4566, %v4582
        %4586 = vrot.lane.b32.xlu0 %v4584, 32
        %v4587 = vpop.permute.xlu0 %4586
        %s4589 = scalar_lea.vmem [#allocation4], 8
        %4590 = vst.msk [vmem:[%s4589] sm:$0xff] %vm4423, %v4587
        %v4591 = vpack.c.bf16 %v4584, %v4584
        %v4592 = vld [vmem:[%s16] sm:$0xf]
        %v4593 = vld [vmem:[%s16 + $0x4] sm:$0xf]
        %v4594 = vld [vmem:[%s16 + $0x8] sm:$0xf]
        %v4595 = vld [vmem:[%s16 + $0xc] sm:$0xf]
        %4597 = vrot.lane.b32.xlu0 %v4591, 32
        %v4598 = vpop.permute.xlu0 %4597
        %v4603 = vunpack.c.l.b16 %v4592
        %v4604 = vunpack.c.l.b16 %v4593
        %v4605 = vunpack.c.l.b16 %v4594
        %v4606 = vunpack.c.l.b16 %v4595
        %v4607 = vpack.c.b16 %v4604, %v4603
        %v4608 = vpack.c.b16 %v4606, %v4605
        %v4612 = vsel %vm4423, %v4598, 0
        %4614 = vmatprep.subr.bf16.mxu0 0
        %4615 = vmatpush1.bf16.msra.mxu0 %v4607
        %4616 = vmatprep.subr.bf16.mxu0 0
        %4617 = vmatpush1.bf16.msra.mxu0 %v4608
        %4618 = vmatprep.subr.bf16.mxu0 0
        %4619 = vmatpush1.bf16.msra.mxu0 0
        %4620 = vmatprep.subr.bf16.mxu0 0
        %4621 = vmatpush1.bf16.msra.mxu0 0
        %4622 = vmatprep.subr.bf16.mxu0 0
        %4623 = vmatpush1.bf16.msra.mxu0 0
        %4624 = vmatprep.subr.bf16.mxu0 0
        %4625 = vmatpush1.bf16.msra.mxu0 0
        %4626 = vmatprep.subr.bf16.mxu0 0
        %4627 = vmatpush1.bf16.msra.mxu0 0
        %4628 = vmatprep.subr.bf16.mxu0 0
        %4629 = vmatpush1.bf16.msra.mxu0 0
        %4630 = vmatprep.subr.bf16.mxu0 0
        %4631 = vmatpush1.bf16.msra.mxu0 0
        %4632 = vmatprep.subr.bf16.mxu0 0
        %4633 = vmatpush1.bf16.msra.mxu0 0
        %4634 = vmatprep.subr.bf16.mxu0 0
        %4635 = vmatpush1.bf16.msra.mxu0 0
        %4636 = vmatprep.subr.bf16.mxu0 0
        %4637 = vmatpush1.bf16.msra.mxu0 0
        %4638 = vmatprep.subr.bf16.mxu0 0
        %4639 = vmatpush1.bf16.msra.mxu0 0
        %4640 = vmatprep.subr.bf16.mxu0 0
        %4641 = vmatpush1.bf16.msra.mxu0 0
        %4642 = vmatprep.subr.bf16.mxu0 0
        %4643 = vmatpush1.bf16.msra.mxu0 0
        %4644 = vmatprep.subr.bf16.mxu0 0
        %4645 = vmatpush1.bf16.msra.mxu0 0
        %4646 = vmatprep.mubr.bf16.mxu0 0
        %4647 = vmatmul.mubr.bf16.gmra.mrb[0].mxu0 %v4612
        %v4648 = vpop.f32.mrb[0].mxu0
        %v4649 = vadd.f32 0.0, %v4648
        %v4650 = vpop.f32.mrb[0].mxu0
        %v4651 = vpop.f32.mrb[0].mxu0
        %v4652 = vpop.f32.mrb[0].mxu0
        %4653 = vdwg.mxu0
        %v4654 = vadd.f32 %v4393, %v4649
        %v4655 = vxor.u32 %v4654, 2147483648
        %v4656 = vmul.f32 %v4655, 1.442695
        %v4657 = vpow.pop %v4656
        %v4658 = vadd.f32 %v4657, 1.0
        %v4659 = vrcp.pop %v4658
        %v4660 = vmul.f32 1.0, %v4659
        %v4661 = vtanh.pop %v4654
        %v4662 = vmul.f32 %v4660, %v4578
        %4664 = vrot.lane.b32.xlu0 %v4661, 64
        %v4665 = vpop.permute.xlu0 %4664
        %v4667 = vmul.f32 %v4660, %v4665
        %4669 = vrot.lane.b32.xlu0 %v4667, 32
        %v4670 = vpop.permute.xlu0 %4669
        %v4672 = vadd.f32 %v4662, %v4670
        %v4673 = vtanh.pop %v4672
        %4675 = vrot.lane.b32.xlu0 %v4673, 64
        %v4676 = vpop.permute.xlu0 %4675
        %v4678 = vmul.f32 %v4660, %v4676
        %4680 = vrot.lane.b32.xlu0 %v4678, 32
        %v4681 = vpop.permute.xlu0 %4680
        %s4683 = scalar_lea.vmem [#allocation4], 16
        %4684 = vst.msk [vmem:[%s4683] sm:$0xff] %vm4423, %v4681
        %v4685 = vpack.c.bf16 %v4678, %v4678
        %v4686 = vld [vmem:[%s16] sm:$0xf]
        %v4687 = vld [vmem:[%s16 + $0x4] sm:$0xf]
        %v4688 = vld [vmem:[%s16 + $0x8] sm:$0xf]
        %v4689 = vld [vmem:[%s16 + $0xc] sm:$0xf]
        %4691 = vrot.lane.b32.xlu0 %v4685, 32
        %v4692 = vpop.permute.xlu0 %4691
        %v4697 = vunpack.c.l.b16 %v4686
        %v4698 = vunpack.c.l.b16 %v4687
        %v4699 = vunpack.c.l.b16 %v4688
        %v4700 = vunpack.c.l.b16 %v4689
        %v4701 = vpack.c.b16 %v4698, %v4697
        %v4702 = vpack.c.b16 %v4700, %v4699
        %v4706 = vsel %vm4423, %v4692, 0
        %4708 = vmatprep.subr.bf16.mxu0 0
        %4709 = vmatpush1.bf16.msra.mxu0 %v4701
        %4710 = vmatprep.subr.bf16.mxu0 0
        %4711 = vmatpush1.bf16.msra.mxu0 %v4702
        %4712 = vmatprep.subr.bf16.mxu0 0
        %4713 = vmatpush1.bf16.msra.mxu0 0
        %4714 = vmatprep.subr.bf16.mxu0 0
        %4715 = vmatpush1.bf16.msra.mxu0 0
        %4716 = vmatprep.subr.bf16.mxu0 0
        %4717 = vmatpush1.bf16.msra.mxu0 0
        %4718 = vmatprep.subr.bf16.mxu0 0
        %4719 = vmatpush1.bf16.msra.mxu0 0
        %4720 = vmatprep.subr.bf16.mxu0 0
        %4721 = vmatpush1.bf16.msra.mxu0 0
        %4722 = vmatprep.subr.bf16.mxu0 0
        %4723 = vmatpush1.bf16.msra.mxu0 0
        %4724 = vmatprep.subr.bf16.mxu0 0
        %4725 = vmatpush1.bf16.msra.mxu0 0
        %4726 = vmatprep.subr.bf16.mxu0 0
        %4727 = vmatpush1.bf16.msra.mxu0 0
        %4728 = vmatprep.subr.bf16.mxu0 0
        %4729 = vmatpush1.bf16.msra.mxu0 0
        %4730 = vmatprep.subr.bf16.mxu0 0
        %4731 = vmatpush1.bf16.msra.mxu0 0
        %4732 = vmatprep.subr.bf16.mxu0 0
        %4733 = vmatpush1.bf16.msra.mxu0 0
        %4734 = vmatprep.subr.bf16.mxu0 0
        %4735 = vmatpush1.bf16.msra.mxu0 0
        %4736 = vmatprep.subr.bf16.mxu0 0
        %4737 = vmatpush1.bf16.msra.mxu0 0
        %4738 = vmatprep.subr.bf16.mxu0 0
        %4739 = vmatpush1.bf16.msra.mxu0 0
        %4740 = vmatprep.mubr.bf16.mxu0 0
        %4741 = vmatmul.mubr.bf16.gmra.mrb[0].mxu0 %v4706
        %v4742 = vpop.f32.mrb[0].mxu0
        %v4743 = vadd.f32 0.0, %v4742
        %v4744 = vpop.f32.mrb[0].mxu0
        %v4745 = vpop.f32.mrb[0].mxu0
        %v4746 = vpop.f32.mrb[0].mxu0
        %4747 = vdwg.mxu0
        %v4748 = vadd.f32 %v4394, %v4743
        %v4749 = vxor.u32 %v4748, 2147483648
        %v4750 = vmul.f32 %v4749, 1.442695
        %v4751 = vpow.pop %v4750
        %v4752 = vadd.f32 %v4751, 1.0
        %v4753 = vrcp.pop %v4752
        %v4754 = vmul.f32 1.0, %v4753
        %v4755 = vtanh.pop %v4748
        %v4756 = vmul.f32 %v4754, %v4672
        %4758 = vrot.lane.b32.xlu0 %v4755, 64
        %v4759 = vpop.permute.xlu0 %4758
        %v4761 = vmul.f32 %v4754, %v4759
        %4763 = vrot.lane.b32.xlu0 %v4761, 32
        %v4764 = vpop.permute.xlu0 %4763
        %v4766 = vadd.f32 %v4756, %v4764
        %v4767 = vtanh.pop %v4766
        %4769 = vrot.lane.b32.xlu0 %v4767, 64
        %v4770 = vpop.permute.xlu0 %4769
        %v4772 = vmul.f32 %v4754, %v4770
        %4774 = vrot.lane.b32.xlu0 %v4772, 32
        %v4775 = vpop.permute.xlu0 %4774
        %s4777 = scalar_lea.vmem [#allocation4], 24
        %4778 = vst.msk [vmem:[%s4777] sm:$0xff] %vm4423, %v4775
        %v4779 = vpack.c.bf16 %v4772, %v4772
        %v4780 = vld [vmem:[%s16] sm:$0xf]
        %v4781 = vld [vmem:[%s16 + $0x4] sm:$0xf]
        %v4782 = vld [vmem:[%s16 + $0x8] sm:$0xf]
        %v4783 = vld [vmem:[%s16 + $0xc] sm:$0xf]
        %4785 = vrot.lane.b32.xlu0 %v4779, 32
        %v4786 = vpop.permute.xlu0 %4785
        %v4791 = vunpack.c.l.b16 %v4780
        %v4792 = vunpack.c.l.b16 %v4781
        %v4793 = vunpack.c.l.b16 %v4782
        %v4794 = vunpack.c.l.b16 %v4783
        %v4795 = vpack.c.b16 %v4792, %v4791
        %v4796 = vpack.c.b16 %v4794, %v4793
        %v4800 = vsel %vm4423, %v4786, 0
        %4802 = vmatprep.subr.bf16.mxu0 0
        %4803 = vmatpush1.bf16.msra.mxu0 %v4795
        %4804 = vmatprep.subr.bf16.mxu0 0
        %4805 = vmatpush1.bf16.msra.mxu0 %v4796
        %4806 = vmatprep.subr.bf16.mxu0 0
        %4807 = vmatpush1.bf16.msra.mxu0 0
        %4808 = vmatprep.subr.bf16.mxu0 0
        %4809 = vmatpush1.bf16.msra.mxu0 0
        %4810 = vmatprep.subr.bf16.mxu0 0
        %4811 = vmatpush1.bf16.msra.mxu0 0
        %4812 = vmatprep.subr.bf16.mxu0 0
        %4813 = vmatpush1.bf16.msra.mxu0 0
        %4814 = vmatprep.subr.bf16.mxu0 0
        %4815 = vmatpush1.bf16.msra.mxu0 0
        %4816 = vmatprep.subr.bf16.mxu0 0
        %4817 = vmatpush1.bf16.msra.mxu0 0
        %4818 = vmatprep.subr.bf16.mxu0 0
        %4819 = vmatpush1.bf16.msra.mxu0 0
        %4820 = vmatprep.subr.bf16.mxu0 0
        %4821 = vmatpush1.bf16.msra.mxu0 0
        %4822 = vmatprep.subr.bf16.mxu0 0
        %4823 = vmatpush1.bf16.msra.mxu0 0
        %4824 = vmatprep.subr.bf16.mxu0 0
        %4825 = vmatpush1.bf16.msra.mxu0 0
        %4826 = vmatprep.subr.bf16.mxu0 0
        %4827 = vmatpush1.bf16.msra.mxu0 0
        %4828 = vmatprep.subr.bf16.mxu0 0
        %4829 = vmatpush1.bf16.msra.mxu0 0
        %4830 = vmatprep.subr.bf16.mxu0 0
        %4831 = vmatpush1.bf16.msra.mxu0 0
        %4832 = vmatprep.subr.bf16.mxu0 0
        %4833 = vmatpush1.bf16.msra.mxu0 0
        %4834 = vmatprep.mubr.bf16.mxu0 0
        %4835 = vmatmul.mubr.bf16.gmra.mrb[0].mxu0 %v4800
        %v4836 = vpop.f32.mrb[0].mxu0
        %v4837 = vadd.f32 0.0, %v4836
        %v4838 = vpop.f32.mrb[0].mxu0
        %v4839 = vpop.f32.mrb[0].mxu0
        %v4840 = vpop.f32.mrb[0].mxu0
        %4841 = vdwg.mxu0
        %v4842 = vadd.f32 %v4395, %v4837
        %v4843 = vxor.u32 %v4842, 2147483648
        %v4844 = vmul.f32 %v4843, 1.442695
        %v4845 = vpow.pop %v4844
        %v4846 = vadd.f32 %v4845, 1.0
        %v4847 = vrcp.pop %v4846
        %v4848 = vmul.f32 1.0, %v4847
        %v4849 = vtanh.pop %v4842
        %v4850 = vmul.f32 %v4848, %v4766
        %4852 = vrot.lane.b32.xlu0 %v4849, 64
        %v4853 = vpop.permute.xlu0 %4852
        %v4855 = vmul.f32 %v4848, %v4853
        %4857 = vrot.lane.b32.xlu0 %v4855, 32
        %v4858 = vpop.permute.xlu0 %4857
        %v4860 = vadd.f32 %v4850, %v4858
        %v4861 = vtanh.pop %v4860
        %4863 = vrot.lane.b32.xlu0 %v4861, 64
        %v4864 = vpop.permute.xlu0 %4863
        %v4866 = vmul.f32 %v4848, %v4864
        %4868 = vrot.lane.b32.xlu0 %v4866, 32
        %v4869 = vpop.permute.xlu0 %4868
        %s4871 = scalar_lea.vmem [#allocation4], 32
        %4872 = vst.msk [vmem:[%s4871] sm:$0xff] %vm4423, %v4869
        %v4873 = vpack.c.bf16 %v4866, %v4866
        %v4874 = vld [vmem:[%s16] sm:$0xf]
        %v4875 = vld [vmem:[%s16 + $0x4] sm:$0xf]
        %v4876 = vld [vmem:[%s16 + $0x8] sm:$0xf]
        %v4877 = vld [vmem:[%s16 + $0xc] sm:$0xf]
        %4879 = vrot.lane.b32.xlu0 %v4873, 32
        %v4880 = vpop.permute.xlu0 %4879
        %v4885 = vunpack.c.l.b16 %v4874
        %v4886 = vunpack.c.l.b16 %v4875
        %v4887 = vunpack.c.l.b16 %v4876
        %v4888 = vunpack.c.l.b16 %v4877
        %v4889 = vpack.c.b16 %v4886, %v4885
        %v4890 = vpack.c.b16 %v4888, %v4887
        %v4894 = vsel %vm4423, %v4880, 0
        %4896 = vmatprep.subr.bf16.mxu0 0
        %4897 = vmatpush1.bf16.msra.mxu0 %v4889
        %4898 = vmatprep.subr.bf16.mxu0 0
        %4899 = vmatpush1.bf16.msra.mxu0 %v4890
        %4900 = vmatprep.subr.bf16.mxu0 0
        %4901 = vmatpush1.bf16.msra.mxu0 0
        %4902 = vmatprep.subr.bf16.mxu0 0
        %4903 = vmatpush1.bf16.msra.mxu0 0
        %4904 = vmatprep.subr.bf16.mxu0 0
        %4905 = vmatpush1.bf16.msra.mxu0 0
        %4906 = vmatprep.subr.bf16.mxu0 0
        %4907 = vmatpush1.bf16.msra.mxu0 0
        %4908 = vmatprep.subr.bf16.mxu0 0
        %4909 = vmatpush1.bf16.msra.mxu0 0
        %4910 = vmatprep.subr.bf16.mxu0 0
        %4911 = vmatpush1.bf16.msra.mxu0 0
        %4912 = vmatprep.subr.bf16.mxu0 0
        %4913 = vmatpush1.bf16.msra.mxu0 0
        %4914 = vmatprep.subr.bf16.mxu0 0
        %4915 = vmatpush1.bf16.msra.mxu0 0
        %4916 = vmatprep.subr.bf16.mxu0 0
        %4917 = vmatpush1.bf16.msra.mxu0 0
        %4918 = vmatprep.subr.bf16.mxu0 0
        %4919 = vmatpush1.bf16.msra.mxu0 0
        %4920 = vmatprep.subr.bf16.mxu0 0
        %4921 = vmatpush1.bf16.msra.mxu0 0
        %4922 = vmatprep.subr.bf16.mxu0 0
        %4923 = vmatpush1.bf16.msra.mxu0 0
        %4924 = vmatprep.subr.bf16.mxu0 0
        %4925 = vmatpush1.bf16.msra.mxu0 0
        %4926 = vmatprep.subr.bf16.mxu0 0
        %4927 = vmatpush1.bf16.msra.mxu0 0
        %4928 = vmatprep.mubr.bf16.mxu0 0
        %4929 = vmatmul.mubr.bf16.gmra.mrb[0].mxu0 %v4894
        %v4930 = vpop.f32.mrb[0].mxu0
        %v4931 = vadd.f32 0.0, %v4930
        %v4932 = vpop.f32.mrb[0].mxu0
        %v4933 = vpop.f32.mrb[0].mxu0
        %v4934 = vpop.f32.mrb[0].mxu0
        %4935 = vdwg.mxu0
        %v4936 = vadd.f32 %v4396, %v4931
        %v4937 = vxor.u32 %v4936, 2147483648
        %v4938 = vmul.f32 %v4937, 1.442695
        %v4939 = vpow.pop %v4938
        %v4940 = vadd.f32 %v4939, 1.0
        %v4941 = vrcp.pop %v4940
        %v4942 = vmul.f32 1.0, %v4941
        %v4943 = vtanh.pop %v4936
        %v4944 = vmul.f32 %v4942, %v4860
        %4946 = vrot.lane.b32.xlu0 %v4943, 64
        %v4947 = vpop.permute.xlu0 %4946
        %v4949 = vmul.f32 %v4942, %v4947
        %4951 = vrot.lane.b32.xlu0 %v4949, 32
        %v4952 = vpop.permute.xlu0 %4951
        %v4954 = vadd.f32 %v4944, %v4952
        %v4955 = vtanh.pop %v4954
        %4957 = vrot.lane.b32.xlu0 %v4955, 64
        %v4958 = vpop.permute.xlu0 %4957
        %v4960 = vmul.f32 %v4942, %v4958
        %4962 = vrot.lane.b32.xlu0 %v4960, 32
        %v4963 = vpop.permute.xlu0 %4962
        %s4965 = scalar_lea.vmem [#allocation4], 40
        %4966 = vst.msk [vmem:[%s4965] sm:$0xff] %vm4423, %v4963
        %v4967 = vpack.c.bf16 %v4960, %v4960
        %v4968 = vld [vmem:[%s16] sm:$0xf]
        %v4969 = vld [vmem:[%s16 + $0x4] sm:$0xf]
        %v4970 = vld [vmem:[%s16 + $0x8] sm:$0xf]
        %v4971 = vld [vmem:[%s16 + $0xc] sm:$0xf]
        %4973 = vrot.lane.b32.xlu0 %v4967, 32
        %v4974 = vpop.permute.xlu0 %4973
        %v4979 = vunpack.c.l.b16 %v4968
        %v4980 = vunpack.c.l.b16 %v4969
        %v4981 = vunpack.c.l.b16 %v4970
        %v4982 = vunpack.c.l.b16 %v4971
        %v4983 = vpack.c.b16 %v4980, %v4979
        %v4984 = vpack.c.b16 %v4982, %v4981
        %v4988 = vsel %vm4423, %v4974, 0
        %4990 = vmatprep.subr.bf16.mxu0 0
        %4991 = vmatpush1.bf16.msra.mxu0 %v4983
        %4992 = vmatprep.subr.bf16.mxu0 0
        %4993 = vmatpush1.bf16.msra.mxu0 %v4984
        %4994 = vmatprep.subr.bf16.mxu0 0
        %4995 = vmatpush1.bf16.msra.mxu0 0
        %4996 = vmatprep.subr.bf16.mxu0 0
        %4997 = vmatpush1.bf16.msra.mxu0 0
        %4998 = vmatprep.subr.bf16.mxu0 0
        %4999 = vmatpush1.bf16.msra.mxu0 0
        %5000 = vmatprep.subr.bf16.mxu0 0
        %5001 = vmatpush1.bf16.msra.mxu0 0
        %5002 = vmatprep.subr.bf16.mxu0 0
        %5003 = vmatpush1.bf16.msra.mxu0 0
        %5004 = vmatprep.subr.bf16.mxu0 0
        %5005 = vmatpush1.bf16.msra.mxu0 0
        %5006 = vmatprep.subr.bf16.mxu0 0
        %5007 = vmatpush1.bf16.msra.mxu0 0
        %5008 = vmatprep.subr.bf16.mxu0 0
        %5009 = vmatpush1.bf16.msra.mxu0 0
        %5010 = vmatprep.subr.bf16.mxu0 0
        %5011 = vmatpush1.bf16.msra.mxu0 0
        %5012 = vmatprep.subr.bf16.mxu0 0
        %5013 = vmatpush1.bf16.msra.mxu0 0
        %5014 = vmatprep.subr.bf16.mxu0 0
        %5015 = vmatpush1.bf16.msra.mxu0 0
        %5016 = vmatprep.subr.bf16.mxu0 0
        %5017 = vmatpush1.bf16.msra.mxu0 0
        %5018 = vmatprep.subr.bf16.mxu0 0
        %5019 = vmatpush1.bf16.msra.mxu0 0
        %5020 = vmatprep.subr.bf16.mxu0 0
        %5021 = vmatpush1.bf16.msra.mxu0 0
        %5022 = vmatprep.mubr.bf16.mxu0 0
        %5023 = vmatmul.mubr.bf16.gmra.mrb[0].mxu0 %v4988
        %v5024 = vpop.f32.mrb[0].mxu0
        %v5025 = vadd.f32 0.0, %v5024
        %v5026 = vpop.f32.mrb[0].mxu0
        %v5027 = vpop.f32.mrb[0].mxu0
        %v5028 = vpop.f32.mrb[0].mxu0
        %5029 = vdwg.mxu0
        %v5030 = vadd.f32 %v4397, %v5025
        %v5031 = vxor.u32 %v5030, 2147483648
        %v5032 = vmul.f32 %v5031, 1.442695
        %v5033 = vpow.pop %v5032
        %v5034 = vadd.f32 %v5033, 1.0
        %v5035 = vrcp.pop %v5034
        %v5036 = vmul.f32 1.0, %v5035
        %v5037 = vtanh.pop %v5030
        %v5038 = vmul.f32 %v5036, %v4954
        %5040 = vrot.lane.b32.xlu0 %v5037, 64
        %v5041 = vpop.permute.xlu0 %5040
        %v5043 = vmul.f32 %v5036, %v5041
        %5045 = vrot.lane.b32.xlu0 %v5043, 32
        %v5046 = vpop.permute.xlu0 %5045
        %v5048 = vadd.f32 %v5038, %v5046
        %v5049 = vtanh.pop %v5048
        %5051 = vrot.lane.b32.xlu0 %v5049, 64
        %v5052 = vpop.permute.xlu0 %5051
        %v5054 = vmul.f32 %v5036, %v5052
        %5056 = vrot.lane.b32.xlu0 %v5054, 32
        %v5057 = vpop.permute.xlu0 %5056
        %s5059 = scalar_lea.vmem [#allocation4], 48
        %5060 = vst.msk [vmem:[%s5059] sm:$0xff] %vm4423, %v5057
        %v5061 = vpack.c.bf16 %v5054, %v5054
        %v5062 = vld [vmem:[%s16] sm:$0xf]
        %v5063 = vld [vmem:[%s16 + $0x4] sm:$0xf]
        %v5064 = vld [vmem:[%s16 + $0x8] sm:$0xf]
        %v5065 = vld [vmem:[%s16 + $0xc] sm:$0xf]
        %5067 = vrot.lane.b32.xlu0 %v5061, 32
        %v5068 = vpop.permute.xlu0 %5067
        %v5073 = vunpack.c.l.b16 %v5062
        %v5074 = vunpack.c.l.b16 %v5063
        %v5075 = vunpack.c.l.b16 %v5064
        %v5076 = vunpack.c.l.b16 %v5065
        %v5077 = vpack.c.b16 %v5074, %v5073
        %v5078 = vpack.c.b16 %v5076, %v5075
        %v5082 = vsel %vm4423, %v5068, 0
        %5084 = vmatprep.subr.bf16.mxu0 0
        %5085 = vmatpush1.bf16.msra.mxu0 %v5077
        %5086 = vmatprep.subr.bf16.mxu0 0
        %5087 = vmatpush1.bf16.msra.mxu0 %v5078
        %5088 = vmatprep.subr.bf16.mxu0 0
        %5089 = vmatpush1.bf16.msra.mxu0 0
        %5090 = vmatprep.subr.bf16.mxu0 0
        %5091 = vmatpush1.bf16.msra.mxu0 0
        %5092 = vmatprep.subr.bf16.mxu0 0
        %5093 = vmatpush1.bf16.msra.mxu0 0
        %5094 = vmatprep.subr.bf16.mxu0 0
        %5095 = vmatpush1.bf16.msra.mxu0 0
        %5096 = vmatprep.subr.bf16.mxu0 0
        %5097 = vmatpush1.bf16.msra.mxu0 0
        %5098 = vmatprep.subr.bf16.mxu0 0
        %5099 = vmatpush1.bf16.msra.mxu0 0
        %5100 = vmatprep.subr.bf16.mxu0 0
        %5101 = vmatpush1.bf16.msra.mxu0 0
        %5102 = vmatprep.subr.bf16.mxu0 0
        %5103 = vmatpush1.bf16.msra.mxu0 0
        %5104 = vmatprep.subr.bf16.mxu0 0
        %5105 = vmatpush1.bf16.msra.mxu0 0
        %5106 = vmatprep.subr.bf16.mxu0 0
        %5107 = vmatpush1.bf16.msra.mxu0 0
        %5108 = vmatprep.subr.bf16.mxu0 0
        %5109 = vmatpush1.bf16.msra.mxu0 0
        %5110 = vmatprep.subr.bf16.mxu0 0
        %5111 = vmatpush1.bf16.msra.mxu0 0
        %5112 = vmatprep.subr.bf16.mxu0 0
        %5113 = vmatpush1.bf16.msra.mxu0 0
        %5114 = vmatprep.subr.bf16.mxu0 0
        %5115 = vmatpush1.bf16.msra.mxu0 0
        %5116 = vmatprep.mubr.bf16.mxu0 0
        %5117 = vmatmul.mubr.bf16.gmra.mrb[0].mxu0 %v5082
        %v5118 = vpop.f32.mrb[0].mxu0
        %v5119 = vadd.f32 0.0, %v5118
        %v5120 = vpop.f32.mrb[0].mxu0
        %v5121 = vpop.f32.mrb[0].mxu0
        %v5122 = vpop.f32.mrb[0].mxu0
        %5123 = vdwg.mxu0
        %v5124 = vadd.f32 %v4398, %v5119
        %v5125 = vxor.u32 %v5124, 2147483648
        %v5126 = vmul.f32 %v5125, 1.442695
        %v5127 = vpow.pop %v5126
        %v5128 = vadd.f32 %v5127, 1.0
        %v5129 = vrcp.pop %v5128
        %v5130 = vmul.f32 1.0, %v5129
        %v5131 = vtanh.pop %v5124
        %v5132 = vmul.f32 %v5130, %v5048
        %5134 = vrot.lane.b32.xlu0 %v5131, 64
        %v5135 = vpop.permute.xlu0 %5134
        %v5137 = vmul.f32 %v5130, %v5135
        %5139 = vrot.lane.b32.xlu0 %v5137, 32
        %v5140 = vpop.permute.xlu0 %5139
        %v5142 = vadd.f32 %v5132, %v5140
        %v5143 = vtanh.pop %v5142
        %5145 = vrot.lane.b32.xlu0 %v5143, 64
        %v5146 = vpop.permute.xlu0 %5145
        %v5148 = vmul.f32 %v5130, %v5146
        %5150 = vrot.lane.b32.xlu0 %v5148, 32
        %v5151 = vpop.permute.xlu0 %5150
        %s5153 = scalar_lea.vmem [#allocation4], 56
        %5154 = vst.msk [vmem:[%s5153] sm:$0xff] %vm4423, %v5151
        %v5155 = vpack.c.bf16 %v5148, %v5148
        %v5156 = vld [vmem:[%s16] sm:$0xf]
        %v5157 = vld [vmem:[%s16 + $0x4] sm:$0xf]
        %v5158 = vld [vmem:[%s16 + $0x8] sm:$0xf]
        %v5159 = vld [vmem:[%s16 + $0xc] sm:$0xf]
        %5161 = vrot.lane.b32.xlu0 %v5155, 32
        %v5162 = vpop.permute.xlu0 %5161
        %v5167 = vunpack.c.l.b16 %v5156
        %v5168 = vunpack.c.l.b16 %v5157
        %v5169 = vunpack.c.l.b16 %v5158
        %v5170 = vunpack.c.l.b16 %v5159
        %v5171 = vpack.c.b16 %v5168, %v5167
        %v5172 = vpack.c.b16 %v5170, %v5169
        %v5176 = vsel %vm4423, %v5162, 0
        %5178 = vmatprep.subr.bf16.mxu0 0
        %5179 = vmatpush1.bf16.msra.mxu0 %v5171
        %5180 = vmatprep.subr.bf16.mxu0 0
        %5181 = vmatpush1.bf16.msra.mxu0 %v5172
        %5182 = vmatprep.subr.bf16.mxu0 0
        %5183 = vmatpush1.bf16.msra.mxu0 0
        %5184 = vmatprep.subr.bf16.mxu0 0
        %5185 = vmatpush1.bf16.msra.mxu0 0
        %5186 = vmatprep.subr.bf16.mxu0 0
        %5187 = vmatpush1.bf16.msra.mxu0 0
        %5188 = vmatprep.subr.bf16.mxu0 0
        %5189 = vmatpush1.bf16.msra.mxu0 0
        %5190 = vmatprep.subr.bf16.mxu0 0
        %5191 = vmatpush1.bf16.msra.mxu0 0
        %5192 = vmatprep.subr.bf16.mxu0 0
        %5193 = vmatpush1.bf16.msra.mxu0 0
        %5194 = vmatprep.subr.bf16.mxu0 0
        %5195 = vmatpush1.bf16.msra.mxu0 0
        %5196 = vmatprep.subr.bf16.mxu0 0
        %5197 = vmatpush1.bf16.msra.mxu0 0
        %5198 = vmatprep.subr.bf16.mxu0 0
        %5199 = vmatpush1.bf16.msra.mxu0 0
        %5200 = vmatprep.subr.bf16.mxu0 0
        %5201 = vmatpush1.bf16.msra.mxu0 0
        %5202 = vmatprep.subr.bf16.mxu0 0
        %5203 = vmatpush1.bf16.msra.mxu0 0
        %5204 = vmatprep.subr.bf16.mxu0 0
        %5205 = vmatpush1.bf16.msra.mxu0 0
        %5206 = vmatprep.subr.bf16.mxu0 0
        %5207 = vmatpush1.bf16.msra.mxu0 0
        %5208 = vmatprep.subr.bf16.mxu0 0
        %5209 = vmatpush1.bf16.msra.mxu0 0
        %5210 = vmatprep.mubr.bf16.mxu0 0
        %5211 = vmatmul.mubr.bf16.gmra.mrb[0].mxu0 %v5176
        %v5212 = vpop.f32.mrb[0].mxu0
        %v5213 = vadd.f32 0.0, %v5212
        %v5214 = vpop.f32.mrb[0].mxu0
        %v5215 = vpop.f32.mrb[0].mxu0
        %v5216 = vpop.f32.mrb[0].mxu0
        %5217 = vdwg.mxu0
        %v5218 = vadd.f32 %v4399, %v5213
        %v5219 = vxor.u32 %v5218, 2147483648
        %v5220 = vmul.f32 %v5219, 1.442695
        %v5221 = vpow.pop %v5220
        %v5222 = vadd.f32 %v5221, 1.0
        %v5223 = vrcp.pop %v5222
        %v5224 = vmul.f32 1.0, %v5223
        %v5225 = vtanh.pop %v5218
        %v5226 = vmul.f32 %v5224, %v5142
        %5228 = vrot.lane.b32.xlu0 %v5225, 64
        %v5229 = vpop.permute.xlu0 %5228
        %v5231 = vmul.f32 %v5224, %v5229
        %5233 = vrot.lane.b32.xlu0 %v5231, 32
        %v5234 = vpop.permute.xlu0 %5233
        %v5236 = vadd.f32 %v5226, %v5234
        %v5237 = vtanh.pop %v5236
        %5239 = vrot.lane.b32.xlu0 %v5237, 64
        %v5240 = vpop.permute.xlu0 %5239
        %v5242 = vmul.f32 %v5224, %v5240
        %5244 = vrot.lane.b32.xlu0 %v5242, 32
        %v5245 = vpop.permute.xlu0 %5244
        %s5247 = scalar_lea.vmem [#allocation4], 64
        %5248 = vst.msk [vmem:[%s5247] sm:$0xff] %vm4423, %v5245
        %v5249 = vpack.c.bf16 %v5242, %v5242
        %v5250 = vld [vmem:[%s16] sm:$0xf]
        %v5251 = vld [vmem:[%s16 + $0x4] sm:$0xf]
        %v5252 = vld [vmem:[%s16 + $0x8] sm:$0xf]
        %v5253 = vld [vmem:[%s16 + $0xc] sm:$0xf]
        %5255 = vrot.lane.b32.xlu0 %v5249, 32
        %v5256 = vpop.permute.xlu0 %5255
        %v5261 = vunpack.c.l.b16 %v5250
        %v5262 = vunpack.c.l.b16 %v5251
        %v5263 = vunpack.c.l.b16 %v5252
        %v5264 = vunpack.c.l.b16 %v5253
        %v5265 = vpack.c.b16 %v5262, %v5261
        %v5266 = vpack.c.b16 %v5264, %v5263
        %v5270 = vsel %vm4423, %v5256, 0
        %5272 = vmatprep.subr.bf16.mxu0 0
        %5273 = vmatpush1.bf16.msra.mxu0 %v5265
        %5274 = vmatprep.subr.bf16.mxu0 0
        %5275 = vmatpush1.bf16.msra.mxu0 %v5266
        %5276 = vmatprep.subr.bf16.mxu0 0
        %5277 = vmatpush1.bf16.msra.mxu0 0
        %5278 = vmatprep.subr.bf16.mxu0 0
        %5279 = vmatpush1.bf16.msra.mxu0 0
        %5280 = vmatprep.subr.bf16.mxu0 0
        %5281 = vmatpush1.bf16.msra.mxu0 0
        %5282 = vmatprep.subr.bf16.mxu0 0
        %5283 = vmatpush1.bf16.msra.mxu0 0
        %5284 = vmatprep.subr.bf16.mxu0 0
        %5285 = vmatpush1.bf16.msra.mxu0 0
        %5286 = vmatprep.subr.bf16.mxu0 0
        %5287 = vmatpush1.bf16.msra.mxu0 0
        %5288 = vmatprep.subr.bf16.mxu0 0
        %5289 = vmatpush1.bf16.msra.mxu0 0
        %5290 = vmatprep.subr.bf16.mxu0 0
        %5291 = vmatpush1.bf16.msra.mxu0 0
        %5292 = vmatprep.subr.bf16.mxu0 0
        %5293 = vmatpush1.bf16.msra.mxu0 0
        %5294 = vmatprep.subr.bf16.mxu0 0
        %5295 = vmatpush1.bf16.msra.mxu0 0
        %5296 = vmatprep.subr.bf16.mxu0 0
        %5297 = vmatpush1.bf16.msra.mxu0 0
        %5298 = vmatprep.subr.bf16.mxu0 0
        %5299 = vmatpush1.bf16.msra.mxu0 0
        %5300 = vmatprep.subr.bf16.mxu0 0
        %5301 = vmatpush1.bf16.msra.mxu0 0
        %5302 = vmatprep.subr.bf16.mxu0 0
        %5303 = vmatpush1.bf16.msra.mxu0 0
        %5304 = vmatprep.mubr.bf16.mxu0 0
        %5305 = vmatmul.mubr.bf16.gmra.mrb[0].mxu0 %v5270
        %v5306 = vpop.f32.mrb[0].mxu0
        %v5307 = vadd.f32 0.0, %v5306
        %v5308 = vpop.f32.mrb[0].mxu0
        %v5309 = vpop.f32.mrb[0].mxu0
        %v5310 = vpop.f32.mrb[0].mxu0
        %5311 = vdwg.mxu0
        %v5312 = vadd.f32 %v4400, %v5307
        %v5313 = vxor.u32 %v5312, 2147483648
        %v5314 = vmul.f32 %v5313, 1.442695
        %v5315 = vpow.pop %v5314
        %v5316 = vadd.f32 %v5315, 1.0
        %v5317 = vrcp.pop %v5316
        %v5318 = vmul.f32 1.0, %v5317
        %v5319 = vtanh.pop %v5312
        %v5320 = vmul.f32 %v5318, %v5236
        %5322 = vrot.lane.b32.xlu0 %v5319, 64
        %v5323 = vpop.permute.xlu0 %5322
        %v5325 = vmul.f32 %v5318, %v5323
        %5327 = vrot.lane.b32.xlu0 %v5325, 32
        %v5328 = vpop.permute.xlu0 %5327
        %v5330 = vadd.f32 %v5320, %v5328
        %v5331 = vtanh.pop %v5330
        %5333 = vrot.lane.b32.xlu0 %v5331, 64
        %v5334 = vpop.permute.xlu0 %5333
        %v5336 = vmul.f32 %v5318, %v5334
        %5338 = vrot.lane.b32.xlu0 %v5336, 32
        %v5339 = vpop.permute.xlu0 %5338
        %s5341 = scalar_lea.vmem [#allocation4], 72
        %5342 = vst.msk [vmem:[%s5341] sm:$0xff] %vm4423, %v5339
        %v5343 = vpack.c.bf16 %v5336, %v5336
        %v5344 = vld [vmem:[%s16] sm:$0xf]
        %v5345 = vld [vmem:[%s16 + $0x4] sm:$0xf]
        %v5346 = vld [vmem:[%s16 + $0x8] sm:$0xf]
        %v5347 = vld [vmem:[%s16 + $0xc] sm:$0xf]
        %5349 = vrot.lane.b32.xlu0 %v5343, 32
        %v5350 = vpop.permute.xlu0 %5349
        %v5355 = vunpack.c.l.b16 %v5344
        %v5356 = vunpack.c.l.b16 %v5345
        %v5357 = vunpack.c.l.b16 %v5346
        %v5358 = vunpack.c.l.b16 %v5347
        %v5359 = vpack.c.b16 %v5356, %v5355
        %v5360 = vpack.c.b16 %v5358, %v5357
        %v5364 = vsel %vm4423, %v5350, 0
        %5366 = vmatprep.subr.bf16.mxu0 0
        %5367 = vmatpush1.bf16.msra.mxu0 %v5359
        %5368 = vmatprep.subr.bf16.mxu0 0
        %5369 = vmatpush1.bf16.msra.mxu0 %v5360
        %5370 = vmatprep.subr.bf16.mxu0 0
        %5371 = vmatpush1.bf16.msra.mxu0 0
        %5372 = vmatprep.subr.bf16.mxu0 0
        %5373 = vmatpush1.bf16.msra.mxu0 0
        %5374 = vmatprep.subr.bf16.mxu0 0
        %5375 = vmatpush1.bf16.msra.mxu0 0
        %5376 = vmatprep.subr.bf16.mxu0 0
        %5377 = vmatpush1.bf16.msra.mxu0 0
        %5378 = vmatprep.subr.bf16.mxu0 0
        %5379 = vmatpush1.bf16.msra.mxu0 0
        %5380 = vmatprep.subr.bf16.mxu0 0
        %5381 = vmatpush1.bf16.msra.mxu0 0
        %5382 = vmatprep.subr.bf16.mxu0 0
        %5383 = vmatpush1.bf16.msra.mxu0 0
        %5384 = vmatprep.subr.bf16.mxu0 0
        %5385 = vmatpush1.bf16.msra.mxu0 0
        %5386 = vmatprep.subr.bf16.mxu0 0
        %5387 = vmatpush1.bf16.msra.mxu0 0
        %5388 = vmatprep.subr.bf16.mxu0 0
        %5389 = vmatpush1.bf16.msra.mxu0 0
        %5390 = vmatprep.subr.bf16.mxu0 0
        %5391 = vmatpush1.bf16.msra.mxu0 0
        %5392 = vmatprep.subr.bf16.mxu0 0
        %5393 = vmatpush1.bf16.msra.mxu0 0
        %5394 = vmatprep.subr.bf16.mxu0 0
        %5395 = vmatpush1.bf16.msra.mxu0 0
        %5396 = vmatprep.subr.bf16.mxu0 0
        %5397 = vmatpush1.bf16.msra.mxu0 0
        %5398 = vmatprep.mubr.bf16.mxu0 0
        %5399 = vmatmul.mubr.bf16.gmra.mrb[0].mxu0 %v5364
        %v5400 = vpop.f32.mrb[0].mxu0
        %v5401 = vadd.f32 0.0, %v5400
        %v5402 = vpop.f32.mrb[0].mxu0
        %v5403 = vpop.f32.mrb[0].mxu0
        %v5404 = vpop.f32.mrb[0].mxu0
        %5405 = vdwg.mxu0
        %v5406 = vadd.f32 %v4401, %v5401
        %v5407 = vxor.u32 %v5406, 2147483648
        %v5408 = vmul.f32 %v5407, 1.442695
        %v5409 = vpow.pop %v5408
        %v5410 = vadd.f32 %v5409, 1.0
        %v5411 = vrcp.pop %v5410
        %v5412 = vmul.f32 1.0, %v5411
        %v5413 = vtanh.pop %v5406
        %v5414 = vmul.f32 %v5412, %v5330
        %5416 = vrot.lane.b32.xlu0 %v5413, 64
        %v5417 = vpop.permute.xlu0 %5416
        %v5419 = vmul.f32 %v5412, %v5417
        %5421 = vrot.lane.b32.xlu0 %v5419, 32
        %v5422 = vpop.permute.xlu0 %5421
        %v5424 = vadd.f32 %v5414, %v5422
        %v5425 = vtanh.pop %v5424
        %5427 = vrot.lane.b32.xlu0 %v5425, 64
        %v5428 = vpop.permute.xlu0 %5427
        %v5430 = vmul.f32 %v5412, %v5428
        %5432 = vrot.lane.b32.xlu0 %v5430, 32
        %v5433 = vpop.permute.xlu0 %5432
        %s5435 = scalar_lea.vmem [#allocation4], 80
        %5436 = vst.msk [vmem:[%s5435] sm:$0xff] %vm4423, %v5433
        %v5437 = vpack.c.bf16 %v5430, %v5430
        %v5438 = vld [vmem:[%s16] sm:$0xf]
        %v5439 = vld [vmem:[%s16 + $0x4] sm:$0xf]
        %v5440 = vld [vmem:[%s16 + $0x8] sm:$0xf]
        %v5441 = vld [vmem:[%s16 + $0xc] sm:$0xf]
        %5443 = vrot.lane.b32.xlu0 %v5437, 32
        %v5444 = vpop.permute.xlu0 %5443
        %v5449 = vunpack.c.l.b16 %v5438
        %v5450 = vunpack.c.l.b16 %v5439
        %v5451 = vunpack.c.l.b16 %v5440
        %v5452 = vunpack.c.l.b16 %v5441
        %v5453 = vpack.c.b16 %v5450, %v5449
        %v5454 = vpack.c.b16 %v5452, %v5451
        %v5458 = vsel %vm4423, %v5444, 0
        %5460 = vmatprep.subr.bf16.mxu0 0
        %5461 = vmatpush1.bf16.msra.mxu0 %v5453
        %5462 = vmatprep.subr.bf16.mxu0 0
        %5463 = vmatpush1.bf16.msra.mxu0 %v5454
        %5464 = vmatprep.subr.bf16.mxu0 0
        %5465 = vmatpush1.bf16.msra.mxu0 0
        %5466 = vmatprep.subr.bf16.mxu0 0
        %5467 = vmatpush1.bf16.msra.mxu0 0
        %5468 = vmatprep.subr.bf16.mxu0 0
        %5469 = vmatpush1.bf16.msra.mxu0 0
        %5470 = vmatprep.subr.bf16.mxu0 0
        %5471 = vmatpush1.bf16.msra.mxu0 0
        %5472 = vmatprep.subr.bf16.mxu0 0
        %5473 = vmatpush1.bf16.msra.mxu0 0
        %5474 = vmatprep.subr.bf16.mxu0 0
        %5475 = vmatpush1.bf16.msra.mxu0 0
        %5476 = vmatprep.subr.bf16.mxu0 0
        %5477 = vmatpush1.bf16.msra.mxu0 0
        %5478 = vmatprep.subr.bf16.mxu0 0
        %5479 = vmatpush1.bf16.msra.mxu0 0
        %5480 = vmatprep.subr.bf16.mxu0 0
        %5481 = vmatpush1.bf16.msra.mxu0 0
        %5482 = vmatprep.subr.bf16.mxu0 0
        %5483 = vmatpush1.bf16.msra.mxu0 0
        %5484 = vmatprep.subr.bf16.mxu0 0
        %5485 = vmatpush1.bf16.msra.mxu0 0
        %5486 = vmatprep.subr.bf16.mxu0 0
        %5487 = vmatpush1.bf16.msra.mxu0 0
        %5488 = vmatprep.subr.bf16.mxu0 0
        %5489 = vmatpush1.bf16.msra.mxu0 0
        %5490 = vmatprep.subr.bf16.mxu0 0
        %5491 = vmatpush1.bf16.msra.mxu0 0
        %5492 = vmatprep.mubr.bf16.mxu0 0
        %5493 = vmatmul.mubr.bf16.gmra.mrb[0].mxu0 %v5458
        %v5494 = vpop.f32.mrb[0].mxu0
        %v5495 = vadd.f32 0.0, %v5494
        %v5496 = vpop.f32.mrb[0].mxu0
        %v5497 = vpop.f32.mrb[0].mxu0
        %v5498 = vpop.f32.mrb[0].mxu0
        %5499 = vdwg.mxu0
        %v5500 = vadd.f32 %v4402, %v5495
        %v5501 = vxor.u32 %v5500, 2147483648
        %v5502 = vmul.f32 %v5501, 1.442695
        %v5503 = vpow.pop %v5502
        %v5504 = vadd.f32 %v5503, 1.0
        %v5505 = vrcp.pop %v5504
        %v5506 = vmul.f32 1.0, %v5505
        %v5507 = vtanh.pop %v5500
        %v5508 = vmul.f32 %v5506, %v5424
        %5510 = vrot.lane.b32.xlu0 %v5507, 64
        %v5511 = vpop.permute.xlu0 %5510
        %v5513 = vmul.f32 %v5506, %v5511
        %5515 = vrot.lane.b32.xlu0 %v5513, 32
        %v5516 = vpop.permute.xlu0 %5515
        %v5518 = vadd.f32 %v5508, %v5516
        %v5519 = vtanh.pop %v5518
        %5521 = vrot.lane.b32.xlu0 %v5519, 64
        %v5522 = vpop.permute.xlu0 %5521
        %v5524 = vmul.f32 %v5506, %v5522
        %5526 = vrot.lane.b32.xlu0 %v5524, 32
        %v5527 = vpop.permute.xlu0 %5526
        %s5529 = scalar_lea.vmem [#allocation4], 88
        %5530 = vst.msk [vmem:[%s5529] sm:$0xff] %vm4423, %v5527
        %v5531 = vpack.c.bf16 %v5524, %v5524
        %v5532 = vld [vmem:[%s16] sm:$0xf]
        %v5533 = vld [vmem:[%s16 + $0x4] sm:$0xf]
        %v5534 = vld [vmem:[%s16 + $0x8] sm:$0xf]
        %v5535 = vld [vmem:[%s16 + $0xc] sm:$0xf]
        %5537 = vrot.lane.b32.xlu0 %v5531, 32
        %v5538 = vpop.permute.xlu0 %5537
        %v5543 = vunpack.c.l.b16 %v5532
        %v5544 = vunpack.c.l.b16 %v5533
        %v5545 = vunpack.c.l.b16 %v5534
        %v5546 = vunpack.c.l.b16 %v5535
        %v5547 = vpack.c.b16 %v5544, %v5543
        %v5548 = vpack.c.b16 %v5546, %v5545
        %v5552 = vsel %vm4423, %v5538, 0
        %5554 = vmatprep.subr.bf16.mxu0 0
        %5555 = vmatpush1.bf16.msra.mxu0 %v5547
        %5556 = vmatprep.subr.bf16.mxu0 0
        %5557 = vmatpush1.bf16.msra.mxu0 %v5548
        %5558 = vmatprep.subr.bf16.mxu0 0
        %5559 = vmatpush1.bf16.msra.mxu0 0
        %5560 = vmatprep.subr.bf16.mxu0 0
        %5561 = vmatpush1.bf16.msra.mxu0 0
        %5562 = vmatprep.subr.bf16.mxu0 0
        %5563 = vmatpush1.bf16.msra.mxu0 0
        %5564 = vmatprep.subr.bf16.mxu0 0
        %5565 = vmatpush1.bf16.msra.mxu0 0
        %5566 = vmatprep.subr.bf16.mxu0 0
        %5567 = vmatpush1.bf16.msra.mxu0 0
        %5568 = vmatprep.subr.bf16.mxu0 0
        %5569 = vmatpush1.bf16.msra.mxu0 0
        %5570 = vmatprep.subr.bf16.mxu0 0
        %5571 = vmatpush1.bf16.msra.mxu0 0
        %5572 = vmatprep.subr.bf16.mxu0 0
        %5573 = vmatpush1.bf16.msra.mxu0 0
        %5574 = vmatprep.subr.bf16.mxu0 0
        %5575 = vmatpush1.bf16.msra.mxu0 0
        %5576 = vmatprep.subr.bf16.mxu0 0
        %5577 = vmatpush1.bf16.msra.mxu0 0
        %5578 = vmatprep.subr.bf16.mxu0 0
        %5579 = vmatpush1.bf16.msra.mxu0 0
        %5580 = vmatprep.subr.bf16.mxu0 0
        %5581 = vmatpush1.bf16.msra.mxu0 0
        %5582 = vmatprep.subr.bf16.mxu0 0
        %5583 = vmatpush1.bf16.msra.mxu0 0
        %5584 = vmatprep.subr.bf16.mxu0 0
        %5585 = vmatpush1.bf16.msra.mxu0 0
        %5586 = vmatprep.mubr.bf16.mxu0 0
        %5587 = vmatmul.mubr.bf16.gmra.mrb[0].mxu0 %v5552
        %v5588 = vpop.f32.mrb[0].mxu0
        %v5589 = vadd.f32 0.0, %v5588
        %v5590 = vpop.f32.mrb[0].mxu0
        %v5591 = vpop.f32.mrb[0].mxu0
        %v5592 = vpop.f32.mrb[0].mxu0
        %5593 = vdwg.mxu0
        %v5594 = vadd.f32 %v4403, %v5589
        %v5595 = vxor.u32 %v5594, 2147483648
        %v5596 = vmul.f32 %v5595, 1.442695
        %v5597 = vpow.pop %v5596
        %v5598 = vadd.f32 %v5597, 1.0
        %v5599 = vrcp.pop %v5598
        %v5600 = vmul.f32 1.0, %v5599
        %v5601 = vtanh.pop %v5594
        %v5602 = vmul.f32 %v5600, %v5518
        %5604 = vrot.lane.b32.xlu0 %v5601, 64
        %v5605 = vpop.permute.xlu0 %5604
        %v5607 = vmul.f32 %v5600, %v5605
        %5609 = vrot.lane.b32.xlu0 %v5607, 32
        %v5610 = vpop.permute.xlu0 %5609
        %v5612 = vadd.f32 %v5602, %v5610
        %v5613 = vtanh.pop %v5612
        %5615 = vrot.lane.b32.xlu0 %v5613, 64
        %v5616 = vpop.permute.xlu0 %5615
        %v5618 = vmul.f32 %v5600, %v5616
        %5620 = vrot.lane.b32.xlu0 %v5618, 32
        %v5621 = vpop.permute.xlu0 %5620
        %s5623 = scalar_lea.vmem [#allocation4], 96
        %5624 = vst.msk [vmem:[%s5623] sm:$0xff] %vm4423, %v5621
        %v5625 = vpack.c.bf16 %v5618, %v5618
        %v5626 = vld [vmem:[%s16] sm:$0xf]
        %v5627 = vld [vmem:[%s16 + $0x4] sm:$0xf]
        %v5628 = vld [vmem:[%s16 + $0x8] sm:$0xf]
        %v5629 = vld [vmem:[%s16 + $0xc] sm:$0xf]
        %5631 = vrot.lane.b32.xlu0 %v5625, 32
        %v5632 = vpop.permute.xlu0 %5631
        %v5637 = vunpack.c.l.b16 %v5626
        %v5638 = vunpack.c.l.b16 %v5627
        %v5639 = vunpack.c.l.b16 %v5628
        %v5640 = vunpack.c.l.b16 %v5629
        %v5641 = vpack.c.b16 %v5638, %v5637
        %v5642 = vpack.c.b16 %v5640, %v5639
        %v5646 = vsel %vm4423, %v5632, 0
        %5648 = vmatprep.subr.bf16.mxu0 0
        %5649 = vmatpush1.bf16.msra.mxu0 %v5641
        %5650 = vmatprep.subr.bf16.mxu0 0
        %5651 = vmatpush1.bf16.msra.mxu0 %v5642
        %5652 = vmatprep.subr.bf16.mxu0 0
        %5653 = vmatpush1.bf16.msra.mxu0 0
        %5654 = vmatprep.subr.bf16.mxu0 0
        %5655 = vmatpush1.bf16.msra.mxu0 0
        %5656 = vmatprep.subr.bf16.mxu0 0
        %5657 = vmatpush1.bf16.msra.mxu0 0
        %5658 = vmatprep.subr.bf16.mxu0 0
        %5659 = vmatpush1.bf16.msra.mxu0 0
        %5660 = vmatprep.subr.bf16.mxu0 0
        %5661 = vmatpush1.bf16.msra.mxu0 0
        %5662 = vmatprep.subr.bf16.mxu0 0
        %5663 = vmatpush1.bf16.msra.mxu0 0
        %5664 = vmatprep.subr.bf16.mxu0 0
        %5665 = vmatpush1.bf16.msra.mxu0 0
        %5666 = vmatprep.subr.bf16.mxu0 0
        %5667 = vmatpush1.bf16.msra.mxu0 0
        %5668 = vmatprep.subr.bf16.mxu0 0
        %5669 = vmatpush1.bf16.msra.mxu0 0
        %5670 = vmatprep.subr.bf16.mxu0 0
        %5671 = vmatpush1.bf16.msra.mxu0 0
        %5672 = vmatprep.subr.bf16.mxu0 0
        %5673 = vmatpush1.bf16.msra.mxu0 0
        %5674 = vmatprep.subr.bf16.mxu0 0
        %5675 = vmatpush1.bf16.msra.mxu0 0
        %5676 = vmatprep.subr.bf16.mxu0 0
        %5677 = vmatpush1.bf16.msra.mxu0 0
        %5678 = vmatprep.subr.bf16.mxu0 0
        %5679 = vmatpush1.bf16.msra.mxu0 0
        %5680 = vmatprep.mubr.bf16.mxu0 0
        %5681 = vmatmul.mubr.bf16.gmra.mrb[0].mxu0 %v5646
        %v5682 = vpop.f32.mrb[0].mxu0
        %v5683 = vadd.f32 0.0, %v5682
        %v5684 = vpop.f32.mrb[0].mxu0
        %v5685 = vpop.f32.mrb[0].mxu0
        %v5686 = vpop.f32.mrb[0].mxu0
        %5687 = vdwg.mxu0
        %v5688 = vadd.f32 %v4404, %v5683
        %v5689 = vxor.u32 %v5688, 2147483648
        %v5690 = vmul.f32 %v5689, 1.442695
        %v5691 = vpow.pop %v5690
        %v5692 = vadd.f32 %v5691, 1.0
        %v5693 = vrcp.pop %v5692
        %v5694 = vmul.f32 1.0, %v5693
        %v5695 = vtanh.pop %v5688
        %v5696 = vmul.f32 %v5694, %v5612
        %5698 = vrot.lane.b32.xlu0 %v5695, 64
        %v5699 = vpop.permute.xlu0 %5698
        %v5701 = vmul.f32 %v5694, %v5699
        %5703 = vrot.lane.b32.xlu0 %v5701, 32
        %v5704 = vpop.permute.xlu0 %5703
        %v5706 = vadd.f32 %v5696, %v5704
        %v5707 = vtanh.pop %v5706
        %5709 = vrot.lane.b32.xlu0 %v5707, 64
        %v5710 = vpop.permute.xlu0 %5709
        %v5712 = vmul.f32 %v5694, %v5710
        %5714 = vrot.lane.b32.xlu0 %v5712, 32
        %v5715 = vpop.permute.xlu0 %5714
        %s5717 = scalar_lea.vmem [#allocation4], 104
        %5718 = vst.msk [vmem:[%s5717] sm:$0xff] %vm4423, %v5715
        %v5719 = vpack.c.bf16 %v5712, %v5712
        %v5720 = vld [vmem:[%s16] sm:$0xf]
        %v5721 = vld [vmem:[%s16 + $0x4] sm:$0xf]
        %v5722 = vld [vmem:[%s16 + $0x8] sm:$0xf]
        %v5723 = vld [vmem:[%s16 + $0xc] sm:$0xf]
        %5725 = vrot.lane.b32.xlu0 %v5719, 32
        %v5726 = vpop.permute.xlu0 %5725
        %v5731 = vunpack.c.l.b16 %v5720
        %v5732 = vunpack.c.l.b16 %v5721
        %v5733 = vunpack.c.l.b16 %v5722
        %v5734 = vunpack.c.l.b16 %v5723
        %v5735 = vpack.c.b16 %v5732, %v5731
        %v5736 = vpack.c.b16 %v5734, %v5733
        %v5740 = vsel %vm4423, %v5726, 0
        %5742 = vmatprep.subr.bf16.mxu0 0
        %5743 = vmatpush1.bf16.msra.mxu0 %v5735
        %5744 = vmatprep.subr.bf16.mxu0 0
        %5745 = vmatpush1.bf16.msra.mxu0 %v5736
        %5746 = vmatprep.subr.bf16.mxu0 0
        %5747 = vmatpush1.bf16.msra.mxu0 0
        %5748 = vmatprep.subr.bf16.mxu0 0
        %5749 = vmatpush1.bf16.msra.mxu0 0
        %5750 = vmatprep.subr.bf16.mxu0 0
        %5751 = vmatpush1.bf16.msra.mxu0 0
        %5752 = vmatprep.subr.bf16.mxu0 0
        %5753 = vmatpush1.bf16.msra.mxu0 0
        %5754 = vmatprep.subr.bf16.mxu0 0
        %5755 = vmatpush1.bf16.msra.mxu0 0
        %5756 = vmatprep.subr.bf16.mxu0 0
        %5757 = vmatpush1.bf16.msra.mxu0 0
        %5758 = vmatprep.subr.bf16.mxu0 0
        %5759 = vmatpush1.bf16.msra.mxu0 0
        %5760 = vmatprep.subr.bf16.mxu0 0
        %5761 = vmatpush1.bf16.msra.mxu0 0
        %5762 = vmatprep.subr.bf16.mxu0 0
        %5763 = vmatpush1.bf16.msra.mxu0 0
        %5764 = vmatprep.subr.bf16.mxu0 0
        %5765 = vmatpush1.bf16.msra.mxu0 0
        %5766 = vmatprep.subr.bf16.mxu0 0
        %5767 = vmatpush1.bf16.msra.mxu0 0
        %5768 = vmatprep.subr.bf16.mxu0 0
        %5769 = vmatpush1.bf16.msra.mxu0 0
        %5770 = vmatprep.subr.bf16.mxu0 0
        %5771 = vmatpush1.bf16.msra.mxu0 0
        %5772 = vmatprep.subr.bf16.mxu0 0
        %5773 = vmatpush1.bf16.msra.mxu0 0
        %5774 = vmatprep.mubr.bf16.mxu0 0
        %5775 = vmatmul.mubr.bf16.gmra.mrb[0].mxu0 %v5740
        %v5776 = vpop.f32.mrb[0].mxu0
        %v5777 = vadd.f32 0.0, %v5776
        %v5778 = vpop.f32.mrb[0].mxu0
        %v5779 = vpop.f32.mrb[0].mxu0
        %v5780 = vpop.f32.mrb[0].mxu0
        %5781 = vdwg.mxu0
        %v5782 = vadd.f32 %v4405, %v5777
        %v5783 = vxor.u32 %v5782, 2147483648
        %v5784 = vmul.f32 %v5783, 1.442695
        %v5785 = vpow.pop %v5784
        %v5786 = vadd.f32 %v5785, 1.0
        %v5787 = vrcp.pop %v5786
        %v5788 = vmul.f32 1.0, %v5787
        %v5789 = vtanh.pop %v5782
        %v5790 = vmul.f32 %v5788, %v5706
        %5792 = vrot.lane.b32.xlu0 %v5789, 64
        %v5793 = vpop.permute.xlu0 %5792
        %v5795 = vmul.f32 %v5788, %v5793
        %5797 = vrot.lane.b32.xlu0 %v5795, 32
        %v5798 = vpop.permute.xlu0 %5797
        %v5800 = vadd.f32 %v5790, %v5798
        %v5801 = vtanh.pop %v5800
        %5803 = vrot.lane.b32.xlu0 %v5801, 64
        %v5804 = vpop.permute.xlu0 %5803
        %v5806 = vmul.f32 %v5788, %v5804
        %5808 = vrot.lane.b32.xlu0 %v5806, 32
        %v5809 = vpop.permute.xlu0 %5808
        %s5811 = scalar_lea.vmem [#allocation4], 112
        %5812 = vst.msk [vmem:[%s5811] sm:$0xff] %vm4423, %v5809
        %v5813 = vpack.c.bf16 %v5806, %v5806
        %v5814 = vld [vmem:[%s16] sm:$0xf]
        %v5815 = vld [vmem:[%s16 + $0x4] sm:$0xf]
        %v5816 = vld [vmem:[%s16 + $0x8] sm:$0xf]
        %v5817 = vld [vmem:[%s16 + $0xc] sm:$0xf]
        %5819 = vrot.lane.b32.xlu0 %v5813, 32
        %v5820 = vpop.permute.xlu0 %5819
        %v5825 = vunpack.c.l.b16 %v5814
        %v5826 = vunpack.c.l.b16 %v5815
        %v5827 = vunpack.c.l.b16 %v5816
        %v5828 = vunpack.c.l.b16 %v5817
        %v5829 = vpack.c.b16 %v5826, %v5825
        %v5830 = vpack.c.b16 %v5828, %v5827
        %v5834 = vsel %vm4423, %v5820, 0
        %5836 = vmatprep.subr.bf16.mxu0 0
        %5837 = vmatpush1.bf16.msra.mxu0 %v5829
        %5838 = vmatprep.subr.bf16.mxu0 0
        %5839 = vmatpush1.bf16.msra.mxu0 %v5830
        %5840 = vmatprep.subr.bf16.mxu0 0
        %5841 = vmatpush1.bf16.msra.mxu0 0
        %5842 = vmatprep.subr.bf16.mxu0 0
        %5843 = vmatpush1.bf16.msra.mxu0 0
        %5844 = vmatprep.subr.bf16.mxu0 0
        %5845 = vmatpush1.bf16.msra.mxu0 0
        %5846 = vmatprep.subr.bf16.mxu0 0
        %5847 = vmatpush1.bf16.msra.mxu0 0
        %5848 = vmatprep.subr.bf16.mxu0 0
        %5849 = vmatpush1.bf16.msra.mxu0 0
        %5850 = vmatprep.subr.bf16.mxu0 0
        %5851 = vmatpush1.bf16.msra.mxu0 0
        %5852 = vmatprep.subr.bf16.mxu0 0
        %5853 = vmatpush1.bf16.msra.mxu0 0
        %5854 = vmatprep.subr.bf16.mxu0 0
        %5855 = vmatpush1.bf16.msra.mxu0 0
        %5856 = vmatprep.subr.bf16.mxu0 0
        %5857 = vmatpush1.bf16.msra.mxu0 0
        %5858 = vmatprep.subr.bf16.mxu0 0
        %5859 = vmatpush1.bf16.msra.mxu0 0
        %5860 = vmatprep.subr.bf16.mxu0 0
        %5861 = vmatpush1.bf16.msra.mxu0 0
        %5862 = vmatprep.subr.bf16.mxu0 0
        %5863 = vmatpush1.bf16.msra.mxu0 0
        %5864 = vmatprep.subr.bf16.mxu0 0
        %5865 = vmatpush1.bf16.msra.mxu0 0
        %5866 = vmatprep.subr.bf16.mxu0 0
        %5867 = vmatpush1.bf16.msra.mxu0 0
        %5868 = vmatprep.mubr.bf16.mxu0 0
        %5869 = vmatmul.mubr.bf16.gmra.mrb[0].mxu0 %v5834
        %v5870 = vpop.f32.mrb[0].mxu0
        %v5871 = vadd.f32 0.0, %v5870
        %v5872 = vpop.f32.mrb[0].mxu0
        %v5873 = vpop.f32.mrb[0].mxu0
        %v5874 = vpop.f32.mrb[0].mxu0
        %5875 = vdwg.mxu0
        %v5876 = vadd.f32 %v4406, %v5871
        %v5877 = vxor.u32 %v5876, 2147483648
        %v5878 = vmul.f32 %v5877, 1.442695
        %v5879 = vpow.pop %v5878
        %v5880 = vadd.f32 %v5879, 1.0
        %v5881 = vrcp.pop %v5880
        %v5882 = vmul.f32 1.0, %v5881
        %v5883 = vtanh.pop %v5876
        %v5884 = vmul.f32 %v5882, %v5800
        %5886 = vrot.lane.b32.xlu0 %v5883, 64
        %v5887 = vpop.permute.xlu0 %5886
        %v5889 = vmul.f32 %v5882, %v5887
        %5891 = vrot.lane.b32.xlu0 %v5889, 32
        %v5892 = vpop.permute.xlu0 %5891
        %v5894 = vadd.f32 %v5884, %v5892
        %v5895 = vtanh.pop %v5894
        %5897 = vrot.lane.b32.xlu0 %v5895, 64
        %v5898 = vpop.permute.xlu0 %5897
        %v5900 = vmul.f32 %v5882, %v5898
        %5902 = vrot.lane.b32.xlu0 %v5900, 32
        %v5903 = vpop.permute.xlu0 %5902
        %s5905 = scalar_lea.vmem [#allocation4], 120
        %5906 = vst.msk [vmem:[%s5905] sm:$0xff] %vm4423, %v5903
        %v5907 = vld [vmem:[#allocation4] sm:$0xff]
        %v5908 = vld [vmem:[#allocation4 + $0x8] sm:$0xff]
        %v5909 = vld [vmem:[#allocation4 + $0x10] sm:$0xff]
        %v5910 = vld [vmem:[#allocation4 + $0x18] sm:$0xff]
        %v5911 = vld [vmem:[#allocation4 + $0x20] sm:$0xff]
        %v5912 = vld [vmem:[#allocation4 + $0x28] sm:$0xff]
        %v5913 = vld [vmem:[#allocation4 + $0x30] sm:$0xff]
        %v5914 = vld [vmem:[#allocation4 + $0x38] sm:$0xff]
        %v5915 = vld [vmem:[#allocation4 + $0x40] sm:$0xff]
        %v5916 = vld [vmem:[#allocation4 + $0x48] sm:$0xff]
        %v5917 = vld [vmem:[#allocation4 + $0x50] sm:$0xff]
        %v5918 = vld [vmem:[#allocation4 + $0x58] sm:$0xff]
        %v5919 = vld [vmem:[#allocation4 + $0x60] sm:$0xff]
        %v5920 = vld [vmem:[#allocation4 + $0x68] sm:$0xff]
        %v5921 = vld [vmem:[#allocation4 + $0x70] sm:$0xff]
        %v5922 = vld [vmem:[#allocation4 + $0x78] sm:$0xff]
        %v5923 = vpack.c.bf16 %v5908, %v5907
        %v5924 = vpack.c.bf16 %v5910, %v5909
        %v5925 = vpack.c.bf16 %v5912, %v5911
        %v5926 = vpack.c.bf16 %v5914, %v5913
        %v5927 = vpack.c.bf16 %v5916, %v5915
        %v5928 = vpack.c.bf16 %v5918, %v5917
        %v5929 = vpack.c.bf16 %v5920, %v5919
        %v5930 = vpack.c.bf16 %v5922, %v5921
        %v5931 = vld [vmem:[%s18] sm:$0xf]
        %v5932 = vld [vmem:[%s18 + $0x4] sm:$0xf]
        %v5933 = vld [vmem:[%s18 + $0x8] sm:$0xf]
        %v5934 = vld [vmem:[%s18 + $0xc] sm:$0xf]
        %v5939 = vunpack.c.l.b16 %v5931
        %v5940 = vunpack.c.l.b16 %v5932
        %v5941 = vunpack.c.l.b16 %v5933
        %v5942 = vunpack.c.l.b16 %v5934
        %v5943 = vpack.c.b16 %v5940, %v5939
        %v5944 = vpack.c.b16 %v5942, %v5941
        %v5948 = vsel %vm4423, %v5923, 0
        %v5951 = vsel %vm4423, %v5924, 0
        %v5954 = vsel %vm4423, %v5925, 0
        %v5957 = vsel %vm4423, %v5926, 0
        %v5960 = vsel %vm4423, %v5927, 0
        %v5963 = vsel %vm4423, %v5928, 0
        %v5966 = vsel %vm4423, %v5929, 0
        %v5969 = vsel %vm4423, %v5930, 0
        %5971 = vmatprep.subr.bf16.mxu0 0
        %5972 = vmatpush1.bf16.msra.mxu0 %v5943
        %5973 = vmatprep.subr.bf16.mxu0 0
        %5974 = vmatpush1.bf16.msra.mxu0 %v5944
        %5975 = vmatprep.subr.bf16.mxu0 0
        %5976 = vmatpush1.bf16.msra.mxu0 0
        %5977 = vmatprep.subr.bf16.mxu0 0
        %5978 = vmatpush1.bf16.msra.mxu0 0
        %5979 = vmatprep.subr.bf16.mxu0 0
        %5980 = vmatpush1.bf16.msra.mxu0 0
        %5981 = vmatprep.subr.bf16.mxu0 0
        %5982 = vmatpush1.bf16.msra.mxu0 0
        %5983 = vmatprep.subr.bf16.mxu0 0
        %5984 = vmatpush1.bf16.msra.mxu0 0
        %5985 = vmatprep.subr.bf16.mxu0 0
        %5986 = vmatpush1.bf16.msra.mxu0 0
        %5987 = vmatprep.subr.bf16.mxu0 0
        %5988 = vmatpush1.bf16.msra.mxu0 0
        %5989 = vmatprep.subr.bf16.mxu0 0
        %5990 = vmatpush1.bf16.msra.mxu0 0
        %5991 = vmatprep.subr.bf16.mxu0 0
        %5992 = vmatpush1.bf16.msra.mxu0 0
        %5993 = vmatprep.subr.bf16.mxu0 0
        %5994 = vmatpush1.bf16.msra.mxu0 0
        %5995 = vmatprep.subr.bf16.mxu0 0
        %5996 = vmatpush1.bf16.msra.mxu0 0
        %5997 = vmatprep.subr.bf16.mxu0 0
        %5998 = vmatpush1.bf16.msra.mxu0 0
        %5999 = vmatprep.subr.bf16.mxu0 0
        %6000 = vmatpush1.bf16.msra.mxu0 0
        %6001 = vmatprep.subr.bf16.mxu0 0
        %6002 = vmatpush1.bf16.msra.mxu0 0
        %6003 = vmatprep.mubr.bf16.mxu0 0
        %6004 = vmatmul.mubr.bf16.gmra.mrb[0].mxu0 %v5948
        %v6005 = vpop.f32.mrb[0].mxu0
        %v6006 = vadd.f32 0.0, %v6005
        %v6007 = vpop.f32.mrb[0].mxu0
        %v6008 = vpop.f32.mrb[0].mxu0
        %v6009 = vadd.f32 0.0, %v6008
        %v6010 = vpop.f32.mrb[0].mxu0
        %6011 = vmatprep.mubr.bf16.mxu0 0
        %6012 = vmatmul.mubr.bf16.gmra.mrb[0].mxu0 %v5951
        %v6013 = vpop.f32.mrb[0].mxu0
        %v6014 = vadd.f32 0.0, %v6013
        %v6015 = vpop.f32.mrb[0].mxu0
        %v6016 = vpop.f32.mrb[0].mxu0
        %v6017 = vadd.f32 0.0, %v6016
        %v6018 = vpop.f32.mrb[0].mxu0
        %6019 = vmatprep.mubr.bf16.mxu0 0
        %6020 = vmatmul.mubr.bf16.gmra.mrb[0].mxu0 %v5954
        %v6021 = vpop.f32.mrb[0].mxu0
        %v6022 = vadd.f32 0.0, %v6021
        %v6023 = vpop.f32.mrb[0].mxu0
        %v6024 = vpop.f32.mrb[0].mxu0
        %v6025 = vadd.f32 0.0, %v6024
        %v6026 = vpop.f32.mrb[0].mxu0
        %6027 = vmatprep.mubr.bf16.mxu0 0
        %6028 = vmatmul.mubr.bf16.gmra.mrb[0].mxu0 %v5957
        %v6029 = vpop.f32.mrb[0].mxu0
        %v6030 = vadd.f32 0.0, %v6029
        %v6031 = vpop.f32.mrb[0].mxu0
        %v6032 = vpop.f32.mrb[0].mxu0
        %v6033 = vadd.f32 0.0, %v6032
        %v6034 = vpop.f32.mrb[0].mxu0
        %6035 = vmatprep.mubr.bf16.mxu0 0
        %6036 = vmatmul.mubr.bf16.gmra.mrb[0].mxu0 %v5960
        %v6037 = vpop.f32.mrb[0].mxu0
        %v6038 = vadd.f32 0.0, %v6037
        %v6039 = vpop.f32.mrb[0].mxu0
        %v6040 = vpop.f32.mrb[0].mxu0
        %v6041 = vadd.f32 0.0, %v6040
        %v6042 = vpop.f32.mrb[0].mxu0
        %6043 = vmatprep.mubr.bf16.mxu0 0
        %6044 = vmatmul.mubr.bf16.gmra.mrb[0].mxu0 %v5963
        %v6045 = vpop.f32.mrb[0].mxu0
        %v6046 = vadd.f32 0.0, %v6045
        %v6047 = vpop.f32.mrb[0].mxu0
        %v6048 = vpop.f32.mrb[0].mxu0
        %v6049 = vadd.f32 0.0, %v6048
        %v6050 = vpop.f32.mrb[0].mxu0
        %6051 = vmatprep.mubr.bf16.mxu0 0
        %6052 = vmatmul.mubr.bf16.gmra.mrb[0].mxu0 %v5966
        %v6053 = vpop.f32.mrb[0].mxu0
        %v6054 = vadd.f32 0.0, %v6053
        %v6055 = vpop.f32.mrb[0].mxu0
        %v6056 = vpop.f32.mrb[0].mxu0
        %v6057 = vadd.f32 0.0, %v6056
        %v6058 = vpop.f32.mrb[0].mxu0
        %6059 = vmatprep.mubr.bf16.mxu0 0
        %6060 = vmatmul.mubr.bf16.gmra.mrb[0].mxu0 %v5969
        %v6061 = vpop.f32.mrb[0].mxu0
        %v6062 = vadd.f32 0.0, %v6061
        %v6063 = vpop.f32.mrb[0].mxu0
        %v6064 = vpop.f32.mrb[0].mxu0
        %v6065 = vadd.f32 0.0, %v6064
        %v6066 = vpop.f32.mrb[0].mxu0
        %6067 = vdwg.mxu0
        %v6068 = vld [vmem:[%s20] sm:$0x1]
        %v6070 = vlaneseq
        %v6071 = vshrl.u32 %v6070, 7
        %v6072 = vsub.s32 0, %v6071
        %v6073 = vrot.slane %v6068, %v6072
        %v6075 = vadd.f32 %v6006, %v6073
        %v6076 = vadd.f32 %v6009, %v6073
        %v6077 = vadd.f32 %v6014, %v6073
        %v6078 = vadd.f32 %v6017, %v6073
        %v6079 = vadd.f32 %v6022, %v6073
        %v6080 = vadd.f32 %v6025, %v6073
        %v6081 = vadd.f32 %v6030, %v6073
        %v6082 = vadd.f32 %v6033, %v6073
        %v6083 = vadd.f32 %v6038, %v6073
        %v6084 = vadd.f32 %v6041, %v6073
        %v6085 = vadd.f32 %v6046, %v6073
        %v6086 = vadd.f32 %v6049, %v6073
        %v6087 = vadd.f32 %v6054, %v6073
        %v6088 = vadd.f32 %v6057, %v6073
        %v6089 = vadd.f32 %v6062, %v6073
        %v6090 = vadd.f32 %v6065, %v6073
        %v6091 = vld [vmem:[%s19] sm:$0xf]
        %v6092 = vld [vmem:[%s19 + $0x4] sm:$0xf]
        %v6093 = vld [vmem:[%s19 + $0x8] sm:$0xf]
        %v6094 = vld [vmem:[%s19 + $0xc] sm:$0xf]
        %v6099 = vunpack.c.l.b16 %v6091
        %v6100 = vunpack.c.l.b16 %v6092
        %v6101 = vunpack.c.l.b16 %v6093
        %v6102 = vunpack.c.l.b16 %v6094
        %v6103 = vpack.c.b16 %v6100, %v6099
        %v6104 = vpack.c.b16 %v6102, %v6101
        %6107 = vmatprep.subr.bf16.mxu0 0
        %6108 = vmatpush1.bf16.msra.mxu0 %v6103
        %6109 = vmatprep.subr.bf16.mxu0 0
        %6110 = vmatpush1.bf16.msra.mxu0 %v6104
        %6111 = vmatprep.subr.bf16.mxu0 0
        %6112 = vmatpush1.bf16.msra.mxu0 0
        %6113 = vmatprep.subr.bf16.mxu0 0
        %6114 = vmatpush1.bf16.msra.mxu0 0
        %6115 = vmatprep.subr.bf16.mxu0 0
        %6116 = vmatpush1.bf16.msra.mxu0 0
        %6117 = vmatprep.subr.bf16.mxu0 0
        %6118 = vmatpush1.bf16.msra.mxu0 0
        %6119 = vmatprep.subr.bf16.mxu0 0
        %6120 = vmatpush1.bf16.msra.mxu0 0
        %6121 = vmatprep.subr.bf16.mxu0 0
        %6122 = vmatpush1.bf16.msra.mxu0 0
        %6123 = vmatprep.subr.bf16.mxu0 0
        %6124 = vmatpush1.bf16.msra.mxu0 0
        %6125 = vmatprep.subr.bf16.mxu0 0
        %6126 = vmatpush1.bf16.msra.mxu0 0
        %6127 = vmatprep.subr.bf16.mxu0 0
        %6128 = vmatpush1.bf16.msra.mxu0 0
        %6129 = vmatprep.subr.bf16.mxu0 0
        %6130 = vmatpush1.bf16.msra.mxu0 0
        %6131 = vmatprep.subr.bf16.mxu0 0
        %6132 = vmatpush1.bf16.msra.mxu0 0
        %6133 = vmatprep.subr.bf16.mxu0 0
        %6134 = vmatpush1.bf16.msra.mxu0 0
        %6135 = vmatprep.subr.bf16.mxu0 0
        %6136 = vmatpush1.bf16.msra.mxu0 0
        %6137 = vmatprep.subr.bf16.mxu0 0
        %6138 = vmatpush1.bf16.msra.mxu0 0
        %6139 = vmatprep.mubr.bf16.mxu0 0
        %6140 = vmatmul.mubr.bf16.gmra.mrb[0].mxu0 %v4425
        %v6141 = vpop.f32.mrb[0].mxu0
        %v6142 = vadd.f32 0.0, %v6141
        %v6143 = vpop.f32.mrb[0].mxu0
        %v6144 = vpop.f32.mrb[0].mxu0
        %v6145 = vpop.f32.mrb[0].mxu0
        %6146 = vdwg.mxu0
        %v6147 = vadd.f32 %v6075, %v6142
        %v6148 = vxor.u32 %v6147, 2147483648
        %v6149 = vmul.f32 %v6148, 1.442695
        %v6150 = vpow.pop %v6149
        %v6151 = vadd.f32 %v6150, 1.0
        %v6152 = vrcp.pop %v6151
        %v6153 = vmul.f32 1.0, %v6152
        %v6154 = vtanh.pop %v6147
        %v6155 = vmul.f32 %v6153, 0.0
        %6157 = vrot.lane.b32.xlu0 %v6154, 64
        %v6158 = vpop.permute.xlu0 %6157
        %v6160 = vmul.f32 %v6153, %v6158
        %6162 = vrot.lane.b32.xlu0 %v6160, 32
        %v6163 = vpop.permute.xlu0 %6162
        %v6165 = vadd.f32 %v6155, %v6163
        %v6166 = vtanh.pop %v6165
        %6168 = vrot.lane.b32.xlu0 %v6166, 64
        %v6169 = vpop.permute.xlu0 %6168
        %v6171 = vmul.f32 %v6153, %v6169
        %v6172 = vpack.c.bf16 %v6171, %v6171
        %6174 = vrot.lane.b32.xlu0 %v6172, 32
        %v6175 = vpop.permute.xlu0 %6174
        %v6177 = vsel %vm4423, %v6175, 0
        %6179 = vmatprep.subr.bf16.mxu0 0
        %6180 = vmatpush1.bf16.msra.mxu0 %v6103
        %6181 = vmatprep.subr.bf16.mxu0 0
        %6182 = vmatpush1.bf16.msra.mxu0 %v6104
        %6183 = vmatprep.subr.bf16.mxu0 0
        %6184 = vmatpush1.bf16.msra.mxu0 0
        %6185 = vmatprep.subr.bf16.mxu0 0
        %6186 = vmatpush1.bf16.msra.mxu0 0
        %6187 = vmatprep.subr.bf16.mxu0 0
        %6188 = vmatpush1.bf16.msra.mxu0 0
        %6189 = vmatprep.subr.bf16.mxu0 0
        %6190 = vmatpush1.bf16.msra.mxu0 0
        %6191 = vmatprep.subr.bf16.mxu0 0
        %6192 = vmatpush1.bf16.msra.mxu0 0
        %6193 = vmatprep.subr.bf16.mxu0 0
        %6194 = vmatpush1.bf16.msra.mxu0 0
        %6195 = vmatprep.subr.bf16.mxu0 0
        %6196 = vmatpush1.bf16.msra.mxu0 0
        %6197 = vmatprep.subr.bf16.mxu0 0
        %6198 = vmatpush1.bf16.msra.mxu0 0
        %6199 = vmatprep.subr.bf16.mxu0 0
        %6200 = vmatpush1.bf16.msra.mxu0 0
        %6201 = vmatprep.subr.bf16.mxu0 0
        %6202 = vmatpush1.bf16.msra.mxu0 0
        %6203 = vmatprep.subr.bf16.mxu0 0
        %6204 = vmatpush1.bf16.msra.mxu0 0
        %6205 = vmatprep.subr.bf16.mxu0 0
        %6206 = vmatpush1.bf16.msra.mxu0 0
        %6207 = vmatprep.subr.bf16.mxu0 0
        %6208 = vmatpush1.bf16.msra.mxu0 0
        %6209 = vmatprep.subr.bf16.mxu0 0
        %6210 = vmatpush1.bf16.msra.mxu0 0
        %6211 = vmatprep.mubr.bf16.mxu0 0
        %6212 = vmatmul.mubr.bf16.gmra.mrb[0].mxu0 %v6177
        %v6213 = vpop.f32.mrb[0].mxu0
        %v6214 = vadd.f32 0.0, %v6213
        %v6215 = vpop.f32.mrb[0].mxu0
        %v6216 = vpop.f32.mrb[0].mxu0
        %v6217 = vpop.f32.mrb[0].mxu0
        %6218 = vdwg.mxu0
        %v6219 = vadd.f32 %v6076, %v6214
        %v6220 = vxor.u32 %v6219, 2147483648
        %v6221 = vmul.f32 %v6220, 1.442695
        %v6222 = vpow.pop %v6221
        %v6223 = vadd.f32 %v6222, 1.0
        %v6224 = vrcp.pop %v6223
        %v6225 = vmul.f32 1.0, %v6224
        %v6226 = vtanh.pop %v6219
        %v6227 = vmul.f32 %v6225, %v6165
        %6229 = vrot.lane.b32.xlu0 %v6226, 64
        %v6230 = vpop.permute.xlu0 %6229
        %v6232 = vmul.f32 %v6225, %v6230
        %6234 = vrot.lane.b32.xlu0 %v6232, 32
        %v6235 = vpop.permute.xlu0 %6234
        %v6237 = vadd.f32 %v6227, %v6235
        %v6238 = vtanh.pop %v6237
        %6240 = vrot.lane.b32.xlu0 %v6238, 64
        %v6241 = vpop.permute.xlu0 %6240
        %v6243 = vmul.f32 %v6225, %v6241
        %v6244 = vpack.c.bf16 %v6243, %v6243
        %6246 = vrot.lane.b32.xlu0 %v6244, 32
        %v6247 = vpop.permute.xlu0 %6246
        %v6249 = vsel %vm4423, %v6247, 0
        %6251 = vmatprep.subr.bf16.mxu0 0
        %6252 = vmatpush1.bf16.msra.mxu0 %v6103
        %6253 = vmatprep.subr.bf16.mxu0 0
        %6254 = vmatpush1.bf16.msra.mxu0 %v6104
        %6255 = vmatprep.subr.bf16.mxu0 0
        %6256 = vmatpush1.bf16.msra.mxu0 0
        %6257 = vmatprep.subr.bf16.mxu0 0
        %6258 = vmatpush1.bf16.msra.mxu0 0
        %6259 = vmatprep.subr.bf16.mxu0 0
        %6260 = vmatpush1.bf16.msra.mxu0 0
        %6261 = vmatprep.subr.bf16.mxu0 0
        %6262 = vmatpush1.bf16.msra.mxu0 0
        %6263 = vmatprep.subr.bf16.mxu0 0
        %6264 = vmatpush1.bf16.msra.mxu0 0
        %6265 = vmatprep.subr.bf16.mxu0 0
        %6266 = vmatpush1.bf16.msra.mxu0 0
        %6267 = vmatprep.subr.bf16.mxu0 0
        %6268 = vmatpush1.bf16.msra.mxu0 0
        %6269 = vmatprep.subr.bf16.mxu0 0
        %6270 = vmatpush1.bf16.msra.mxu0 0
        %6271 = vmatprep.subr.bf16.mxu0 0
        %6272 = vmatpush1.bf16.msra.mxu0 0
        %6273 = vmatprep.subr.bf16.mxu0 0
        %6274 = vmatpush1.bf16.msra.mxu0 0
        %6275 = vmatprep.subr.bf16.mxu0 0
        %6276 = vmatpush1.bf16.msra.mxu0 0
        %6277 = vmatprep.subr.bf16.mxu0 0
        %6278 = vmatpush1.bf16.msra.mxu0 0
        %6279 = vmatprep.subr.bf16.mxu0 0
        %6280 = vmatpush1.bf16.msra.mxu0 0
        %6281 = vmatprep.subr.bf16.mxu0 0
        %6282 = vmatpush1.bf16.msra.mxu0 0
        %6283 = vmatprep.mubr.bf16.mxu0 0
        %6284 = vmatmul.mubr.bf16.gmra.mrb[0].mxu0 %v6249
        %v6285 = vpop.f32.mrb[0].mxu0
        %v6286 = vadd.f32 0.0, %v6285
        %v6287 = vpop.f32.mrb[0].mxu0
        %v6288 = vpop.f32.mrb[0].mxu0
        %v6289 = vpop.f32.mrb[0].mxu0
        %6290 = vdwg.mxu0
        %v6291 = vadd.f32 %v6077, %v6286
        %v6292 = vxor.u32 %v6291, 2147483648
        %v6293 = vmul.f32 %v6292, 1.442695
        %v6294 = vpow.pop %v6293
        %v6295 = vadd.f32 %v6294, 1.0
        %v6296 = vrcp.pop %v6295
        %v6297 = vmul.f32 1.0, %v6296
        %v6298 = vtanh.pop %v6291
        %v6299 = vmul.f32 %v6297, %v6237
        %6301 = vrot.lane.b32.xlu0 %v6298, 64
        %v6302 = vpop.permute.xlu0 %6301
        %v6304 = vmul.f32 %v6297, %v6302
        %6306 = vrot.lane.b32.xlu0 %v6304, 32
        %v6307 = vpop.permute.xlu0 %6306
        %v6309 = vadd.f32 %v6299, %v6307
        %v6310 = vtanh.pop %v6309
        %6312 = vrot.lane.b32.xlu0 %v6310, 64
        %v6313 = vpop.permute.xlu0 %6312
        %v6315 = vmul.f32 %v6297, %v6313
        %v6316 = vpack.c.bf16 %v6315, %v6315
        %6318 = vrot.lane.b32.xlu0 %v6316, 32
        %v6319 = vpop.permute.xlu0 %6318
        %v6321 = vsel %vm4423, %v6319, 0
        %6323 = vmatprep.subr.bf16.mxu0 0
        %6324 = vmatpush1.bf16.msra.mxu0 %v6103
        %6325 = vmatprep.subr.bf16.mxu0 0
        %6326 = vmatpush1.bf16.msra.mxu0 %v6104
        %6327 = vmatprep.subr.bf16.mxu0 0
        %6328 = vmatpush1.bf16.msra.mxu0 0
        %6329 = vmatprep.subr.bf16.mxu0 0
        %6330 = vmatpush1.bf16.msra.mxu0 0
        %6331 = vmatprep.subr.bf16.mxu0 0
        %6332 = vmatpush1.bf16.msra.mxu0 0
        %6333 = vmatprep.subr.bf16.mxu0 0
        %6334 = vmatpush1.bf16.msra.mxu0 0
        %6335 = vmatprep.subr.bf16.mxu0 0
        %6336 = vmatpush1.bf16.msra.mxu0 0
        %6337 = vmatprep.subr.bf16.mxu0 0
        %6338 = vmatpush1.bf16.msra.mxu0 0
        %6339 = vmatprep.subr.bf16.mxu0 0
        %6340 = vmatpush1.bf16.msra.mxu0 0
        %6341 = vmatprep.subr.bf16.mxu0 0
        %6342 = vmatpush1.bf16.msra.mxu0 0
        %6343 = vmatprep.subr.bf16.mxu0 0
        %6344 = vmatpush1.bf16.msra.mxu0 0
        %6345 = vmatprep.subr.bf16.mxu0 0
        %6346 = vmatpush1.bf16.msra.mxu0 0
        %6347 = vmatprep.subr.bf16.mxu0 0
        %6348 = vmatpush1.bf16.msra.mxu0 0
        %6349 = vmatprep.subr.bf16.mxu0 0
        %6350 = vmatpush1.bf16.msra.mxu0 0
        %6351 = vmatprep.subr.bf16.mxu0 0
        %6352 = vmatpush1.bf16.msra.mxu0 0
        %6353 = vmatprep.subr.bf16.mxu0 0
        %6354 = vmatpush1.bf16.msra.mxu0 0
        %6355 = vmatprep.mubr.bf16.mxu0 0
        %6356 = vmatmul.mubr.bf16.gmra.mrb[0].mxu0 %v6321
        %v6357 = vpop.f32.mrb[0].mxu0
        %v6358 = vadd.f32 0.0, %v6357
        %v6359 = vpop.f32.mrb[0].mxu0
        %v6360 = vpop.f32.mrb[0].mxu0
        %v6361 = vpop.f32.mrb[0].mxu0
        %6362 = vdwg.mxu0
        %v6363 = vadd.f32 %v6078, %v6358
        %v6364 = vxor.u32 %v6363, 2147483648
        %v6365 = vmul.f32 %v6364, 1.442695
        %v6366 = vpow.pop %v6365
        %v6367 = vadd.f32 %v6366, 1.0
        %v6368 = vrcp.pop %v6367
        %v6369 = vmul.f32 1.0, %v6368
        %v6370 = vtanh.pop %v6363
        %v6371 = vmul.f32 %v6369, %v6309
        %6373 = vrot.lane.b32.xlu0 %v6370, 64
        %v6374 = vpop.permute.xlu0 %6373
        %v6376 = vmul.f32 %v6369, %v6374
        %6378 = vrot.lane.b32.xlu0 %v6376, 32
        %v6379 = vpop.permute.xlu0 %6378
        %v6381 = vadd.f32 %v6371, %v6379
        %v6382 = vtanh.pop %v6381
        %6384 = vrot.lane.b32.xlu0 %v6382, 64
        %v6385 = vpop.permute.xlu0 %6384
        %v6387 = vmul.f32 %v6369, %v6385
        %v6388 = vpack.c.bf16 %v6387, %v6387
        %6390 = vrot.lane.b32.xlu0 %v6388, 32
        %v6391 = vpop.permute.xlu0 %6390
        %v6393 = vsel %vm4423, %v6391, 0
        %6395 = vmatprep.subr.bf16.mxu0 0
        %6396 = vmatpush1.bf16.msra.mxu0 %v6103
        %6397 = vmatprep.subr.bf16.mxu0 0
        %6398 = vmatpush1.bf16.msra.mxu0 %v6104
        %6399 = vmatprep.subr.bf16.mxu0 0
        %6400 = vmatpush1.bf16.msra.mxu0 0
        %6401 = vmatprep.subr.bf16.mxu0 0
        %6402 = vmatpush1.bf16.msra.mxu0 0
        %6403 = vmatprep.subr.bf16.mxu0 0
        %6404 = vmatpush1.bf16.msra.mxu0 0
        %6405 = vmatprep.subr.bf16.mxu0 0
        %6406 = vmatpush1.bf16.msra.mxu0 0
        %6407 = vmatprep.subr.bf16.mxu0 0
        %6408 = vmatpush1.bf16.msra.mxu0 0
        %6409 = vmatprep.subr.bf16.mxu0 0
        %6410 = vmatpush1.bf16.msra.mxu0 0
        %6411 = vmatprep.subr.bf16.mxu0 0
        %6412 = vmatpush1.bf16.msra.mxu0 0
        %6413 = vmatprep.subr.bf16.mxu0 0
        %6414 = vmatpush1.bf16.msra.mxu0 0
        %6415 = vmatprep.subr.bf16.mxu0 0
        %6416 = vmatpush1.bf16.msra.mxu0 0
        %6417 = vmatprep.subr.bf16.mxu0 0
        %6418 = vmatpush1.bf16.msra.mxu0 0
        %6419 = vmatprep.subr.bf16.mxu0 0
        %6420 = vmatpush1.bf16.msra.mxu0 0
        %6421 = vmatprep.subr.bf16.mxu0 0
        %6422 = vmatpush1.bf16.msra.mxu0 0
        %6423 = vmatprep.subr.bf16.mxu0 0
        %6424 = vmatpush1.bf16.msra.mxu0 0
        %6425 = vmatprep.subr.bf16.mxu0 0
        %6426 = vmatpush1.bf16.msra.mxu0 0
        %6427 = vmatprep.mubr.bf16.mxu0 0
        %6428 = vmatmul.mubr.bf16.gmra.mrb[0].mxu0 %v6393
        %v6429 = vpop.f32.mrb[0].mxu0
        %v6430 = vadd.f32 0.0, %v6429
        %v6431 = vpop.f32.mrb[0].mxu0
        %v6432 = vpop.f32.mrb[0].mxu0
        %v6433 = vpop.f32.mrb[0].mxu0
        %6434 = vdwg.mxu0
        %v6435 = vadd.f32 %v6079, %v6430
        %v6436 = vxor.u32 %v6435, 2147483648
        %v6437 = vmul.f32 %v6436, 1.442695
        %v6438 = vpow.pop %v6437
        %v6439 = vadd.f32 %v6438, 1.0
        %v6440 = vrcp.pop %v6439
        %v6441 = vmul.f32 1.0, %v6440
        %v6442 = vtanh.pop %v6435
        %v6443 = vmul.f32 %v6441, %v6381
        %6445 = vrot.lane.b32.xlu0 %v6442, 64
        %v6446 = vpop.permute.xlu0 %6445
        %v6448 = vmul.f32 %v6441, %v6446
        %6450 = vrot.lane.b32.xlu0 %v6448, 32
        %v6451 = vpop.permute.xlu0 %6450
        %v6453 = vadd.f32 %v6443, %v6451
        %v6454 = vtanh.pop %v6453
        %6456 = vrot.lane.b32.xlu0 %v6454, 64
        %v6457 = vpop.permute.xlu0 %6456
        %v6459 = vmul.f32 %v6441, %v6457
        %v6460 = vpack.c.bf16 %v6459, %v6459
        %6462 = vrot.lane.b32.xlu0 %v6460, 32
        %v6463 = vpop.permute.xlu0 %6462
        %v6465 = vsel %vm4423, %v6463, 0
        %6467 = vmatprep.subr.bf16.mxu0 0
        %6468 = vmatpush1.bf16.msra.mxu0 %v6103
        %6469 = vmatprep.subr.bf16.mxu0 0
        %6470 = vmatpush1.bf16.msra.mxu0 %v6104
        %6471 = vmatprep.subr.bf16.mxu0 0
        %6472 = vmatpush1.bf16.msra.mxu0 0
        %6473 = vmatprep.subr.bf16.mxu0 0
        %6474 = vmatpush1.bf16.msra.mxu0 0
        %6475 = vmatprep.subr.bf16.mxu0 0
        %6476 = vmatpush1.bf16.msra.mxu0 0
        %6477 = vmatprep.subr.bf16.mxu0 0
        %6478 = vmatpush1.bf16.msra.mxu0 0
        %6479 = vmatprep.subr.bf16.mxu0 0
        %6480 = vmatpush1.bf16.msra.mxu0 0
        %6481 = vmatprep.subr.bf16.mxu0 0
        %6482 = vmatpush1.bf16.msra.mxu0 0
        %6483 = vmatprep.subr.bf16.mxu0 0
        %6484 = vmatpush1.bf16.msra.mxu0 0
        %6485 = vmatprep.subr.bf16.mxu0 0
        %6486 = vmatpush1.bf16.msra.mxu0 0
        %6487 = vmatprep.subr.bf16.mxu0 0
        %6488 = vmatpush1.bf16.msra.mxu0 0
        %6489 = vmatprep.subr.bf16.mxu0 0
        %6490 = vmatpush1.bf16.msra.mxu0 0
        %6491 = vmatprep.subr.bf16.mxu0 0
        %6492 = vmatpush1.bf16.msra.mxu0 0
        %6493 = vmatprep.subr.bf16.mxu0 0
        %6494 = vmatpush1.bf16.msra.mxu0 0
        %6495 = vmatprep.subr.bf16.mxu0 0
        %6496 = vmatpush1.bf16.msra.mxu0 0
        %6497 = vmatprep.subr.bf16.mxu0 0
        %6498 = vmatpush1.bf16.msra.mxu0 0
        %6499 = vmatprep.mubr.bf16.mxu0 0
        %6500 = vmatmul.mubr.bf16.gmra.mrb[0].mxu0 %v6465
        %v6501 = vpop.f32.mrb[0].mxu0
        %v6502 = vadd.f32 0.0, %v6501
        %v6503 = vpop.f32.mrb[0].mxu0
        %v6504 = vpop.f32.mrb[0].mxu0
        %v6505 = vpop.f32.mrb[0].mxu0
        %6506 = vdwg.mxu0
        %v6507 = vadd.f32 %v6080, %v6502
        %v6508 = vxor.u32 %v6507, 2147483648
        %v6509 = vmul.f32 %v6508, 1.442695
        %v6510 = vpow.pop %v6509
        %v6511 = vadd.f32 %v6510, 1.0
        %v6512 = vrcp.pop %v6511
        %v6513 = vmul.f32 1.0, %v6512
        %v6514 = vtanh.pop %v6507
        %v6515 = vmul.f32 %v6513, %v6453
        %6517 = vrot.lane.b32.xlu0 %v6514, 64
        %v6518 = vpop.permute.xlu0 %6517
        %v6520 = vmul.f32 %v6513, %v6518
        %6522 = vrot.lane.b32.xlu0 %v6520, 32
        %v6523 = vpop.permute.xlu0 %6522
        %v6525 = vadd.f32 %v6515, %v6523
        %v6526 = vtanh.pop %v6525
        %6528 = vrot.lane.b32.xlu0 %v6526, 64
        %v6529 = vpop.permute.xlu0 %6528
        %v6531 = vmul.f32 %v6513, %v6529
        %v6532 = vpack.c.bf16 %v6531, %v6531
        %6534 = vrot.lane.b32.xlu0 %v6532, 32
        %v6535 = vpop.permute.xlu0 %6534
        %v6537 = vsel %vm4423, %v6535, 0
        %6539 = vmatprep.subr.bf16.mxu0 0
        %6540 = vmatpush1.bf16.msra.mxu0 %v6103
        %6541 = vmatprep.subr.bf16.mxu0 0
        %6542 = vmatpush1.bf16.msra.mxu0 %v6104
        %6543 = vmatprep.subr.bf16.mxu0 0
        %6544 = vmatpush1.bf16.msra.mxu0 0
        %6545 = vmatprep.subr.bf16.mxu0 0
        %6546 = vmatpush1.bf16.msra.mxu0 0
        %6547 = vmatprep.subr.bf16.mxu0 0
        %6548 = vmatpush1.bf16.msra.mxu0 0
        %6549 = vmatprep.subr.bf16.mxu0 0
        %6550 = vmatpush1.bf16.msra.mxu0 0
        %6551 = vmatprep.subr.bf16.mxu0 0
        %6552 = vmatpush1.bf16.msra.mxu0 0
        %6553 = vmatprep.subr.bf16.mxu0 0
        %6554 = vmatpush1.bf16.msra.mxu0 0
        %6555 = vmatprep.subr.bf16.mxu0 0
        %6556 = vmatpush1.bf16.msra.mxu0 0
        %6557 = vmatprep.subr.bf16.mxu0 0
        %6558 = vmatpush1.bf16.msra.mxu0 0
        %6559 = vmatprep.subr.bf16.mxu0 0
        %6560 = vmatpush1.bf16.msra.mxu0 0
        %6561 = vmatprep.subr.bf16.mxu0 0
        %6562 = vmatpush1.bf16.msra.mxu0 0
        %6563 = vmatprep.subr.bf16.mxu0 0
        %6564 = vmatpush1.bf16.msra.mxu0 0
        %6565 = vmatprep.subr.bf16.mxu0 0
        %6566 = vmatpush1.bf16.msra.mxu0 0
        %6567 = vmatprep.subr.bf16.mxu0 0
        %6568 = vmatpush1.bf16.msra.mxu0 0
        %6569 = vmatprep.subr.bf16.mxu0 0
        %6570 = vmatpush1.bf16.msra.mxu0 0
        %6571 = vmatprep.mubr.bf16.mxu0 0
        %6572 = vmatmul.mubr.bf16.gmra.mrb[0].mxu0 %v6537
        %v6573 = vpop.f32.mrb[0].mxu0
        %v6574 = vadd.f32 0.0, %v6573
        %v6575 = vpop.f32.mrb[0].mxu0
        %v6576 = vpop.f32.mrb[0].mxu0
        %v6577 = vpop.f32.mrb[0].mxu0
        %6578 = vdwg.mxu0
        %v6579 = vadd.f32 %v6081, %v6574
        %v6580 = vxor.u32 %v6579, 2147483648
        %v6581 = vmul.f32 %v6580, 1.442695
        %v6582 = vpow.pop %v6581
        %v6583 = vadd.f32 %v6582, 1.0
        %v6584 = vrcp.pop %v6583
        %v6585 = vmul.f32 1.0, %v6584
        %v6586 = vtanh.pop %v6579
        %v6587 = vmul.f32 %v6585, %v6525
        %6589 = vrot.lane.b32.xlu0 %v6586, 64
        %v6590 = vpop.permute.xlu0 %6589
        %v6592 = vmul.f32 %v6585, %v6590
        %6594 = vrot.lane.b32.xlu0 %v6592, 32
        %v6595 = vpop.permute.xlu0 %6594
        %v6597 = vadd.f32 %v6587, %v6595
        %v6598 = vtanh.pop %v6597
        %6600 = vrot.lane.b32.xlu0 %v6598, 64
        %v6601 = vpop.permute.xlu0 %6600
        %v6603 = vmul.f32 %v6585, %v6601
        %v6604 = vpack.c.bf16 %v6603, %v6603
        %6606 = vrot.lane.b32.xlu0 %v6604, 32
        %v6607 = vpop.permute.xlu0 %6606
        %v6609 = vsel %vm4423, %v6607, 0
        %6611 = vmatprep.subr.bf16.mxu0 0
        %6612 = vmatpush1.bf16.msra.mxu0 %v6103
        %6613 = vmatprep.subr.bf16.mxu0 0
        %6614 = vmatpush1.bf16.msra.mxu0 %v6104
        %6615 = vmatprep.subr.bf16.mxu0 0
        %6616 = vmatpush1.bf16.msra.mxu0 0
        %6617 = vmatprep.subr.bf16.mxu0 0
        %6618 = vmatpush1.bf16.msra.mxu0 0
        %6619 = vmatprep.subr.bf16.mxu0 0
        %6620 = vmatpush1.bf16.msra.mxu0 0
        %6621 = vmatprep.subr.bf16.mxu0 0
        %6622 = vmatpush1.bf16.msra.mxu0 0
        %6623 = vmatprep.subr.bf16.mxu0 0
        %6624 = vmatpush1.bf16.msra.mxu0 0
        %6625 = vmatprep.subr.bf16.mxu0 0
        %6626 = vmatpush1.bf16.msra.mxu0 0
        %6627 = vmatprep.subr.bf16.mxu0 0
        %6628 = vmatpush1.bf16.msra.mxu0 0
        %6629 = vmatprep.subr.bf16.mxu0 0
        %6630 = vmatpush1.bf16.msra.mxu0 0
        %6631 = vmatprep.subr.bf16.mxu0 0
        %6632 = vmatpush1.bf16.msra.mxu0 0
        %6633 = vmatprep.subr.bf16.mxu0 0
        %6634 = vmatpush1.bf16.msra.mxu0 0
        %6635 = vmatprep.subr.bf16.mxu0 0
        %6636 = vmatpush1.bf16.msra.mxu0 0
        %6637 = vmatprep.subr.bf16.mxu0 0
        %6638 = vmatpush1.bf16.msra.mxu0 0
        %6639 = vmatprep.subr.bf16.mxu0 0
        %6640 = vmatpush1.bf16.msra.mxu0 0
        %6641 = vmatprep.subr.bf16.mxu0 0
        %6642 = vmatpush1.bf16.msra.mxu0 0
        %6643 = vmatprep.mubr.bf16.mxu0 0
        %6644 = vmatmul.mubr.bf16.gmra.mrb[0].mxu0 %v6609
        %v6645 = vpop.f32.mrb[0].mxu0
        %v6646 = vadd.f32 0.0, %v6645
        %v6647 = vpop.f32.mrb[0].mxu0
        %v6648 = vpop.f32.mrb[0].mxu0
        %v6649 = vpop.f32.mrb[0].mxu0
        %6650 = vdwg.mxu0
        %v6651 = vadd.f32 %v6082, %v6646
        %v6652 = vxor.u32 %v6651, 2147483648
        %v6653 = vmul.f32 %v6652, 1.442695
        %v6654 = vpow.pop %v6653
        %v6655 = vadd.f32 %v6654, 1.0
        %v6656 = vrcp.pop %v6655
        %v6657 = vmul.f32 1.0, %v6656
        %v6658 = vtanh.pop %v6651
        %v6659 = vmul.f32 %v6657, %v6597
        %6661 = vrot.lane.b32.xlu0 %v6658, 64
        %v6662 = vpop.permute.xlu0 %6661
        %v6664 = vmul.f32 %v6657, %v6662
        %6666 = vrot.lane.b32.xlu0 %v6664, 32
        %v6667 = vpop.permute.xlu0 %6666
        %v6669 = vadd.f32 %v6659, %v6667
        %v6670 = vtanh.pop %v6669
        %6672 = vrot.lane.b32.xlu0 %v6670, 64
        %v6673 = vpop.permute.xlu0 %6672
        %v6675 = vmul.f32 %v6657, %v6673
        %v6676 = vpack.c.bf16 %v6675, %v6675
        %6678 = vrot.lane.b32.xlu0 %v6676, 32
        %v6679 = vpop.permute.xlu0 %6678
        %v6681 = vsel %vm4423, %v6679, 0
        %6683 = vmatprep.subr.bf16.mxu0 0
        %6684 = vmatpush1.bf16.msra.mxu0 %v6103
        %6685 = vmatprep.subr.bf16.mxu0 0
        %6686 = vmatpush1.bf16.msra.mxu0 %v6104
        %6687 = vmatprep.subr.bf16.mxu0 0
        %6688 = vmatpush1.bf16.msra.mxu0 0
        %6689 = vmatprep.subr.bf16.mxu0 0
        %6690 = vmatpush1.bf16.msra.mxu0 0
        %6691 = vmatprep.subr.bf16.mxu0 0
        %6692 = vmatpush1.bf16.msra.mxu0 0
        %6693 = vmatprep.subr.bf16.mxu0 0
        %6694 = vmatpush1.bf16.msra.mxu0 0
        %6695 = vmatprep.subr.bf16.mxu0 0
        %6696 = vmatpush1.bf16.msra.mxu0 0
        %6697 = vmatprep.subr.bf16.mxu0 0
        %6698 = vmatpush1.bf16.msra.mxu0 0
        %6699 = vmatprep.subr.bf16.mxu0 0
        %6700 = vmatpush1.bf16.msra.mxu0 0
        %6701 = vmatprep.subr.bf16.mxu0 0
        %6702 = vmatpush1.bf16.msra.mxu0 0
        %6703 = vmatprep.subr.bf16.mxu0 0
        %6704 = vmatpush1.bf16.msra.mxu0 0
        %6705 = vmatprep.subr.bf16.mxu0 0
        %6706 = vmatpush1.bf16.msra.mxu0 0
        %6707 = vmatprep.subr.bf16.mxu0 0
        %6708 = vmatpush1.bf16.msra.mxu0 0
        %6709 = vmatprep.subr.bf16.mxu0 0
        %6710 = vmatpush1.bf16.msra.mxu0 0
        %6711 = vmatprep.subr.bf16.mxu0 0
        %6712 = vmatpush1.bf16.msra.mxu0 0
        %6713 = vmatprep.subr.bf16.mxu0 0
        %6714 = vmatpush1.bf16.msra.mxu0 0
        %6715 = vmatprep.mubr.bf16.mxu0 0
        %6716 = vmatmul.mubr.bf16.gmra.mrb[0].mxu0 %v6681
        %v6717 = vpop.f32.mrb[0].mxu0
        %v6718 = vadd.f32 0.0, %v6717
        %v6719 = vpop.f32.mrb[0].mxu0
        %v6720 = vpop.f32.mrb[0].mxu0
        %v6721 = vpop.f32.mrb[0].mxu0
        %6722 = vdwg.mxu0
        %v6723 = vadd.f32 %v6083, %v6718
        %v6724 = vxor.u32 %v6723, 2147483648
        %v6725 = vmul.f32 %v6724, 1.442695
        %v6726 = vpow.pop %v6725
        %v6727 = vadd.f32 %v6726, 1.0
        %v6728 = vrcp.pop %v6727
        %v6729 = vmul.f32 1.0, %v6728
        %v6730 = vtanh.pop %v6723
        %v6731 = vmul.f32 %v6729, %v6669
        %6733 = vrot.lane.b32.xlu0 %v6730, 64
        %v6734 = vpop.permute.xlu0 %6733
        %v6736 = vmul.f32 %v6729, %v6734
        %6738 = vrot.lane.b32.xlu0 %v6736, 32
        %v6739 = vpop.permute.xlu0 %6738
        %v6741 = vadd.f32 %v6731, %v6739
        %v6742 = vtanh.pop %v6741
        %6744 = vrot.lane.b32.xlu0 %v6742, 64
        %v6745 = vpop.permute.xlu0 %6744
        %v6747 = vmul.f32 %v6729, %v6745
        %v6748 = vpack.c.bf16 %v6747, %v6747
        %6750 = vrot.lane.b32.xlu0 %v6748, 32
        %v6751 = vpop.permute.xlu0 %6750
        %v6753 = vsel %vm4423, %v6751, 0
        %6755 = vmatprep.subr.bf16.mxu0 0
        %6756 = vmatpush1.bf16.msra.mxu0 %v6103
        %6757 = vmatprep.subr.bf16.mxu0 0
        %6758 = vmatpush1.bf16.msra.mxu0 %v6104
        %6759 = vmatprep.subr.bf16.mxu0 0
        %6760 = vmatpush1.bf16.msra.mxu0 0
        %6761 = vmatprep.subr.bf16.mxu0 0
        %6762 = vmatpush1.bf16.msra.mxu0 0
        %6763 = vmatprep.subr.bf16.mxu0 0
        %6764 = vmatpush1.bf16.msra.mxu0 0
        %6765 = vmatprep.subr.bf16.mxu0 0
        %6766 = vmatpush1.bf16.msra.mxu0 0
        %6767 = vmatprep.subr.bf16.mxu0 0
        %6768 = vmatpush1.bf16.msra.mxu0 0
        %6769 = vmatprep.subr.bf16.mxu0 0
        %6770 = vmatpush1.bf16.msra.mxu0 0
        %6771 = vmatprep.subr.bf16.mxu0 0
        %6772 = vmatpush1.bf16.msra.mxu0 0
        %6773 = vmatprep.subr.bf16.mxu0 0
        %6774 = vmatpush1.bf16.msra.mxu0 0
        %6775 = vmatprep.subr.bf16.mxu0 0
        %6776 = vmatpush1.bf16.msra.mxu0 0
        %6777 = vmatprep.subr.bf16.mxu0 0
        %6778 = vmatpush1.bf16.msra.mxu0 0
        %6779 = vmatprep.subr.bf16.mxu0 0
        %6780 = vmatpush1.bf16.msra.mxu0 0
        %6781 = vmatprep.subr.bf16.mxu0 0
        %6782 = vmatpush1.bf16.msra.mxu0 0
        %6783 = vmatprep.subr.bf16.mxu0 0
        %6784 = vmatpush1.bf16.msra.mxu0 0
        %6785 = vmatprep.subr.bf16.mxu0 0
        %6786 = vmatpush1.bf16.msra.mxu0 0
        %6787 = vmatprep.mubr.bf16.mxu0 0
        %6788 = vmatmul.mubr.bf16.gmra.mrb[0].mxu0 %v6753
        %v6789 = vpop.f32.mrb[0].mxu0
        %v6790 = vadd.f32 0.0, %v6789
        %v6791 = vpop.f32.mrb[0].mxu0
        %v6792 = vpop.f32.mrb[0].mxu0
        %v6793 = vpop.f32.mrb[0].mxu0
        %6794 = vdwg.mxu0
        %v6795 = vadd.f32 %v6084, %v6790
        %v6796 = vxor.u32 %v6795, 2147483648
        %v6797 = vmul.f32 %v6796, 1.442695
        %v6798 = vpow.pop %v6797
        %v6799 = vadd.f32 %v6798, 1.0
        %v6800 = vrcp.pop %v6799
        %v6801 = vmul.f32 1.0, %v6800
        %v6802 = vtanh.pop %v6795
        %v6803 = vmul.f32 %v6801, %v6741
        %6805 = vrot.lane.b32.xlu0 %v6802, 64
        %v6806 = vpop.permute.xlu0 %6805
        %v6808 = vmul.f32 %v6801, %v6806
        %6810 = vrot.lane.b32.xlu0 %v6808, 32
        %v6811 = vpop.permute.xlu0 %6810
        %v6813 = vadd.f32 %v6803, %v6811
        %v6814 = vtanh.pop %v6813
        %6816 = vrot.lane.b32.xlu0 %v6814, 64
        %v6817 = vpop.permute.xlu0 %6816
        %v6819 = vmul.f32 %v6801, %v6817
        %v6820 = vpack.c.bf16 %v6819, %v6819
        %6822 = vrot.lane.b32.xlu0 %v6820, 32
        %v6823 = vpop.permute.xlu0 %6822
        %v6825 = vsel %vm4423, %v6823, 0
        %6827 = vmatprep.subr.bf16.mxu0 0
        %6828 = vmatpush1.bf16.msra.mxu0 %v6103
        %6829 = vmatprep.subr.bf16.mxu0 0
        %6830 = vmatpush1.bf16.msra.mxu0 %v6104
        %6831 = vmatprep.subr.bf16.mxu0 0
        %6832 = vmatpush1.bf16.msra.mxu0 0
        %6833 = vmatprep.subr.bf16.mxu0 0
        %6834 = vmatpush1.bf16.msra.mxu0 0
        %6835 = vmatprep.subr.bf16.mxu0 0
        %6836 = vmatpush1.bf16.msra.mxu0 0
        %6837 = vmatprep.subr.bf16.mxu0 0
        %6838 = vmatpush1.bf16.msra.mxu0 0
        %6839 = vmatprep.subr.bf16.mxu0 0
        %6840 = vmatpush1.bf16.msra.mxu0 0
        %6841 = vmatprep.subr.bf16.mxu0 0
        %6842 = vmatpush1.bf16.msra.mxu0 0
        %6843 = vmatprep.subr.bf16.mxu0 0
        %6844 = vmatpush1.bf16.msra.mxu0 0
        %6845 = vmatprep.subr.bf16.mxu0 0
        %6846 = vmatpush1.bf16.msra.mxu0 0
        %6847 = vmatprep.subr.bf16.mxu0 0
        %6848 = vmatpush1.bf16.msra.mxu0 0
        %6849 = vmatprep.subr.bf16.mxu0 0
        %6850 = vmatpush1.bf16.msra.mxu0 0
        %6851 = vmatprep.subr.bf16.mxu0 0
        %6852 = vmatpush1.bf16.msra.mxu0 0
        %6853 = vmatprep.subr.bf16.mxu0 0
        %6854 = vmatpush1.bf16.msra.mxu0 0
        %6855 = vmatprep.subr.bf16.mxu0 0
        %6856 = vmatpush1.bf16.msra.mxu0 0
        %6857 = vmatprep.subr.bf16.mxu0 0
        %6858 = vmatpush1.bf16.msra.mxu0 0
        %6859 = vmatprep.mubr.bf16.mxu0 0
        %6860 = vmatmul.mubr.bf16.gmra.mrb[0].mxu0 %v6825
        %v6861 = vpop.f32.mrb[0].mxu0
        %v6862 = vadd.f32 0.0, %v6861
        %v6863 = vpop.f32.mrb[0].mxu0
        %v6864 = vpop.f32.mrb[0].mxu0
        %v6865 = vpop.f32.mrb[0].mxu0
        %6866 = vdwg.mxu0
        %v6867 = vadd.f32 %v6085, %v6862
        %v6868 = vxor.u32 %v6867, 2147483648
        %v6869 = vmul.f32 %v6868, 1.442695
        %v6870 = vpow.pop %v6869
        %v6871 = vadd.f32 %v6870, 1.0
        %v6872 = vrcp.pop %v6871
        %v6873 = vmul.f32 1.0, %v6872
        %v6874 = vtanh.pop %v6867
        %v6875 = vmul.f32 %v6873, %v6813
        %6877 = vrot.lane.b32.xlu0 %v6874, 64
        %v6878 = vpop.permute.xlu0 %6877
        %v6880 = vmul.f32 %v6873, %v6878
        %6882 = vrot.lane.b32.xlu0 %v6880, 32
        %v6883 = vpop.permute.xlu0 %6882
        %v6885 = vadd.f32 %v6875, %v6883
        %v6886 = vtanh.pop %v6885
        %6888 = vrot.lane.b32.xlu0 %v6886, 64
        %v6889 = vpop.permute.xlu0 %6888
        %v6891 = vmul.f32 %v6873, %v6889
        %v6892 = vpack.c.bf16 %v6891, %v6891
        %6894 = vrot.lane.b32.xlu0 %v6892, 32
        %v6895 = vpop.permute.xlu0 %6894
        %v6897 = vsel %vm4423, %v6895, 0
        %6899 = vmatprep.subr.bf16.mxu0 0
        %6900 = vmatpush1.bf16.msra.mxu0 %v6103
        %6901 = vmatprep.subr.bf16.mxu0 0
        %6902 = vmatpush1.bf16.msra.mxu0 %v6104
        %6903 = vmatprep.subr.bf16.mxu0 0
        %6904 = vmatpush1.bf16.msra.mxu0 0
        %6905 = vmatprep.subr.bf16.mxu0 0
        %6906 = vmatpush1.bf16.msra.mxu0 0
        %6907 = vmatprep.subr.bf16.mxu0 0
        %6908 = vmatpush1.bf16.msra.mxu0 0
        %6909 = vmatprep.subr.bf16.mxu0 0
        %6910 = vmatpush1.bf16.msra.mxu0 0
        %6911 = vmatprep.subr.bf16.mxu0 0
        %6912 = vmatpush1.bf16.msra.mxu0 0
        %6913 = vmatprep.subr.bf16.mxu0 0
        %6914 = vmatpush1.bf16.msra.mxu0 0
        %6915 = vmatprep.subr.bf16.mxu0 0
        %6916 = vmatpush1.bf16.msra.mxu0 0
        %6917 = vmatprep.subr.bf16.mxu0 0
        %6918 = vmatpush1.bf16.msra.mxu0 0
        %6919 = vmatprep.subr.bf16.mxu0 0
        %6920 = vmatpush1.bf16.msra.mxu0 0
        %6921 = vmatprep.subr.bf16.mxu0 0
        %6922 = vmatpush1.bf16.msra.mxu0 0
        %6923 = vmatprep.subr.bf16.mxu0 0
        %6924 = vmatpush1.bf16.msra.mxu0 0
        %6925 = vmatprep.subr.bf16.mxu0 0
        %6926 = vmatpush1.bf16.msra.mxu0 0
        %6927 = vmatprep.subr.bf16.mxu0 0
        %6928 = vmatpush1.bf16.msra.mxu0 0
        %6929 = vmatprep.subr.bf16.mxu0 0
        %6930 = vmatpush1.bf16.msra.mxu0 0
        %6931 = vmatprep.mubr.bf16.mxu0 0
        %6932 = vmatmul.mubr.bf16.gmra.mrb[0].mxu0 %v6897
        %v6933 = vpop.f32.mrb[0].mxu0
        %v6934 = vadd.f32 0.0, %v6933
        %v6935 = vpop.f32.mrb[0].mxu0
        %v6936 = vpop.f32.mrb[0].mxu0
        %v6937 = vpop.f32.mrb[0].mxu0
        %6938 = vdwg.mxu0
        %v6939 = vadd.f32 %v6086, %v6934
        %v6940 = vxor.u32 %v6939, 2147483648
        %v6941 = vmul.f32 %v6940, 1.442695
        %v6942 = vpow.pop %v6941
        %v6943 = vadd.f32 %v6942, 1.0
        %v6944 = vrcp.pop %v6943
        %v6945 = vmul.f32 1.0, %v6944
        %v6946 = vtanh.pop %v6939
        %v6947 = vmul.f32 %v6945, %v6885
        %6949 = vrot.lane.b32.xlu0 %v6946, 64
        %v6950 = vpop.permute.xlu0 %6949
        %v6952 = vmul.f32 %v6945, %v6950
        %6954 = vrot.lane.b32.xlu0 %v6952, 32
        %v6955 = vpop.permute.xlu0 %6954
        %v6957 = vadd.f32 %v6947, %v6955
        %v6958 = vtanh.pop %v6957
        %6960 = vrot.lane.b32.xlu0 %v6958, 64
        %v6961 = vpop.permute.xlu0 %6960
        %v6963 = vmul.f32 %v6945, %v6961
        %v6964 = vpack.c.bf16 %v6963, %v6963
        %6966 = vrot.lane.b32.xlu0 %v6964, 32
        %v6967 = vpop.permute.xlu0 %6966
        %v6969 = vsel %vm4423, %v6967, 0
        %6971 = vmatprep.subr.bf16.mxu0 0
        %6972 = vmatpush1.bf16.msra.mxu0 %v6103
        %6973 = vmatprep.subr.bf16.mxu0 0
        %6974 = vmatpush1.bf16.msra.mxu0 %v6104
        %6975 = vmatprep.subr.bf16.mxu0 0
        %6976 = vmatpush1.bf16.msra.mxu0 0
        %6977 = vmatprep.subr.bf16.mxu0 0
        %6978 = vmatpush1.bf16.msra.mxu0 0
        %6979 = vmatprep.subr.bf16.mxu0 0
        %6980 = vmatpush1.bf16.msra.mxu0 0
        %6981 = vmatprep.subr.bf16.mxu0 0
        %6982 = vmatpush1.bf16.msra.mxu0 0
        %6983 = vmatprep.subr.bf16.mxu0 0
        %6984 = vmatpush1.bf16.msra.mxu0 0
        %6985 = vmatprep.subr.bf16.mxu0 0
        %6986 = vmatpush1.bf16.msra.mxu0 0
        %6987 = vmatprep.subr.bf16.mxu0 0
        %6988 = vmatpush1.bf16.msra.mxu0 0
        %6989 = vmatprep.subr.bf16.mxu0 0
        %6990 = vmatpush1.bf16.msra.mxu0 0
        %6991 = vmatprep.subr.bf16.mxu0 0
        %6992 = vmatpush1.bf16.msra.mxu0 0
        %6993 = vmatprep.subr.bf16.mxu0 0
        %6994 = vmatpush1.bf16.msra.mxu0 0
        %6995 = vmatprep.subr.bf16.mxu0 0
        %6996 = vmatpush1.bf16.msra.mxu0 0
        %6997 = vmatprep.subr.bf16.mxu0 0
        %6998 = vmatpush1.bf16.msra.mxu0 0
        %6999 = vmatprep.subr.bf16.mxu0 0
        %7000 = vmatpush1.bf16.msra.mxu0 0
        %7001 = vmatprep.subr.bf16.mxu0 0
        %7002 = vmatpush1.bf16.msra.mxu0 0
        %7003 = vmatprep.mubr.bf16.mxu0 0
        %7004 = vmatmul.mubr.bf16.gmra.mrb[0].mxu0 %v6969
        %v7005 = vpop.f32.mrb[0].mxu0
        %v7006 = vadd.f32 0.0, %v7005
        %v7007 = vpop.f32.mrb[0].mxu0
        %v7008 = vpop.f32.mrb[0].mxu0
        %v7009 = vpop.f32.mrb[0].mxu0
        %7010 = vdwg.mxu0
        %v7011 = vadd.f32 %v6087, %v7006
        %v7012 = vxor.u32 %v7011, 2147483648
        %v7013 = vmul.f32 %v7012, 1.442695
        %v7014 = vpow.pop %v7013
        %v7015 = vadd.f32 %v7014, 1.0
        %v7016 = vrcp.pop %v7015
        %v7017 = vmul.f32 1.0, %v7016
        %v7018 = vtanh.pop %v7011
        %v7019 = vmul.f32 %v7017, %v6957
        %7021 = vrot.lane.b32.xlu0 %v7018, 64
        %v7022 = vpop.permute.xlu0 %7021
        %v7024 = vmul.f32 %v7017, %v7022
        %7026 = vrot.lane.b32.xlu0 %v7024, 32
        %v7027 = vpop.permute.xlu0 %7026
        %v7029 = vadd.f32 %v7019, %v7027
        %v7030 = vtanh.pop %v7029
        %7032 = vrot.lane.b32.xlu0 %v7030, 64
        %v7033 = vpop.permute.xlu0 %7032
        %v7035 = vmul.f32 %v7017, %v7033
        %v7036 = vpack.c.bf16 %v7035, %v7035
        %7038 = vrot.lane.b32.xlu0 %v7036, 32
        %v7039 = vpop.permute.xlu0 %7038
        %v7041 = vsel %vm4423, %v7039, 0
        %7043 = vmatprep.subr.bf16.mxu0 0
        %7044 = vmatpush1.bf16.msra.mxu0 %v6103
        %7045 = vmatprep.subr.bf16.mxu0 0
        %7046 = vmatpush1.bf16.msra.mxu0 %v6104
        %7047 = vmatprep.subr.bf16.mxu0 0
        %7048 = vmatpush1.bf16.msra.mxu0 0
        %7049 = vmatprep.subr.bf16.mxu0 0
        %7050 = vmatpush1.bf16.msra.mxu0 0
        %7051 = vmatprep.subr.bf16.mxu0 0
        %7052 = vmatpush1.bf16.msra.mxu0 0
        %7053 = vmatprep.subr.bf16.mxu0 0
        %7054 = vmatpush1.bf16.msra.mxu0 0
        %7055 = vmatprep.subr.bf16.mxu0 0
        %7056 = vmatpush1.bf16.msra.mxu0 0
        %7057 = vmatprep.subr.bf16.mxu0 0
        %7058 = vmatpush1.bf16.msra.mxu0 0
        %7059 = vmatprep.subr.bf16.mxu0 0
        %7060 = vmatpush1.bf16.msra.mxu0 0
        %7061 = vmatprep.subr.bf16.mxu0 0
        %7062 = vmatpush1.bf16.msra.mxu0 0
        %7063 = vmatprep.subr.bf16.mxu0 0
        %7064 = vmatpush1.bf16.msra.mxu0 0
        %7065 = vmatprep.subr.bf16.mxu0 0
        %7066 = vmatpush1.bf16.msra.mxu0 0
        %7067 = vmatprep.subr.bf16.mxu0 0
        %7068 = vmatpush1.bf16.msra.mxu0 0
        %7069 = vmatprep.subr.bf16.mxu0 0
        %7070 = vmatpush1.bf16.msra.mxu0 0
        %7071 = vmatprep.subr.bf16.mxu0 0
        %7072 = vmatpush1.bf16.msra.mxu0 0
        %7073 = vmatprep.subr.bf16.mxu0 0
        %7074 = vmatpush1.bf16.msra.mxu0 0
        %7075 = vmatprep.mubr.bf16.mxu0 0
        %7076 = vmatmul.mubr.bf16.gmra.mrb[0].mxu0 %v7041
        %v7077 = vpop.f32.mrb[0].mxu0
        %v7078 = vadd.f32 0.0, %v7077
        %v7079 = vpop.f32.mrb[0].mxu0
        %v7080 = vpop.f32.mrb[0].mxu0
        %v7081 = vpop.f32.mrb[0].mxu0
        %7082 = vdwg.mxu0
        %v7083 = vadd.f32 %v6088, %v7078
        %v7084 = vxor.u32 %v7083, 2147483648
        %v7085 = vmul.f32 %v7084, 1.442695
        %v7086 = vpow.pop %v7085
        %v7087 = vadd.f32 %v7086, 1.0
        %v7088 = vrcp.pop %v7087
        %v7089 = vmul.f32 1.0, %v7088
        %v7090 = vtanh.pop %v7083
        %v7091 = vmul.f32 %v7089, %v7029
        %7093 = vrot.lane.b32.xlu0 %v7090, 64
        %v7094 = vpop.permute.xlu0 %7093
        %v7096 = vmul.f32 %v7089, %v7094
        %7098 = vrot.lane.b32.xlu0 %v7096, 32
        %v7099 = vpop.permute.xlu0 %7098
        %v7101 = vadd.f32 %v7091, %v7099
        %v7102 = vtanh.pop %v7101
        %7104 = vrot.lane.b32.xlu0 %v7102, 64
        %v7105 = vpop.permute.xlu0 %7104
        %v7107 = vmul.f32 %v7089, %v7105
        %v7108 = vpack.c.bf16 %v7107, %v7107
        %7110 = vrot.lane.b32.xlu0 %v7108, 32
        %v7111 = vpop.permute.xlu0 %7110
        %v7113 = vsel %vm4423, %v7111, 0
        %7115 = vmatprep.subr.bf16.mxu0 0
        %7116 = vmatpush1.bf16.msra.mxu0 %v6103
        %7117 = vmatprep.subr.bf16.mxu0 0
        %7118 = vmatpush1.bf16.msra.mxu0 %v6104
        %7119 = vmatprep.subr.bf16.mxu0 0
        %7120 = vmatpush1.bf16.msra.mxu0 0
        %7121 = vmatprep.subr.bf16.mxu0 0
        %7122 = vmatpush1.bf16.msra.mxu0 0
        %7123 = vmatprep.subr.bf16.mxu0 0
        %7124 = vmatpush1.bf16.msra.mxu0 0
        %7125 = vmatprep.subr.bf16.mxu0 0
        %7126 = vmatpush1.bf16.msra.mxu0 0
        %7127 = vmatprep.subr.bf16.mxu0 0
        %7128 = vmatpush1.bf16.msra.mxu0 0
        %7129 = vmatprep.subr.bf16.mxu0 0
        %7130 = vmatpush1.bf16.msra.mxu0 0
        %7131 = vmatprep.subr.bf16.mxu0 0
        %7132 = vmatpush1.bf16.msra.mxu0 0
        %7133 = vmatprep.subr.bf16.mxu0 0
        %7134 = vmatpush1.bf16.msra.mxu0 0
        %7135 = vmatprep.subr.bf16.mxu0 0
        %7136 = vmatpush1.bf16.msra.mxu0 0
        %7137 = vmatprep.subr.bf16.mxu0 0
        %7138 = vmatpush1.bf16.msra.mxu0 0
        %7139 = vmatprep.subr.bf16.mxu0 0
        %7140 = vmatpush1.bf16.msra.mxu0 0
        %7141 = vmatprep.subr.bf16.mxu0 0
        %7142 = vmatpush1.bf16.msra.mxu0 0
        %7143 = vmatprep.subr.bf16.mxu0 0
        %7144 = vmatpush1.bf16.msra.mxu0 0
        %7145 = vmatprep.subr.bf16.mxu0 0
        %7146 = vmatpush1.bf16.msra.mxu0 0
        %7147 = vmatprep.mubr.bf16.mxu0 0
        %7148 = vmatmul.mubr.bf16.gmra.mrb[0].mxu0 %v7113
        %v7149 = vpop.f32.mrb[0].mxu0
        %v7150 = vadd.f32 0.0, %v7149
        %v7151 = vpop.f32.mrb[0].mxu0
        %v7152 = vpop.f32.mrb[0].mxu0
        %v7153 = vpop.f32.mrb[0].mxu0
        %7154 = vdwg.mxu0
        %v7155 = vadd.f32 %v6089, %v7150
        %v7156 = vxor.u32 %v7155, 2147483648
        %v7157 = vmul.f32 %v7156, 1.442695
        %v7158 = vpow.pop %v7157
        %v7159 = vadd.f32 %v7158, 1.0
        %v7160 = vrcp.pop %v7159
        %v7161 = vmul.f32 1.0, %v7160
        %v7162 = vtanh.pop %v7155
        %v7163 = vmul.f32 %v7161, %v7101
        %7165 = vrot.lane.b32.xlu0 %v7162, 64
        %v7166 = vpop.permute.xlu0 %7165
        %v7168 = vmul.f32 %v7161, %v7166
        %7170 = vrot.lane.b32.xlu0 %v7168, 32
        %v7171 = vpop.permute.xlu0 %7170
        %v7173 = vadd.f32 %v7163, %v7171
        %v7174 = vtanh.pop %v7173
        %7176 = vrot.lane.b32.xlu0 %v7174, 64
        %v7177 = vpop.permute.xlu0 %7176
        %v7179 = vmul.f32 %v7161, %v7177
        %v7180 = vpack.c.bf16 %v7179, %v7179
        %7182 = vrot.lane.b32.xlu0 %v7180, 32
        %v7183 = vpop.permute.xlu0 %7182
        %v7185 = vsel %vm4423, %v7183, 0
        %7187 = vmatprep.subr.bf16.mxu0 0
        %7188 = vmatpush1.bf16.msra.mxu0 %v6103
        %7189 = vmatprep.subr.bf16.mxu0 0
        %7190 = vmatpush1.bf16.msra.mxu0 %v6104
        %7191 = vmatprep.subr.bf16.mxu0 0
        %7192 = vmatpush1.bf16.msra.mxu0 0
        %7193 = vmatprep.subr.bf16.mxu0 0
        %7194 = vmatpush1.bf16.msra.mxu0 0
        %7195 = vmatprep.subr.bf16.mxu0 0
        %7196 = vmatpush1.bf16.msra.mxu0 0
        %7197 = vmatprep.subr.bf16.mxu0 0
        %7198 = vmatpush1.bf16.msra.mxu0 0
        %7199 = vmatprep.subr.bf16.mxu0 0
        %7200 = vmatpush1.bf16.msra.mxu0 0
        %7201 = vmatprep.subr.bf16.mxu0 0
        %7202 = vmatpush1.bf16.msra.mxu0 0
        %7203 = vmatprep.subr.bf16.mxu0 0
        %7204 = vmatpush1.bf16.msra.mxu0 0
        %7205 = vmatprep.subr.bf16.mxu0 0
        %7206 = vmatpush1.bf16.msra.mxu0 0
        %7207 = vmatprep.subr.bf16.mxu0 0
        %7208 = vmatpush1.bf16.msra.mxu0 0
        %7209 = vmatprep.subr.bf16.mxu0 0
        %7210 = vmatpush1.bf16.msra.mxu0 0
        %7211 = vmatprep.subr.bf16.mxu0 0
        %7212 = vmatpush1.bf16.msra.mxu0 0
        %7213 = vmatprep.subr.bf16.mxu0 0
        %7214 = vmatpush1.bf16.msra.mxu0 0
        %7215 = vmatprep.subr.bf16.mxu0 0
        %7216 = vmatpush1.bf16.msra.mxu0 0
        %7217 = vmatprep.subr.bf16.mxu0 0
        %7218 = vmatpush1.bf16.msra.mxu0 0
        %7219 = vmatprep.mubr.bf16.mxu0 0
        %7220 = vmatmul.mubr.bf16.gmra.mrb[0].mxu0 %v7185
        %v7221 = vpop.f32.mrb[0].mxu0
        %v7222 = vadd.f32 0.0, %v7221
        %v7223 = vpop.f32.mrb[0].mxu0
        %v7224 = vpop.f32.mrb[0].mxu0
        %v7225 = vpop.f32.mrb[0].mxu0
        %7226 = vdwg.mxu0
        %v7227 = vadd.f32 %v6090, %v7222
        %v7228 = vxor.u32 %v7227, 2147483648
        %v7229 = vmul.f32 %v7228, 1.442695
        %v7230 = vpow.pop %v7229
        %v7231 = vadd.f32 %v7230, 1.0
        %v7232 = vrcp.pop %v7231
        %v7233 = vmul.f32 1.0, %v7232
        %v7234 = vtanh.pop %v7227
        %v7235 = vmul.f32 %v7233, %v7173
        %7237 = vrot.lane.b32.xlu0 %v7234, 64
        %v7238 = vpop.permute.xlu0 %7237
        %v7240 = vmul.f32 %v7233, %v7238
        %7242 = vrot.lane.b32.xlu0 %v7240, 32
        %v7243 = vpop.permute.xlu0 %7242
        %v7245 = vadd.f32 %v7235, %v7243
        %v7246 = vtanh.pop %v7245
        %7248 = vrot.lane.b32.xlu0 %v7246, 64
        %v7249 = vpop.permute.xlu0 %7248
        %v7251 = vmul.f32 %v7233, %v7249
        %v7252 = vld [vmem:[%s21] sm:$0x1]
        %v7254 = vlaneseq
        %v7255 = vshrl.u32 %v7254, 7
        %v7256 = vsub.s32 0, %v7255
        %v7257 = vrot.slane %v7252, %v7256
        %7258 = vrot.lane.b32.xlu0 %v7257, 96
        %v7259 = vpop.permute.xlu0 %7258
        %v7261 = vmul.f32 %v7251, %v7259
        %7263 = vrot.lane.b32.xlu0 %v7261, 32
        %v7264 = vpop.permute.xlu0 %7263
        %v7266 = vsel %vm4423, %v7264, 0.0
        %7267 = vadd.xlane.f32.xlu0 %v7266
        %v7268 = vpop.xlane.xlu0 %7267
        %v7269 = vld [vmem:[#allocation6] sm:$0x1]
        %v7271 = vlaneseq
        %v7272 = vshrl.u32 %v7271, 7
        %v7273 = vsub.s32 0, %v7272
        %v7274 = vrot.slane %v7269, %v7273
        %v7276 = vadd.f32 %v7268, %v7274
        %v7277 = vld [vmem:[%s23] sm:$0x1]
        %v7279 = vlaneseq
        %v7280 = vshrl.u32 %v7279, 7
        %v7281 = vsub.s32 0, %v7280
        %v7282 = vrot.slane %v7277, %v7281
        %7283 = vrot.lane.b32.xlu0 %v7282, 96
        %v7284 = vpop.permute.xlu0 %7283
        %v7286 = vmul.f32 %v7251, %v7284
        %7288 = vrot.lane.b32.xlu0 %v7286, 32
        %v7289 = vpop.permute.xlu0 %7288
        %v7291 = vsel %vm4423, %v7289, 0.0
        %7292 = vadd.xlane.f32.xlu0 %v7291
        %v7293 = vpop.xlane.xlu0 %7292
        %v7294 = vld [vmem:[#allocation7] sm:$0x1]
        %v7296 = vlaneseq
        %v7297 = vshrl.u32 %v7296, 7
        %v7298 = vsub.s32 0, %v7297
        %v7299 = vrot.slane %v7294, %v7298
        %v7301 = vadd.f32 %v7293, %v7299
        %v7302 = vxor.u32 %v7276, 2147483648
        %v7303 = vmul.f32 %v7302, 1.442695
        %v7304 = vpow.pop %v7303
        %v7305 = vadd.f32 %v7304, 1.0
        %v7306 = vrcp.pop %v7305
        %v7307 = vmul.f32 1.0, %v7306
        %7308 = vst.msk [vmem:[%s821] sm:$0x3] %vm830, %v7307
        %v7309 = vmax.f32 %v7301, 0.0
        %v7310 = vand.u32 2147483647, %v7301
        %v7311 = vsub.f32 0.0, %v7310
        %v7312 = vmul.f32 %v7311, 1.442695
        %v7313 = vpow.pop %v7312
        %v7314 = vadd.f32 %v7313, 1.0
        %v7315 = vlog2.pop %v7314
        %v7316 = vmul.f32 %v7315, 0.6931472
        %v7317 = vadd.f32 %v7309, %v7316
        %7318 = vst.msk [vmem:[%s825] sm:$0x3] %vm830, %v7317
      $region128: #{deeptrader_forward.1} parent=119 // pred_fallthru
        _
      %p7319 = scmp.lt.s32.totalorder %s45, 1
      %s7320 = scalar_select %p7319, %s45, 1
      %s7321 = smul.addr %s7320, 2
      %s7322 = smul.addr %s7321, 8
      %s7323 = scalar_lea.vmem %s25, %s7322
      %p7324 = scmp.lt.s32.totalorder %s45, 1
      %s7325 = scalar_select %p7324, %s45, 1
      %s7326 = smul.addr %s7325, 2
      %s7327 = scalar_lea.vmem %s26, %s7326
      %p7328 = scmp.lt.s32.totalorder %s45, 1
      %s7329 = scalar_select %p7328, %s45, 1
      %s7330 = smul.addr %s7329, 2
      %s7331 = scalar_lea.vmem %s27, %s7330
      // Predicated region
      $region129: #{deeptrader_forward.1} parent=119 // pred_check
        %p7332 = pneg %p588
      $region130: #{deeptrader_forward.1} parent=119 // pred_check_branch
        %7334 = sbr.rel (%p7332) target = $region132
      $region131: #{deeptrader_forward.1} parent=119 // pred_region
        _
      $region132: #{deeptrader_forward.1} parent=119 // pred_fallthru
        _
      // Predicated region
      $region133: #{deeptrader_forward.1} parent=119 // pred_check
        %p7335 = pneg %p614
      $region134: #{deeptrader_forward.1} parent=119 // pred_check_branch
        %7337 = sbr.rel (%p7335) target = $region136
      $region135: #{deeptrader_forward.1} parent=119 // pred_region
        _
      $region136: #{deeptrader_forward.1} parent=119 // pred_fallthru
        _
      // Predicated region
      $region137: #{deeptrader_forward.1} parent=119 // pred_check
        %p7338 = pneg %p640
      $region138: #{deeptrader_forward.1} parent=119 // pred_check_branch
        %7340 = sbr.rel (%p7338) target = $region140
      $region139: #{deeptrader_forward.1} parent=119 // pred_region
        _
      $region140: #{deeptrader_forward.1} parent=119 // pred_fallthru
        _
    $region120: #{deeptrader_forward.1} parent=5 // pred_fallthru
      _
    %p7341 = scmp.le.s32.totalorder 2, %s40
    // Predicated region
    $region141: #{deeptrader_forward.1} parent=5 // pred_check
      %p7342 = pneg %p7341
    $region142: #{deeptrader_forward.1} parent=5 // pred_check_branch
      %7344 = sbr.rel (%p7342) target = $region144
    $region143: #{deeptrader_forward.1} parent=5 // pred_region
      %s7345 = ssub.s32 %s40, 2
      // Predicated region
      $region145: #{deeptrader_forward.1} parent=143 // pred_check
        %p7346 = pneg %p594
      $region146: #{deeptrader_forward.1} parent=143 // pred_check_branch
        %7348 = sbr.rel (%p7346) target = $region148
      $region147: #{deeptrader_forward.1} parent=143 // pred_region
        %p7349 = scmp.lt.s32.totalorder %s46, 1
        %s7350 = scalar_select %p7349, %s46, 1
        %s7351 = smul.addr %s7350, 2
        %s7352 = smul.addr %s7351, 8
        %s7353 = scalar_lea.vmem %s25, %s7352
      $region148: #{deeptrader_forward.1} parent=143 // pred_fallthru
        _
      // Predicated region
      $region149: #{deeptrader_forward.1} parent=143 // pred_check
        %p7354 = pneg %p620
      $region150: #{deeptrader_forward.1} parent=143 // pred_check_branch
        %7356 = sbr.rel (%p7354) target = $region152
      $region151: #{deeptrader_forward.1} parent=143 // pred_region
        %p7357 = scmp.lt.s32.totalorder %s46, 1
        %s7358 = scalar_select %p7357, %s46, 1
        %s7359 = smul.addr %s7358, 2
        %s7360 = scalar_lea.vmem %s26, %s7359
      $region152: #{deeptrader_forward.1} parent=143 // pred_fallthru
        _
      // Predicated region
      $region153: #{deeptrader_forward.1} parent=143 // pred_check
        %p7361 = pneg %p646
      $region154: #{deeptrader_forward.1} parent=143 // pred_check_branch
        %7363 = sbr.rel (%p7361) target = $region156
      $region155: #{deeptrader_forward.1} parent=143 // pred_region
        %p7364 = scmp.lt.s32.totalorder %s46, 1
        %s7365 = scalar_select %p7364, %s46, 1
        %s7366 = smul.addr %s7365, 2
        %s7367 = scalar_lea.vmem %s27, %s7366
      $region156: #{deeptrader_forward.1} parent=143 // pred_fallthru
        _
    $region144: #{deeptrader_forward.1} parent=5 // pred_fallthru
      _
  $region6: #{deeptrader_forward.1} parent=0 // loop_footer
    %s44 = sadd.s32 1, %s40
  $region7: #{deeptrader_forward.1} parent=0 // loop_footer_branch
    %39 = sbr.rel target = $region3
  $region8: #{deeptrader_forward.1} parent=0 // loop_exit
    _

</llo_original>
